<compile_context>
chip_gen: v7x
topology: tpu7x:2x2x1
jax: 0.10.0
libtpu: 0.0.40
codegen_flags: <defaults>
</compile_context>

<pallas_src>
import functools

import jax
import jax.numpy as jnp
from jax.experimental import pallas as pl
from jax.experimental.pallas import tpu as pltpu


VMEM_LIMIT = 32 * 1024 * 1024   # raises v5e's 16 MiB default; safe on v6e/v7x


# ----------------------------- small helpers --------------------------------

def _round_up(x, m):
    return ((x + m - 1) // m) * m


def _apply_act(y, act):
    if act == "silu":
        return y * jax.nn.sigmoid(y)
    if act == "sigmoid":
        return jax.nn.sigmoid(y)
    return y


# ----------------------------- Pallas kernels -------------------------------

def _matmul_bias_act_kernel(x_ref, w_ref, b_ref, o_ref, *, act):
    # bf16 x bf16 -> f32 accumulation on the MXU; bias + activation in f32.
    acc = jnp.dot(x_ref[...], w_ref[...], preferred_element_type=jnp.float32)
    acc = acc + b_ref[...]
    o_ref[...] = _apply_act(acc, act).astype(o_ref.dtype)


def matmul_bias_act(x, w, b, act="none", out_dtype=jnp.bfloat16):
    """act(x @ w + b). x:(M,K), w:(K,N), b:(N,). bf16 inputs, f32 accum.

    M is tiled at up to 512 rows (HBM-bandwidth-bound regime); the M tail is
    handled by Pallas boundary masking (no full-slab jnp.pad) except a tiny
    sub-8-row pad for very small M (e.g. the final FC with M = batch).
    """
    M, K = x.shape
    N = w.shape[1]
    x = x.astype(jnp.bfloat16)
    w = w.astype(jnp.bfloat16)
    b2 = b.reshape(1, N).astype(jnp.float32)

    Mp = M
    if M % 8 != 0:                       # only tiny tails (M < 8 multiples)
        Mp = _round_up(M, 8)
        x = jnp.pad(x, ((0, Mp - M), (0, 0)))
    tm = min(512, Mp)

    out = pl.pallas_call(
        functools.partial(_matmul_bias_act_kernel, act=act),
        grid=(pl.cdiv(Mp, tm),),
        in_specs=[
            pl.BlockSpec((tm, K), lambda i: (i, 0)),
            pl.BlockSpec((K, N), lambda i: (0, 0)),
            pl.BlockSpec((1, N), lambda i: (0, 0)),
        ],
        out_specs=pl.BlockSpec((tm, N), lambda i: (i, 0)),
        out_shape=jax.ShapeDtypeStruct((Mp, N), out_dtype),
        compiler_params=pltpu.CompilerParams(
            dimension_semantics=("parallel",),
            vmem_limit_bytes=VMEM_LIMIT),
    )(x, w, b2)
    return out[:M] if Mp != M else out


def _dwconv_bn_silu_kernel(x_ref, w_ref, b_ref, o_ref, se_ref, *,
                           k, stride, Ho, Wo, Hq):
    # x_ref block: (1, stride*stride*Hq, Wq, C) phase-split padded image (bf16).
    # Accumulate k*k shifted contiguous taps into an (Ho, Wo, C) f32 slab
    # (per-tap upcast only), add the folded-BN shift, apply SiLU, and also
    # emit the SE "squeeze" channel sum as a second (1,1,C) f32 output.
    w = w_ref[...]                                   # (k*k, C) f32, BN folded
    C = w.shape[-1]
    x = x_ref[0]                                     # (s*s*Hq, Wq, C) bf16
    acc = jnp.zeros((Ho, Wo, C), jnp.float32)
    qmax = (k - 1) // stride + 1
    for dj in range(k):
        qj, pj = dj // stride, dj % stride
        for pi in range(stride):
            base = (pi * stride + pj) * Hq
            # One sublane-axis (column) slice per (dj, pi); reused across qi.
            xcol = x[base:base + Hq, qj:qj + Wo, :]
            for qi in range(qmax):
                di = qi * stride + pi
                if di >= k:
                    continue
                tap = xcol[qi:qi + Ho].astype(jnp.float32)   # per-tap upcast
                acc = acc + tap * w[di * k + dj]
    y = acc + b_ref[...].reshape(1, 1, C)
    y = y * jax.nn.sigmoid(y)                        # SiLU (BN already folded)
    o_ref[0] = y.astype(o_ref.dtype)
    # Fused SE squeeze: channel sum of the activated output (mean applied later).
    se = jnp.sum(y, axis=1, keepdims=True)           # (Ho, 1, C)
    se_ref[...] = jnp.sum(se, axis=0, keepdims=True)  # (1, 1, C)


def depthwise_conv_bn_silu(x, w2d, shift, k, stride):
    """Depthwise conv (SAME, no bias) + folded BN + SiLU + fused SE squeeze.

    x:(N,H,W,C) bf16, w2d:(k*k,C) f32 with BN scale folded, shift:(C,) f32.
    Returns (out:(N,Ho,Wo,C) bf16, se_sum:(N,1,C) f32).
    """
    N, H, W, C = x.shape
    Ho = -(-H // stride)
    Wo = -(-W // stride)
    pad_h = max((Ho - 1) * stride + k - H, 0)
    pad_w = max((Wo - 1) * stride + k - W, 0)
    pt, pL = pad_h // 2, pad_w // 2
    # Pad out to an exact multiple of stride sized for the phase decomposition.
    Hq = (k - 1) // stride + Ho
    Wq = (k - 1) // stride + Wo
    Hp2, Wp2 = Hq * stride, Wq * stride
    xp = jnp.pad(x.astype(jnp.bfloat16),
                 ((0, 0), (pt, Hp2 - H - pt), (pL, Wp2 - W - pL), (0, 0)))
    if stride == 1:
        xph = xp                                      # phase split is identity
    else:
        # TODO(synk): fold this space-to-depth into the expand conv's out_specs
        # to avoid an extra XLA pass over the expanded activation.
        xph = xp.reshape(N, Hq, stride, Wq, stride, C)
        xph = jnp.transpose(xph, (0, 2, 4, 1, 3, 5)).reshape(
            N, stride * stride * Hq, Wq, C)

    # TODO(synk): at real B7 resolutions, add an Ho (row-tile) grid axis with
    # halo windows so the per-sample block and f32 accumulator stay bounded.
    out, se_sum = pl.pallas_call(
        functools.partial(_dwconv_bn_silu_kernel, k=k, stride=stride,
                          Ho=Ho, Wo=Wo, Hq=Hq),
        grid=(N,),
        in_specs=[
            pl.BlockSpec((1, stride * stride * Hq, Wq, C),
                         lambda n: (n, 0, 0, 0)),
            pl.BlockSpec((k * k, C), lambda n: (0, 0)),
            pl.BlockSpec((1, C), lambda n: (0, 0)),
        ],
        out_specs=(pl.BlockSpec((1, Ho, Wo, C), lambda n: (n, 0, 0, 0)),
                   pl.BlockSpec((1, 1, C), lambda n: (n, 0, 0))),
        out_shape=(jax.ShapeDtypeStruct((N, Ho, Wo, C), jnp.bfloat16),
                   jax.ShapeDtypeStruct((N, 1, C), jnp.float32)),
        compiler_params=pltpu.CompilerParams(
            dimension_semantics=("parallel",),
            vmem_limit_bytes=VMEM_LIMIT),
    )(xph, w2d.astype(jnp.float32), shift.reshape(1, C).astype(jnp.float32))
    return out, se_sum


def _se_fc_kernel(p_ref, w1_ref, b1_ref, w2_ref, b2_ref, o_ref, *, inv_hw):
    # Fused SE excite: mean -> FC1 -> SiLU -> FC2 -> sigmoid, M = batch rows.
    pooled = p_ref[...] * inv_hw                     # channel sum -> mean (f32)
    s1 = jnp.dot(pooled.astype(jnp.bfloat16), w1_ref[...],
                 preferred_element_type=jnp.float32) + b1_ref[...]
    s1 = s1 * jax.nn.sigmoid(s1)
    s2 = jnp.dot(s1.astype(jnp.bfloat16), w2_ref[...],
                 preferred_element_type=jnp.float32) + b2_ref[...]
    o_ref[...] = jax.nn.sigmoid(s2).astype(o_ref.dtype)


def se_fc(pooled_sum, w1, b1, w2, b2, inv_hw):
    """Fused SE FCs: sigmoid(silu(sum/HW @ w1 + b1) @ w2 + b2) -> (N, Cm) bf16."""
    N, Cm = pooled_sum.shape
    Cse = w1.shape[1]
    return pl.pallas_call(
        functools.partial(_se_fc_kernel, inv_hw=inv_hw),
        grid=(1,),
        in_specs=[
            pl.BlockSpec((N, Cm), lambda i: (0, 0)),
            pl.BlockSpec((Cm, Cse), lambda i: (0, 0)),
            pl.BlockSpec((1, Cse), lambda i: (0, 0)),
            pl.BlockSpec((Cse, Cm), lambda i: (0, 0)),
            pl.BlockSpec((1, Cm), lambda i: (0, 0)),
        ],
        out_specs=pl.BlockSpec((N, Cm), lambda i: (0, 0)),
        out_shape=jax.ShapeDtypeStruct((N, Cm), jnp.bfloat16),
        compiler_params=pltpu.CompilerParams(
            dimension_semantics=("arbitrary",),
            vmem_limit_bytes=VMEM_LIMIT),
    )(pooled_sum.astype(jnp.float32),
      w1.astype(jnp.bfloat16), b1.reshape(1, Cse).astype(jnp.float32),
      w2.astype(jnp.bfloat16), b2.reshape(1, Cm).astype(jnp.float32))


def _mean_pool_kernel(x_ref, o_ref, *, inv_hw):
    @pl.when(pl.program_id(1) == 0)
    def _init():
        o_ref[...] = jnp.zeros_like(o_ref)
    o_ref[...] += jnp.sum(x_ref[...].astype(jnp.float32), axis=1, keepdims=True)

    @pl.when(pl.program_id(1) == pl.num_programs(1) - 1)
    def _fin():
        o_ref[...] = o_ref[...] * inv_hw


def mean_pool(x3d):
    """Mean over the HW axis. x3d:(N,HW,C) -> (N,C) f32. Gridded reduction."""
    N, HW, C = x3d.shape
    thw = HW
    for cand in (1024, 512, 256, 128):
        if HW >= cand and HW % cand == 0:
            thw = cand
            break
    out = pl.pallas_call(
        functools.partial(_mean_pool_kernel, inv_hw=1.0 / HW),
        grid=(N, HW // thw),
        in_specs=[pl.BlockSpec((1, thw, C), lambda n, j: (n, j, 0))],
        out_specs=pl.BlockSpec((1, 1, C), lambda n, j: (n, 0, 0)),
        out_shape=jax.ShapeDtypeStruct((N, 1, C), jnp.float32),
        compiler_params=pltpu.CompilerParams(
            dimension_semantics=("parallel", "arbitrary"),
            vmem_limit_bytes=VMEM_LIMIT),
    )(x3d)
    return out.reshape(N, C)


def _proj_kernel(x_ref, s_ref, w_ref, b_ref, o_ref):
    xs = x_ref[0] * s_ref[0]                          # SE scale, bf16 (no f32 slab)
    acc = jnp.dot(xs, w_ref[...], preferred_element_type=jnp.float32)
    o_ref[0] = (acc + b_ref[...]).astype(o_ref.dtype)


def _proj_res_kernel(x_ref, s_ref, w_ref, b_ref, r_ref, o_ref):
    xs = x_ref[0] * s_ref[0]
    acc = jnp.dot(xs, w_ref[...], preferred_element_type=jnp.float32)
    acc = acc + b_ref[...] + r_ref[0].astype(jnp.float32)    # residual epilogue
    o_ref[0] = acc.astype(o_ref.dtype)


def proj_se_residual(h3, se_scale, w, bias, residual=None):
    """Fused: (h * se_scale) @ w + bias [+ residual], tiled over HW.

    h3:(N,HW,Cm) bf16, se_scale:(N,Cm) bf16, w:(Cm,Cout) bf16 (BN folded),
    bias:(Cout,) f32 (BN shift), residual:(N,HW,Cout) bf16 or None.
    """
    N, HW, Cm = h3.shape
    Cout = w.shape[1]
    thw = HW if HW <= 512 else 512
    grid = (N, pl.cdiv(HW, thw))
    args = [h3, se_scale.reshape(N, 1, Cm).astype(jnp.bfloat16),
            w.astype(jnp.bfloat16), bias.reshape(1, Cout).astype(jnp.float32)]
    in_specs = [
        pl.BlockSpec((1, thw, Cm), lambda n, t: (n, t, 0)),
        pl.BlockSpec((1, 1, Cm), lambda n, t: (n, 0, 0)),
        pl.BlockSpec((Cm, Cout), lambda n, t: (0, 0)),
        pl.BlockSpec((1, Cout), lambda n, t: (0, 0)),
    ]
    if residual is not None:
        args.append(residual)
        in_specs.append(pl.BlockSpec((1, thw, Cout), lambda n, t: (n, t, 0)))
        kern = _proj_res_kernel
    else:
        kern = _proj_kernel
    return pl.pallas_call(
        kern,
        grid=grid,
        in_specs=in_specs,
        out_specs=pl.BlockSpec((1, thw, Cout), lambda n, t: (n, t, 0)),
        out_shape=jax.ShapeDtypeStruct((N, HW, Cout), jnp.bfloat16),
        compiler_params=pltpu.CompilerParams(
            dimension_semantics=("parallel", "parallel"),
            vmem_limit_bytes=VMEM_LIMIT),
    )(*args)


# --------------------------- JAX glue (stem im2col) --------------------------

def _same_pad(size, k, s):
    out = -(-size // s)
    pad = max((out - 1) * s + k - size, 0)
    return pad // 2, pad - pad // 2


def _extract_patches(x, k, stride):
    """x:(N,H,W,C) -> (N,Ho,Wo,k*k,C). Only used for the tiny 3-channel stem."""
    N, H, W, C = x.shape
    pt, pb = _same_pad(H, k, stride)
    pL, pR = _same_pad(W, k, stride)
    xp = jnp.pad(x, ((0, 0), (pt, pb), (pL, pR), (0, 0)))
    Hp, Wp = H + pt + pb, W + pL + pR
    Ho = (Hp - k) // stride + 1
    Wo = (Wp - k) // stride + 1
    slices = []
    for di in range(k):
        for dj in range(k):
            slices.append(
                xp[:, di:di + stride * Ho:stride, dj:dj + stride * Wo:stride, :])
    return jnp.stack(slices, axis=3), Ho, Wo


# ----------------------------- Parameter init --------------------------------

BLOCK_CFG = [
    dict(k=3, stride=1, expand=1, cout=16),
    dict(k=3, stride=2, expand=4, cout=24),
    dict(k=5, stride=2, expand=4, cout=40),
]
STEM_CH = 16
HEAD_CH = 128
NUM_CLASSES = 18
FC_PAD = 128   # lane-dense padded FC width; logits are sliced back to 18


class _Keys:
    def __init__(self, key):
        self._key = key

    def __call__(self):
        self._key, k = jax.random.split(self._key)
        return k


def _init_conv(key, shape, fan_in):
    return jax.random.normal(key, shape, jnp.float32) / jnp.sqrt(float(fan_in))


def _init_bn(keys, c, eps=1e-3):
    gamma = 1.0 + 0.1 * jax.random.normal(keys(), (c,), jnp.float32)
    beta = 0.1 * jax.random.normal(keys(), (c,), jnp.float32)
    mean = 0.1 * jax.random.normal(keys(), (c,), jnp.float32)
    var = jnp.abs(1.0 + 0.1 * jax.random.normal(keys(), (c,), jnp.float32))
    scale = gamma / jnp.sqrt(var + eps)
    shift = beta - mean * scale
    return {"scale": scale, "shift": shift}


def init_params(key):
    keys = _Keys(key)
    params = {}
    params["stem_w"] = _init_conv(keys(), (3, 3, 3, STEM_CH), 3 * 3 * 3)
    params["stem_bn"] = _init_bn(keys, STEM_CH)

    blocks = []
    cin = STEM_CH
    for cfg in BLOCK_CFG:
        k, expand, cout = cfg["k"], cfg["expand"], cfg["cout"]
        cmid = cin * expand
        cse = max(1, cin // 4)
        b = {}
        if expand != 1:
            b["expand_w"] = _init_conv(keys(), (1, 1, cin, cmid), cin)
            b["bn0"] = _init_bn(keys, cmid)
        b["dw_w"] = _init_conv(keys(), (k, k, cmid), k * k)
        b["bn1"] = _init_bn(keys, cmid)
        b["se_w1"] = _init_conv(keys(), (cmid, cse), cmid)
        b["se_b1"] = 0.01 * jax.random.normal(keys(), (cse,), jnp.float32)
        b["se_w2"] = _init_conv(keys(), (cse, cmid), cse)
        b["se_b2"] = 0.01 * jax.random.normal(keys(), (cmid,), jnp.float32)
        b["proj_w"] = _init_conv(keys(), (1, 1, cmid, cout), cmid)
        b["bn2"] = _init_bn(keys, cout)
        blocks.append(b)
        cin = cout
    params["blocks"] = blocks

    params["head_w"] = _init_conv(keys(), (1, 1, cin, HEAD_CH), cin)
    params["head_bn"] = _init_bn(keys, HEAD_CH)
    params["fc_w"] = _init_conv(keys(), (HEAD_CH, NUM_CLASSES), HEAD_CH)
    params["fc_b"] = 0.01 * jax.random.normal(keys(), (NUM_CLASSES,), jnp.float32)
    return params


def fold_params(raw):
    """Fold inference BN into conv weights/bias; pre-cast matmul weights bf16."""
    f = {}
    sw = raw["stem_w"] * raw["stem_bn"]["scale"][None, None, None, :]
    f["stem_w"] = sw.reshape(-1, STEM_CH).astype(jnp.bfloat16)
    f["stem_shift"] = raw["stem_bn"]["shift"].astype(jnp.float32)

    blocks = []
    for b, cfg in zip(raw["blocks"], BLOCK_CFG):
        k = cfg["k"]
        fb = {}
        if cfg["expand"] != 1:
            ew = b["expand_w"][0, 0] * b["bn0"]["scale"][None, :]
            fb["expand_w"] = ew.astype(jnp.bfloat16)
            fb["bn0_shift"] = b["bn0"]["shift"].astype(jnp.float32)
        dw = b["dw_w"] * b["bn1"]["scale"][None, None, :]
        fb["dw_w"] = dw.reshape(k * k, -1).astype(jnp.float32)
        fb["bn1_shift"] = b["bn1"]["shift"].astype(jnp.float32)
        fb["se_w1"] = b["se_w1"].astype(jnp.bfloat16)
        fb["se_b1"] = b["se_b1"].astype(jnp.float32)
        fb["se_w2"] = b["se_w2"].astype(jnp.bfloat16)
        fb["se_b2"] = b["se_b2"].astype(jnp.float32)
        pw = b["proj_w"][0, 0] * b["bn2"]["scale"][None, :]
        fb["proj_w"] = pw.astype(jnp.bfloat16)
        fb["bn2_shift"] = b["bn2"]["shift"].astype(jnp.float32)
        blocks.append(fb)
    f["blocks"] = blocks

    hw = raw["head_w"][0, 0] * raw["head_bn"]["scale"][None, :]
    f["head_w"] = hw.astype(jnp.bfloat16)
    f["head_shift"] = raw["head_bn"]["shift"].astype(jnp.float32)
    # Pad the FC output 18 -> 128 so the MXU / stores stay lane-dense.
    f["fc_w"] = jnp.pad(raw["fc_w"],
                        ((0, 0), (0, FC_PAD - NUM_CLASSES))).astype(jnp.bfloat16)
    f["fc_b"] = jnp.pad(raw["fc_b"], (0, FC_PAD - NUM_CLASSES)).astype(jnp.float32)
    return f


# ------------------------------ Forward pass ---------------------------------

def mbconv_forward(h, p, cfg):
    N, H, W, Cin = h.shape
    k, stride, expand = cfg["k"], cfg["stride"], cfg["expand"]
    x_in = h

    if expand != 1:
        Cm = p["expand_w"].shape[1]
        h = matmul_bias_act(h.reshape(N * H * W, Cin), p["expand_w"],
                            p["bn0_shift"], "silu").reshape(N, H, W, Cm)
    Cm = h.shape[-1]

    # Fused: depthwise conv + folded BN1 + SiLU + SE squeeze (channel sum).
    h, se_sum = depthwise_conv_bn_silu(h, p["dw_w"], p["bn1_shift"], k, stride)
    _, Ho, Wo, _ = h.shape
    h3 = h.reshape(N, Ho * Wo, Cm)

    # Fused SE excite (FC1 -> SiLU -> FC2 -> sigmoid) in a single tiny kernel.
    se_scale = se_fc(se_sum.reshape(N, Cm), p["se_w1"], p["se_b1"],
                     p["se_w2"], p["se_b2"], 1.0 / float(Ho * Wo))

    # Fused SE-scale + 1x1 projection + folded BN2 (+ residual), HW-tiled.
    Cout = p["proj_w"].shape[1]
    residual = None
    if stride == 1 and Cin == Cout:
        residual = x_in.reshape(N, H * W, Cin)
    out = proj_se_residual(h3, se_scale, p["proj_w"], p["bn2_shift"], residual)
    return out.reshape(N, Ho, Wo, Cout)


@jax.jit
def efficientnet_forward(params, x_nchw):
    # PyTorch convention is NCHW; convert to NHWC (channels in lanes), bf16.
    x = jnp.transpose(x_nchw, (0, 2, 3, 1)).astype(jnp.bfloat16)
    N = x.shape[0]

    # Stem: 3x3 s2 conv (bf16 im2col on 3 channels) + folded BN + SiLU.
    patches, Ho, Wo = _extract_patches(x, 3, 2)
    h = matmul_bias_act(patches.reshape(N * Ho * Wo, 9 * 3), params["stem_w"],
                        params["stem_shift"], "silu").reshape(N, Ho, Wo, STEM_CH)

    for p, cfg in zip(params["blocks"], BLOCK_CFG):
        h = mbconv_forward(h, p, cfg)

    # Head 1x1 conv + folded BN + SiLU.
    _, H, W, Cin = h.shape
    h = matmul_bias_act(h.reshape(N * H * W, Cin), params["head_w"],
                        params["head_shift"], "silu").reshape(N, H, W, HEAD_CH)

    pooled = mean_pool(h.reshape(N, H * W, HEAD_CH))              # global avg pool
    logits = matmul_bias_act(pooled, params["fc_w"], params["fc_b"], "none",
                             out_dtype=jnp.float32)
    return logits[:, :NUM_CLASSES]                                # (N, 18)


# ---------------------------------- Main --------------------------------------

if __name__ == "__main__":
    key = jax.random.PRNGKey(0)
    k_params, k_data = jax.random.split(key)
    raw_params = init_params(k_params)
    params = fold_params(raw_params)          # BN folding / bf16 at prep time
    x = jax.random.normal(k_data, (2, 3, 32, 32), jnp.float32)  # NCHW like PyTorch

    logits = efficientnet_forward(params, x)
    logits = jax.block_until_ready(logits)
    assert logits.shape == (2, NUM_CLASSES)
    assert logits.dtype == jnp.float32
    print("KERNEL_OK")
</pallas_src>

<mosaic_0001>
module attributes {stable_mosaic.version = 11 : i64} {
  func.func @_matmul_bias_act_kernel(%arg0: i32, %arg1: memref<512x27xbf16, #tpu.memory_space<vmem>>, %arg2: memref<27x16xbf16, #tpu.memory_space<vmem>>, %arg3: memref<1x16xf32, #tpu.memory_space<vmem>>, %arg4: memref<512x16xbf16, #tpu.memory_space<vmem>>) attributes {dimension_semantics = [#tpu.dimension_semantics<parallel>], iteration_bounds = array<i64: 1>, scalar_prefetch = 0 : i64, scratch_operands = 0 : i64, tpu.core_type = #tpu.core_type<tc>, window_params = [{transform_indices = @transform_0, window_bounds = array<i64: 512, 27>}, {pipeline_mode = #tpu.pipeline_mode<synchronous>, transform_indices = @transform_1, window_bounds = array<i64: 27, 16>}, {pipeline_mode = #tpu.pipeline_mode<synchronous>, transform_indices = @transform_2, window_bounds = array<i64: 1, 16>}, {transform_indices = @transform_3, window_bounds = array<i64: 512, 16>}]} {
    %c0 = arith.constant 0 : index
    %c0_0 = arith.constant 0 : index
    %0 = vector.load %arg1[%c0, %c0_0] : memref<512x27xbf16, #tpu.memory_space<vmem>>, vector<512x27xbf16>
    %c0_1 = arith.constant 0 : index
    %c0_2 = arith.constant 0 : index
    %1 = vector.load %arg2[%c0_1, %c0_2] : memref<27x16xbf16, #tpu.memory_space<vmem>>, vector<27x16xbf16>
    %cst = arith.constant dense<0.000000e+00> : vector<512x16xf32>
    %2 = tpu.matmul %0, %1, %cst {dimension_numbers = #tpu.dot_dimension_numbers<[1], [0], [0], [1], [0, 0, 1, 1], [], []>} : vector<512x27xbf16>, vector<27x16xbf16>, vector<512x16xf32> -> vector<512x16xf32>
    %c0_3 = arith.constant 0 : index
    %c0_4 = arith.constant 0 : index
    %3 = vector.load %arg3[%c0_3, %c0_4] : memref<1x16xf32, #tpu.memory_space<vmem>>, vector<1x16xf32>
    %4 = vector.broadcast %3 : vector<1x16xf32> to vector<512x16xf32>
    %5 = arith.addf %2, %4 : vector<512x16xf32>
    %6 = arith.negf %5 : vector<512x16xf32>
    %7 = math.exp %6 : vector<512x16xf32>
    %cst_5 = arith.constant 1.000000e+00 : f32
    %8 = vector.broadcast %cst_5 : f32 to vector<512x16xf32>
    %9 = arith.addf %8, %7 : vector<512x16xf32>
    %10 = arith.divf %8, %9 : vector<512x16xf32>
    %11 = arith.mulf %5, %10 : vector<512x16xf32>
    %12 = arith.truncf %11 : vector<512x16xf32> to vector<512x16xbf16>
    %c0_6 = arith.constant 0 : index
    %c0_7 = arith.constant 0 : index
    %13 = vector.load %arg4[%c0_6, %c0_7] : memref<512x16xbf16, #tpu.memory_space<vmem>>, vector<512x16xbf16>
    tpu.vector_store %arg4[%c0_6, %c0_7], %12 {strides = array<i32>} : memref<512x16xbf16, #tpu.memory_space<vmem>>, vector<512x16xbf16>,
    return
  }
  func.func @transform_0(%arg0: i32) -> (i32, i32) {
    %c0_i32 = arith.constant 0 : i32
    %c0_i32_0 = arith.constant 0 : i32
    return %arg0, %c0_i32 : i32, i32
  }
  func.func @transform_1(%arg0: i32) -> (i32, i32) {
    %c0_i32 = arith.constant 0 : i32
    %c0_i32_0 = arith.constant 0 : i32
    %c0_i32_1 = arith.constant 0 : i32
    return %c0_i32, %c0_i32_0 : i32, i32
  }
  func.func @transform_2(%arg0: i32) -> (i32, i32) {
    %c0_i32 = arith.constant 0 : i32
    %c0_i32_0 = arith.constant 0 : i32
    %c0_i32_1 = arith.constant 0 : i32
    return %c0_i32, %c0_i32_0 : i32, i32
  }
  func.func @transform_3(%arg0: i32) -> (i32, i32) {
    %c0_i32 = arith.constant 0 : i32
    %c0_i32_0 = arith.constant 0 : i32
    return %arg0, %c0_i32 : i32, i32
  }
}

module attributes {stable_mosaic.version = 11 : i64} {
  func.func @_dwconv_bn_silu_kernel(%arg0: i32, %arg1: memref<1x18x18x16xbf16, #tpu.memory_space<vmem>>, %arg2: memref<9x16xf32, #tpu.memory_space<vmem>>, %arg3: memref<1x16xf32, #tpu.memory_space<vmem>>, %arg4: memref<1x16x16x16xbf16, #tpu.memory_space<vmem>>, %arg5: memref<1x1x16xf32, #tpu.memory_space<vmem>>) attributes {dimension_semantics = [#tpu.dimension_semantics<parallel>], iteration_bounds = array<i64: 2>, scalar_prefetch = 0 : i64, scratch_operands = 0 : i64, tpu.core_type = #tpu.core_type<tc>, window_params = [{transform_indices = @transform_0, window_bounds = array<i64: 1, 18, 18, 16>}, {pipeline_mode = #tpu.pipeline_mode<synchronous>, transform_indices = @transform_1, window_bounds = array<i64: 9, 16>}, {pipeline_mode = #tpu.pipeline_mode<synchronous>, transform_indices = @transform_2, window_bounds = array<i64: 1, 16>}, {transform_indices = @transform_3, window_bounds = array<i64: 1, 16, 16, 16>}, {transform_indices = @transform_4, window_bounds = array<i64: 1, 1, 16>}]} {
    %c0 = arith.constant 0 : index
    %c0_0 = arith.constant 0 : index
    %0 = vector.load %arg2[%c0, %c0_0] : memref<9x16xf32, #tpu.memory_space<vmem>>, vector<9x16xf32>
    %c0_1 = arith.constant 0 : index
    %c0_2 = arith.constant 0 : index
    %c0_3 = arith.constant 0 : index
    %c0_4 = arith.constant 0 : index
    %1 = vector.load %arg1[%c0_1, %c0_2, %c0_3, %c0_4] : memref<1x18x18x16xbf16, #tpu.memory_space<vmem>>, vector<1x18x18x16xbf16>
    %2 = vector.shape_cast %1 : vector<1x18x18x16xbf16> to vector<18x18x16xbf16>
    %cst = arith.constant 0.000000e+00 : f32
    %3 = vector.broadcast %cst : f32 to vector<16x16x16xf32>
    %4 = vector.extract_strided_slice %2 {offsets = [0, 0, 0], sizes = [18, 16, 16], strides = [1, 1, 1]} : vector<18x18x16xbf16> to vector<18x16x16xbf16>
    %5 = vector.extract_strided_slice %4 {offsets = [0, 0, 0], sizes = [16, 16, 16], strides = [1, 1, 1]} : vector<18x16x16xbf16> to vector<16x16x16xbf16>
    %6 = arith.extf %5 : vector<16x16x16xbf16> to vector<16x16x16xf32>
    %7 = vector.extract_strided_slice %0 {offsets = [0, 0], sizes = [1, 16], strides = [1, 1]} : vector<9x16xf32> to vector<1x16xf32>
    %8 = vector.shape_cast %7 : vector<1x16xf32> to vector<16xf32>
    %9 = vector.shape_cast %8 : vector<16xf32> to vector<1x1x16xf32>
    %10 = vector.broadcast %9 : vector<1x1x16xf32> to vector<16x16x16xf32>
    %11 = arith.mulf %6, %10 : vector<16x16x16xf32>
    %12 = arith.addf %3, %11 : vector<16x16x16xf32>
    %13 = vector.extract_strided_slice %4 {offsets = [1, 0, 0], sizes = [16, 16, 16], strides = [1, 1, 1]} : vector<18x16x16xbf16> to vector<16x16x16xbf16>
    %14 = arith.extf %13 : vector<16x16x16xbf16> to vector<16x16x16xf32>
    %15 = vector.extract_strided_slice %0 {offsets = [3, 0], sizes = [1, 16], strides = [1, 1]} : vector<9x16xf32> to vector<1x16xf32>
    %16 = vector.shape_cast %15 : vector<1x16xf32> to vector<16xf32>
    %17 = vector.shape_cast %16 : vector<16xf32> to vector<1x1x16xf32>
    %18 = vector.broadcast %17 : vector<1x1x16xf32> to vector<16x16x16xf32>
    %19 = arith.mulf %14, %18 : vector<16x16x16xf32>
    %20 = arith.addf %12, %19 : vector<16x16x16xf32>
    %21 = vector.extract_strided_slice %4 {offsets = [2, 0, 0], sizes = [16, 16, 16], strides = [1, 1, 1]} : vector<18x16x16xbf16> to vector<16x16x16xbf16>
    %22 = arith.extf %21 : vector<16x16x16xbf16> to vector<16x16x16xf32>
    %23 = vector.extract_strided_slice %0 {offsets = [6, 0], sizes = [1, 16], strides = [1, 1]} : vector<9x16xf32> to vector<1x16xf32>
    %24 = vector.shape_cast %23 : vector<1x16xf32> to vector<16xf32>
    %25 = vector.shape_cast %24 : vector<16xf32> to vector<1x1x16xf32>
    %26 = vector.broadcast %25 : vector<1x1x16xf32> to vector<16x16x16xf32>
    %27 = arith.mulf %22, %26 : vector<16x16x16xf32>
    %28 = arith.addf %20, %27 : vector<16x16x16xf32>
    %29 = vector.extract_strided_slice %2 {offsets = [0, 1, 0], sizes = [18, 16, 16], strides = [1, 1, 1]} : vector<18x18x16xbf16> to vector<18x16x16xbf16>
    %30 = vector.extract_strided_slice %29 {offsets = [0, 0, 0], sizes = [16, 16, 16], strides = [1, 1, 1]} : vector<18x16x16xbf16> to vector<16x16x16xbf16>
    %31 = arith.extf %30 : vector<16x16x16xbf16> to vector<16x16x16xf32>
    %32 = vector.extract_strided_slice %0 {offsets = [1, 0], sizes = [1, 16], strides = [1, 1]} : vector<9x16xf32> to vector<1x16xf32>
    %33 = vector.shape_cast %32 : vector<1x16xf32> to vector<16xf32>
    %34 = vector.shape_cast %33 : vector<16xf32> to vector<1x1x16xf32>
    %35 = vector.broadcast %34 : vector<1x1x16xf32> to vector<16x16x16xf32>
    %36 = arith.mulf %31, %35 : vector<16x16x16xf32>
    %37 = arith.addf %28, %36 : vector<16x16x16xf32>
    %38 = vector.extract_strided_slice %29 {offsets = [1, 0, 0], sizes = [16, 16, 16], strides = [1, 1, 1]} : vector<18x16x16xbf16> to vector<16x16x16xbf16>
    %39 = arith.extf %38 : vector<16x16x16xbf16> to vector<16x16x16xf32>
    %40 = vector.extract_strided_slice %0 {offsets = [4, 0], sizes = [1, 16], strides = [1, 1]} : vector<9x16xf32> to vector<1x16xf32>
    %41 = vector.shape_cast %40 : vector<1x16xf32> to vector<16xf32>
    %42 = vector.shape_cast %41 : vector<16xf32> to vector<1x1x16xf32>
    %43 = vector.broadcast %42 : vector<1x1x16xf32> to vector<16x16x16xf32>
    %44 = arith.mulf %39, %43 : vector<16x16x16xf32>
    %45 = arith.addf %37, %44 : vector<16x16x16xf32>
    %46 = vector.extract_strided_slice %29 {offsets = [2, 0, 0], sizes = [16, 16, 16], strides = [1, 1, 1]} : vector<18x16x16xbf16> to vector<16x16x16xbf16>
    %47 = arith.extf %46 : vector<16x16x16xbf16> to vector<16x16x16xf32>
    %48 = vector.extract_strided_slice %0 {offsets = [7, 0], sizes = [1, 16], strides = [1, 1]} : vector<9x16xf32> to vector<1x16xf32>
    %49 = vector.shape_cast %48 : vector<1x16xf32> to vector<16xf32>
    %50 = vector.shape_cast %49 : vector<16xf32> to vector<1x1x16xf32>
    %51 = vector.broadcast %50 : vector<1x1x16xf32> to vector<16x16x16xf32>
    %52 = arith.mulf %47, %51 : vector<16x16x16xf32>
    %53 = arith.addf %45, %52 : vector<16x16x16xf32>
    %54 = vector.extract_strided_slice %2 {offsets = [0, 2, 0], sizes = [18, 16, 16], strides = [1, 1, 1]} : vector<18x18x16xbf16> to vector<18x16x16xbf16>
    %55 = vector.extract_strided_slice %54 {offsets = [0, 0, 0], sizes = [16, 16, 16], strides = [1, 1, 1]} : vector<18x16x16xbf16> to vector<16x16x16xbf16>
    %56 = arith.extf %55 : vector<16x16x16xbf16> to vector<16x16x16xf32>
    %57 = vector.extract_strided_slice %0 {offsets = [2, 0], sizes = [1, 16], strides = [1, 1]} : vector<9x16xf32> to vector<1x16xf32>
    %58 = vector.shape_cast %57 : vector<1x16xf32> to vector<16xf32>
    %59 = vector.shape_cast %58 : vector<16xf32> to vector<1x1x16xf32>
    %60 = vector.broadcast %59 : vector<1x1x16xf32> to vector<16x16x16xf32>
    %61 = arith.mulf %56, %60 : vector<16x16x16xf32>
    %62 = arith.addf %53, %61 : vector<16x16x16xf32>
    %63 = vector.extract_strided_slice %54 {offsets = [1, 0, 0], sizes = [16, 16, 16], strides = [1, 1, 1]} : vector<18x16x16xbf16> to vector<16x16x16xbf16>
    %64 = arith.extf %63 : vector<16x16x16xbf16> to vector<16x16x16xf32>
    %65 = vector.extract_strided_slice %0 {offsets = [5, 0], sizes = [1, 16], strides = [1, 1]} : vector<9x16xf32> to vector<1x16xf32>
    %66 = vector.shape_cast %65 : vector<1x16xf32> to vector<16xf32>
    %67 = vector.shape_cast %66 : vector<16xf32> to vector<1x1x16xf32>
    %68 = vector.broadcast %67 : vector<1x1x16xf32> to vector<16x16x16xf32>
    %69 = arith.mulf %64, %68 : vector<16x16x16xf32>
    %70 = arith.addf %62, %69 : vector<16x16x16xf32>
    %71 = vector.extract_strided_slice %54 {offsets = [2, 0, 0], sizes = [16, 16, 16], strides = [1, 1, 1]} : vector<18x16x16xbf16> to vector<16x16x16xbf16>
    %72 = arith.extf %71 : vector<16x16x16xbf16> to vector<16x16x16xf32>
    %73 = vector.extract_strided_slice %0 {offsets = [8, 0], sizes = [1, 16], strides = [1, 1]} : vector<9x16xf32> to vector<1x16xf32>
    %74 = vector.shape_cast %73 : vector<1x16xf32> to vector<16xf32>
    %75 = vector.shape_cast %74 : vector<16xf32> to vector<1x1x16xf32>
    %76 = vector.broadcast %75 : vector<1x1x16xf32> to vector<16x16x16xf32>
    %77 = arith.mulf %72, %76 : vector<16x16x16xf32>
    %78 = arith.addf %70, %77 : vector<16x16x16xf32>
    %c0_5 = arith.constant 0 : index
    %c0_6 = arith.constant 0 : index
    %79 = vector.load %arg3[%c0_5, %c0_6] : memref<1x16xf32, #tpu.memory_space<vmem>>, vector<1x16xf32>
    %80 = vector.shape_cast %79 : vector<1x16xf32> to vector<1x1x16xf32>
    %81 = vector.broadcast %80 : vector<1x1x16xf32> to vector<16x16x16xf32>
    %82 = arith.addf %78, %81 : vector<16x16x16xf32>
    %83 = arith.negf %82 : vector<16x16x16xf32>
    %84 = math.exp %83 : vector<16x16x16xf32>
    %cst_7 = arith.constant 1.000000e+00 : f32
    %85 = vector.broadcast %cst_7 : f32 to vector<16x16x16xf32>
    %86 = arith.addf %85, %84 : vector<16x16x16xf32>
    %87 = arith.divf %85, %86 : vector<16x16x16xf32>
    %88 = arith.mulf %82, %87 : vector<16x16x16xf32>
    %89 = arith.truncf %88 : vector<16x16x16xf32> to vector<16x16x16xbf16>
    %c0_8 = arith.constant 0 : index
    %c0_9 = arith.constant 0 : index
    %c0_10 = arith.constant 0 : index
    %c0_11 = arith.constant 0 : index
    %90 = vector.load %arg4[%c0_8, %c0_9, %c0_10, %c0_11] : memref<1x16x16x16xbf16, #tpu.memory_space<vmem>>, vector<1x16x16x16xbf16>
    %91 = vector.shape_cast %90 : vector<1x16x16x16xbf16> to vector<16x16x16xbf16>
    %92 = vector.shape_cast %89 : vector<16x16x16xbf16> to vector<1x16x16x16xbf16>
    tpu.vector_store %arg4[%c0_8, %c0_9, %c0_10, %c0_11], %92 {strides = array<i32>} : memref<1x16x16x16xbf16, #tpu.memory_space<vmem>>, vector<1x16x16x16xbf16>,
    %cst_12 = arith.constant dense<0.000000e+00> : vector<16x16xf32>
    %93 = vector.multi_reduction <add>, %88, %cst_12 [1] : vector<16x16x16xf32> to vector<16x16xf32>
    %94 = vector.shape_cast %93 : vector<16x16xf32> to vector<16x1x16xf32>
    %cst_13 = arith.constant dense<0.000000e+00> : vector<1x16xf32>
    %95 = vector.multi_reduction <add>, %94, %cst_13 [0] : vector<16x1x16xf32> to vector<1x16xf32>
    %96 = vector.shape_cast %95 : vector<1x16xf32> to vector<1x1x16xf32>
    %c0_14 = arith.constant 0 : index
    %c0_15 = arith.constant 0 : index
    %c0_16 = arith.constant 0 : index
    %97 = vector.load %arg5[%c0_14, %c0_15, %c0_16] : memref<1x1x16xf32, #tpu.memory_space<vmem>>, vector<1x1x16xf32>
    tpu.vector_store %arg5[%c0_14, %c0_15, %c0_16], %96 {strides = array<i32>} : memref<1x1x16xf32, #tpu.memory_space<vmem>>, vector<1x1x16xf32>,
    return
  }
  func.func @transform_0(%arg0: i32) -> (i32, i32, i32, i32) {
    %c0_i32 = arith.constant 0 : i32
    %c0_i32_0 = arith.constant 0 : i32
    %c0_i32_1 = arith.constant 0 : i32
    %c0_i32_2 = arith.constant 0 : i32
    return %arg0, %c0_i32, %c0_i32_0, %c0_i32_1 : i32, i32, i32, i32
  }
  func.func @transform_1(%arg0: i32) -> (i32, i32) {
    %c0_i32 = arith.constant 0 : i32
    %c0_i32_0 = arith.constant 0 : i32
    %c0_i32_1 = arith.constant 0 : i32
    return %c0_i32, %c0_i32_0 : i32, i32
  }
  func.func @transform_2(%arg0: i32) -> (i32, i32) {
    %c0_i32 = arith.constant 0 : i32
    %c0_i32_0 = arith.constant 0 : i32
    %c0_i32_1 = arith.constant 0 : i32
    return %c0_i32, %c0_i32_0 : i32, i32
  }
  func.func @transform_3(%arg0: i32) -> (i32, i32, i32, i32) {
    %c0_i32 = arith.constant 0 : i32
    %c0_i32_0 = arith.constant 0 : i32
    %c0_i32_1 = arith.constant 0 : i32
    %c0_i32_2 = arith.constant 0 : i32
    return %arg0, %c0_i32, %c0_i32_0, %c0_i32_1 : i32, i32, i32, i32
  }
  func.func @transform_4(%arg0: i32) -> (i32, i32, i32) {
    %c0_i32 = arith.constant 0 : i32
    %c0_i32_0 = arith.constant 0 : i32
    %c0_i32_1 = arith.constant 0 : i32
    return %arg0, %c0_i32, %c0_i32_0 : i32, i32, i32
  }
}

module attributes {stable_mosaic.version = 11 : i64} {
  func.func @_se_fc_kernel(%arg0: i32, %arg1: memref<2x16xf32, #tpu.memory_space<vmem>>, %arg2: memref<16x4xbf16, #tpu.memory_space<vmem>>, %arg3: memref<1x4xf32, #tpu.memory_space<vmem>>, %arg4: memref<4x16xbf16, #tpu.memory_space<vmem>>, %arg5: memref<1x16xf32, #tpu.memory_space<vmem>>, %arg6: memref<2x16xbf16, #tpu.memory_space<vmem>>) attributes {dimension_semantics = [#tpu.dimension_semantics<arbitrary>], iteration_bounds = array<i64: 1>, scalar_prefetch = 0 : i64, scratch_operands = 0 : i64, tpu.core_type = #tpu.core_type<tc>, window_params = [{pipeline_mode = #tpu.pipeline_mode<synchronous>, transform_indices = @transform_0, window_bounds = array<i64: 2, 16>}, {pipeline_mode = #tpu.pipeline_mode<synchronous>, transform_indices = @transform_1, window_bounds = array<i64: 16, 4>}, {pipeline_mode = #tpu.pipeline_mode<synchronous>, transform_indices = @transform_2, window_bounds = array<i64: 1, 4>}, {pipeline_mode = #tpu.pipeline_mode<synchronous>, transform_indices = @transform_3, window_bounds = array<i64: 4, 16>}, {pipeline_mode = #tpu.pipeline_mode<synchronous>, transform_indices = @transform_4, window_bounds = array<i64: 1, 16>}, {pipeline_mode = #tpu.pipeline_mode<synchronous>, transform_indices = @transform_5, window_bounds = array<i64: 2, 16>}]} {
    %c0 = arith.constant 0 : index
    %c0_0 = arith.constant 0 : index
    %0 = vector.load %arg1[%c0, %c0_0] : memref<2x16xf32, #tpu.memory_space<vmem>>, vector<2x16xf32>
    %cst = arith.constant 3.906250e-03 : f32
    %1 = vector.broadcast %cst : f32 to vector<2x16xf32>
    %2 = arith.mulf %0, %1 : vector<2x16xf32>
    %3 = arith.truncf %2 : vector<2x16xf32> to vector<2x16xbf16>
    %c0_1 = arith.constant 0 : index
    %c0_2 = arith.constant 0 : index
    %4 = vector.load %arg2[%c0_1, %c0_2] : memref<16x4xbf16, #tpu.memory_space<vmem>>, vector<16x4xbf16>
    %cst_3 = arith.constant dense<0.000000e+00> : vector<2x4xf32>
    %5 = tpu.matmul %3, %4, %cst_3 {dimension_numbers = #tpu.dot_dimension_numbers<[1], [0], [0], [1], [0, 0, 1, 1], [], []>} : vector<2x16xbf16>, vector<16x4xbf16>, vector<2x4xf32> -> vector<2x4xf32>
    %c0_4 = arith.constant 0 : index
    %c0_5 = arith.constant 0 : index
    %6 = vector.load %arg3[%c0_4, %c0_5] : memref<1x4xf32, #tpu.memory_space<vmem>>, vector<1x4xf32>
    %7 = vector.broadcast %6 : vector<1x4xf32> to vector<2x4xf32>
    %8 = arith.addf %5, %7 : vector<2x4xf32>
    %9 = arith.negf %8 : vector<2x4xf32>
    %10 = math.exp %9 : vector<2x4xf32>
    %cst_6 = arith.constant 1.000000e+00 : f32
    %11 = vector.broadcast %cst_6 : f32 to vector<2x4xf32>
    %12 = arith.addf %11, %10 : vector<2x4xf32>
    %13 = arith.divf %11, %12 : vector<2x4xf32>
    %14 = arith.mulf %8, %13 : vector<2x4xf32>
    %15 = arith.truncf %14 : vector<2x4xf32> to vector<2x4xbf16>
    %c0_7 = arith.constant 0 : index
    %c0_8 = arith.constant 0 : index
    %16 = vector.load %arg4[%c0_7, %c0_8] : memref<4x16xbf16, #tpu.memory_space<vmem>>, vector<4x16xbf16>
    %cst_9 = arith.constant dense<0.000000e+00> : vector<2x16xf32>
    %17 = tpu.matmul %15, %16, %cst_9 {dimension_numbers = #tpu.dot_dimension_numbers<[1], [0], [0], [1], [0, 0, 1, 1], [], []>} : vector<2x4xbf16>, vector<4x16xbf16>, vector<2x16xf32> -> vector<2x16xf32>
    %c0_10 = arith.constant 0 : index
    %c0_11 = arith.constant 0 : index
    %18 = vector.load %arg5[%c0_10, %c0_11] : memref<1x16xf32, #tpu.memory_space<vmem>>, vector<1x16xf32>
    %19 = vector.broadcast %18 : vector<1x16xf32> to vector<2x16xf32>
    %20 = arith.addf %17, %19 : vector<2x16xf32>
    %21 = arith.negf %20 : vector<2x16xf32>
    %22 = math.exp %21 : vector<2x16xf32>
    %cst_12 = arith.constant 1.000000e+00 : f32
    %23 = vector.broadcast %cst_12 : f32 to vector<2x16xf32>
    %24 = arith.addf %23, %22 : vector<2x16xf32>
    %25 = arith.divf %23, %24 : vector<2x16xf32>
    %26 = arith.truncf %25 : vector<2x16xf32> to vector<2x16xbf16>
    %c0_13 = arith.constant 0 : index
    %c0_14 = arith.constant 0 : index
    %27 = vector.load %arg6[%c0_13, %c0_14] : memref<2x16xbf16, #tpu.memory_space<vmem>>, vector<2x16xbf16>
    tpu.vector_store %arg6[%c0_13, %c0_14], %26 {strides = array<i32>} : memref<2x16xbf16, #tpu.memory_space<vmem>>, vector<2x16xbf16>,
    return
  }
  func.func @transform_0(%arg0: i32) -> (i32, i32) {
    %c0_i32 = arith.constant 0 : i32
    %c0_i32_0 = arith.constant 0 : i32
    %c0_i32_1 = arith.constant 0 : i32
    return %c0_i32, %c0_i32_0 : i32, i32
  }
  func.func @transform_1(%arg0: i32) -> (i32, i32) {
    %c0_i32 = arith.constant 0 : i32
    %c0_i32_0 = arith.constant 0 : i32
    %c0_i32_1 = arith.constant 0 : i32
    return %c0_i32, %c0_i32_0 : i32, i32
  }
  func.func @transform_2(%arg0: i32) -> (i32, i32) {
    %c0_i32 = arith.constant 0 : i32
    %c0_i32_0 = arith.constant 0 : i32
    %c0_i32_1 = arith.constant 0 : i32
    return %c0_i32, %c0_i32_0 : i32, i32
  }
  func.func @transform_3(%arg0: i32) -> (i32, i32) {
    %c0_i32 = arith.constant 0 : i32
    %c0_i32_0 = arith.constant 0 : i32
    %c0_i32_1 = arith.constant 0 : i32
    return %c0_i32, %c0_i32_0 : i32, i32
  }
  func.func @transform_4(%arg0: i32) -> (i32, i32) {
    %c0_i32 = arith.constant 0 : i32
    %c0_i32_0 = arith.constant 0 : i32
    %c0_i32_1 = arith.constant 0 : i32
    return %c0_i32, %c0_i32_0 : i32, i32
  }
  func.func @transform_5(%arg0: i32) -> (i32, i32) {
    %c0_i32 = arith.constant 0 : i32
    %c0_i32_0 = arith.constant 0 : i32
    %c0_i32_1 = arith.constant 0 : i32
    return %c0_i32, %c0_i32_0 : i32, i32
  }
}

module attributes {stable_mosaic.version = 11 : i64} {
  func.func @_proj_res_kernel(%arg0: i32, %arg1: i32, %arg2: memref<1x256x16xbf16, #tpu.memory_space<vmem>>, %arg3: memref<1x1x16xbf16, #tpu.memory_space<vmem>>, %arg4: memref<16x16xbf16, #tpu.memory_space<vmem>>, %arg5: memref<1x16xf32, #tpu.memory_space<vmem>>, %arg6: memref<1x256x16xbf16, #tpu.memory_space<vmem>>, %arg7: memref<1x256x16xbf16, #tpu.memory_space<vmem>>) attributes {dimension_semantics = [#tpu.dimension_semantics<parallel>, #tpu.dimension_semantics<parallel>], iteration_bounds = array<i64: 2, 1>, scalar_prefetch = 0 : i64, scratch_operands = 0 : i64, tpu.core_type = #tpu.core_type<tc>, window_params = [{transform_indices = @transform_0, window_bounds = array<i64: 1, 256, 16>}, {transform_indices = @transform_1, window_bounds = array<i64: 1, 1, 16>}, {pipeline_mode = #tpu.pipeline_mode<synchronous>, transform_indices = @transform_2, window_bounds = array<i64: 16, 16>}, {pipeline_mode = #tpu.pipeline_mode<synchronous>, transform_indices = @transform_3, window_bounds = array<i64: 1, 16>}, {transform_indices = @transform_4, window_bounds = array<i64: 1, 256, 16>}, {transform_indices = @transform_5, window_bounds = array<i64: 1, 256, 16>}]} {
    %c0 = arith.constant 0 : index
    %c0_0 = arith.constant 0 : index
    %c0_1 = arith.constant 0 : index
    %0 = vector.load %arg2[%c0, %c0_0, %c0_1] : memref<1x256x16xbf16, #tpu.memory_space<vmem>>, vector<1x256x16xbf16>
    %1 = vector.shape_cast %0 : vector<1x256x16xbf16> to vector<256x16xbf16>
    %c0_2 = arith.constant 0 : index
    %c0_3 = arith.constant 0 : index
    %c0_4 = arith.constant 0 : index
    %2 = vector.load %arg3[%c0_2, %c0_3, %c0_4] : memref<1x1x16xbf16, #tpu.memory_space<vmem>>, vector<1x1x16xbf16>
    %3 = vector.shape_cast %2 : vector<1x1x16xbf16> to vector<1x16xbf16>
    %4 = vector.broadcast %3 : vector<1x16xbf16> to vector<256x16xbf16>
    %5 = arith.mulf %1, %4 : vector<256x16xbf16>
    %c0_5 = arith.constant 0 : index
    %c0_6 = arith.constant 0 : index
    %6 = vector.load %arg4[%c0_5, %c0_6] : memref<16x16xbf16, #tpu.memory_space<vmem>>, vector<16x16xbf16>
    %cst = arith.constant dense<0.000000e+00> : vector<256x16xf32>
    %7 = tpu.matmul %5, %6, %cst {dimension_numbers = #tpu.dot_dimension_numbers<[1], [0], [0], [1], [0, 0, 1, 1], [], []>} : vector<256x16xbf16>, vector<16x16xbf16>, vector<256x16xf32> -> vector<256x16xf32>
    %c0_7 = arith.constant 0 : index
    %c0_8 = arith.constant 0 : index
    %8 = vector.load %arg5[%c0_7, %c0_8] : memref<1x16xf32, #tpu.memory_space<vmem>>, vector<1x16xf32>
    %9 = vector.broadcast %8 : vector<1x16xf32> to vector<256x16xf32>
    %10 = arith.addf %7, %9 : vector<256x16xf32>
    %c0_9 = arith.constant 0 : index
    %c0_10 = arith.constant 0 : index
    %c0_11 = arith.constant 0 : index
    %11 = vector.load %arg6[%c0_9, %c0_10, %c0_11] : memref<1x256x16xbf16, #tpu.memory_space<vmem>>, vector<1x256x16xbf16>
    %12 = vector.shape_cast %11 : vector<1x256x16xbf16> to vector<256x16xbf16>
    %13 = arith.extf %12 : vector<256x16xbf16> to vector<256x16xf32>
    %14 = arith.addf %10, %13 : vector<256x16xf32>
    %15 = arith.truncf %14 : vector<256x16xf32> to vector<256x16xbf16>
    %c0_12 = arith.constant 0 : index
    %c0_13 = arith.constant 0 : index
    %c0_14 = arith.constant 0 : index
    %16 = vector.load %arg7[%c0_12, %c0_13, %c0_14] : memref<1x256x16xbf16, #tpu.memory_space<vmem>>, vector<1x256x16xbf16>
    %17 = vector.shape_cast %16 : vector<1x256x16xbf16> to vector<256x16xbf16>
    %18 = vector.shape_cast %15 : vector<256x16xbf16> to vector<1x256x16xbf16>
    tpu.vector_store %arg7[%c0_12, %c0_13, %c0_14], %18 {strides = array<i32>} : memref<1x256x16xbf16, #tpu.memory_space<vmem>>, vector<1x256x16xbf16>,
    return
  }
  func.func @transform_0(%arg0: i32, %arg1: i32) -> (i32, i32, i32) {
    %c0_i32 = arith.constant 0 : i32
    %c0_i32_0 = arith.constant 0 : i32
    return %arg0, %arg1, %c0_i32 : i32, i32, i32
  }
  func.func @transform_1(%arg0: i32, %arg1: i32) -> (i32, i32, i32) {
    %c0_i32 = arith.constant 0 : i32
    %c0_i32_0 = arith.constant 0 : i32
    %c0_i32_1 = arith.constant 0 : i32
    return %arg0, %c0_i32, %c0_i32_0 : i32, i32, i32
  }
  func.func @transform_2(%arg0: i32, %arg1: i32) -> (i32, i32) {
    %c0_i32 = arith.constant 0 : i32
    %c0_i32_0 = arith.constant 0 : i32
    %c0_i32_1 = arith.constant 0 : i32
    return %c0_i32, %c0_i32_0 : i32, i32
  }
  func.func @transform_3(%arg0: i32, %arg1: i32) -> (i32, i32) {
    %c0_i32 = arith.constant 0 : i32
    %c0_i32_0 = arith.constant 0 : i32
    %c0_i32_1 = arith.constant 0 : i32
    return %c0_i32, %c0_i32_0 : i32, i32
  }
  func.func @transform_4(%arg0: i32, %arg1: i32) -> (i32, i32, i32) {
    %c0_i32 = arith.constant 0 : i32
    %c0_i32_0 = arith.constant 0 : i32
    return %arg0, %arg1, %c0_i32 : i32, i32, i32
  }
  func.func @transform_5(%arg0: i32, %arg1: i32) -> (i32, i32, i32) {
    %c0_i32 = arith.constant 0 : i32
    %c0_i32_0 = arith.constant 0 : i32
    return %arg0, %arg1, %c0_i32 : i32, i32, i32
  }
}

module attributes {stable_mosaic.version = 11 : i64} {
  func.func @_matmul_bias_act_kernel(%arg0: i32, %arg1: memref<512x16xbf16, #tpu.memory_space<vmem>>, %arg2: memref<16x64xbf16, #tpu.memory_space<vmem>>, %arg3: memref<1x64xf32, #tpu.memory_space<vmem>>, %arg4: memref<512x64xbf16, #tpu.memory_space<vmem>>) attributes {dimension_semantics = [#tpu.dimension_semantics<parallel>], iteration_bounds = array<i64: 1>, scalar_prefetch = 0 : i64, scratch_operands = 0 : i64, tpu.core_type = #tpu.core_type<tc>, window_params = [{transform_indices = @transform_0, window_bounds = array<i64: 512, 16>}, {pipeline_mode = #tpu.pipeline_mode<synchronous>, transform_indices = @transform_1, window_bounds = array<i64: 16, 64>}, {pipeline_mode = #tpu.pipeline_mode<synchronous>, transform_indices = @transform_2, window_bounds = array<i64: 1, 64>}, {transform_indices = @transform_3, window_bounds = array<i64: 512, 64>}]} {
    %c0 = arith.constant 0 : index
    %c0_0 = arith.constant 0 : index
    %0 = vector.load %arg1[%c0, %c0_0] : memref<512x16xbf16, #tpu.memory_space<vmem>>, vector<512x16xbf16>
    %c0_1 = arith.constant 0 : index
    %c0_2 = arith.constant 0 : index
    %1 = vector.load %arg2[%c0_1, %c0_2] : memref<16x64xbf16, #tpu.memory_space<vmem>>, vector<16x64xbf16>
    %cst = arith.constant dense<0.000000e+00> : vector<512x64xf32>
    %2 = tpu.matmul %0, %1, %cst {dimension_numbers = #tpu.dot_dimension_numbers<[1], [0], [0], [1], [0, 0, 1, 1], [], []>} : vector<512x16xbf16>, vector<16x64xbf16>, vector<512x64xf32> -> vector<512x64xf32>
    %c0_3 = arith.constant 0 : index
    %c0_4 = arith.constant 0 : index
    %3 = vector.load %arg3[%c0_3, %c0_4] : memref<1x64xf32, #tpu.memory_space<vmem>>, vector<1x64xf32>
    %4 = vector.broadcast %3 : vector<1x64xf32> to vector<512x64xf32>
    %5 = arith.addf %2, %4 : vector<512x64xf32>
    %6 = arith.negf %5 : vector<512x64xf32>
    %7 = math.exp %6 : vector<512x64xf32>
    %cst_5 = arith.constant 1.000000e+00 : f32
    %8 = vector.broadcast %cst_5 : f32 to vector<512x64xf32>
    %9 = arith.addf %8, %7 : vector<512x64xf32>
    %10 = arith.divf %8, %9 : vector<512x64xf32>
    %11 = arith.mulf %5, %10 : vector<512x64xf32>
    %12 = arith.truncf %11 : vector<512x64xf32> to vector<512x64xbf16>
    %c0_6 = arith.constant 0 : index
    %c0_7 = arith.constant 0 : index
    %13 = vector.load %arg4[%c0_6, %c0_7] : memref<512x64xbf16, #tpu.memory_space<vmem>>, vector<512x64xbf16>
    tpu.vector_store %arg4[%c0_6, %c0_7], %12 {strides = array<i32>} : memref<512x64xbf16, #tpu.memory_space<vmem>>, vector<512x64xbf16>,
    return
  }
  func.func @transform_0(%arg0: i32) -> (i32, i32) {
    %c0_i32 = arith.constant 0 : i32
    %c0_i32_0 = arith.constant 0 : i32
    return %arg0, %c0_i32 : i32, i32
  }
  func.func @transform_1(%arg0: i32) -> (i32, i32) {
    %c0_i32 = arith.constant 0 : i32
    %c0_i32_0 = arith.constant 0 : i32
    %c0_i32_1 = arith.constant 0 : i32
    return %c0_i32, %c0_i32_0 : i32, i32
  }
  func.func @transform_2(%arg0: i32) -> (i32, i32) {
    %c0_i32 = arith.constant 0 : i32
    %c0_i32_0 = arith.constant 0 : i32
    %c0_i32_1 = arith.constant 0 : i32
    return %c0_i32, %c0_i32_0 : i32, i32
  }
  func.func @transform_3(%arg0: i32) -> (i32, i32) {
    %c0_i32 = arith.constant 0 : i32
    %c0_i32_0 = arith.constant 0 : i32
    return %arg0, %c0_i32 : i32, i32
  }
}

module attributes {stable_mosaic.version = 11 : i64} {
  func.func @_dwconv_bn_silu_kernel(%arg0: i32, %arg1: memref<1x36x9x64xbf16, #tpu.memory_space<vmem>>, %arg2: memref<9x64xf32, #tpu.memory_space<vmem>>, %arg3: memref<1x64xf32, #tpu.memory_space<vmem>>, %arg4: memref<1x8x8x64xbf16, #tpu.memory_space<vmem>>, %arg5: memref<1x1x64xf32, #tpu.memory_space<vmem>>) attributes {dimension_semantics = [#tpu.dimension_semantics<parallel>], iteration_bounds = array<i64: 2>, scalar_prefetch = 0 : i64, scratch_operands = 0 : i64, tpu.core_type = #tpu.core_type<tc>, window_params = [{transform_indices = @transform_0, window_bounds = array<i64: 1, 36, 9, 64>}, {pipeline_mode = #tpu.pipeline_mode<synchronous>, transform_indices = @transform_1, window_bounds = array<i64: 9, 64>}, {pipeline_mode = #tpu.pipeline_mode<synchronous>, transform_indices = @transform_2, window_bounds = array<i64: 1, 64>}, {transform_indices = @transform_3, window_bounds = array<i64: 1, 8, 8, 64>}, {transform_indices = @transform_4, window_bounds = array<i64: 1, 1, 64>}]} {
    %c0 = arith.constant 0 : index
    %c0_0 = arith.constant 0 : index
    %0 = vector.load %arg2[%c0, %c0_0] : memref<9x64xf32, #tpu.memory_space<vmem>>, vector<9x64xf32>
    %c0_1 = arith.constant 0 : index
    %c0_2 = arith.constant 0 : index
    %c0_3 = arith.constant 0 : index
    %c0_4 = arith.constant 0 : index
    %1 = vector.load %arg1[%c0_1, %c0_2, %c0_3, %c0_4] : memref<1x36x9x64xbf16, #tpu.memory_space<vmem>>, vector<1x36x9x64xbf16>
    %2 = vector.shape_cast %1 : vector<1x36x9x64xbf16> to vector<36x9x64xbf16>
    %cst = arith.constant 0.000000e+00 : f32
    %3 = vector.broadcast %cst : f32 to vector<8x8x64xf32>
    %4 = vector.extract_strided_slice %2 {offsets = [0, 0, 0], sizes = [9, 8, 64], strides = [1, 1, 1]} : vector<36x9x64xbf16> to vector<9x8x64xbf16>
    %5 = vector.extract_strided_slice %4 {offsets = [0, 0, 0], sizes = [8, 8, 64], strides = [1, 1, 1]} : vector<9x8x64xbf16> to vector<8x8x64xbf16>
    %6 = arith.extf %5 : vector<8x8x64xbf16> to vector<8x8x64xf32>
    %7 = vector.extract_strided_slice %0 {offsets = [0, 0], sizes = [1, 64], strides = [1, 1]} : vector<9x64xf32> to vector<1x64xf32>
    %8 = vector.shape_cast %7 : vector<1x64xf32> to vector<64xf32>
    %9 = vector.shape_cast %8 : vector<64xf32> to vector<1x1x64xf32>
    %10 = vector.broadcast %9 : vector<1x1x64xf32> to vector<8x8x64xf32>
    %11 = arith.mulf %6, %10 : vector<8x8x64xf32>
    %12 = arith.addf %3, %11 : vector<8x8x64xf32>
    %13 = vector.extract_strided_slice %4 {offsets = [1, 0, 0], sizes = [8, 8, 64], strides = [1, 1, 1]} : vector<9x8x64xbf16> to vector<8x8x64xbf16>
    %14 = arith.extf %13 : vector<8x8x64xbf16> to vector<8x8x64xf32>
    %15 = vector.extract_strided_slice %0 {offsets = [6, 0], sizes = [1, 64], strides = [1, 1]} : vector<9x64xf32> to vector<1x64xf32>
    %16 = vector.shape_cast %15 : vector<1x64xf32> to vector<64xf32>
    %17 = vector.shape_cast %16 : vector<64xf32> to vector<1x1x64xf32>
    %18 = vector.broadcast %17 : vector<1x1x64xf32> to vector<8x8x64xf32>
    %19 = arith.mulf %14, %18 : vector<8x8x64xf32>
    %20 = arith.addf %12, %19 : vector<8x8x64xf32>
    %21 = vector.extract_strided_slice %2 {offsets = [18, 0, 0], sizes = [9, 8, 64], strides = [1, 1, 1]} : vector<36x9x64xbf16> to vector<9x8x64xbf16>
    %22 = vector.extract_strided_slice %21 {offsets = [0, 0, 0], sizes = [8, 8, 64], strides = [1, 1, 1]} : vector<9x8x64xbf16> to vector<8x8x64xbf16>
    %23 = arith.extf %22 : vector<8x8x64xbf16> to vector<8x8x64xf32>
    %24 = vector.extract_strided_slice %0 {offsets = [3, 0], sizes = [1, 64], strides = [1, 1]} : vector<9x64xf32> to vector<1x64xf32>
    %25 = vector.shape_cast %24 : vector<1x64xf32> to vector<64xf32>
    %26 = vector.shape_cast %25 : vector<64xf32> to vector<1x1x64xf32>
    %27 = vector.broadcast %26 : vector<1x1x64xf32> to vector<8x8x64xf32>
    %28 = arith.mulf %23, %27 : vector<8x8x64xf32>
    %29 = arith.addf %20, %28 : vector<8x8x64xf32>
    %30 = vector.extract_strided_slice %2 {offsets = [9, 0, 0], sizes = [9, 8, 64], strides = [1, 1, 1]} : vector<36x9x64xbf16> to vector<9x8x64xbf16>
    %31 = vector.extract_strided_slice %30 {offsets = [0, 0, 0], sizes = [8, 8, 64], strides = [1, 1, 1]} : vector<9x8x64xbf16> to vector<8x8x64xbf16>
    %32 = arith.extf %31 : vector<8x8x64xbf16> to vector<8x8x64xf32>
    %33 = vector.extract_strided_slice %0 {offsets = [1, 0], sizes = [1, 64], strides = [1, 1]} : vector<9x64xf32> to vector<1x64xf32>
    %34 = vector.shape_cast %33 : vector<1x64xf32> to vector<64xf32>
    %35 = vector.shape_cast %34 : vector<64xf32> to vector<1x1x64xf32>
    %36 = vector.broadcast %35 : vector<1x1x64xf32> to vector<8x8x64xf32>
    %37 = arith.mulf %32, %36 : vector<8x8x64xf32>
    %38 = arith.addf %29, %37 : vector<8x8x64xf32>
    %39 = vector.extract_strided_slice %30 {offsets = [1, 0, 0], sizes = [8, 8, 64], strides = [1, 1, 1]} : vector<9x8x64xbf16> to vector<8x8x64xbf16>
    %40 = arith.extf %39 : vector<8x8x64xbf16> to vector<8x8x64xf32>
    %41 = vector.extract_strided_slice %0 {offsets = [7, 0], sizes = [1, 64], strides = [1, 1]} : vector<9x64xf32> to vector<1x64xf32>
    %42 = vector.shape_cast %41 : vector<1x64xf32> to vector<64xf32>
    %43 = vector.shape_cast %42 : vector<64xf32> to vector<1x1x64xf32>
    %44 = vector.broadcast %43 : vector<1x1x64xf32> to vector<8x8x64xf32>
    %45 = arith.mulf %40, %44 : vector<8x8x64xf32>
    %46 = arith.addf %38, %45 : vector<8x8x64xf32>
    %47 = vector.extract_strided_slice %2 {offsets = [27, 0, 0], sizes = [9, 8, 64], strides = [1, 1, 1]} : vector<36x9x64xbf16> to vector<9x8x64xbf16>
    %48 = vector.extract_strided_slice %47 {offsets = [0, 0, 0], sizes = [8, 8, 64], strides = [1, 1, 1]} : vector<9x8x64xbf16> to vector<8x8x64xbf16>
    %49 = arith.extf %48 : vector<8x8x64xbf16> to vector<8x8x64xf32>
    %50 = vector.extract_strided_slice %0 {offsets = [4, 0], sizes = [1, 64], strides = [1, 1]} : vector<9x64xf32> to vector<1x64xf32>
    %51 = vector.shape_cast %50 : vector<1x64xf32> to vector<64xf32>
    %52 = vector.shape_cast %51 : vector<64xf32> to vector<1x1x64xf32>
    %53 = vector.broadcast %52 : vector<1x1x64xf32> to vector<8x8x64xf32>
    %54 = arith.mulf %49, %53 : vector<8x8x64xf32>
    %55 = arith.addf %46, %54 : vector<8x8x64xf32>
    %56 = vector.extract_strided_slice %2 {offsets = [0, 1, 0], sizes = [9, 8, 64], strides = [1, 1, 1]} : vector<36x9x64xbf16> to vector<9x8x64xbf16>
    %57 = vector.extract_strided_slice %56 {offsets = [0, 0, 0], sizes = [8, 8, 64], strides = [1, 1, 1]} : vector<9x8x64xbf16> to vector<8x8x64xbf16>
    %58 = arith.extf %57 : vector<8x8x64xbf16> to vector<8x8x64xf32>
    %59 = vector.extract_strided_slice %0 {offsets = [2, 0], sizes = [1, 64], strides = [1, 1]} : vector<9x64xf32> to vector<1x64xf32>
    %60 = vector.shape_cast %59 : vector<1x64xf32> to vector<64xf32>
    %61 = vector.shape_cast %60 : vector<64xf32> to vector<1x1x64xf32>
    %62 = vector.broadcast %61 : vector<1x1x64xf32> to vector<8x8x64xf32>
    %63 = arith.mulf %58, %62 : vector<8x8x64xf32>
    %64 = arith.addf %55, %63 : vector<8x8x64xf32>
    %65 = vector.extract_strided_slice %56 {offsets = [1, 0, 0], sizes = [8, 8, 64], strides = [1, 1, 1]} : vector<9x8x64xbf16> to vector<8x8x64xbf16>
    %66 = arith.extf %65 : vector<8x8x64xbf16> to vector<8x8x64xf32>
    %67 = vector.extract_strided_slice %0 {offsets = [8, 0], sizes = [1, 64], strides = [1, 1]} : vector<9x64xf32> to vector<1x64xf32>
    %68 = vector.shape_cast %67 : vector<1x64xf32> to vector<64xf32>
    %69 = vector.shape_cast %68 : vector<64xf32> to vector<1x1x64xf32>
    %70 = vector.broadcast %69 : vector<1x1x64xf32> to vector<8x8x64xf32>
    %71 = arith.mulf %66, %70 : vector<8x8x64xf32>
    %72 = arith.addf %64, %71 : vector<8x8x64xf32>
    %73 = vector.extract_strided_slice %2 {offsets = [18, 1, 0], sizes = [9, 8, 64], strides = [1, 1, 1]} : vector<36x9x64xbf16> to vector<9x8x64xbf16>
    %74 = vector.extract_strided_slice %73 {offsets = [0, 0, 0], sizes = [8, 8, 64], strides = [1, 1, 1]} : vector<9x8x64xbf16> to vector<8x8x64xbf16>
    %75 = arith.extf %74 : vector<8x8x64xbf16> to vector<8x8x64xf32>
    %76 = vector.extract_strided_slice %0 {offsets = [5, 0], sizes = [1, 64], strides = [1, 1]} : vector<9x64xf32> to vector<1x64xf32>
    %77 = vector.shape_cast %76 : vector<1x64xf32> to vector<64xf32>
    %78 = vector.shape_cast %77 : vector<64xf32> to vector<1x1x64xf32>
    %79 = vector.broadcast %78 : vector<1x1x64xf32> to vector<8x8x64xf32>
    %80 = arith.mulf %75, %79 : vector<8x8x64xf32>
    %81 = arith.addf %72, %80 : vector<8x8x64xf32>
    %c0_5 = arith.constant 0 : index
    %c0_6 = arith.constant 0 : index
    %82 = vector.load %arg3[%c0_5, %c0_6] : memref<1x64xf32, #tpu.memory_space<vmem>>, vector<1x64xf32>
    %83 = vector.shape_cast %82 : vector<1x64xf32> to vector<1x1x64xf32>
    %84 = vector.broadcast %83 : vector<1x1x64xf32> to vector<8x8x64xf32>
    %85 = arith.addf %81, %84 : vector<8x8x64xf32>
    %86 = arith.negf %85 : vector<8x8x64xf32>
    %87 = math.exp %86 : vector<8x8x64xf32>
    %cst_7 = arith.constant 1.000000e+00 : f32
    %88 = vector.broadcast %cst_7 : f32 to vector<8x8x64xf32>
    %89 = arith.addf %88, %87 : vector<8x8x64xf32>
    %90 = arith.divf %88, %89 : vector<8x8x64xf32>
    %91 = arith.mulf %85, %90 : vector<8x8x64xf32>
    %92 = arith.truncf %91 : vector<8x8x64xf32> to vector<8x8x64xbf16>
    %c0_8 = arith.constant 0 : index
    %c0_9 = arith.constant 0 : index
    %c0_10 = arith.constant 0 : index
    %c0_11 = arith.constant 0 : index
    %93 = vector.load %arg4[%c0_8, %c0_9, %c0_10, %c0_11] : memref<1x8x8x64xbf16, #tpu.memory_space<vmem>>, vector<1x8x8x64xbf16>
    %94 = vector.shape_cast %93 : vector<1x8x8x64xbf16> to vector<8x8x64xbf16>
    %95 = vector.shape_cast %92 : vector<8x8x64xbf16> to vector<1x8x8x64xbf16>
    tpu.vector_store %arg4[%c0_8, %c0_9, %c0_10, %c0_11], %95 {strides = array<i32>} : memref<1x8x8x64xbf16, #tpu.memory_space<vmem>>, vector<1x8x8x64xbf16>,
    %cst_12 = arith.constant dense<0.000000e+00> : vector<8x64xf32>
    %96 = vector.multi_reduction <add>, %91, %cst_12 [1] : vector<8x8x64xf32> to vector<8x64xf32>
    %97 = vector.shape_cast %96 : vector<8x64xf32> to vector<8x1x64xf32>
    %cst_13 = arith.constant dense<0.000000e+00> : vector<1x64xf32>
    %98 = vector.multi_reduction <add>, %97, %cst_13 [0] : vector<8x1x64xf32> to vector<1x64xf32>
    %99 = vector.shape_cast %98 : vector<1x64xf32> to vector<1x1x64xf32>
    %c0_14 = arith.constant 0 : index
    %c0_15 = arith.constant 0 : index
    %c0_16 = arith.constant 0 : index
    %100 = vector.load %arg5[%c0_14, %c0_15, %c0_16] : memref<1x1x64xf32, #tpu.memory_space<vmem>>, vector<1x1x64xf32>
    tpu.vector_store %arg5[%c0_14, %c0_15, %c0_16], %99 {strides = array<i32>} : memref<1x1x64xf32, #tpu.memory_space<vmem>>, vector<1x1x64xf32>,
    return
  }
  func.func @transform_0(%arg0: i32) -> (i32, i32, i32, i32) {
    %c0_i32 = arith.constant 0 : i32
    %c0_i32_0 = arith.constant 0 : i32
    %c0_i32_1 = arith.constant 0 : i32
    %c0_i32_2 = arith.constant 0 : i32
    return %arg0, %c0_i32, %c0_i32_0, %c0_i32_1 : i32, i32, i32, i32
  }
  func.func @transform_1(%arg0: i32) -> (i32, i32) {
    %c0_i32 = arith.constant 0 : i32
    %c0_i32_0 = arith.constant 0 : i32
    %c0_i32_1 = arith.constant 0 : i32
    return %c0_i32, %c0_i32_0 : i32, i32
  }
  func.func @transform_2(%arg0: i32) -> (i32, i32) {
    %c0_i32 = arith.constant 0 : i32
    %c0_i32_0 = arith.constant 0 : i32
    %c0_i32_1 = arith.constant 0 : i32
    return %c0_i32, %c0_i32_0 : i32, i32
  }
  func.func @transform_3(%arg0: i32) -> (i32, i32, i32, i32) {
    %c0_i32 = arith.constant 0 : i32
    %c0_i32_0 = arith.constant 0 : i32
    %c0_i32_1 = arith.constant 0 : i32
    %c0_i32_2 = arith.constant 0 : i32
    return %arg0, %c0_i32, %c0_i32_0, %c0_i32_1 : i32, i32, i32, i32
  }
  func.func @transform_4(%arg0: i32) -> (i32, i32, i32) {
    %c0_i32 = arith.constant 0 : i32
    %c0_i32_0 = arith.constant 0 : i32
    %c0_i32_1 = arith.constant 0 : i32
    return %arg0, %c0_i32, %c0_i32_0 : i32, i32, i32
  }
}

module attributes {stable_mosaic.version = 11 : i64} {
  func.func @_se_fc_kernel(%arg0: i32, %arg1: memref<2x64xf32, #tpu.memory_space<vmem>>, %arg2: memref<64x4xbf16, #tpu.memory_space<vmem>>, %arg3: memref<1x4xf32, #tpu.memory_space<vmem>>, %arg4: memref<4x64xbf16, #tpu.memory_space<vmem>>, %arg5: memref<1x64xf32, #tpu.memory_space<vmem>>, %arg6: memref<2x64xbf16, #tpu.memory_space<vmem>>) attributes {dimension_semantics = [#tpu.dimension_semantics<arbitrary>], iteration_bounds = array<i64: 1>, scalar_prefetch = 0 : i64, scratch_operands = 0 : i64, tpu.core_type = #tpu.core_type<tc>, window_params = [{pipeline_mode = #tpu.pipeline_mode<synchronous>, transform_indices = @transform_0, window_bounds = array<i64: 2, 64>}, {pipeline_mode = #tpu.pipeline_mode<synchronous>, transform_indices = @transform_1, window_bounds = array<i64: 64, 4>}, {pipeline_mode = #tpu.pipeline_mode<synchronous>, transform_indices = @transform_2, window_bounds = array<i64: 1, 4>}, {pipeline_mode = #tpu.pipeline_mode<synchronous>, transform_indices = @transform_3, window_bounds = array<i64: 4, 64>}, {pipeline_mode = #tpu.pipeline_mode<synchronous>, transform_indices = @transform_4, window_bounds = array<i64: 1, 64>}, {pipeline_mode = #tpu.pipeline_mode<synchronous>, transform_indices = @transform_5, window_bounds = array<i64: 2, 64>}]} {
    %c0 = arith.constant 0 : index
    %c0_0 = arith.constant 0 : index
    %0 = vector.load %arg1[%c0, %c0_0] : memref<2x64xf32, #tpu.memory_space<vmem>>, vector<2x64xf32>
    %cst = arith.constant 1.562500e-02 : f32
    %1 = vector.broadcast %cst : f32 to vector<2x64xf32>
    %2 = arith.mulf %0, %1 : vector<2x64xf32>
    %3 = arith.truncf %2 : vector<2x64xf32> to vector<2x64xbf16>
    %c0_1 = arith.constant 0 : index
    %c0_2 = arith.constant 0 : index
    %4 = vector.load %arg2[%c0_1, %c0_2] : memref<64x4xbf16, #tpu.memory_space<vmem>>, vector<64x4xbf16>
    %cst_3 = arith.constant dense<0.000000e+00> : vector<2x4xf32>
    %5 = tpu.matmul %3, %4, %cst_3 {dimension_numbers = #tpu.dot_dimension_numbers<[1], [0], [0], [1], [0, 0, 1, 1], [], []>} : vector<2x64xbf16>, vector<64x4xbf16>, vector<2x4xf32> -> vector<2x4xf32>
    %c0_4 = arith.constant 0 : index
    %c0_5 = arith.constant 0 : index
    %6 = vector.load %arg3[%c0_4, %c0_5] : memref<1x4xf32, #tpu.memory_space<vmem>>, vector<1x4xf32>
    %7 = vector.broadcast %6 : vector<1x4xf32> to vector<2x4xf32>
    %8 = arith.addf %5, %7 : vector<2x4xf32>
    %9 = arith.negf %8 : vector<2x4xf32>
    %10 = math.exp %9 : vector<2x4xf32>
    %cst_6 = arith.constant 1.000000e+00 : f32
    %11 = vector.broadcast %cst_6 : f32 to vector<2x4xf32>
    %12 = arith.addf %11, %10 : vector<2x4xf32>
    %13 = arith.divf %11, %12 : vector<2x4xf32>
    %14 = arith.mulf %8, %13 : vector<2x4xf32>
    %15 = arith.truncf %14 : vector<2x4xf32> to vector<2x4xbf16>
    %c0_7 = arith.constant 0 : index
    %c0_8 = arith.constant 0 : index
    %16 = vector.load %arg4[%c0_7, %c0_8] : memref<4x64xbf16, #tpu.memory_space<vmem>>, vector<4x64xbf16>
    %cst_9 = arith.constant dense<0.000000e+00> : vector<2x64xf32>
    %17 = tpu.matmul %15, %16, %cst_9 {dimension_numbers = #tpu.dot_dimension_numbers<[1], [0], [0], [1], [0, 0, 1, 1], [], []>} : vector<2x4xbf16>, vector<4x64xbf16>, vector<2x64xf32> -> vector<2x64xf32>
    %c0_10 = arith.constant 0 : index
    %c0_11 = arith.constant 0 : index
    %18 = vector.load %arg5[%c0_10, %c0_11] : memref<1x64xf32, #tpu.memory_space<vmem>>, vector<1x64xf32>
    %19 = vector.broadcast %18 : vector<1x64xf32> to vector<2x64xf32>
    %20 = arith.addf %17, %19 : vector<2x64xf32>
    %21 = arith.negf %20 : vector<2x64xf32>
    %22 = math.exp %21 : vector<2x64xf32>
    %cst_12 = arith.constant 1.000000e+00 : f32
    %23 = vector.broadcast %cst_12 : f32 to vector<2x64xf32>
    %24 = arith.addf %23, %22 : vector<2x64xf32>
    %25 = arith.divf %23, %24 : vector<2x64xf32>
    %26 = arith.truncf %25 : vector<2x64xf32> to vector<2x64xbf16>
    %c0_13 = arith.constant 0 : index
    %c0_14 = arith.constant 0 : index
    %27 = vector.load %arg6[%c0_13, %c0_14] : memref<2x64xbf16, #tpu.memory_space<vmem>>, vector<2x64xbf16>
    tpu.vector_store %arg6[%c0_13, %c0_14], %26 {strides = array<i32>} : memref<2x64xbf16, #tpu.memory_space<vmem>>, vector<2x64xbf16>,
    return
  }
  func.func @transform_0(%arg0: i32) -> (i32, i32) {
    %c0_i32 = arith.constant 0 : i32
    %c0_i32_0 = arith.constant 0 : i32
    %c0_i32_1 = arith.constant 0 : i32
    return %c0_i32, %c0_i32_0 : i32, i32
  }
  func.func @transform_1(%arg0: i32) -> (i32, i32) {
    %c0_i32 = arith.constant 0 : i32
    %c0_i32_0 = arith.constant 0 : i32
    %c0_i32_1 = arith.constant 0 : i32
    return %c0_i32, %c0_i32_0 : i32, i32
  }
  func.func @transform_2(%arg0: i32) -> (i32, i32) {
    %c0_i32 = arith.constant 0 : i32
    %c0_i32_0 = arith.constant 0 : i32
    %c0_i32_1 = arith.constant 0 : i32
    return %c0_i32, %c0_i32_0 : i32, i32
  }
  func.func @transform_3(%arg0: i32) -> (i32, i32) {
    %c0_i32 = arith.constant 0 : i32
    %c0_i32_0 = arith.constant 0 : i32
    %c0_i32_1 = arith.constant 0 : i32
    return %c0_i32, %c0_i32_0 : i32, i32
  }
  func.func @transform_4(%arg0: i32) -> (i32, i32) {
    %c0_i32 = arith.constant 0 : i32
    %c0_i32_0 = arith.constant 0 : i32
    %c0_i32_1 = arith.constant 0 : i32
    return %c0_i32, %c0_i32_0 : i32, i32
  }
  func.func @transform_5(%arg0: i32) -> (i32, i32) {
    %c0_i32 = arith.constant 0 : i32
    %c0_i32_0 = arith.constant 0 : i32
    %c0_i32_1 = arith.constant 0 : i32
    return %c0_i32, %c0_i32_0 : i32, i32
  }
}

module attributes {stable_mosaic.version = 11 : i64} {
  func.func @_proj_kernel(%arg0: i32, %arg1: i32, %arg2: memref<1x64x64xbf16, #tpu.memory_space<vmem>>, %arg3: memref<1x1x64xbf16, #tpu.memory_space<vmem>>, %arg4: memref<64x24xbf16, #tpu.memory_space<vmem>>, %arg5: memref<1x24xf32, #tpu.memory_space<vmem>>, %arg6: memref<1x64x24xbf16, #tpu.memory_space<vmem>>) attributes {dimension_semantics = [#tpu.dimension_semantics<parallel>, #tpu.dimension_semantics<parallel>], iteration_bounds = array<i64: 2, 1>, scalar_prefetch = 0 : i64, scratch_operands = 0 : i64, tpu.core_type = #tpu.core_type<tc>, window_params = [{transform_indices = @transform_0, window_bounds = array<i64: 1, 64, 64>}, {transform_indices = @transform_1, window_bounds = array<i64: 1, 1, 64>}, {pipeline_mode = #tpu.pipeline_mode<synchronous>, transform_indices = @transform_2, window_bounds = array<i64: 64, 24>}, {pipeline_mode = #tpu.pipeline_mode<synchronous>, transform_indices = @transform_3, window_bounds = array<i64: 1, 24>}, {transform_indices = @transform_4, window_bounds = array<i64: 1, 64, 24>}]} {
    %c0 = arith.constant 0 : index
    %c0_0 = arith.constant 0 : index
    %c0_1 = arith.constant 0 : index
    %0 = vector.load %arg2[%c0, %c0_0, %c0_1] : memref<1x64x64xbf16, #tpu.memory_space<vmem>>, vector<1x64x64xbf16>
    %1 = vector.shape_cast %0 : vector<1x64x64xbf16> to vector<64x64xbf16>
    %c0_2 = arith.constant 0 : index
    %c0_3 = arith.constant 0 : index
    %c0_4 = arith.constant 0 : index
    %2 = vector.load %arg3[%c0_2, %c0_3, %c0_4] : memref<1x1x64xbf16, #tpu.memory_space<vmem>>, vector<1x1x64xbf16>
    %3 = vector.shape_cast %2 : vector<1x1x64xbf16> to vector<1x64xbf16>
    %4 = vector.broadcast %3 : vector<1x64xbf16> to vector<64x64xbf16>
    %5 = arith.mulf %1, %4 : vector<64x64xbf16>
    %c0_5 = arith.constant 0 : index
    %c0_6 = arith.constant 0 : index
    %6 = vector.load %arg4[%c0_5, %c0_6] : memref<64x24xbf16, #tpu.memory_space<vmem>>, vector<64x24xbf16>
    %cst = arith.constant dense<0.000000e+00> : vector<64x24xf32>
    %7 = tpu.matmul %5, %6, %cst {dimension_numbers = #tpu.dot_dimension_numbers<[1], [0], [0], [1], [0, 0, 1, 1], [], []>} : vector<64x64xbf16>, vector<64x24xbf16>, vector<64x24xf32> -> vector<64x24xf32>
    %c0_7 = arith.constant 0 : index
    %c0_8 = arith.constant 0 : index
    %8 = vector.load %arg5[%c0_7, %c0_8] : memref<1x24xf32, #tpu.memory_space<vmem>>, vector<1x24xf32>
    %9 = vector.broadcast %8 : vector<1x24xf32> to vector<64x24xf32>
    %10 = arith.addf %7, %9 : vector<64x24xf32>
    %11 = arith.truncf %10 : vector<64x24xf32> to vector<64x24xbf16>
    %c0_9 = arith.constant 0 : index
    %c0_10 = arith.constant 0 : index
    %c0_11 = arith.constant 0 : index
    %12 = vector.load %arg6[%c0_9, %c0_10, %c0_11] : memref<1x64x24xbf16, #tpu.memory_space<vmem>>, vector<1x64x24xbf16>
    %13 = vector.shape_cast %12 : vector<1x64x24xbf16> to vector<64x24xbf16>
    %14 = vector.shape_cast %11 : vector<64x24xbf16> to vector<1x64x24xbf16>
    tpu.vector_store %arg6[%c0_9, %c0_10, %c0_11], %14 {strides = array<i32>} : memref<1x64x24xbf16, #tpu.memory_space<vmem>>, vector<1x64x24xbf16>,
    return
  }
  func.func @transform_0(%arg0: i32, %arg1: i32) -> (i32, i32, i32) {
    %c0_i32 = arith.constant 0 : i32
    %c0_i32_0 = arith.constant 0 : i32
    return %arg0, %arg1, %c0_i32 : i32, i32, i32
  }
  func.func @transform_1(%arg0: i32, %arg1: i32) -> (i32, i32, i32) {
    %c0_i32 = arith.constant 0 : i32
    %c0_i32_0 = arith.constant 0 : i32
    %c0_i32_1 = arith.constant 0 : i32
    return %arg0, %c0_i32, %c0_i32_0 : i32, i32, i32
  }
  func.func @transform_2(%arg0: i32, %arg1: i32) -> (i32, i32) {
    %c0_i32 = arith.constant 0 : i32
    %c0_i32_0 = arith.constant 0 : i32
    %c0_i32_1 = arith.constant 0 : i32
    return %c0_i32, %c0_i32_0 : i32, i32
  }
  func.func @transform_3(%arg0: i32, %arg1: i32) -> (i32, i32) {
    %c0_i32 = arith.constant 0 : i32
    %c0_i32_0 = arith.constant 0 : i32
    %c0_i32_1 = arith.constant 0 : i32
    return %c0_i32, %c0_i32_0 : i32, i32
  }
  func.func @transform_4(%arg0: i32, %arg1: i32) -> (i32, i32, i32) {
    %c0_i32 = arith.constant 0 : i32
    %c0_i32_0 = arith.constant 0 : i32
    return %arg0, %arg1, %c0_i32 : i32, i32, i32
  }
}

module attributes {stable_mosaic.version = 11 : i64} {
  func.func @_matmul_bias_act_kernel(%arg0: i32, %arg1: memref<128x24xbf16, #tpu.memory_space<vmem>>, %arg2: memref<24x96xbf16, #tpu.memory_space<vmem>>, %arg3: memref<1x96xf32, #tpu.memory_space<vmem>>, %arg4: memref<128x96xbf16, #tpu.memory_space<vmem>>) attributes {dimension_semantics = [#tpu.dimension_semantics<parallel>], iteration_bounds = array<i64: 1>, scalar_prefetch = 0 : i64, scratch_operands = 0 : i64, tpu.core_type = #tpu.core_type<tc>, window_params = [{transform_indices = @transform_0, window_bounds = array<i64: 128, 24>}, {pipeline_mode = #tpu.pipeline_mode<synchronous>, transform_indices = @transform_1, window_bounds = array<i64: 24, 96>}, {pipeline_mode = #tpu.pipeline_mode<synchronous>, transform_indices = @transform_2, window_bounds = array<i64: 1, 96>}, {transform_indices = @transform_3, window_bounds = array<i64: 128, 96>}]} {
    %c0 = arith.constant 0 : index
    %c0_0 = arith.constant 0 : index
    %0 = vector.load %arg1[%c0, %c0_0] : memref<128x24xbf16, #tpu.memory_space<vmem>>, vector<128x24xbf16>
    %c0_1 = arith.constant 0 : index
    %c0_2 = arith.constant 0 : index
    %1 = vector.load %arg2[%c0_1, %c0_2] : memref<24x96xbf16, #tpu.memory_space<vmem>>, vector<24x96xbf16>
    %cst = arith.constant dense<0.000000e+00> : vector<128x96xf32>
    %2 = tpu.matmul %0, %1, %cst {dimension_numbers = #tpu.dot_dimension_numbers<[1], [0], [0], [1], [0, 0, 1, 1], [], []>} : vector<128x24xbf16>, vector<24x96xbf16>, vector<128x96xf32> -> vector<128x96xf32>
    %c0_3 = arith.constant 0 : index
    %c0_4 = arith.constant 0 : index
    %3 = vector.load %arg3[%c0_3, %c0_4] : memref<1x96xf32, #tpu.memory_space<vmem>>, vector<1x96xf32>
    %4 = vector.broadcast %3 : vector<1x96xf32> to vector<128x96xf32>
    %5 = arith.addf %2, %4 : vector<128x96xf32>
    %6 = arith.negf %5 : vector<128x96xf32>
    %7 = math.exp %6 : vector<128x96xf32>
    %cst_5 = arith.constant 1.000000e+00 : f32
    %8 = vector.broadcast %cst_5 : f32 to vector<128x96xf32>
    %9 = arith.addf %8, %7 : vector<128x96xf32>
    %10 = arith.divf %8, %9 : vector<128x96xf32>
    %11 = arith.mulf %5, %10 : vector<128x96xf32>
    %12 = arith.truncf %11 : vector<128x96xf32> to vector<128x96xbf16>
    %c0_6 = arith.constant 0 : index
    %c0_7 = arith.constant 0 : index
    %13 = vector.load %arg4[%c0_6, %c0_7] : memref<128x96xbf16, #tpu.memory_space<vmem>>, vector<128x96xbf16>
    tpu.vector_store %arg4[%c0_6, %c0_7], %12 {strides = array<i32>} : memref<128x96xbf16, #tpu.memory_space<vmem>>, vector<128x96xbf16>,
    return
  }
  func.func @transform_0(%arg0: i32) -> (i32, i32) {
    %c0_i32 = arith.constant 0 : i32
    %c0_i32_0 = arith.constant 0 : i32
    return %arg0, %c0_i32 : i32, i32
  }
  func.func @transform_1(%arg0: i32) -> (i32, i32) {
    %c0_i32 = arith.constant 0 : i32
    %c0_i32_0 = arith.constant 0 : i32
    %c0_i32_1 = arith.constant 0 : i32
    return %c0_i32, %c0_i32_0 : i32, i32
  }
  func.func @transform_2(%arg0: i32) -> (i32, i32) {
    %c0_i32 = arith.constant 0 : i32
    %c0_i32_0 = arith.constant 0 : i32
    %c0_i32_1 = arith.constant 0 : i32
    return %c0_i32, %c0_i32_0 : i32, i32
  }
  func.func @transform_3(%arg0: i32) -> (i32, i32) {
    %c0_i32 = arith.constant 0 : i32
    %c0_i32_0 = arith.constant 0 : i32
    return %arg0, %c0_i32 : i32, i32
  }
}

module attributes {stable_mosaic.version = 11 : i64} {
  func.func @_dwconv_bn_silu_kernel(%arg0: i32, %arg1: memref<1x24x6x96xbf16, #tpu.memory_space<vmem>>, %arg2: memref<25x96xf32, #tpu.memory_space<vmem>>, %arg3: memref<1x96xf32, #tpu.memory_space<vmem>>, %arg4: memref<1x4x4x96xbf16, #tpu.memory_space<vmem>>, %arg5: memref<1x1x96xf32, #tpu.memory_space<vmem>>) attributes {dimension_semantics = [#tpu.dimension_semantics<parallel>], iteration_bounds = array<i64: 2>, scalar_prefetch = 0 : i64, scratch_operands = 0 : i64, tpu.core_type = #tpu.core_type<tc>, window_params = [{transform_indices = @transform_0, window_bounds = array<i64: 1, 24, 6, 96>}, {pipeline_mode = #tpu.pipeline_mode<synchronous>, transform_indices = @transform_1, window_bounds = array<i64: 25, 96>}, {pipeline_mode = #tpu.pipeline_mode<synchronous>, transform_indices = @transform_2, window_bounds = array<i64: 1, 96>}, {transform_indices = @transform_3, window_bounds = array<i64: 1, 4, 4, 96>}, {transform_indices = @transform_4, window_bounds = array<i64: 1, 1, 96>}]} {
    %c0 = arith.constant 0 : index
    %c0_0 = arith.constant 0 : index
    %0 = vector.load %arg2[%c0, %c0_0] : memref<25x96xf32, #tpu.memory_space<vmem>>, vector<25x96xf32>
    %c0_1 = arith.constant 0 : index
    %c0_2 = arith.constant 0 : index
    %c0_3 = arith.constant 0 : index
    %c0_4 = arith.constant 0 : index
    %1 = vector.load %arg1[%c0_1, %c0_2, %c0_3, %c0_4] : memref<1x24x6x96xbf16, #tpu.memory_space<vmem>>, vector<1x24x6x96xbf16>
    %2 = vector.shape_cast %1 : vector<1x24x6x96xbf16> to vector<24x6x96xbf16>
    %cst = arith.constant 0.000000e+00 : f32
    %3 = vector.broadcast %cst : f32 to vector<4x4x96xf32>
    %4 = vector.extract_strided_slice %2 {offsets = [0, 0, 0], sizes = [6, 4, 96], strides = [1, 1, 1]} : vector<24x6x96xbf16> to vector<6x4x96xbf16>
    %5 = vector.extract_strided_slice %4 {offsets = [0, 0, 0], sizes = [4, 4, 96], strides = [1, 1, 1]} : vector<6x4x96xbf16> to vector<4x4x96xbf16>
    %6 = arith.extf %5 : vector<4x4x96xbf16> to vector<4x4x96xf32>
    %7 = vector.extract_strided_slice %0 {offsets = [0, 0], sizes = [1, 96], strides = [1, 1]} : vector<25x96xf32> to vector<1x96xf32>
    %8 = vector.shape_cast %7 : vector<1x96xf32> to vector<96xf32>
    %9 = vector.shape_cast %8 : vector<96xf32> to vector<1x1x96xf32>
    %10 = vector.broadcast %9 : vector<1x1x96xf32> to vector<4x4x96xf32>
    %11 = arith.mulf %6, %10 : vector<4x4x96xf32>
    %12 = arith.addf %3, %11 : vector<4x4x96xf32>
    %13 = vector.extract_strided_slice %4 {offsets = [1, 0, 0], sizes = [4, 4, 96], strides = [1, 1, 1]} : vector<6x4x96xbf16> to vector<4x4x96xbf16>
    %14 = arith.extf %13 : vector<4x4x96xbf16> to vector<4x4x96xf32>
    %15 = vector.extract_strided_slice %0 {offsets = [10, 0], sizes = [1, 96], strides = [1, 1]} : vector<25x96xf32> to vector<1x96xf32>
    %16 = vector.shape_cast %15 : vector<1x96xf32> to vector<96xf32>
    %17 = vector.shape_cast %16 : vector<96xf32> to vector<1x1x96xf32>
    %18 = vector.broadcast %17 : vector<1x1x96xf32> to vector<4x4x96xf32>
    %19 = arith.mulf %14, %18 : vector<4x4x96xf32>
    %20 = arith.addf %12, %19 : vector<4x4x96xf32>
    %21 = vector.extract_strided_slice %4 {offsets = [2, 0, 0], sizes = [4, 4, 96], strides = [1, 1, 1]} : vector<6x4x96xbf16> to vector<4x4x96xbf16>
    %22 = arith.extf %21 : vector<4x4x96xbf16> to vector<4x4x96xf32>
    %23 = vector.extract_strided_slice %0 {offsets = [20, 0], sizes = [1, 96], strides = [1, 1]} : vector<25x96xf32> to vector<1x96xf32>
    %24 = vector.shape_cast %23 : vector<1x96xf32> to vector<96xf32>
    %25 = vector.shape_cast %24 : vector<96xf32> to vector<1x1x96xf32>
    %26 = vector.broadcast %25 : vector<1x1x96xf32> to vector<4x4x96xf32>
    %27 = arith.mulf %22, %26 : vector<4x4x96xf32>
    %28 = arith.addf %20, %27 : vector<4x4x96xf32>
    %29 = vector.extract_strided_slice %2 {offsets = [12, 0, 0], sizes = [6, 4, 96], strides = [1, 1, 1]} : vector<24x6x96xbf16> to vector<6x4x96xbf16>
    %30 = vector.extract_strided_slice %29 {offsets = [0, 0, 0], sizes = [4, 4, 96], strides = [1, 1, 1]} : vector<6x4x96xbf16> to vector<4x4x96xbf16>
    %31 = arith.extf %30 : vector<4x4x96xbf16> to vector<4x4x96xf32>
    %32 = vector.extract_strided_slice %0 {offsets = [5, 0], sizes = [1, 96], strides = [1, 1]} : vector<25x96xf32> to vector<1x96xf32>
    %33 = vector.shape_cast %32 : vector<1x96xf32> to vector<96xf32>
    %34 = vector.shape_cast %33 : vector<96xf32> to vector<1x1x96xf32>
    %35 = vector.broadcast %34 : vector<1x1x96xf32> to vector<4x4x96xf32>
    %36 = arith.mulf %31, %35 : vector<4x4x96xf32>
    %37 = arith.addf %28, %36 : vector<4x4x96xf32>
    %38 = vector.extract_strided_slice %29 {offsets = [1, 0, 0], sizes = [4, 4, 96], strides = [1, 1, 1]} : vector<6x4x96xbf16> to vector<4x4x96xbf16>
    %39 = arith.extf %38 : vector<4x4x96xbf16> to vector<4x4x96xf32>
    %40 = vector.extract_strided_slice %0 {offsets = [15, 0], sizes = [1, 96], strides = [1, 1]} : vector<25x96xf32> to vector<1x96xf32>
    %41 = vector.shape_cast %40 : vector<1x96xf32> to vector<96xf32>
    %42 = vector.shape_cast %41 : vector<96xf32> to vector<1x1x96xf32>
    %43 = vector.broadcast %42 : vector<1x1x96xf32> to vector<4x4x96xf32>
    %44 = arith.mulf %39, %43 : vector<4x4x96xf32>
    %45 = arith.addf %37, %44 : vector<4x4x96xf32>
    %46 = vector.extract_strided_slice %2 {offsets = [6, 0, 0], sizes = [6, 4, 96], strides = [1, 1, 1]} : vector<24x6x96xbf16> to vector<6x4x96xbf16>
    %47 = vector.extract_strided_slice %46 {offsets = [0, 0, 0], sizes = [4, 4, 96], strides = [1, 1, 1]} : vector<6x4x96xbf16> to vector<4x4x96xbf16>
    %48 = arith.extf %47 : vector<4x4x96xbf16> to vector<4x4x96xf32>
    %49 = vector.extract_strided_slice %0 {offsets = [1, 0], sizes = [1, 96], strides = [1, 1]} : vector<25x96xf32> to vector<1x96xf32>
    %50 = vector.shape_cast %49 : vector<1x96xf32> to vector<96xf32>
    %51 = vector.shape_cast %50 : vector<96xf32> to vector<1x1x96xf32>
    %52 = vector.broadcast %51 : vector<1x1x96xf32> to vector<4x4x96xf32>
    %53 = arith.mulf %48, %52 : vector<4x4x96xf32>
    %54 = arith.addf %45, %53 : vector<4x4x96xf32>
    %55 = vector.extract_strided_slice %46 {offsets = [1, 0, 0], sizes = [4, 4, 96], strides = [1, 1, 1]} : vector<6x4x96xbf16> to vector<4x4x96xbf16>
    %56 = arith.extf %55 : vector<4x4x96xbf16> to vector<4x4x96xf32>
    %57 = vector.extract_strided_slice %0 {offsets = [11, 0], sizes = [1, 96], strides = [1, 1]} : vector<25x96xf32> to vector<1x96xf32>
    %58 = vector.shape_cast %57 : vector<1x96xf32> to vector<96xf32>
    %59 = vector.shape_cast %58 : vector<96xf32> to vector<1x1x96xf32>
    %60 = vector.broadcast %59 : vector<1x1x96xf32> to vector<4x4x96xf32>
    %61 = arith.mulf %56, %60 : vector<4x4x96xf32>
    %62 = arith.addf %54, %61 : vector<4x4x96xf32>
    %63 = vector.extract_strided_slice %46 {offsets = [2, 0, 0], sizes = [4, 4, 96], strides = [1, 1, 1]} : vector<6x4x96xbf16> to vector<4x4x96xbf16>
    %64 = arith.extf %63 : vector<4x4x96xbf16> to vector<4x4x96xf32>
    %65 = vector.extract_strided_slice %0 {offsets = [21, 0], sizes = [1, 96], strides = [1, 1]} : vector<25x96xf32> to vector<1x96xf32>
    %66 = vector.shape_cast %65 : vector<1x96xf32> to vector<96xf32>
    %67 = vector.shape_cast %66 : vector<96xf32> to vector<1x1x96xf32>
    %68 = vector.broadcast %67 : vector<1x1x96xf32> to vector<4x4x96xf32>
    %69 = arith.mulf %64, %68 : vector<4x4x96xf32>
    %70 = arith.addf %62, %69 : vector<4x4x96xf32>
    %71 = vector.extract_strided_slice %2 {offsets = [18, 0, 0], sizes = [6, 4, 96], strides = [1, 1, 1]} : vector<24x6x96xbf16> to vector<6x4x96xbf16>
    %72 = vector.extract_strided_slice %71 {offsets = [0, 0, 0], sizes = [4, 4, 96], strides = [1, 1, 1]} : vector<6x4x96xbf16> to vector<4x4x96xbf16>
    %73 = arith.extf %72 : vector<4x4x96xbf16> to vector<4x4x96xf32>
    %74 = vector.extract_strided_slice %0 {offsets = [6, 0], sizes = [1, 96], strides = [1, 1]} : vector<25x96xf32> to vector<1x96xf32>
    %75 = vector.shape_cast %74 : vector<1x96xf32> to vector<96xf32>
    %76 = vector.shape_cast %75 : vector<96xf32> to vector<1x1x96xf32>
    %77 = vector.broadcast %76 : vector<1x1x96xf32> to vector<4x4x96xf32>
    %78 = arith.mulf %73, %77 : vector<4x4x96xf32>
    %79 = arith.addf %70, %78 : vector<4x4x96xf32>
    %80 = vector.extract_strided_slice %71 {offsets = [1, 0, 0], sizes = [4, 4, 96], strides = [1, 1, 1]} : vector<6x4x96xbf16> to vector<4x4x96xbf16>
    %81 = arith.extf %80 : vector<4x4x96xbf16> to vector<4x4x96xf32>
    %82 = vector.extract_strided_slice %0 {offsets = [16, 0], sizes = [1, 96], strides = [1, 1]} : vector<25x96xf32> to vector<1x96xf32>
    %83 = vector.shape_cast %82 : vector<1x96xf32> to vector<96xf32>
    %84 = vector.shape_cast %83 : vector<96xf32> to vector<1x1x96xf32>
    %85 = vector.broadcast %84 : vector<1x1x96xf32> to vector<4x4x96xf32>
    %86 = arith.mulf %81, %85 : vector<4x4x96xf32>
    %87 = arith.addf %79, %86 : vector<4x4x96xf32>
    %88 = vector.extract_strided_slice %2 {offsets = [0, 1, 0], sizes = [6, 4, 96], strides = [1, 1, 1]} : vector<24x6x96xbf16> to vector<6x4x96xbf16>
    %89 = vector.extract_strided_slice %88 {offsets = [0, 0, 0], sizes = [4, 4, 96], strides = [1, 1, 1]} : vector<6x4x96xbf16> to vector<4x4x96xbf16>
    %90 = arith.extf %89 : vector<4x4x96xbf16> to vector<4x4x96xf32>
    %91 = vector.extract_strided_slice %0 {offsets = [2, 0], sizes = [1, 96], strides = [1, 1]} : vector<25x96xf32> to vector<1x96xf32>
    %92 = vector.shape_cast %91 : vector<1x96xf32> to vector<96xf32>
    %93 = vector.shape_cast %92 : vector<96xf32> to vector<1x1x96xf32>
    %94 = vector.broadcast %93 : vector<1x1x96xf32> to vector<4x4x96xf32>
    %95 = arith.mulf %90, %94 : vector<4x4x96xf32>
    %96 = arith.addf %87, %95 : vector<4x4x96xf32>
    %97 = vector.extract_strided_slice %88 {offsets = [1, 0, 0], sizes = [4, 4, 96], strides = [1, 1, 1]} : vector<6x4x96xbf16> to vector<4x4x96xbf16>
    %98 = arith.extf %97 : vector<4x4x96xbf16> to vector<4x4x96xf32>
    %99 = vector.extract_strided_slice %0 {offsets = [12, 0], sizes = [1, 96], strides = [1, 1]} : vector<25x96xf32> to vector<1x96xf32>
    %100 = vector.shape_cast %99 : vector<1x96xf32> to vector<96xf32>
    %101 = vector.shape_cast %100 : vector<96xf32> to vector<1x1x96xf32>
    %102 = vector.broadcast %101 : vector<1x1x96xf32> to vector<4x4x96xf32>
    %103 = arith.mulf %98, %102 : vector<4x4x96xf32>
    %104 = arith.addf %96, %103 : vector<4x4x96xf32>
    %105 = vector.extract_strided_slice %88 {offsets = [2, 0, 0], sizes = [4, 4, 96], strides = [1, 1, 1]} : vector<6x4x96xbf16> to vector<4x4x96xbf16>
    %106 = arith.extf %105 : vector<4x4x96xbf16> to vector<4x4x96xf32>
    %107 = vector.extract_strided_slice %0 {offsets = [22, 0], sizes = [1, 96], strides = [1, 1]} : vector<25x96xf32> to vector<1x96xf32>
    %108 = vector.shape_cast %107 : vector<1x96xf32> to vector<96xf32>
    %109 = vector.shape_cast %108 : vector<96xf32> to vector<1x1x96xf32>
    %110 = vector.broadcast %109 : vector<1x1x96xf32> to vector<4x4x96xf32>
    %111 = arith.mulf %106, %110 : vector<4x4x96xf32>
    %112 = arith.addf %104, %111 : vector<4x4x96xf32>
    %113 = vector.extract_strided_slice %2 {offsets = [12, 1, 0], sizes = [6, 4, 96], strides = [1, 1, 1]} : vector<24x6x96xbf16> to vector<6x4x96xbf16>
    %114 = vector.extract_strided_slice %113 {offsets = [0, 0, 0], sizes = [4, 4, 96], strides = [1, 1, 1]} : vector<6x4x96xbf16> to vector<4x4x96xbf16>
    %115 = arith.extf %114 : vector<4x4x96xbf16> to vector<4x4x96xf32>
    %116 = vector.extract_strided_slice %0 {offsets = [7, 0], sizes = [1, 96], strides = [1, 1]} : vector<25x96xf32> to vector<1x96xf32>
    %117 = vector.shape_cast %116 : vector<1x96xf32> to vector<96xf32>
    %118 = vector.shape_cast %117 : vector<96xf32> to vector<1x1x96xf32>
    %119 = vector.broadcast %118 : vector<1x1x96xf32> to vector<4x4x96xf32>
    %120 = arith.mulf %115, %119 : vector<4x4x96xf32>
    %121 = arith.addf %112, %120 : vector<4x4x96xf32>
    %122 = vector.extract_strided_slice %113 {offsets = [1, 0, 0], sizes = [4, 4, 96], strides = [1, 1, 1]} : vector<6x4x96xbf16> to vector<4x4x96xbf16>
    %123 = arith.extf %122 : vector<4x4x96xbf16> to vector<4x4x96xf32>
    %124 = vector.extract_strided_slice %0 {offsets = [17, 0], sizes = [1, 96], strides = [1, 1]} : vector<25x96xf32> to vector<1x96xf32>
    %125 = vector.shape_cast %124 : vector<1x96xf32> to vector<96xf32>
    %126 = vector.shape_cast %125 : vector<96xf32> to vector<1x1x96xf32>
    %127 = vector.broadcast %126 : vector<1x1x96xf32> to vector<4x4x96xf32>
    %128 = arith.mulf %123, %127 : vector<4x4x96xf32>
    %129 = arith.addf %121, %128 : vector<4x4x96xf32>
    %130 = vector.extract_strided_slice %2 {offsets = [6, 1, 0], sizes = [6, 4, 96], strides = [1, 1, 1]} : vector<24x6x96xbf16> to vector<6x4x96xbf16>
    %131 = vector.extract_strided_slice %130 {offsets = [0, 0, 0], sizes = [4, 4, 96], strides = [1, 1, 1]} : vector<6x4x96xbf16> to vector<4x4x96xbf16>
    %132 = arith.extf %131 : vector<4x4x96xbf16> to vector<4x4x96xf32>
    %133 = vector.extract_strided_slice %0 {offsets = [3, 0], sizes = [1, 96], strides = [1, 1]} : vector<25x96xf32> to vector<1x96xf32>
    %134 = vector.shape_cast %133 : vector<1x96xf32> to vector<96xf32>
    %135 = vector.shape_cast %134 : vector<96xf32> to vector<1x1x96xf32>
    %136 = vector.broadcast %135 : vector<1x1x96xf32> to vector<4x4x96xf32>
    %137 = arith.mulf %132, %136 : vector<4x4x96xf32>
    %138 = arith.addf %129, %137 : vector<4x4x96xf32>
    %139 = vector.extract_strided_slice %130 {offsets = [1, 0, 0], sizes = [4, 4, 96], strides = [1, 1, 1]} : vector<6x4x96xbf16> to vector<4x4x96xbf16>
    %140 = arith.extf %139 : vector<4x4x96xbf16> to vector<4x4x96xf32>
    %141 = vector.extract_strided_slice %0 {offsets = [13, 0], sizes = [1, 96], strides = [1, 1]} : vector<25x96xf32> to vector<1x96xf32>
    %142 = vector.shape_cast %141 : vector<1x96xf32> to vector<96xf32>
    %143 = vector.shape_cast %142 : vector<96xf32> to vector<1x1x96xf32>
    %144 = vector.broadcast %143 : vector<1x1x96xf32> to vector<4x4x96xf32>
    %145 = arith.mulf %140, %144 : vector<4x4x96xf32>
    %146 = arith.addf %138, %145 : vector<4x4x96xf32>
    %147 = vector.extract_strided_slice %130 {offsets = [2, 0, 0], sizes = [4, 4, 96], strides = [1, 1, 1]} : vector<6x4x96xbf16> to vector<4x4x96xbf16>
    %148 = arith.extf %147 : vector<4x4x96xbf16> to vector<4x4x96xf32>
    %149 = vector.extract_strided_slice %0 {offsets = [23, 0], sizes = [1, 96], strides = [1, 1]} : vector<25x96xf32> to vector<1x96xf32>
    %150 = vector.shape_cast %149 : vector<1x96xf32> to vector<96xf32>
    %151 = vector.shape_cast %150 : vector<96xf32> to vector<1x1x96xf32>
    %152 = vector.broadcast %151 : vector<1x1x96xf32> to vector<4x4x96xf32>
    %153 = arith.mulf %148, %152 : vector<4x4x96xf32>
    %154 = arith.addf %146, %153 : vector<4x4x96xf32>
    %155 = vector.extract_strided_slice %2 {offsets = [18, 1, 0], sizes = [6, 4, 96], strides = [1, 1, 1]} : vector<24x6x96xbf16> to vector<6x4x96xbf16>
    %156 = vector.extract_strided_slice %155 {offsets = [0, 0, 0], sizes = [4, 4, 96], strides = [1, 1, 1]} : vector<6x4x96xbf16> to vector<4x4x96xbf16>
    %157 = arith.extf %156 : vector<4x4x96xbf16> to vector<4x4x96xf32>
    %158 = vector.extract_strided_slice %0 {offsets = [8, 0], sizes = [1, 96], strides = [1, 1]} : vector<25x96xf32> to vector<1x96xf32>
    %159 = vector.shape_cast %158 : vector<1x96xf32> to vector<96xf32>
    %160 = vector.shape_cast %159 : vector<96xf32> to vector<1x1x96xf32>
    %161 = vector.broadcast %160 : vector<1x1x96xf32> to vector<4x4x96xf32>
    %162 = arith.mulf %157, %161 : vector<4x4x96xf32>
    %163 = arith.addf %154, %162 : vector<4x4x96xf32>
    %164 = vector.extract_strided_slice %155 {offsets = [1, 0, 0], sizes = [4, 4, 96], strides = [1, 1, 1]} : vector<6x4x96xbf16> to vector<4x4x96xbf16>
    %165 = arith.extf %164 : vector<4x4x96xbf16> to vector<4x4x96xf32>
    %166 = vector.extract_strided_slice %0 {offsets = [18, 0], sizes = [1, 96], strides = [1, 1]} : vector<25x96xf32> to vector<1x96xf32>
    %167 = vector.shape_cast %166 : vector<1x96xf32> to vector<96xf32>
    %168 = vector.shape_cast %167 : vector<96xf32> to vector<1x1x96xf32>
    %169 = vector.broadcast %168 : vector<1x1x96xf32> to vector<4x4x96xf32>
    %170 = arith.mulf %165, %169 : vector<4x4x96xf32>
    %171 = arith.addf %163, %170 : vector<4x4x96xf32>
    %172 = vector.extract_strided_slice %2 {offsets = [0, 2, 0], sizes = [6, 4, 96], strides = [1, 1, 1]} : vector<24x6x96xbf16> to vector<6x4x96xbf16>
    %173 = vector.extract_strided_slice %172 {offsets = [0, 0, 0], sizes = [4, 4, 96], strides = [1, 1, 1]} : vector<6x4x96xbf16> to vector<4x4x96xbf16>
    %174 = arith.extf %173 : vector<4x4x96xbf16> to vector<4x4x96xf32>
    %175 = vector.extract_strided_slice %0 {offsets = [4, 0], sizes = [1, 96], strides = [1, 1]} : vector<25x96xf32> to vector<1x96xf32>
    %176 = vector.shape_cast %175 : vector<1x96xf32> to vector<96xf32>
    %177 = vector.shape_cast %176 : vector<96xf32> to vector<1x1x96xf32>
    %178 = vector.broadcast %177 : vector<1x1x96xf32> to vector<4x4x96xf32>
    %179 = arith.mulf %174, %178 : vector<4x4x96xf32>
    %180 = arith.addf %171, %179 : vector<4x4x96xf32>
    %181 = vector.extract_strided_slice %172 {offsets = [1, 0, 0], sizes = [4, 4, 96], strides = [1, 1, 1]} : vector<6x4x96xbf16> to vector<4x4x96xbf16>
    %182 = arith.extf %181 : vector<4x4x96xbf16> to vector<4x4x96xf32>
    %183 = vector.extract_strided_slice %0 {offsets = [14, 0], sizes = [1, 96], strides = [1, 1]} : vector<25x96xf32> to vector<1x96xf32>
    %184 = vector.shape_cast %183 : vector<1x96xf32> to vector<96xf32>
    %185 = vector.shape_cast %184 : vector<96xf32> to vector<1x1x96xf32>
    %186 = vector.broadcast %185 : vector<1x1x96xf32> to vector<4x4x96xf32>
    %187 = arith.mulf %182, %186 : vector<4x4x96xf32>
    %188 = arith.addf %180, %187 : vector<4x4x96xf32>
    %189 = vector.extract_strided_slice %172 {offsets = [2, 0, 0], sizes = [4, 4, 96], strides = [1, 1, 1]} : vector<6x4x96xbf16> to vector<4x4x96xbf16>
    %190 = arith.extf %189 : vector<4x4x96xbf16> to vector<4x4x96xf32>
    %191 = vector.extract_strided_slice %0 {offsets = [24, 0], sizes = [1, 96], strides = [1, 1]} : vector<25x96xf32> to vector<1x96xf32>
    %192 = vector.shape_cast %191 : vector<1x96xf32> to vector<96xf32>
    %193 = vector.shape_cast %192 : vector<96xf32> to vector<1x1x96xf32>
    %194 = vector.broadcast %193 : vector<1x1x96xf32> to vector<4x4x96xf32>
    %195 = arith.mulf %190, %194 : vector<4x4x96xf32>
    %196 = arith.addf %188, %195 : vector<4x4x96xf32>
    %197 = vector.extract_strided_slice %2 {offsets = [12, 2, 0], sizes = [6, 4, 96], strides = [1, 1, 1]} : vector<24x6x96xbf16> to vector<6x4x96xbf16>
    %198 = vector.extract_strided_slice %197 {offsets = [0, 0, 0], sizes = [4, 4, 96], strides = [1, 1, 1]} : vector<6x4x96xbf16> to vector<4x4x96xbf16>
    %199 = arith.extf %198 : vector<4x4x96xbf16> to vector<4x4x96xf32>
    %200 = vector.extract_strided_slice %0 {offsets = [9, 0], sizes = [1, 96], strides = [1, 1]} : vector<25x96xf32> to vector<1x96xf32>
    %201 = vector.shape_cast %200 : vector<1x96xf32> to vector<96xf32>
    %202 = vector.shape_cast %201 : vector<96xf32> to vector<1x1x96xf32>
    %203 = vector.broadcast %202 : vector<1x1x96xf32> to vector<4x4x96xf32>
    %204 = arith.mulf %199, %203 : vector<4x4x96xf32>
    %205 = arith.addf %196, %204 : vector<4x4x96xf32>
    %206 = vector.extract_strided_slice %197 {offsets = [1, 0, 0], sizes = [4, 4, 96], strides = [1, 1, 1]} : vector<6x4x96xbf16> to vector<4x4x96xbf16>
    %207 = arith.extf %206 : vector<4x4x96xbf16> to vector<4x4x96xf32>
    %208 = vector.extract_strided_slice %0 {offsets = [19, 0], sizes = [1, 96], strides = [1, 1]} : vector<25x96xf32> to vector<1x96xf32>
    %209 = vector.shape_cast %208 : vector<1x96xf32> to vector<96xf32>
    %210 = vector.shape_cast %209 : vector<96xf32> to vector<1x1x96xf32>
    %211 = vector.broadcast %210 : vector<1x1x96xf32> to vector<4x4x96xf32>
    %212 = arith.mulf %207, %211 : vector<4x4x96xf32>
    %213 = arith.addf %205, %212 : vector<4x4x96xf32>
    %c0_5 = arith.constant 0 : index
    %c0_6 = arith.constant 0 : index
    %214 = vector.load %arg3[%c0_5, %c0_6] : memref<1x96xf32, #tpu.memory_space<vmem>>, vector<1x96xf32>
    %215 = vector.shape_cast %214 : vector<1x96xf32> to vector<1x1x96xf32>
    %216 = vector.broadcast %215 : vector<1x1x96xf32> to vector<4x4x96xf32>
    %217 = arith.addf %213, %216 : vector<4x4x96xf32>
    %218 = arith.negf %217 : vector<4x4x96xf32>
    %219 = math.exp %218 : vector<4x4x96xf32>
    %cst_7 = arith.constant 1.000000e+00 : f32
    %220 = vector.broadcast %cst_7 : f32 to vector<4x4x96xf32>
    %221 = arith.addf %220, %219 : vector<4x4x96xf32>
    %222 = arith.divf %220, %221 : vector<4x4x96xf32>
    %223 = arith.mulf %217, %222 : vector<4x4x96xf32>
    %224 = arith.truncf %223 : vector<4x4x96xf32> to vector<4x4x96xbf16>
    %c0_8 = arith.constant 0 : index
    %c0_9 = arith.constant 0 : index
    %c0_10 = arith.constant 0 : index
    %c0_11 = arith.constant 0 : index
    %225 = vector.load %arg4[%c0_8, %c0_9, %c0_10, %c0_11] : memref<1x4x4x96xbf16, #tpu.memory_space<vmem>>, vector<1x4x4x96xbf16>
    %226 = vector.shape_cast %225 : vector<1x4x4x96xbf16> to vector<4x4x96xbf16>
    %227 = vector.shape_cast %224 : vector<4x4x96xbf16> to vector<1x4x4x96xbf16>
    tpu.vector_store %arg4[%c0_8, %c0_9, %c0_10, %c0_11], %227 {strides = array<i32>} : memref<1x4x4x96xbf16, #tpu.memory_space<vmem>>, vector<1x4x4x96xbf16>,
    %cst_12 = arith.constant dense<0.000000e+00> : vector<4x96xf32>
    %228 = vector.multi_reduction <add>, %223, %cst_12 [1] : vector<4x4x96xf32> to vector<4x96xf32>
    %229 = vector.shape_cast %228 : vector<4x96xf32> to vector<4x1x96xf32>
    %cst_13 = arith.constant dense<0.000000e+00> : vector<1x96xf32>
    %230 = vector.multi_reduction <add>, %229, %cst_13 [0] : vector<4x1x96xf32> to vector<1x96xf32>
    %231 = vector.shape_cast %230 : vector<1x96xf32> to vector<1x1x96xf32>
    %c0_14 = arith.constant 0 : index
    %c0_15 = arith.constant 0 : index
    %c0_16 = arith.constant 0 : index
    %232 = vector.load %arg5[%c0_14, %c0_15, %c0_16] : memref<1x1x96xf32, #tpu.memory_space<vmem>>, vector<1x1x96xf32>
    tpu.vector_store %arg5[%c0_14, %c0_15, %c0_16], %231 {strides = array<i32>} : memref<1x1x96xf32, #tpu.memory_space<vmem>>, vector<1x1x96xf32>,
    return
  }
  func.func @transform_0(%arg0: i32) -> (i32, i32, i32, i32) {
    %c0_i32 = arith.constant 0 : i32
    %c0_i32_0 = arith.constant 0 : i32
    %c0_i32_1 = arith.constant 0 : i32
    %c0_i32_2 = arith.constant 0 : i32
    return %arg0, %c0_i32, %c0_i32_0, %c0_i32_1 : i32, i32, i32, i32
  }
  func.func @transform_1(%arg0: i32) -> (i32, i32) {
    %c0_i32 = arith.constant 0 : i32
    %c0_i32_0 = arith.constant 0 : i32
    %c0_i32_1 = arith.constant 0 : i32
    return %c0_i32, %c0_i32_0 : i32, i32
  }
  func.func @transform_2(%arg0: i32) -> (i32, i32) {
    %c0_i32 = arith.constant 0 : i32
    %c0_i32_0 = arith.constant 0 : i32
    %c0_i32_1 = arith.constant 0 : i32
    return %c0_i32, %c0_i32_0 : i32, i32
  }
  func.func @transform_3(%arg0: i32) -> (i32, i32, i32, i32) {
    %c0_i32 = arith.constant 0 : i32
    %c0_i32_0 = arith.constant 0 : i32
    %c0_i32_1 = arith.constant 0 : i32
    %c0_i32_2 = arith.constant 0 : i32
    return %arg0, %c0_i32, %c0_i32_0, %c0_i32_1 : i32, i32, i32, i32
  }
  func.func @transform_4(%arg0: i32) -> (i32, i32, i32) {
    %c0_i32 = arith.constant 0 : i32
    %c0_i32_0 = arith.constant 0 : i32
    %c0_i32_1 = arith.constant 0 : i32
    return %arg0, %c0_i32, %c0_i32_0 : i32, i32, i32
  }
}

module attributes {stable_mosaic.version = 11 : i64} {
  func.func @_se_fc_kernel(%arg0: i32, %arg1: memref<2x96xf32, #tpu.memory_space<vmem>>, %arg2: memref<96x6xbf16, #tpu.memory_space<vmem>>, %arg3: memref<1x6xf32, #tpu.memory_space<vmem>>, %arg4: memref<6x96xbf16, #tpu.memory_space<vmem>>, %arg5: memref<1x96xf32, #tpu.memory_space<vmem>>, %arg6: memref<2x96xbf16, #tpu.memory_space<vmem>>) attributes {dimension_semantics = [#tpu.dimension_semantics<arbitrary>], iteration_bounds = array<i64: 1>, scalar_prefetch = 0 : i64, scratch_operands = 0 : i64, tpu.core_type = #tpu.core_type<tc>, window_params = [{pipeline_mode = #tpu.pipeline_mode<synchronous>, transform_indices = @transform_0, window_bounds = array<i64: 2, 96>}, {pipeline_mode = #tpu.pipeline_mode<synchronous>, transform_indices = @transform_1, window_bounds = array<i64: 96, 6>}, {pipeline_mode = #tpu.pipeline_mode<synchronous>, transform_indices = @transform_2, window_bounds = array<i64: 1, 6>}, {pipeline_mode = #tpu.pipeline_mode<synchronous>, transform_indices = @transform_3, window_bounds = array<i64: 6, 96>}, {pipeline_mode = #tpu.pipeline_mode<synchronous>, transform_indices = @transform_4, window_bounds = array<i64: 1, 96>}, {pipeline_mode = #tpu.pipeline_mode<synchronous>, transform_indices = @transform_5, window_bounds = array<i64: 2, 96>}]} {
    %c0 = arith.constant 0 : index
    %c0_0 = arith.constant 0 : index
    %0 = vector.load %arg1[%c0, %c0_0] : memref<2x96xf32, #tpu.memory_space<vmem>>, vector<2x96xf32>
    %cst = arith.constant 6.250000e-02 : f32
    %1 = vector.broadcast %cst : f32 to vector<2x96xf32>
    %2 = arith.mulf %0, %1 : vector<2x96xf32>
    %3 = arith.truncf %2 : vector<2x96xf32> to vector<2x96xbf16>
    %c0_1 = arith.constant 0 : index
    %c0_2 = arith.constant 0 : index
    %4 = vector.load %arg2[%c0_1, %c0_2] : memref<96x6xbf16, #tpu.memory_space<vmem>>, vector<96x6xbf16>
    %cst_3 = arith.constant dense<0.000000e+00> : vector<2x6xf32>
    %5 = tpu.matmul %3, %4, %cst_3 {dimension_numbers = #tpu.dot_dimension_numbers<[1], [0], [0], [1], [0, 0, 1, 1], [], []>} : vector<2x96xbf16>, vector<96x6xbf16>, vector<2x6xf32> -> vector<2x6xf32>
    %c0_4 = arith.constant 0 : index
    %c0_5 = arith.constant 0 : index
    %6 = vector.load %arg3[%c0_4, %c0_5] : memref<1x6xf32, #tpu.memory_space<vmem>>, vector<1x6xf32>
    %7 = vector.broadcast %6 : vector<1x6xf32> to vector<2x6xf32>
    %8 = arith.addf %5, %7 : vector<2x6xf32>
    %9 = arith.negf %8 : vector<2x6xf32>
    %10 = math.exp %9 : vector<2x6xf32>
    %cst_6 = arith.constant 1.000000e+00 : f32
    %11 = vector.broadcast %cst_6 : f32 to vector<2x6xf32>
    %12 = arith.addf %11, %10 : vector<2x6xf32>
    %13 = arith.divf %11, %12 : vector<2x6xf32>
    %14 = arith.mulf %8, %13 : vector<2x6xf32>
    %15 = arith.truncf %14 : vector<2x6xf32> to vector<2x6xbf16>
    %c0_7 = arith.constant 0 : index
    %c0_8 = arith.constant 0 : index
    %16 = vector.load %arg4[%c0_7, %c0_8] : memref<6x96xbf16, #tpu.memory_space<vmem>>, vector<6x96xbf16>
    %cst_9 = arith.constant dense<0.000000e+00> : vector<2x96xf32>
    %17 = tpu.matmul %15, %16, %cst_9 {dimension_numbers = #tpu.dot_dimension_numbers<[1], [0], [0], [1], [0, 0, 1, 1], [], []>} : vector<2x6xbf16>, vector<6x96xbf16>, vector<2x96xf32> -> vector<2x96xf32>
    %c0_10 = arith.constant 0 : index
    %c0_11 = arith.constant 0 : index
    %18 = vector.load %arg5[%c0_10, %c0_11] : memref<1x96xf32, #tpu.memory_space<vmem>>, vector<1x96xf32>
    %19 = vector.broadcast %18 : vector<1x96xf32> to vector<2x96xf32>
    %20 = arith.addf %17, %19 : vector<2x96xf32>
    %21 = arith.negf %20 : vector<2x96xf32>
    %22 = math.exp %21 : vector<2x96xf32>
    %cst_12 = arith.constant 1.000000e+00 : f32
    %23 = vector.broadcast %cst_12 : f32 to vector<2x96xf32>
    %24 = arith.addf %23, %22 : vector<2x96xf32>
    %25 = arith.divf %23, %24 : vector<2x96xf32>
    %26 = arith.truncf %25 : vector<2x96xf32> to vector<2x96xbf16>
    %c0_13 = arith.constant 0 : index
    %c0_14 = arith.constant 0 : index
    %27 = vector.load %arg6[%c0_13, %c0_14] : memref<2x96xbf16, #tpu.memory_space<vmem>>, vector<2x96xbf16>
    tpu.vector_store %arg6[%c0_13, %c0_14], %26 {strides = array<i32>} : memref<2x96xbf16, #tpu.memory_space<vmem>>, vector<2x96xbf16>,
    return
  }
  func.func @transform_0(%arg0: i32) -> (i32, i32) {
    %c0_i32 = arith.constant 0 : i32
    %c0_i32_0 = arith.constant 0 : i32
    %c0_i32_1 = arith.constant 0 : i32
    return %c0_i32, %c0_i32_0 : i32, i32
  }
  func.func @transform_1(%arg0: i32) -> (i32, i32) {
    %c0_i32 = arith.constant 0 : i32
    %c0_i32_0 = arith.constant 0 : i32
    %c0_i32_1 = arith.constant 0 : i32
    return %c0_i32, %c0_i32_0 : i32, i32
  }
  func.func @transform_2(%arg0: i32) -> (i32, i32) {
    %c0_i32 = arith.constant 0 : i32
    %c0_i32_0 = arith.constant 0 : i32
    %c0_i32_1 = arith.constant 0 : i32
    return %c0_i32, %c0_i32_0 : i32, i32
  }
  func.func @transform_3(%arg0: i32) -> (i32, i32) {
    %c0_i32 = arith.constant 0 : i32
    %c0_i32_0 = arith.constant 0 : i32
    %c0_i32_1 = arith.constant 0 : i32
    return %c0_i32, %c0_i32_0 : i32, i32
  }
  func.func @transform_4(%arg0: i32) -> (i32, i32) {
    %c0_i32 = arith.constant 0 : i32
    %c0_i32_0 = arith.constant 0 : i32
    %c0_i32_1 = arith.constant 0 : i32
    return %c0_i32, %c0_i32_0 : i32, i32
  }
  func.func @transform_5(%arg0: i32) -> (i32, i32) {
    %c0_i32 = arith.constant 0 : i32
    %c0_i32_0 = arith.constant 0 : i32
    %c0_i32_1 = arith.constant 0 : i32
    return %c0_i32, %c0_i32_0 : i32, i32
  }
}

module attributes {stable_mosaic.version = 11 : i64} {
  func.func @_proj_kernel(%arg0: i32, %arg1: i32, %arg2: memref<1x16x96xbf16, #tpu.memory_space<vmem>>, %arg3: memref<1x1x96xbf16, #tpu.memory_space<vmem>>, %arg4: memref<96x40xbf16, #tpu.memory_space<vmem>>, %arg5: memref<1x40xf32, #tpu.memory_space<vmem>>, %arg6: memref<1x16x40xbf16, #tpu.memory_space<vmem>>) attributes {dimension_semantics = [#tpu.dimension_semantics<parallel>, #tpu.dimension_semantics<parallel>], iteration_bounds = array<i64: 2, 1>, scalar_prefetch = 0 : i64, scratch_operands = 0 : i64, tpu.core_type = #tpu.core_type<tc>, window_params = [{transform_indices = @transform_0, window_bounds = array<i64: 1, 16, 96>}, {transform_indices = @transform_1, window_bounds = array<i64: 1, 1, 96>}, {pipeline_mode = #tpu.pipeline_mode<synchronous>, transform_indices = @transform_2, window_bounds = array<i64: 96, 40>}, {pipeline_mode = #tpu.pipeline_mode<synchronous>, transform_indices = @transform_3, window_bounds = array<i64: 1, 40>}, {transform_indices = @transform_4, window_bounds = array<i64: 1, 16, 40>}]} {
    %c0 = arith.constant 0 : index
    %c0_0 = arith.constant 0 : index
    %c0_1 = arith.constant 0 : index
    %0 = vector.load %arg2[%c0, %c0_0, %c0_1] : memref<1x16x96xbf16, #tpu.memory_space<vmem>>, vector<1x16x96xbf16>
    %1 = vector.shape_cast %0 : vector<1x16x96xbf16> to vector<16x96xbf16>
    %c0_2 = arith.constant 0 : index
    %c0_3 = arith.constant 0 : index
    %c0_4 = arith.constant 0 : index
    %2 = vector.load %arg3[%c0_2, %c0_3, %c0_4] : memref<1x1x96xbf16, #tpu.memory_space<vmem>>, vector<1x1x96xbf16>
    %3 = vector.shape_cast %2 : vector<1x1x96xbf16> to vector<1x96xbf16>
    %4 = vector.broadcast %3 : vector<1x96xbf16> to vector<16x96xbf16>
    %5 = arith.mulf %1, %4 : vector<16x96xbf16>
    %c0_5 = arith.constant 0 : index
    %c0_6 = arith.constant 0 : index
    %6 = vector.load %arg4[%c0_5, %c0_6] : memref<96x40xbf16, #tpu.memory_space<vmem>>, vector<96x40xbf16>
    %cst = arith.constant dense<0.000000e+00> : vector<16x40xf32>
    %7 = tpu.matmul %5, %6, %cst {dimension_numbers = #tpu.dot_dimension_numbers<[1], [0], [0], [1], [0, 0, 1, 1], [], []>} : vector<16x96xbf16>, vector<96x40xbf16>, vector<16x40xf32> -> vector<16x40xf32>
    %c0_7 = arith.constant 0 : index
    %c0_8 = arith.constant 0 : index
    %8 = vector.load %arg5[%c0_7, %c0_8] : memref<1x40xf32, #tpu.memory_space<vmem>>, vector<1x40xf32>
    %9 = vector.broadcast %8 : vector<1x40xf32> to vector<16x40xf32>
    %10 = arith.addf %7, %9 : vector<16x40xf32>
    %11 = arith.truncf %10 : vector<16x40xf32> to vector<16x40xbf16>
    %c0_9 = arith.constant 0 : index
    %c0_10 = arith.constant 0 : index
    %c0_11 = arith.constant 0 : index
    %12 = vector.load %arg6[%c0_9, %c0_10, %c0_11] : memref<1x16x40xbf16, #tpu.memory_space<vmem>>, vector<1x16x40xbf16>
    %13 = vector.shape_cast %12 : vector<1x16x40xbf16> to vector<16x40xbf16>
    %14 = vector.shape_cast %11 : vector<16x40xbf16> to vector<1x16x40xbf16>
    tpu.vector_store %arg6[%c0_9, %c0_10, %c0_11], %14 {strides = array<i32>} : memref<1x16x40xbf16, #tpu.memory_space<vmem>>, vector<1x16x40xbf16>,
    return
  }
  func.func @transform_0(%arg0: i32, %arg1: i32) -> (i32, i32, i32) {
    %c0_i32 = arith.constant 0 : i32
    %c0_i32_0 = arith.constant 0 : i32
    return %arg0, %arg1, %c0_i32 : i32, i32, i32
  }
  func.func @transform_1(%arg0: i32, %arg1: i32) -> (i32, i32, i32) {
    %c0_i32 = arith.constant 0 : i32
    %c0_i32_0 = arith.constant 0 : i32
    %c0_i32_1 = arith.constant 0 : i32
    return %arg0, %c0_i32, %c0_i32_0 : i32, i32, i32
  }
  func.func @transform_2(%arg0: i32, %arg1: i32) -> (i32, i32) {
    %c0_i32 = arith.constant 0 : i32
    %c0_i32_0 = arith.constant 0 : i32
    %c0_i32_1 = arith.constant 0 : i32
    return %c0_i32, %c0_i32_0 : i32, i32
  }
  func.func @transform_3(%arg0: i32, %arg1: i32) -> (i32, i32) {
    %c0_i32 = arith.constant 0 : i32
    %c0_i32_0 = arith.constant 0 : i32
    %c0_i32_1 = arith.constant 0 : i32
    return %c0_i32, %c0_i32_0 : i32, i32
  }
  func.func @transform_4(%arg0: i32, %arg1: i32) -> (i32, i32, i32) {
    %c0_i32 = arith.constant 0 : i32
    %c0_i32_0 = arith.constant 0 : i32
    return %arg0, %arg1, %c0_i32 : i32, i32, i32
  }
}

module attributes {stable_mosaic.version = 11 : i64} {
  func.func @_matmul_bias_act_kernel(%arg0: i32, %arg1: memref<32x40xbf16, #tpu.memory_space<vmem>>, %arg2: memref<40x128xbf16, #tpu.memory_space<vmem>>, %arg3: memref<1x128xf32, #tpu.memory_space<vmem>>, %arg4: memref<32x128xbf16, #tpu.memory_space<vmem>>) attributes {dimension_semantics = [#tpu.dimension_semantics<parallel>], iteration_bounds = array<i64: 1>, scalar_prefetch = 0 : i64, scratch_operands = 0 : i64, tpu.core_type = #tpu.core_type<tc>, window_params = [{transform_indices = @transform_0, window_bounds = array<i64: 32, 40>}, {pipeline_mode = #tpu.pipeline_mode<synchronous>, transform_indices = @transform_1, window_bounds = array<i64: 40, 128>}, {pipeline_mode = #tpu.pipeline_mode<synchronous>, transform_indices = @transform_2, window_bounds = array<i64: 1, 128>}, {transform_indices = @transform_3, window_bounds = array<i64: 32, 128>}]} {
    %c0 = arith.constant 0 : index
    %c0_0 = arith.constant 0 : index
    %0 = vector.load %arg1[%c0, %c0_0] : memref<32x40xbf16, #tpu.memory_space<vmem>>, vector<32x40xbf16>
    %c0_1 = arith.constant 0 : index
    %c0_2 = arith.constant 0 : index
    %1 = vector.load %arg2[%c0_1, %c0_2] : memref<40x128xbf16, #tpu.memory_space<vmem>>, vector<40x128xbf16>
    %cst = arith.constant dense<0.000000e+00> : vector<32x128xf32>
    %2 = tpu.matmul %0, %1, %cst {dimension_numbers = #tpu.dot_dimension_numbers<[1], [0], [0], [1], [0, 0, 1, 1], [], []>} : vector<32x40xbf16>, vector<40x128xbf16>, vector<32x128xf32> -> vector<32x128xf32>
    %c0_3 = arith.constant 0 : index
    %c0_4 = arith.constant 0 : index
    %3 = vector.load %arg3[%c0_3, %c0_4] : memref<1x128xf32, #tpu.memory_space<vmem>>, vector<1x128xf32>
    %4 = vector.broadcast %3 : vector<1x128xf32> to vector<32x128xf32>
    %5 = arith.addf %2, %4 : vector<32x128xf32>
    %6 = arith.negf %5 : vector<32x128xf32>
    %7 = math.exp %6 : vector<32x128xf32>
    %cst_5 = arith.constant 1.000000e+00 : f32
    %8 = vector.broadcast %cst_5 : f32 to vector<32x128xf32>
    %9 = arith.addf %8, %7 : vector<32x128xf32>
    %10 = arith.divf %8, %9 : vector<32x128xf32>
    %11 = arith.mulf %5, %10 : vector<32x128xf32>
    %12 = arith.truncf %11 : vector<32x128xf32> to vector<32x128xbf16>
    %c0_6 = arith.constant 0 : index
    %c0_7 = arith.constant 0 : index
    %13 = vector.load %arg4[%c0_6, %c0_7] : memref<32x128xbf16, #tpu.memory_space<vmem>>, vector<32x128xbf16>
    tpu.vector_store %arg4[%c0_6, %c0_7], %12 {strides = array<i32>} : memref<32x128xbf16, #tpu.memory_space<vmem>>, vector<32x128xbf16>,
    return
  }
  func.func @transform_0(%arg0: i32) -> (i32, i32) {
    %c0_i32 = arith.constant 0 : i32
    %c0_i32_0 = arith.constant 0 : i32
    return %arg0, %c0_i32 : i32, i32
  }
  func.func @transform_1(%arg0: i32) -> (i32, i32) {
    %c0_i32 = arith.constant 0 : i32
    %c0_i32_0 = arith.constant 0 : i32
    %c0_i32_1 = arith.constant 0 : i32
    return %c0_i32, %c0_i32_0 : i32, i32
  }
  func.func @transform_2(%arg0: i32) -> (i32, i32) {
    %c0_i32 = arith.constant 0 : i32
    %c0_i32_0 = arith.constant 0 : i32
    %c0_i32_1 = arith.constant 0 : i32
    return %c0_i32, %c0_i32_0 : i32, i32
  }
  func.func @transform_3(%arg0: i32) -> (i32, i32) {
    %c0_i32 = arith.constant 0 : i32
    %c0_i32_0 = arith.constant 0 : i32
    return %arg0, %c0_i32 : i32, i32
  }
}

module attributes {stable_mosaic.version = 11 : i64} {
  func.func @_mean_pool_kernel(%arg0: i32, %arg1: i32, %arg2: memref<1x16x128xbf16, #tpu.memory_space<vmem>>, %arg3: memref<1x1x128xf32, #tpu.memory_space<vmem>>) attributes {dimension_semantics = [#tpu.dimension_semantics<parallel>, #tpu.dimension_semantics<arbitrary>], iteration_bounds = array<i64: 2, 1>, scalar_prefetch = 0 : i64, scratch_operands = 0 : i64, tpu.core_type = #tpu.core_type<tc>, window_params = [{transform_indices = @transform_0, window_bounds = array<i64: 1, 16, 128>}, {transform_indices = @transform_1, window_bounds = array<i64: 1, 1, 128>}]} {
    %c0_i32 = arith.constant 0 : i32
    %0 = arith.cmpi eq, %arg1, %c0_i32 : i32
    %1 = arith.extui %0 : i1 to i32
    %c0_i32_0 = arith.constant 0 : i32
    %2 = arith.cmpi ne, %1, %c0_i32_0 : i32
    scf.if %2 {
      %cst_11 = arith.constant 0.000000e+00 : f32
      %13 = vector.broadcast %cst_11 : f32 to vector<1x1x128xf32>
      %c0_12 = arith.constant 0 : index
      %c0_13 = arith.constant 0 : index
      %c0_14 = arith.constant 0 : index
      %14 = vector.load %arg3[%c0_12, %c0_13, %c0_14] : memref<1x1x128xf32, #tpu.memory_space<vmem>>, vector<1x1x128xf32>
      tpu.vector_store %arg3[%c0_12, %c0_13, %c0_14], %13 {strides = array<i32>} : memref<1x1x128xf32, #tpu.memory_space<vmem>>, vector<1x1x128xf32>,
    } else {
    }
    %c0 = arith.constant 0 : index
    %c0_1 = arith.constant 0 : index
    %c0_2 = arith.constant 0 : index
    %3 = vector.load %arg3[%c0, %c0_1, %c0_2] : memref<1x1x128xf32, #tpu.memory_space<vmem>>, vector<1x1x128xf32>
    %c0_3 = arith.constant 0 : index
    %c0_4 = arith.constant 0 : index
    %c0_5 = arith.constant 0 : index
    %4 = vector.load %arg2[%c0_3, %c0_4, %c0_5] : memref<1x16x128xbf16, #tpu.memory_space<vmem>>, vector<1x16x128xbf16>
    %5 = arith.extf %4 : vector<1x16x128xbf16> to vector<1x16x128xf32>
    %cst = arith.constant dense<0.000000e+00> : vector<1x128xf32>
    %6 = vector.multi_reduction <add>, %5, %cst [1] : vector<1x16x128xf32> to vector<1x128xf32>
    %7 = vector.shape_cast %6 : vector<1x128xf32> to vector<1x1x128xf32>
    %8 = arith.addf %3, %7 : vector<1x1x128xf32>
    %c0_6 = arith.constant 0 : index
    %c0_7 = arith.constant 0 : index
    %c0_8 = arith.constant 0 : index
    %9 = vector.load %arg3[%c0_6, %c0_7, %c0_8] : memref<1x1x128xf32, #tpu.memory_space<vmem>>, vector<1x1x128xf32>
    tpu.vector_store %arg3[%c0_6, %c0_7, %c0_8], %8 {strides = array<i32>} : memref<1x1x128xf32, #tpu.memory_space<vmem>>, vector<1x1x128xf32>,
    %c0_i32_9 = arith.constant 0 : i32
    %10 = arith.cmpi eq, %arg1, %c0_i32_9 : i32
    %11 = arith.extui %10 : i1 to i32
    %c0_i32_10 = arith.constant 0 : i32
    %12 = arith.cmpi ne, %11, %c0_i32_10 : i32
    scf.if %12 {
      %c0_11 = arith.constant 0 : index
      %c0_12 = arith.constant 0 : index
      %c0_13 = arith.constant 0 : index
      %13 = vector.load %arg3[%c0_11, %c0_12, %c0_13] : memref<1x1x128xf32, #tpu.memory_space<vmem>>, vector<1x1x128xf32>
      %cst_14 = arith.constant 6.250000e-02 : f32
      %14 = vector.broadcast %cst_14 : f32 to vector<1x1x128xf32>
      %15 = arith.mulf %13, %14 : vector<1x1x128xf32>
      %c0_15 = arith.constant 0 : index
      %c0_16 = arith.constant 0 : index
      %c0_17 = arith.constant 0 : index
      %16 = vector.load %arg3[%c0_15, %c0_16, %c0_17] : memref<1x1x128xf32, #tpu.memory_space<vmem>>, vector<1x1x128xf32>
      tpu.vector_store %arg3[%c0_15, %c0_16, %c0_17], %15 {strides = array<i32>} : memref<1x1x128xf32, #tpu.memory_space<vmem>>, vector<1x1x128xf32>,
    } else {
    }
    return
  }
  func.func @transform_0(%arg0: i32, %arg1: i32) -> (i32, i32, i32) {
    %c0_i32 = arith.constant 0 : i32
    %c0_i32_0 = arith.constant 0 : i32
    return %arg0, %arg1, %c0_i32 : i32, i32, i32
  }
  func.func @transform_1(%arg0: i32, %arg1: i32) -> (i32, i32, i32) {
    %c0_i32 = arith.constant 0 : i32
    %c0_i32_0 = arith.constant 0 : i32
    %c0_i32_1 = arith.constant 0 : i32
    return %arg0, %c0_i32, %c0_i32_0 : i32, i32, i32
  }
}

module attributes {stable_mosaic.version = 11 : i64} {
  func.func @_matmul_bias_act_kernel(%arg0: i32, %arg1: memref<8x128xbf16, #tpu.memory_space<vmem>>, %arg2: memref<128x128xbf16, #tpu.memory_space<vmem>>, %arg3: memref<1x128xf32, #tpu.memory_space<vmem>>, %arg4: memref<8x128xf32, #tpu.memory_space<vmem>>) attributes {dimension_semantics = [#tpu.dimension_semantics<parallel>], iteration_bounds = array<i64: 1>, scalar_prefetch = 0 : i64, scratch_operands = 0 : i64, tpu.core_type = #tpu.core_type<tc>, window_params = [{transform_indices = @transform_0, window_bounds = array<i64: 8, 128>}, {pipeline_mode = #tpu.pipeline_mode<synchronous>, transform_indices = @transform_1, window_bounds = array<i64: 128, 128>}, {pipeline_mode = #tpu.pipeline_mode<synchronous>, transform_indices = @transform_2, window_bounds = array<i64: 1, 128>}, {transform_indices = @transform_3, window_bounds = array<i64: 8, 128>}]} {
    %c0 = arith.constant 0 : index
    %c0_0 = arith.constant 0 : index
    %0 = vector.load %arg1[%c0, %c0_0] : memref<8x128xbf16, #tpu.memory_space<vmem>>, vector<8x128xbf16>
    %c0_1 = arith.constant 0 : index
    %c0_2 = arith.constant 0 : index
    %1 = vector.load %arg2[%c0_1, %c0_2] : memref<128x128xbf16, #tpu.memory_space<vmem>>, vector<128x128xbf16>
    %cst = arith.constant dense<0.000000e+00> : vector<8x128xf32>
    %2 = tpu.matmul %0, %1, %cst {dimension_numbers = #tpu.dot_dimension_numbers<[1], [0], [0], [1], [0, 0, 1, 1], [], []>} : vector<8x128xbf16>, vector<128x128xbf16>, vector<8x128xf32> -> vector<8x128xf32>
    %c0_3 = arith.constant 0 : index
    %c0_4 = arith.constant 0 : index
    %3 = vector.load %arg3[%c0_3, %c0_4] : memref<1x128xf32, #tpu.memory_space<vmem>>, vector<1x128xf32>
    %4 = vector.broadcast %3 : vector<1x128xf32> to vector<8x128xf32>
    %5 = arith.addf %2, %4 : vector<8x128xf32>
    %c0_5 = arith.constant 0 : index
    %c0_6 = arith.constant 0 : index
    %6 = vector.load %arg4[%c0_5, %c0_6] : memref<8x128xf32, #tpu.memory_space<vmem>>, vector<8x128xf32>
    tpu.vector_store %arg4[%c0_5, %c0_6], %5 {strides = array<i32>} : memref<8x128xf32, #tpu.memory_space<vmem>>, vector<8x128xf32>,
    return
  }
  func.func @transform_0(%arg0: i32) -> (i32, i32) {
    %c0_i32 = arith.constant 0 : i32
    %c0_i32_0 = arith.constant 0 : i32
    return %arg0, %c0_i32 : i32, i32
  }
  func.func @transform_1(%arg0: i32) -> (i32, i32) {
    %c0_i32 = arith.constant 0 : i32
    %c0_i32_0 = arith.constant 0 : i32
    %c0_i32_1 = arith.constant 0 : i32
    return %c0_i32, %c0_i32_0 : i32, i32
  }
  func.func @transform_2(%arg0: i32) -> (i32, i32) {
    %c0_i32 = arith.constant 0 : i32
    %c0_i32_0 = arith.constant 0 : i32
    %c0_i32_1 = arith.constant 0 : i32
    return %c0_i32, %c0_i32_0 : i32, i32
  }
  func.func @transform_3(%arg0: i32) -> (i32, i32) {
    %c0_i32 = arith.constant 0 : i32
    %c0_i32_0 = arith.constant 0 : i32
    return %arg0, %c0_i32 : i32, i32
  }
}

</mosaic_0001>

<llo_original>
// kernel: efficientnet_forward.17
$region0: #{efficientnet_forward.17}
  #allocation0 [shape = 'u32[]', space=smem, size = 0x4, offset = 0x4, fixed_abs, tag = 'smem constant byte address 0x4 - core index']
  #allocation1 [shape = 'u32[144,128]{1,0:T(1,128)}', space=vmem, size = 0x12000, scoped, tag = 'internal scratch']
  %s0 = inlined_call_operand.vmem [shape: f32[2,16], index: 0, kind: input, shape index: {}]
  %s1 = inlined_call_operand.vmem [shape: bf16[16,4], index: 1, kind: input, shape index: {}]
  %s2 = inlined_call_operand.vmem [shape: f32[1,4], index: 2, kind: input, shape index: {}]
  %s3 = inlined_call_operand.vmem [shape: bf16[4,16], index: 3, kind: input, shape index: {}]
  %s4 = inlined_call_operand.vmem [shape: f32[1,16], index: 4, kind: input, shape index: {}]
  %s5 = inlined_call_operand.vmem [shape: bf16[2,16], index: 5, kind: output, shape index: {}]
  %s6 = sld [smem:[#allocation0]]
  $region30: #{efficientnet_forward.17} parent=0
    _
  %s8 = ssub.s32 1, %s6
  %s9 = scalar_select 0, %s8, %s6
  // Predicated region
  $region2: #{efficientnet_forward.17} parent=0 // pred_check
    _
  $region3: #{efficientnet_forward.17} parent=0 // pred_check_branch
    %11 = sbr.rel (0) target = $region5
  $region4: #{efficientnet_forward.17} parent=0 // pred_region
    _
  $region5: #{efficientnet_forward.17} parent=0 // pred_fallthru
    _
  // Predicated region
  $region6: #{efficientnet_forward.17} parent=0 // pred_check
    _
  $region7: #{efficientnet_forward.17} parent=0 // pred_check_branch
    %13 = sbr.rel (0) target = $region9
  $region8: #{efficientnet_forward.17} parent=0 // pred_region
    _
  $region9: #{efficientnet_forward.17} parent=0 // pred_fallthru
    _
  // Predicated region
  $region10: #{efficientnet_forward.17} parent=0 // pred_check
    _
  $region11: #{efficientnet_forward.17} parent=0 // pred_check_branch
    %15 = sbr.rel (0) target = $region13
  $region12: #{efficientnet_forward.17} parent=0 // pred_region
    _
  $region13: #{efficientnet_forward.17} parent=0 // pred_fallthru
    _
  // Predicated region
  $region14: #{efficientnet_forward.17} parent=0 // pred_check
    _
  $region15: #{efficientnet_forward.17} parent=0 // pred_check_branch
    %17 = sbr.rel (0) target = $region17
  $region16: #{efficientnet_forward.17} parent=0 // pred_region
    _
  $region17: #{efficientnet_forward.17} parent=0 // pred_fallthru
    _
  // Predicated region
  $region18: #{efficientnet_forward.17} parent=0 // pred_check
    _
  $region19: #{efficientnet_forward.17} parent=0 // pred_check_branch
    %19 = sbr.rel (0) target = $region21
  $region20: #{efficientnet_forward.17} parent=0 // pred_region
    _
  $region21: #{efficientnet_forward.17} parent=0 // pred_fallthru
    _
  %v21 = vld [vmem:[%s0] sm:$0x3]
  %v22 = vmul.f32 %v21, 0.00390625
  %v23 = vpack.c.bf16 %v22, %v22
  %v24 = vld [vmem:[%s1] sm:$0xf]
  %v25 = vld [vmem:[%s1 + $0x4] sm:$0xf]
  %v26 = vld [vmem:[%s2] sm:$0x1]
  %v28 = vlaneseq
  %v29 = vshrl.u32 %v28, 7
  %v30 = vsub.s32 0, %v29
  %v31 = vrot.slane %v26, %v30
  %v35 = vunpack.c.l.b16 %v24
  %v36 = vunpack.c.l.b16 %v25
  %v37 = vpack.c.b16 %v36, %v35
  %vm39 = vcmask 130048
  %v41 = vsel %vm39, %v23, 0
  %43 = vmatprep.subr.bf16.mxu0 0
  %44 = vmatpush1.bf16.msra.mxu0 %v37
  %45 = vmatprep.subr.bf16.mxu0 0
  %46 = vmatpush1.bf16.msra.mxu0 0
  %47 = vmatprep.subr.bf16.mxu0 0
  %48 = vmatpush1.bf16.msra.mxu0 0
  %49 = vmatprep.subr.bf16.mxu0 0
  %50 = vmatpush1.bf16.msra.mxu0 0
  %51 = vmatprep.subr.bf16.mxu0 0
  %52 = vmatpush1.bf16.msra.mxu0 0
  %53 = vmatprep.subr.bf16.mxu0 0
  %54 = vmatpush1.bf16.msra.mxu0 0
  %55 = vmatprep.subr.bf16.mxu0 0
  %56 = vmatpush1.bf16.msra.mxu0 0
  %57 = vmatprep.subr.bf16.mxu0 0
  %58 = vmatpush1.bf16.msra.mxu0 0
  %59 = vmatprep.subr.bf16.mxu0 0
  %60 = vmatpush1.bf16.msra.mxu0 0
  %61 = vmatprep.subr.bf16.mxu0 0
  %62 = vmatpush1.bf16.msra.mxu0 0
  %63 = vmatprep.subr.bf16.mxu0 0
  %64 = vmatpush1.bf16.msra.mxu0 0
  %65 = vmatprep.subr.bf16.mxu0 0
  %66 = vmatpush1.bf16.msra.mxu0 0
  %67 = vmatprep.subr.bf16.mxu0 0
  %68 = vmatpush1.bf16.msra.mxu0 0
  %69 = vmatprep.subr.bf16.mxu0 0
  %70 = vmatpush1.bf16.msra.mxu0 0
  %71 = vmatprep.subr.bf16.mxu0 0
  %72 = vmatpush1.bf16.msra.mxu0 0
  %73 = vmatprep.subr.bf16.mxu0 0
  %74 = vmatpush1.bf16.msra.mxu0 0
  %75 = vmatprep.mubr.bf16.mxu0 0
  %76 = vmatmul.mubr.bf16.gmra.mrb[0].mxu0 %v41
  %v77 = vpop.f32.mrb[0].mxu0
  %v78 = vadd.f32 %v31, %v77
  %v79 = vpop.f32.mrb[0].mxu0
  %v80 = vpop.f32.mrb[0].mxu0
  %v81 = vpop.f32.mrb[0].mxu0
  %82 = vdwg.mxu0
  %v83 = vxor.u32 %v78, 2147483648
  %v84 = vmul.f32 %v83, 1.442695
  %v85 = vpow.pop %v84
  %v86 = vadd.f32 %v85, 1.0
  %v87 = vrcp.pop %v86
  %v88 = vmul.f32 1.0, %v87
  %v89 = vmul.f32 %v78, %v88
  %v90 = vpack.c.bf16 %v89, %v89
  %v91 = vld [vmem:[%s3] sm:$0x3]
  %v92 = vld [vmem:[%s4] sm:$0x1]
  %v94 = vlaneseq
  %v95 = vshrl.u32 %v94, 7
  %v96 = vsub.s32 0, %v95
  %v97 = vrot.slane %v92, %v96
  %vm99 = vcmask 31744
  %v101 = vsel %vm99, %v90, 0
  %vm103 = vcmask 1041408
  %v105 = vsel %vm103, %v91, 0
  %107 = vmatprep.subr.bf16.mxu0 0
  %108 = vmatpush1.bf16.msra.mxu0 %v105
  %109 = vmatprep.subr.bf16.mxu0 0
  %110 = vmatpush1.bf16.msra.mxu0 0
  %111 = vmatprep.subr.bf16.mxu0 0
  %112 = vmatpush1.bf16.msra.mxu0 0
  %113 = vmatprep.subr.bf16.mxu0 0
  %114 = vmatpush1.bf16.msra.mxu0 0
  %115 = vmatprep.subr.bf16.mxu0 0
  %116 = vmatpush1.bf16.msra.mxu0 0
  %117 = vmatprep.subr.bf16.mxu0 0
  %118 = vmatpush1.bf16.msra.mxu0 0
  %119 = vmatprep.subr.bf16.mxu0 0
  %120 = vmatpush1.bf16.msra.mxu0 0
  %121 = vmatprep.subr.bf16.mxu0 0
  %122 = vmatpush1.bf16.msra.mxu0 0
  %123 = vmatprep.subr.bf16.mxu0 0
  %124 = vmatpush1.bf16.msra.mxu0 0
  %125 = vmatprep.subr.bf16.mxu0 0
  %126 = vmatpush1.bf16.msra.mxu0 0
  %127 = vmatprep.subr.bf16.mxu0 0
  %128 = vmatpush1.bf16.msra.mxu0 0
  %129 = vmatprep.subr.bf16.mxu0 0
  %130 = vmatpush1.bf16.msra.mxu0 0
  %131 = vmatprep.subr.bf16.mxu0 0
  %132 = vmatpush1.bf16.msra.mxu0 0
  %133 = vmatprep.subr.bf16.mxu0 0
  %134 = vmatpush1.bf16.msra.mxu0 0
  %135 = vmatprep.subr.bf16.mxu0 0
  %136 = vmatpush1.bf16.msra.mxu0 0
  %137 = vmatprep.subr.bf16.mxu0 0
  %138 = vmatpush1.bf16.msra.mxu0 0
  %139 = vmatprep.mubr.bf16.mxu0 0
  %140 = vmatmul.mubr.bf16.gmra.mrb[0].mxu0 %v101
  %v141 = vpop.f32.mrb[0].mxu0
  %v142 = vadd.f32 %v97, %v141
  %v143 = vpop.f32.mrb[0].mxu0
  %v144 = vpop.f32.mrb[0].mxu0
  %v145 = vpop.f32.mrb[0].mxu0
  %146 = vdwg.mxu0
  %v147 = vxor.u32 %v142, 2147483648
  %v148 = vmul.f32 %v147, 1.442695
  %v149 = vpow.pop %v148
  %v150 = vadd.f32 %v149, 1.0
  %v151 = vrcp.pop %v150
  %v152 = vmul.f32 1.0, %v151
  %v153 = vpack.c.bf16 %v152, %v152
  %vm154 = vcmask 122880
  %155 = vst.msk [vmem:[%s5] sm:$0x1] %vm154, %v153
  // Predicated region
  $region22: #{efficientnet_forward.17} parent=0 // pred_check
    _
  $region23: #{efficientnet_forward.17} parent=0 // pred_check_branch
    %157 = sbr.rel (0) target = $region25
  $region24: #{efficientnet_forward.17} parent=0 // pred_region
    _
  $region25: #{efficientnet_forward.17} parent=0 // pred_fallthru
    _
  // Predicated region
  $region26: #{efficientnet_forward.17} parent=0 // pred_check
    _
  $region27: #{efficientnet_forward.17} parent=0 // pred_check_branch
    %159 = sbr.rel (0) target = $region29
  $region28: #{efficientnet_forward.17} parent=0 // pred_region
    _
  $region29: #{efficientnet_forward.17} parent=0 // pred_fallthru
    _

// kernel: efficientnet_forward.15
$region0: #{efficientnet_forward.15}
  #allocation0 [shape = 'u32[]', space=smem, size = 0x4, offset = 0x4, fixed_abs, tag = 'smem constant byte address 0x4 - core index']
  #allocation1 [shape = 'u32[144,128]{1,0:T(1,128)}', space=vmem, size = 0x12000, scoped, tag = 'internal scratch']
  %s0 = inlined_call_operand.vmem [shape: bf16[512,27], index: 0, kind: input, shape index: {}]
  %s1 = inlined_call_operand.vmem [shape: bf16[27,16], index: 1, kind: input, shape index: {}]
  %s2 = inlined_call_operand.vmem [shape: f32[1,16], index: 2, kind: input, shape index: {}]
  %s3 = inlined_call_operand.vmem [shape: bf16[512,16], index: 3, kind: output, shape index: {}]
  %s4 = sld [smem:[#allocation0]]
  $region22: #{efficientnet_forward.15} parent=0
    _
  %s6 = ssub.s32 1, %s4
  %s7 = scalar_select 0, %s6, %s4
  // Predicated region
  $region2: #{efficientnet_forward.15} parent=0 // pred_check
    _
  $region3: #{efficientnet_forward.15} parent=0 // pred_check_branch
    %9 = sbr.rel (0) target = $region5
  $region4: #{efficientnet_forward.15} parent=0 // pred_region
    _
  $region5: #{efficientnet_forward.15} parent=0 // pred_fallthru
    _
  // Predicated region
  $region6: #{efficientnet_forward.15} parent=0 // pred_check
    _
  $region7: #{efficientnet_forward.15} parent=0 // pred_check_branch
    %11 = sbr.rel (0) target = $region9
  $region8: #{efficientnet_forward.15} parent=0 // pred_region
    _
  $region9: #{efficientnet_forward.15} parent=0 // pred_fallthru
    _
  // Predicated region
  $region10: #{efficientnet_forward.15} parent=0 // pred_check
    _
  $region11: #{efficientnet_forward.15} parent=0 // pred_check_branch
    %13 = sbr.rel (0) target = $region13
  $region12: #{efficientnet_forward.15} parent=0 // pred_region
    _
  $region13: #{efficientnet_forward.15} parent=0 // pred_fallthru
    _
  %v15 = vld [vmem:[%s0] sm:$0xf]
  %v16 = vld [vmem:[%s0 + $0x4] sm:$0xf]
  %v17 = vld [vmem:[%s0 + $0x8] sm:$0xf]
  %v18 = vld [vmem:[%s0 + $0xc] sm:$0xf]
  %v19 = vld [vmem:[%s0 + $0x10] sm:$0xf]
  %v20 = vld [vmem:[%s0 + $0x14] sm:$0xf]
  %v21 = vld [vmem:[%s0 + $0x18] sm:$0xf]
  %v22 = vld [vmem:[%s0 + $0x1c] sm:$0xf]
  %v23 = vld [vmem:[%s0 + $0x20] sm:$0xf]
  %v24 = vld [vmem:[%s0 + $0x24] sm:$0xf]
  %v25 = vld [vmem:[%s0 + $0x28] sm:$0xf]
  %v26 = vld [vmem:[%s0 + $0x2c] sm:$0xf]
  %v27 = vld [vmem:[%s0 + $0x30] sm:$0xf]
  %v28 = vld [vmem:[%s0 + $0x34] sm:$0xf]
  %v29 = vld [vmem:[%s0 + $0x38] sm:$0xf]
  %v30 = vld [vmem:[%s0 + $0x3c] sm:$0xf]
  %v31 = vld [vmem:[%s0 + $0x40] sm:$0xf]
  %v32 = vld [vmem:[%s0 + $0x44] sm:$0xf]
  %v33 = vld [vmem:[%s0 + $0x48] sm:$0xf]
  %v34 = vld [vmem:[%s0 + $0x4c] sm:$0xf]
  %v35 = vld [vmem:[%s0 + $0x50] sm:$0xf]
  %v36 = vld [vmem:[%s0 + $0x54] sm:$0xf]
  %v37 = vld [vmem:[%s0 + $0x58] sm:$0xf]
  %v38 = vld [vmem:[%s0 + $0x5c] sm:$0xf]
  %v39 = vld [vmem:[%s0 + $0x60] sm:$0xf]
  %v40 = vld [vmem:[%s0 + $0x64] sm:$0xf]
  %v41 = vld [vmem:[%s0 + $0x68] sm:$0xf]
  %v42 = vld [vmem:[%s0 + $0x6c] sm:$0xf]
  %v43 = vld [vmem:[%s0 + $0x70] sm:$0xf]
  %v44 = vld [vmem:[%s0 + $0x74] sm:$0xf]
  %v45 = vld [vmem:[%s0 + $0x78] sm:$0xf]
  %v46 = vld [vmem:[%s0 + $0x7c] sm:$0xf]
  %v47 = vld [vmem:[%s0 + $0x80] sm:$0xf]
  %v48 = vld [vmem:[%s0 + $0x84] sm:$0xf]
  %v49 = vld [vmem:[%s0 + $0x88] sm:$0xf]
  %v50 = vld [vmem:[%s0 + $0x8c] sm:$0xf]
  %v51 = vld [vmem:[%s0 + $0x90] sm:$0xf]
  %v52 = vld [vmem:[%s0 + $0x94] sm:$0xf]
  %v53 = vld [vmem:[%s0 + $0x98] sm:$0xf]
  %v54 = vld [vmem:[%s0 + $0x9c] sm:$0xf]
  %v55 = vld [vmem:[%s0 + $0xa0] sm:$0xf]
  %v56 = vld [vmem:[%s0 + $0xa4] sm:$0xf]
  %v57 = vld [vmem:[%s0 + $0xa8] sm:$0xf]
  %v58 = vld [vmem:[%s0 + $0xac] sm:$0xf]
  %v59 = vld [vmem:[%s0 + $0xb0] sm:$0xf]
  %v60 = vld [vmem:[%s0 + $0xb4] sm:$0xf]
  %v61 = vld [vmem:[%s0 + $0xb8] sm:$0xf]
  %v62 = vld [vmem:[%s0 + $0xbc] sm:$0xf]
  %v63 = vld [vmem:[%s0 + $0xc0] sm:$0xf]
  %v64 = vld [vmem:[%s0 + $0xc4] sm:$0xf]
  %v65 = vld [vmem:[%s0 + $0xc8] sm:$0xf]
  %v66 = vld [vmem:[%s0 + $0xcc] sm:$0xf]
  %v67 = vld [vmem:[%s0 + $0xd0] sm:$0xf]
  %v68 = vld [vmem:[%s0 + $0xd4] sm:$0xf]
  %v69 = vld [vmem:[%s0 + $0xd8] sm:$0xf]
  %v70 = vld [vmem:[%s0 + $0xdc] sm:$0xf]
  %v71 = vld [vmem:[%s0 + $0xe0] sm:$0xf]
  %v72 = vld [vmem:[%s0 + $0xe4] sm:$0xf]
  %v73 = vld [vmem:[%s0 + $0xe8] sm:$0xf]
  %v74 = vld [vmem:[%s0 + $0xec] sm:$0xf]
  %v75 = vld [vmem:[%s0 + $0xf0] sm:$0xf]
  %v76 = vld [vmem:[%s0 + $0xf4] sm:$0xf]
  %v77 = vld [vmem:[%s0 + $0xf8] sm:$0xf]
  %v78 = vld [vmem:[%s0 + $0xfc] sm:$0xf]
  %v79 = vld [vmem:[%s1] sm:$0xf]
  %v80 = vld [vmem:[%s1 + $0x4] sm:$0xf]
  %v81 = vld [vmem:[%s1 + $0x8] sm:$0xf]
  %v82 = vld [vmem:[%s1 + $0xc] sm:$0x3]
  %v83 = vld [vmem:[%s2] sm:$0x1]
  %v85 = vlaneseq
  %v86 = vshrl.u32 %v85, 7
  %v87 = vsub.s32 0, %v86
  %v88 = vrot.slane %v83, %v87
  %v154 = vunpack.c.l.b16 %v15
  %v155 = vunpack.c.l.b16 %v16
  %v156 = vunpack.c.l.b16 %v17
  %v157 = vunpack.c.l.b16 %v18
  %v158 = vunpack.c.l.b16 %v19
  %v159 = vunpack.c.l.b16 %v20
  %v160 = vunpack.c.l.b16 %v21
  %v161 = vunpack.c.l.b16 %v22
  %v162 = vunpack.c.l.b16 %v23
  %v163 = vunpack.c.l.b16 %v24
  %v164 = vunpack.c.l.b16 %v25
  %v165 = vunpack.c.l.b16 %v26
  %v166 = vunpack.c.l.b16 %v27
  %v167 = vunpack.c.l.b16 %v28
  %v168 = vunpack.c.l.b16 %v29
  %v169 = vunpack.c.l.b16 %v30
  %v170 = vunpack.c.l.b16 %v31
  %v171 = vunpack.c.l.b16 %v32
  %v172 = vunpack.c.l.b16 %v33
  %v173 = vunpack.c.l.b16 %v34
  %v174 = vunpack.c.l.b16 %v35
  %v175 = vunpack.c.l.b16 %v36
  %v176 = vunpack.c.l.b16 %v37
  %v177 = vunpack.c.l.b16 %v38
  %v178 = vunpack.c.l.b16 %v39
  %v179 = vunpack.c.l.b16 %v40
  %v180 = vunpack.c.l.b16 %v41
  %v181 = vunpack.c.l.b16 %v42
  %v182 = vunpack.c.l.b16 %v43
  %v183 = vunpack.c.l.b16 %v44
  %v184 = vunpack.c.l.b16 %v45
  %v185 = vunpack.c.l.b16 %v46
  %v186 = vunpack.c.l.b16 %v47
  %v187 = vunpack.c.l.b16 %v48
  %v188 = vunpack.c.l.b16 %v49
  %v189 = vunpack.c.l.b16 %v50
  %v190 = vunpack.c.l.b16 %v51
  %v191 = vunpack.c.l.b16 %v52
  %v192 = vunpack.c.l.b16 %v53
  %v193 = vunpack.c.l.b16 %v54
  %v194 = vunpack.c.l.b16 %v55
  %v195 = vunpack.c.l.b16 %v56
  %v196 = vunpack.c.l.b16 %v57
  %v197 = vunpack.c.l.b16 %v58
  %v198 = vunpack.c.l.b16 %v59
  %v199 = vunpack.c.l.b16 %v60
  %v200 = vunpack.c.l.b16 %v61
  %v201 = vunpack.c.l.b16 %v62
  %v202 = vunpack.c.l.b16 %v63
  %v203 = vunpack.c.l.b16 %v64
  %v204 = vunpack.c.l.b16 %v65
  %v205 = vunpack.c.l.b16 %v66
  %v206 = vunpack.c.l.b16 %v67
  %v207 = vunpack.c.l.b16 %v68
  %v208 = vunpack.c.l.b16 %v69
  %v209 = vunpack.c.l.b16 %v70
  %v210 = vunpack.c.l.b16 %v71
  %v211 = vunpack.c.l.b16 %v72
  %v212 = vunpack.c.l.b16 %v73
  %v213 = vunpack.c.l.b16 %v74
  %v214 = vunpack.c.l.b16 %v75
  %v215 = vunpack.c.l.b16 %v76
  %v216 = vunpack.c.l.b16 %v77
  %v217 = vunpack.c.l.b16 %v78
  %v218 = vpack.c.b16 %v155, %v154
  %v219 = vpack.c.b16 %v157, %v156
  %v220 = vpack.c.b16 %v159, %v158
  %v221 = vpack.c.b16 %v161, %v160
  %v222 = vpack.c.b16 %v163, %v162
  %v223 = vpack.c.b16 %v165, %v164
  %v224 = vpack.c.b16 %v167, %v166
  %v225 = vpack.c.b16 %v169, %v168
  %v226 = vpack.c.b16 %v171, %v170
  %v227 = vpack.c.b16 %v173, %v172
  %v228 = vpack.c.b16 %v175, %v174
  %v229 = vpack.c.b16 %v177, %v176
  %v230 = vpack.c.b16 %v179, %v178
  %v231 = vpack.c.b16 %v181, %v180
  %v232 = vpack.c.b16 %v183, %v182
  %v233 = vpack.c.b16 %v185, %v184
  %v234 = vpack.c.b16 %v187, %v186
  %v235 = vpack.c.b16 %v189, %v188
  %v236 = vpack.c.b16 %v191, %v190
  %v237 = vpack.c.b16 %v193, %v192
  %v238 = vpack.c.b16 %v195, %v194
  %v239 = vpack.c.b16 %v197, %v196
  %v240 = vpack.c.b16 %v199, %v198
  %v241 = vpack.c.b16 %v201, %v200
  %v242 = vpack.c.b16 %v203, %v202
  %v243 = vpack.c.b16 %v205, %v204
  %v244 = vpack.c.b16 %v207, %v206
  %v245 = vpack.c.b16 %v209, %v208
  %v246 = vpack.c.b16 %v211, %v210
  %v247 = vpack.c.b16 %v213, %v212
  %v248 = vpack.c.b16 %v215, %v214
  %v249 = vpack.c.b16 %v217, %v216
  %v254 = vunpack.c.l.b16 %v79
  %v255 = vunpack.c.l.b16 %v80
  %v256 = vunpack.c.l.b16 %v81
  %v257 = vunpack.c.l.b16 %v82
  %v258 = vpack.c.b16 %v255, %v254
  %v259 = vpack.c.b16 %v257, %v256
  %vm261 = vcmask 220160
  %v263 = vsel %vm261, %v218, 0
  %v266 = vsel %vm261, %v219, 0
  %v269 = vsel %vm261, %v220, 0
  %v272 = vsel %vm261, %v221, 0
  %v275 = vsel %vm261, %v222, 0
  %v278 = vsel %vm261, %v223, 0
  %v281 = vsel %vm261, %v224, 0
  %v284 = vsel %vm261, %v225, 0
  %v287 = vsel %vm261, %v226, 0
  %v290 = vsel %vm261, %v227, 0
  %v293 = vsel %vm261, %v228, 0
  %v296 = vsel %vm261, %v229, 0
  %v299 = vsel %vm261, %v230, 0
  %v302 = vsel %vm261, %v231, 0
  %v305 = vsel %vm261, %v232, 0
  %v308 = vsel %vm261, %v233, 0
  %v311 = vsel %vm261, %v234, 0
  %v314 = vsel %vm261, %v235, 0
  %v317 = vsel %vm261, %v236, 0
  %v320 = vsel %vm261, %v237, 0
  %v323 = vsel %vm261, %v238, 0
  %v326 = vsel %vm261, %v239, 0
  %v329 = vsel %vm261, %v240, 0
  %v332 = vsel %vm261, %v241, 0
  %v335 = vsel %vm261, %v242, 0
  %v338 = vsel %vm261, %v243, 0
  %v341 = vsel %vm261, %v244, 0
  %v344 = vsel %vm261, %v245, 0
  %v347 = vsel %vm261, %v246, 0
  %v350 = vsel %vm261, %v247, 0
  %v353 = vsel %vm261, %v248, 0
  %v356 = vsel %vm261, %v249, 0
  %vm358 = vcmask 1044480
  %vm359 = vcmask 1045504
  %v360 = vsel %vm358, 4294967295, 65535
  %v361 = vsel %vm359, %v360, 0
  %v363 = vand.u32 %v259, %v361
  %365 = vmatprep.subr.bf16.mxu0 0
  %366 = vmatpush1.bf16.msra.mxu0 %v258
  %367 = vmatprep.subr.bf16.mxu0 0
  %368 = vmatpush1.bf16.msra.mxu0 %v363
  %369 = vmatprep.subr.bf16.mxu0 0
  %370 = vmatpush1.bf16.msra.mxu0 0
  %371 = vmatprep.subr.bf16.mxu0 0
  %372 = vmatpush1.bf16.msra.mxu0 0
  %373 = vmatprep.subr.bf16.mxu0 0
  %374 = vmatpush1.bf16.msra.mxu0 0
  %375 = vmatprep.subr.bf16.mxu0 0
  %376 = vmatpush1.bf16.msra.mxu0 0
  %377 = vmatprep.subr.bf16.mxu0 0
  %378 = vmatpush1.bf16.msra.mxu0 0
  %379 = vmatprep.subr.bf16.mxu0 0
  %380 = vmatpush1.bf16.msra.mxu0 0
  %381 = vmatprep.subr.bf16.mxu0 0
  %382 = vmatpush1.bf16.msra.mxu0 0
  %383 = vmatprep.subr.bf16.mxu0 0
  %384 = vmatpush1.bf16.msra.mxu0 0
  %385 = vmatprep.subr.bf16.mxu0 0
  %386 = vmatpush1.bf16.msra.mxu0 0
  %387 = vmatprep.subr.bf16.mxu0 0
  %388 = vmatpush1.bf16.msra.mxu0 0
  %389 = vmatprep.subr.bf16.mxu0 0
  %390 = vmatpush1.bf16.msra.mxu0 0
  %391 = vmatprep.subr.bf16.mxu0 0
  %392 = vmatpush1.bf16.msra.mxu0 0
  %393 = vmatprep.subr.bf16.mxu0 0
  %394 = vmatpush1.bf16.msra.mxu0 0
  %395 = vmatprep.subr.bf16.mxu0 0
  %396 = vmatpush1.bf16.msra.mxu0 0
  %397 = vmatprep.mubr.bf16.mxu0 0
  %398 = vmatmul.mubr.bf16.gmra.mrb[0].mxu0 %v263
  %v399 = vpop.f32.mrb[0].mxu0
  %v400 = vadd.f32 %v88, %v399
  %v401 = vpop.f32.mrb[0].mxu0
  %v402 = vpop.f32.mrb[0].mxu0
  %v403 = vadd.f32 %v88, %v402
  %v404 = vpop.f32.mrb[0].mxu0
  %405 = vmatprep.mubr.bf16.mxu0 0
  %406 = vmatmul.mubr.bf16.gmra.mrb[0].mxu0 %v266
  %v407 = vpop.f32.mrb[0].mxu0
  %v408 = vadd.f32 %v88, %v407
  %v409 = vpop.f32.mrb[0].mxu0
  %v410 = vpop.f32.mrb[0].mxu0
  %v411 = vadd.f32 %v88, %v410
  %v412 = vpop.f32.mrb[0].mxu0
  %413 = vmatprep.mubr.bf16.mxu0 0
  %414 = vmatmul.mubr.bf16.gmra.mrb[0].mxu0 %v269
  %v415 = vpop.f32.mrb[0].mxu0
  %v416 = vadd.f32 %v88, %v415
  %v417 = vpop.f32.mrb[0].mxu0
  %v418 = vpop.f32.mrb[0].mxu0
  %v419 = vadd.f32 %v88, %v418
  %v420 = vpop.f32.mrb[0].mxu0
  %421 = vmatprep.mubr.bf16.mxu0 0
  %422 = vmatmul.mubr.bf16.gmra.mrb[0].mxu0 %v272
  %v423 = vpop.f32.mrb[0].mxu0
  %v424 = vadd.f32 %v88, %v423
  %v425 = vpop.f32.mrb[0].mxu0
  %v426 = vpop.f32.mrb[0].mxu0
  %v427 = vadd.f32 %v88, %v426
  %v428 = vpop.f32.mrb[0].mxu0
  %429 = vmatprep.mubr.bf16.mxu0 0
  %430 = vmatmul.mubr.bf16.gmra.mrb[0].mxu0 %v275
  %v431 = vpop.f32.mrb[0].mxu0
  %v432 = vadd.f32 %v88, %v431
  %v433 = vpop.f32.mrb[0].mxu0
  %v434 = vpop.f32.mrb[0].mxu0
  %v435 = vadd.f32 %v88, %v434
  %v436 = vpop.f32.mrb[0].mxu0
  %437 = vmatprep.mubr.bf16.mxu0 0
  %438 = vmatmul.mubr.bf16.gmra.mrb[0].mxu0 %v278
  %v439 = vpop.f32.mrb[0].mxu0
  %v440 = vadd.f32 %v88, %v439
  %v441 = vpop.f32.mrb[0].mxu0
  %v442 = vpop.f32.mrb[0].mxu0
  %v443 = vadd.f32 %v88, %v442
  %v444 = vpop.f32.mrb[0].mxu0
  %445 = vmatprep.mubr.bf16.mxu0 0
  %446 = vmatmul.mubr.bf16.gmra.mrb[0].mxu0 %v281
  %v447 = vpop.f32.mrb[0].mxu0
  %v448 = vadd.f32 %v88, %v447
  %v449 = vpop.f32.mrb[0].mxu0
  %v450 = vpop.f32.mrb[0].mxu0
  %v451 = vadd.f32 %v88, %v450
  %v452 = vpop.f32.mrb[0].mxu0
  %453 = vmatprep.mubr.bf16.mxu0 0
  %454 = vmatmul.mubr.bf16.gmra.mrb[0].mxu0 %v284
  %v455 = vpop.f32.mrb[0].mxu0
  %v456 = vadd.f32 %v88, %v455
  %v457 = vpop.f32.mrb[0].mxu0
  %v458 = vpop.f32.mrb[0].mxu0
  %v459 = vadd.f32 %v88, %v458
  %v460 = vpop.f32.mrb[0].mxu0
  %461 = vmatprep.mubr.bf16.mxu0 0
  %462 = vmatmul.mubr.bf16.gmra.mrb[0].mxu0 %v287
  %v463 = vpop.f32.mrb[0].mxu0
  %v464 = vadd.f32 %v88, %v463
  %v465 = vpop.f32.mrb[0].mxu0
  %v466 = vpop.f32.mrb[0].mxu0
  %v467 = vadd.f32 %v88, %v466
  %v468 = vpop.f32.mrb[0].mxu0
  %469 = vmatprep.mubr.bf16.mxu0 0
  %470 = vmatmul.mubr.bf16.gmra.mrb[0].mxu0 %v290
  %v471 = vpop.f32.mrb[0].mxu0
  %v472 = vadd.f32 %v88, %v471
  %v473 = vpop.f32.mrb[0].mxu0
  %v474 = vpop.f32.mrb[0].mxu0
  %v475 = vadd.f32 %v88, %v474
  %v476 = vpop.f32.mrb[0].mxu0
  %477 = vmatprep.mubr.bf16.mxu0 0
  %478 = vmatmul.mubr.bf16.gmra.mrb[0].mxu0 %v293
  %v479 = vpop.f32.mrb[0].mxu0
  %v480 = vadd.f32 %v88, %v479
  %v481 = vpop.f32.mrb[0].mxu0
  %v482 = vpop.f32.mrb[0].mxu0
  %v483 = vadd.f32 %v88, %v482
  %v484 = vpop.f32.mrb[0].mxu0
  %485 = vmatprep.mubr.bf16.mxu0 0
  %486 = vmatmul.mubr.bf16.gmra.mrb[0].mxu0 %v296
  %v487 = vpop.f32.mrb[0].mxu0
  %v488 = vadd.f32 %v88, %v487
  %v489 = vpop.f32.mrb[0].mxu0
  %v490 = vpop.f32.mrb[0].mxu0
  %v491 = vadd.f32 %v88, %v490
  %v492 = vpop.f32.mrb[0].mxu0
  %493 = vmatprep.mubr.bf16.mxu0 0
  %494 = vmatmul.mubr.bf16.gmra.mrb[0].mxu0 %v299
  %v495 = vpop.f32.mrb[0].mxu0
  %v496 = vadd.f32 %v88, %v495
  %v497 = vpop.f32.mrb[0].mxu0
  %v498 = vpop.f32.mrb[0].mxu0
  %v499 = vadd.f32 %v88, %v498
  %v500 = vpop.f32.mrb[0].mxu0
  %501 = vmatprep.mubr.bf16.mxu0 0
  %502 = vmatmul.mubr.bf16.gmra.mrb[0].mxu0 %v302
  %v503 = vpop.f32.mrb[0].mxu0
  %v504 = vadd.f32 %v88, %v503
  %v505 = vpop.f32.mrb[0].mxu0
  %v506 = vpop.f32.mrb[0].mxu0
  %v507 = vadd.f32 %v88, %v506
  %v508 = vpop.f32.mrb[0].mxu0
  %509 = vmatprep.mubr.bf16.mxu0 0
  %510 = vmatmul.mubr.bf16.gmra.mrb[0].mxu0 %v305
  %v511 = vpop.f32.mrb[0].mxu0
  %v512 = vadd.f32 %v88, %v511
  %v513 = vpop.f32.mrb[0].mxu0
  %v514 = vpop.f32.mrb[0].mxu0
  %v515 = vadd.f32 %v88, %v514
  %v516 = vpop.f32.mrb[0].mxu0
  %517 = vmatprep.mubr.bf16.mxu0 0
  %518 = vmatmul.mubr.bf16.gmra.mrb[0].mxu0 %v308
  %v519 = vpop.f32.mrb[0].mxu0
  %v520 = vadd.f32 %v88, %v519
  %v521 = vpop.f32.mrb[0].mxu0
  %v522 = vpop.f32.mrb[0].mxu0
  %v523 = vadd.f32 %v88, %v522
  %v524 = vpop.f32.mrb[0].mxu0
  %525 = vmatprep.mubr.bf16.mxu0 0
  %526 = vmatmul.mubr.bf16.gmra.mrb[0].mxu0 %v311
  %v527 = vpop.f32.mrb[0].mxu0
  %v528 = vadd.f32 %v88, %v527
  %v529 = vpop.f32.mrb[0].mxu0
  %v530 = vpop.f32.mrb[0].mxu0
  %v531 = vadd.f32 %v88, %v530
  %v532 = vpop.f32.mrb[0].mxu0
  %533 = vmatprep.mubr.bf16.mxu0 0
  %534 = vmatmul.mubr.bf16.gmra.mrb[0].mxu0 %v314
  %v535 = vpop.f32.mrb[0].mxu0
  %v536 = vadd.f32 %v88, %v535
  %v537 = vpop.f32.mrb[0].mxu0
  %v538 = vpop.f32.mrb[0].mxu0
  %v539 = vadd.f32 %v88, %v538
  %v540 = vpop.f32.mrb[0].mxu0
  %541 = vmatprep.mubr.bf16.mxu0 0
  %542 = vmatmul.mubr.bf16.gmra.mrb[0].mxu0 %v317
  %v543 = vpop.f32.mrb[0].mxu0
  %v544 = vadd.f32 %v88, %v543
  %v545 = vpop.f32.mrb[0].mxu0
  %v546 = vpop.f32.mrb[0].mxu0
  %v547 = vadd.f32 %v88, %v546
  %v548 = vpop.f32.mrb[0].mxu0
  %549 = vmatprep.mubr.bf16.mxu0 0
  %550 = vmatmul.mubr.bf16.gmra.mrb[0].mxu0 %v320
  %v551 = vpop.f32.mrb[0].mxu0
  %v552 = vadd.f32 %v88, %v551
  %v553 = vpop.f32.mrb[0].mxu0
  %v554 = vpop.f32.mrb[0].mxu0
  %v555 = vadd.f32 %v88, %v554
  %v556 = vpop.f32.mrb[0].mxu0
  %557 = vmatprep.mubr.bf16.mxu0 0
  %558 = vmatmul.mubr.bf16.gmra.mrb[0].mxu0 %v323
  %v559 = vpop.f32.mrb[0].mxu0
  %v560 = vadd.f32 %v88, %v559
  %v561 = vpop.f32.mrb[0].mxu0
  %v562 = vpop.f32.mrb[0].mxu0
  %v563 = vadd.f32 %v88, %v562
  %v564 = vpop.f32.mrb[0].mxu0
  %565 = vmatprep.mubr.bf16.mxu0 0
  %566 = vmatmul.mubr.bf16.gmra.mrb[0].mxu0 %v326
  %v567 = vpop.f32.mrb[0].mxu0
  %v568 = vadd.f32 %v88, %v567
  %v569 = vpop.f32.mrb[0].mxu0
  %v570 = vpop.f32.mrb[0].mxu0
  %v571 = vadd.f32 %v88, %v570
  %v572 = vpop.f32.mrb[0].mxu0
  %573 = vmatprep.mubr.bf16.mxu0 0
  %574 = vmatmul.mubr.bf16.gmra.mrb[0].mxu0 %v329
  %v575 = vpop.f32.mrb[0].mxu0
  %v576 = vadd.f32 %v88, %v575
  %v577 = vpop.f32.mrb[0].mxu0
  %v578 = vpop.f32.mrb[0].mxu0
  %v579 = vadd.f32 %v88, %v578
  %v580 = vpop.f32.mrb[0].mxu0
  %581 = vmatprep.mubr.bf16.mxu0 0
  %582 = vmatmul.mubr.bf16.gmra.mrb[0].mxu0 %v332
  %v583 = vpop.f32.mrb[0].mxu0
  %v584 = vadd.f32 %v88, %v583
  %v585 = vpop.f32.mrb[0].mxu0
  %v586 = vpop.f32.mrb[0].mxu0
  %v587 = vadd.f32 %v88, %v586
  %v588 = vpop.f32.mrb[0].mxu0
  %589 = vmatprep.mubr.bf16.mxu0 0
  %590 = vmatmul.mubr.bf16.gmra.mrb[0].mxu0 %v335
  %v591 = vpop.f32.mrb[0].mxu0
  %v592 = vadd.f32 %v88, %v591
  %v593 = vpop.f32.mrb[0].mxu0
  %v594 = vpop.f32.mrb[0].mxu0
  %v595 = vadd.f32 %v88, %v594
  %v596 = vpop.f32.mrb[0].mxu0
  %597 = vmatprep.mubr.bf16.mxu0 0
  %598 = vmatmul.mubr.bf16.gmra.mrb[0].mxu0 %v338
  %v599 = vpop.f32.mrb[0].mxu0
  %v600 = vadd.f32 %v88, %v599
  %v601 = vpop.f32.mrb[0].mxu0
  %v602 = vpop.f32.mrb[0].mxu0
  %v603 = vadd.f32 %v88, %v602
  %v604 = vpop.f32.mrb[0].mxu0
  %605 = vmatprep.mubr.bf16.mxu0 0
  %606 = vmatmul.mubr.bf16.gmra.mrb[0].mxu0 %v341
  %v607 = vpop.f32.mrb[0].mxu0
  %v608 = vadd.f32 %v88, %v607
  %v609 = vpop.f32.mrb[0].mxu0
  %v610 = vpop.f32.mrb[0].mxu0
  %v611 = vadd.f32 %v88, %v610
  %v612 = vpop.f32.mrb[0].mxu0
  %613 = vmatprep.mubr.bf16.mxu0 0
  %614 = vmatmul.mubr.bf16.gmra.mrb[0].mxu0 %v344
  %v615 = vpop.f32.mrb[0].mxu0
  %v616 = vadd.f32 %v88, %v615
  %v617 = vpop.f32.mrb[0].mxu0
  %v618 = vpop.f32.mrb[0].mxu0
  %v619 = vadd.f32 %v88, %v618
  %v620 = vpop.f32.mrb[0].mxu0
  %621 = vmatprep.mubr.bf16.mxu0 0
  %622 = vmatmul.mubr.bf16.gmra.mrb[0].mxu0 %v347
  %v623 = vpop.f32.mrb[0].mxu0
  %v624 = vadd.f32 %v88, %v623
  %v625 = vpop.f32.mrb[0].mxu0
  %v626 = vpop.f32.mrb[0].mxu0
  %v627 = vadd.f32 %v88, %v626
  %v628 = vpop.f32.mrb[0].mxu0
  %629 = vmatprep.mubr.bf16.mxu0 0
  %630 = vmatmul.mubr.bf16.gmra.mrb[0].mxu0 %v350
  %v631 = vpop.f32.mrb[0].mxu0
  %v632 = vadd.f32 %v88, %v631
  %v633 = vpop.f32.mrb[0].mxu0
  %v634 = vpop.f32.mrb[0].mxu0
  %v635 = vadd.f32 %v88, %v634
  %v636 = vpop.f32.mrb[0].mxu0
  %637 = vmatprep.mubr.bf16.mxu0 0
  %638 = vmatmul.mubr.bf16.gmra.mrb[0].mxu0 %v353
  %v639 = vpop.f32.mrb[0].mxu0
  %v640 = vadd.f32 %v88, %v639
  %v641 = vpop.f32.mrb[0].mxu0
  %v642 = vpop.f32.mrb[0].mxu0
  %v643 = vadd.f32 %v88, %v642
  %v644 = vpop.f32.mrb[0].mxu0
  %645 = vmatprep.mubr.bf16.mxu0 0
  %646 = vmatmul.mubr.bf16.gmra.mrb[0].mxu0 %v356
  %v647 = vpop.f32.mrb[0].mxu0
  %v648 = vadd.f32 %v88, %v647
  %v649 = vpop.f32.mrb[0].mxu0
  %v650 = vpop.f32.mrb[0].mxu0
  %v651 = vadd.f32 %v88, %v650
  %v652 = vpop.f32.mrb[0].mxu0
  %653 = vdwg.mxu0
  %v654 = vxor.u32 %v400, 2147483648
  %v655 = vxor.u32 %v403, 2147483648
  %v656 = vxor.u32 %v408, 2147483648
  %v657 = vxor.u32 %v411, 2147483648
  %v658 = vxor.u32 %v416, 2147483648
  %v659 = vxor.u32 %v419, 2147483648
  %v660 = vxor.u32 %v424, 2147483648
  %v661 = vxor.u32 %v427, 2147483648
  %v662 = vxor.u32 %v432, 2147483648
  %v663 = vxor.u32 %v435, 2147483648
  %v664 = vxor.u32 %v440, 2147483648
  %v665 = vxor.u32 %v443, 2147483648
  %v666 = vxor.u32 %v448, 2147483648
  %v667 = vxor.u32 %v451, 2147483648
  %v668 = vxor.u32 %v456, 2147483648
  %v669 = vxor.u32 %v459, 2147483648
  %v670 = vxor.u32 %v464, 2147483648
  %v671 = vxor.u32 %v467, 2147483648
  %v672 = vxor.u32 %v472, 2147483648
  %v673 = vxor.u32 %v475, 2147483648
  %v674 = vxor.u32 %v480, 2147483648
  %v675 = vxor.u32 %v483, 2147483648
  %v676 = vxor.u32 %v488, 2147483648
  %v677 = vxor.u32 %v491, 2147483648
  %v678 = vxor.u32 %v496, 2147483648
  %v679 = vxor.u32 %v499, 2147483648
  %v680 = vxor.u32 %v504, 2147483648
  %v681 = vxor.u32 %v507, 2147483648
  %v682 = vxor.u32 %v512, 2147483648
  %v683 = vxor.u32 %v515, 2147483648
  %v684 = vxor.u32 %v520, 2147483648
  %v685 = vxor.u32 %v523, 2147483648
  %v686 = vxor.u32 %v528, 2147483648
  %v687 = vxor.u32 %v531, 2147483648
  %v688 = vxor.u32 %v536, 2147483648
  %v689 = vxor.u32 %v539, 2147483648
  %v690 = vxor.u32 %v544, 2147483648
  %v691 = vxor.u32 %v547, 2147483648
  %v692 = vxor.u32 %v552, 2147483648
  %v693 = vxor.u32 %v555, 2147483648
  %v694 = vxor.u32 %v560, 2147483648
  %v695 = vxor.u32 %v563, 2147483648
  %v696 = vxor.u32 %v568, 2147483648
  %v697 = vxor.u32 %v571, 2147483648
  %v698 = vxor.u32 %v576, 2147483648
  %v699 = vxor.u32 %v579, 2147483648
  %v700 = vxor.u32 %v584, 2147483648
  %v701 = vxor.u32 %v587, 2147483648
  %v702 = vxor.u32 %v592, 2147483648
  %v703 = vxor.u32 %v595, 2147483648
  %v704 = vxor.u32 %v600, 2147483648
  %v705 = vxor.u32 %v603, 2147483648
  %v706 = vxor.u32 %v608, 2147483648
  %v707 = vxor.u32 %v611, 2147483648
  %v708 = vxor.u32 %v616, 2147483648
  %v709 = vxor.u32 %v619, 2147483648
  %v710 = vxor.u32 %v624, 2147483648
  %v711 = vxor.u32 %v627, 2147483648
  %v712 = vxor.u32 %v632, 2147483648
  %v713 = vxor.u32 %v635, 2147483648
  %v714 = vxor.u32 %v640, 2147483648
  %v715 = vxor.u32 %v643, 2147483648
  %v716 = vxor.u32 %v648, 2147483648
  %v717 = vxor.u32 %v651, 2147483648
  %v718 = vmul.f32 %v654, 1.442695
  %v719 = vpow.pop %v718
  %v720 = vmul.f32 %v655, 1.442695
  %v721 = vpow.pop %v720
  %v722 = vmul.f32 %v656, 1.442695
  %v723 = vpow.pop %v722
  %v724 = vmul.f32 %v657, 1.442695
  %v725 = vpow.pop %v724
  %v726 = vmul.f32 %v658, 1.442695
  %v727 = vpow.pop %v726
  %v728 = vmul.f32 %v659, 1.442695
  %v729 = vpow.pop %v728
  %v730 = vmul.f32 %v660, 1.442695
  %v731 = vpow.pop %v730
  %v732 = vmul.f32 %v661, 1.442695
  %v733 = vpow.pop %v732
  %v734 = vmul.f32 %v662, 1.442695
  %v735 = vpow.pop %v734
  %v736 = vmul.f32 %v663, 1.442695
  %v737 = vpow.pop %v736
  %v738 = vmul.f32 %v664, 1.442695
  %v739 = vpow.pop %v738
  %v740 = vmul.f32 %v665, 1.442695
  %v741 = vpow.pop %v740
  %v742 = vmul.f32 %v666, 1.442695
  %v743 = vpow.pop %v742
  %v744 = vmul.f32 %v667, 1.442695
  %v745 = vpow.pop %v744
  %v746 = vmul.f32 %v668, 1.442695
  %v747 = vpow.pop %v746
  %v748 = vmul.f32 %v669, 1.442695
  %v749 = vpow.pop %v748
  %v750 = vmul.f32 %v670, 1.442695
  %v751 = vpow.pop %v750
  %v752 = vmul.f32 %v671, 1.442695
  %v753 = vpow.pop %v752
  %v754 = vmul.f32 %v672, 1.442695
  %v755 = vpow.pop %v754
  %v756 = vmul.f32 %v673, 1.442695
  %v757 = vpow.pop %v756
  %v758 = vmul.f32 %v674, 1.442695
  %v759 = vpow.pop %v758
  %v760 = vmul.f32 %v675, 1.442695
  %v761 = vpow.pop %v760
  %v762 = vmul.f32 %v676, 1.442695
  %v763 = vpow.pop %v762
  %v764 = vmul.f32 %v677, 1.442695
  %v765 = vpow.pop %v764
  %v766 = vmul.f32 %v678, 1.442695
  %v767 = vpow.pop %v766
  %v768 = vmul.f32 %v679, 1.442695
  %v769 = vpow.pop %v768
  %v770 = vmul.f32 %v680, 1.442695
  %v771 = vpow.pop %v770
  %v772 = vmul.f32 %v681, 1.442695
  %v773 = vpow.pop %v772
  %v774 = vmul.f32 %v682, 1.442695
  %v775 = vpow.pop %v774
  %v776 = vmul.f32 %v683, 1.442695
  %v777 = vpow.pop %v776
  %v778 = vmul.f32 %v684, 1.442695
  %v779 = vpow.pop %v778
  %v780 = vmul.f32 %v685, 1.442695
  %v781 = vpow.pop %v780
  %v782 = vmul.f32 %v686, 1.442695
  %v783 = vpow.pop %v782
  %v784 = vmul.f32 %v687, 1.442695
  %v785 = vpow.pop %v784
  %v786 = vmul.f32 %v688, 1.442695
  %v787 = vpow.pop %v786
  %v788 = vmul.f32 %v689, 1.442695
  %v789 = vpow.pop %v788
  %v790 = vmul.f32 %v690, 1.442695
  %v791 = vpow.pop %v790
  %v792 = vmul.f32 %v691, 1.442695
  %v793 = vpow.pop %v792
  %v794 = vmul.f32 %v692, 1.442695
  %v795 = vpow.pop %v794
  %v796 = vmul.f32 %v693, 1.442695
  %v797 = vpow.pop %v796
  %v798 = vmul.f32 %v694, 1.442695
  %v799 = vpow.pop %v798
  %v800 = vmul.f32 %v695, 1.442695
  %v801 = vpow.pop %v800
  %v802 = vmul.f32 %v696, 1.442695
  %v803 = vpow.pop %v802
  %v804 = vmul.f32 %v697, 1.442695
  %v805 = vpow.pop %v804
  %v806 = vmul.f32 %v698, 1.442695
  %v807 = vpow.pop %v806
  %v808 = vmul.f32 %v699, 1.442695
  %v809 = vpow.pop %v808
  %v810 = vmul.f32 %v700, 1.442695
  %v811 = vpow.pop %v810
  %v812 = vmul.f32 %v701, 1.442695
  %v813 = vpow.pop %v812
  %v814 = vmul.f32 %v702, 1.442695
  %v815 = vpow.pop %v814
  %v816 = vmul.f32 %v703, 1.442695
  %v817 = vpow.pop %v816
  %v818 = vmul.f32 %v704, 1.442695
  %v819 = vpow.pop %v818
  %v820 = vmul.f32 %v705, 1.442695
  %v821 = vpow.pop %v820
  %v822 = vmul.f32 %v706, 1.442695
  %v823 = vpow.pop %v822
  %v824 = vmul.f32 %v707, 1.442695
  %v825 = vpow.pop %v824
  %v826 = vmul.f32 %v708, 1.442695
  %v827 = vpow.pop %v826
  %v828 = vmul.f32 %v709, 1.442695
  %v829 = vpow.pop %v828
  %v830 = vmul.f32 %v710, 1.442695
  %v831 = vpow.pop %v830
  %v832 = vmul.f32 %v711, 1.442695
  %v833 = vpow.pop %v832
  %v834 = vmul.f32 %v712, 1.442695
  %v835 = vpow.pop %v834
  %v836 = vmul.f32 %v713, 1.442695
  %v837 = vpow.pop %v836
  %v838 = vmul.f32 %v714, 1.442695
  %v839 = vpow.pop %v838
  %v840 = vmul.f32 %v715, 1.442695
  %v841 = vpow.pop %v840
  %v842 = vmul.f32 %v716, 1.442695
  %v843 = vpow.pop %v842
  %v844 = vmul.f32 %v717, 1.442695
  %v845 = vpow.pop %v844
  %v846 = vadd.f32 %v719, 1.0
  %v847 = vadd.f32 %v721, 1.0
  %v848 = vadd.f32 %v723, 1.0
  %v849 = vadd.f32 %v725, 1.0
  %v850 = vadd.f32 %v727, 1.0
  %v851 = vadd.f32 %v729, 1.0
  %v852 = vadd.f32 %v731, 1.0
  %v853 = vadd.f32 %v733, 1.0
  %v854 = vadd.f32 %v735, 1.0
  %v855 = vadd.f32 %v737, 1.0
  %v856 = vadd.f32 %v739, 1.0
  %v857 = vadd.f32 %v741, 1.0
  %v858 = vadd.f32 %v743, 1.0
  %v859 = vadd.f32 %v745, 1.0
  %v860 = vadd.f32 %v747, 1.0
  %v861 = vadd.f32 %v749, 1.0
  %v862 = vadd.f32 %v751, 1.0
  %v863 = vadd.f32 %v753, 1.0
  %v864 = vadd.f32 %v755, 1.0
  %v865 = vadd.f32 %v757, 1.0
  %v866 = vadd.f32 %v759, 1.0
  %v867 = vadd.f32 %v761, 1.0
  %v868 = vadd.f32 %v763, 1.0
  %v869 = vadd.f32 %v765, 1.0
  %v870 = vadd.f32 %v767, 1.0
  %v871 = vadd.f32 %v769, 1.0
  %v872 = vadd.f32 %v771, 1.0
  %v873 = vadd.f32 %v773, 1.0
  %v874 = vadd.f32 %v775, 1.0
  %v875 = vadd.f32 %v777, 1.0
  %v876 = vadd.f32 %v779, 1.0
  %v877 = vadd.f32 %v781, 1.0
  %v878 = vadd.f32 %v783, 1.0
  %v879 = vadd.f32 %v785, 1.0
  %v880 = vadd.f32 %v787, 1.0
  %v881 = vadd.f32 %v789, 1.0
  %v882 = vadd.f32 %v791, 1.0
  %v883 = vadd.f32 %v793, 1.0
  %v884 = vadd.f32 %v795, 1.0
  %v885 = vadd.f32 %v797, 1.0
  %v886 = vadd.f32 %v799, 1.0
  %v887 = vadd.f32 %v801, 1.0
  %v888 = vadd.f32 %v803, 1.0
  %v889 = vadd.f32 %v805, 1.0
  %v890 = vadd.f32 %v807, 1.0
  %v891 = vadd.f32 %v809, 1.0
  %v892 = vadd.f32 %v811, 1.0
  %v893 = vadd.f32 %v813, 1.0
  %v894 = vadd.f32 %v815, 1.0
  %v895 = vadd.f32 %v817, 1.0
  %v896 = vadd.f32 %v819, 1.0
  %v897 = vadd.f32 %v821, 1.0
  %v898 = vadd.f32 %v823, 1.0
  %v899 = vadd.f32 %v825, 1.0
  %v900 = vadd.f32 %v827, 1.0
  %v901 = vadd.f32 %v829, 1.0
  %v902 = vadd.f32 %v831, 1.0
  %v903 = vadd.f32 %v833, 1.0
  %v904 = vadd.f32 %v835, 1.0
  %v905 = vadd.f32 %v837, 1.0
  %v906 = vadd.f32 %v839, 1.0
  %v907 = vadd.f32 %v841, 1.0
  %v908 = vadd.f32 %v843, 1.0
  %v909 = vadd.f32 %v845, 1.0
  %v910 = vrcp.pop %v846
  %v911 = vmul.f32 1.0, %v910
  %v912 = vrcp.pop %v847
  %v913 = vmul.f32 1.0, %v912
  %v914 = vrcp.pop %v848
  %v915 = vmul.f32 1.0, %v914
  %v916 = vrcp.pop %v849
  %v917 = vmul.f32 1.0, %v916
  %v918 = vrcp.pop %v850
  %v919 = vmul.f32 1.0, %v918
  %v920 = vrcp.pop %v851
  %v921 = vmul.f32 1.0, %v920
  %v922 = vrcp.pop %v852
  %v923 = vmul.f32 1.0, %v922
  %v924 = vrcp.pop %v853
  %v925 = vmul.f32 1.0, %v924
  %v926 = vrcp.pop %v854
  %v927 = vmul.f32 1.0, %v926
  %v928 = vrcp.pop %v855
  %v929 = vmul.f32 1.0, %v928
  %v930 = vrcp.pop %v856
  %v931 = vmul.f32 1.0, %v930
  %v932 = vrcp.pop %v857
  %v933 = vmul.f32 1.0, %v932
  %v934 = vrcp.pop %v858
  %v935 = vmul.f32 1.0, %v934
  %v936 = vrcp.pop %v859
  %v937 = vmul.f32 1.0, %v936
  %v938 = vrcp.pop %v860
  %v939 = vmul.f32 1.0, %v938
  %v940 = vrcp.pop %v861
  %v941 = vmul.f32 1.0, %v940
  %v942 = vrcp.pop %v862
  %v943 = vmul.f32 1.0, %v942
  %v944 = vrcp.pop %v863
  %v945 = vmul.f32 1.0, %v944
  %v946 = vrcp.pop %v864
  %v947 = vmul.f32 1.0, %v946
  %v948 = vrcp.pop %v865
  %v949 = vmul.f32 1.0, %v948
  %v950 = vrcp.pop %v866
  %v951 = vmul.f32 1.0, %v950
  %v952 = vrcp.pop %v867
  %v953 = vmul.f32 1.0, %v952
  %v954 = vrcp.pop %v868
  %v955 = vmul.f32 1.0, %v954
  %v956 = vrcp.pop %v869
  %v957 = vmul.f32 1.0, %v956
  %v958 = vrcp.pop %v870
  %v959 = vmul.f32 1.0, %v958
  %v960 = vrcp.pop %v871
  %v961 = vmul.f32 1.0, %v960
  %v962 = vrcp.pop %v872
  %v963 = vmul.f32 1.0, %v962
  %v964 = vrcp.pop %v873
  %v965 = vmul.f32 1.0, %v964
  %v966 = vrcp.pop %v874
  %v967 = vmul.f32 1.0, %v966
  %v968 = vrcp.pop %v875
  %v969 = vmul.f32 1.0, %v968
  %v970 = vrcp.pop %v876
  %v971 = vmul.f32 1.0, %v970
  %v972 = vrcp.pop %v877
  %v973 = vmul.f32 1.0, %v972
  %v974 = vrcp.pop %v878
  %v975 = vmul.f32 1.0, %v974
  %v976 = vrcp.pop %v879
  %v977 = vmul.f32 1.0, %v976
  %v978 = vrcp.pop %v880
  %v979 = vmul.f32 1.0, %v978
  %v980 = vrcp.pop %v881
  %v981 = vmul.f32 1.0, %v980
  %v982 = vrcp.pop %v882
  %v983 = vmul.f32 1.0, %v982
  %v984 = vrcp.pop %v883
  %v985 = vmul.f32 1.0, %v984
  %v986 = vrcp.pop %v884
  %v987 = vmul.f32 1.0, %v986
  %v988 = vrcp.pop %v885
  %v989 = vmul.f32 1.0, %v988
  %v990 = vrcp.pop %v886
  %v991 = vmul.f32 1.0, %v990
  %v992 = vrcp.pop %v887
  %v993 = vmul.f32 1.0, %v992
  %v994 = vrcp.pop %v888
  %v995 = vmul.f32 1.0, %v994
  %v996 = vrcp.pop %v889
  %v997 = vmul.f32 1.0, %v996
  %v998 = vrcp.pop %v890
  %v999 = vmul.f32 1.0, %v998
  %v1000 = vrcp.pop %v891
  %v1001 = vmul.f32 1.0, %v1000
  %v1002 = vrcp.pop %v892
  %v1003 = vmul.f32 1.0, %v1002
  %v1004 = vrcp.pop %v893
  %v1005 = vmul.f32 1.0, %v1004
  %v1006 = vrcp.pop %v894
  %v1007 = vmul.f32 1.0, %v1006
  %v1008 = vrcp.pop %v895
  %v1009 = vmul.f32 1.0, %v1008
  %v1010 = vrcp.pop %v896
  %v1011 = vmul.f32 1.0, %v1010
  %v1012 = vrcp.pop %v897
  %v1013 = vmul.f32 1.0, %v1012
  %v1014 = vrcp.pop %v898
  %v1015 = vmul.f32 1.0, %v1014
  %v1016 = vrcp.pop %v899
  %v1017 = vmul.f32 1.0, %v1016
  %v1018 = vrcp.pop %v900
  %v1019 = vmul.f32 1.0, %v1018
  %v1020 = vrcp.pop %v901
  %v1021 = vmul.f32 1.0, %v1020
  %v1022 = vrcp.pop %v902
  %v1023 = vmul.f32 1.0, %v1022
  %v1024 = vrcp.pop %v903
  %v1025 = vmul.f32 1.0, %v1024
  %v1026 = vrcp.pop %v904
  %v1027 = vmul.f32 1.0, %v1026
  %v1028 = vrcp.pop %v905
  %v1029 = vmul.f32 1.0, %v1028
  %v1030 = vrcp.pop %v906
  %v1031 = vmul.f32 1.0, %v1030
  %v1032 = vrcp.pop %v907
  %v1033 = vmul.f32 1.0, %v1032
  %v1034 = vrcp.pop %v908
  %v1035 = vmul.f32 1.0, %v1034
  %v1036 = vrcp.pop %v909
  %v1037 = vmul.f32 1.0, %v1036
  %v1038 = vmul.f32 %v400, %v911
  %v1039 = vmul.f32 %v403, %v913
  %v1040 = vmul.f32 %v408, %v915
  %v1041 = vmul.f32 %v411, %v917
  %v1042 = vmul.f32 %v416, %v919
  %v1043 = vmul.f32 %v419, %v921
  %v1044 = vmul.f32 %v424, %v923
  %v1045 = vmul.f32 %v427, %v925
  %v1046 = vmul.f32 %v432, %v927
  %v1047 = vmul.f32 %v435, %v929
  %v1048 = vmul.f32 %v440, %v931
  %v1049 = vmul.f32 %v443, %v933
  %v1050 = vmul.f32 %v448, %v935
  %v1051 = vmul.f32 %v451, %v937
  %v1052 = vmul.f32 %v456, %v939
  %v1053 = vmul.f32 %v459, %v941
  %v1054 = vmul.f32 %v464, %v943
  %v1055 = vmul.f32 %v467, %v945
  %v1056 = vmul.f32 %v472, %v947
  %v1057 = vmul.f32 %v475, %v949
  %v1058 = vmul.f32 %v480, %v951
  %v1059 = vmul.f32 %v483, %v953
  %v1060 = vmul.f32 %v488, %v955
  %v1061 = vmul.f32 %v491, %v957
  %v1062 = vmul.f32 %v496, %v959
  %v1063 = vmul.f32 %v499, %v961
  %v1064 = vmul.f32 %v504, %v963
  %v1065 = vmul.f32 %v507, %v965
  %v1066 = vmul.f32 %v512, %v967
  %v1067 = vmul.f32 %v515, %v969
  %v1068 = vmul.f32 %v520, %v971
  %v1069 = vmul.f32 %v523, %v973
  %v1070 = vmul.f32 %v528, %v975
  %v1071 = vmul.f32 %v531, %v977
  %v1072 = vmul.f32 %v536, %v979
  %v1073 = vmul.f32 %v539, %v981
  %v1074 = vmul.f32 %v544, %v983
  %v1075 = vmul.f32 %v547, %v985
  %v1076 = vmul.f32 %v552, %v987
  %v1077 = vmul.f32 %v555, %v989
  %v1078 = vmul.f32 %v560, %v991
  %v1079 = vmul.f32 %v563, %v993
  %v1080 = vmul.f32 %v568, %v995
  %v1081 = vmul.f32 %v571, %v997
  %v1082 = vmul.f32 %v576, %v999
  %v1083 = vmul.f32 %v579, %v1001
  %v1084 = vmul.f32 %v584, %v1003
  %v1085 = vmul.f32 %v587, %v1005
  %v1086 = vmul.f32 %v592, %v1007
  %v1087 = vmul.f32 %v595, %v1009
  %v1088 = vmul.f32 %v600, %v1011
  %v1089 = vmul.f32 %v603, %v1013
  %v1090 = vmul.f32 %v608, %v1015
  %v1091 = vmul.f32 %v611, %v1017
  %v1092 = vmul.f32 %v616, %v1019
  %v1093 = vmul.f32 %v619, %v1021
  %v1094 = vmul.f32 %v624, %v1023
  %v1095 = vmul.f32 %v627, %v1025
  %v1096 = vmul.f32 %v632, %v1027
  %v1097 = vmul.f32 %v635, %v1029
  %v1098 = vmul.f32 %v640, %v1031
  %v1099 = vmul.f32 %v643, %v1033
  %v1100 = vmul.f32 %v648, %v1035
  %v1101 = vmul.f32 %v651, %v1037
  %v1102 = vpack.c.bf16 %v1039, %v1038
  %v1103 = vpack.c.bf16 %v1041, %v1040
  %v1104 = vpack.c.bf16 %v1043, %v1042
  %v1105 = vpack.c.bf16 %v1045, %v1044
  %v1106 = vpack.c.bf16 %v1047, %v1046
  %v1107 = vpack.c.bf16 %v1049, %v1048
  %v1108 = vpack.c.bf16 %v1051, %v1050
  %v1109 = vpack.c.bf16 %v1053, %v1052
  %v1110 = vpack.c.bf16 %v1055, %v1054
  %v1111 = vpack.c.bf16 %v1057, %v1056
  %v1112 = vpack.c.bf16 %v1059, %v1058
  %v1113 = vpack.c.bf16 %v1061, %v1060
  %v1114 = vpack.c.bf16 %v1063, %v1062
  %v1115 = vpack.c.bf16 %v1065, %v1064
  %v1116 = vpack.c.bf16 %v1067, %v1066
  %v1117 = vpack.c.bf16 %v1069, %v1068
  %v1118 = vpack.c.bf16 %v1071, %v1070
  %v1119 = vpack.c.bf16 %v1073, %v1072
  %v1120 = vpack.c.bf16 %v1075, %v1074
  %v1121 = vpack.c.bf16 %v1077, %v1076
  %v1122 = vpack.c.bf16 %v1079, %v1078
  %v1123 = vpack.c.bf16 %v1081, %v1080
  %v1124 = vpack.c.bf16 %v1083, %v1082
  %v1125 = vpack.c.bf16 %v1085, %v1084
  %v1126 = vpack.c.bf16 %v1087, %v1086
  %v1127 = vpack.c.bf16 %v1089, %v1088
  %v1128 = vpack.c.bf16 %v1091, %v1090
  %v1129 = vpack.c.bf16 %v1093, %v1092
  %v1130 = vpack.c.bf16 %v1095, %v1094
  %v1131 = vpack.c.bf16 %v1097, %v1096
  %v1132 = vpack.c.bf16 %v1099, %v1098
  %v1133 = vpack.c.bf16 %v1101, %v1100
  %v1166 = vunpack.c.l.b16 %v1102
  %v1167 = vunpack.c.h.b16 %v1102
  %v1168 = vunpack.c.l.b16 %v1103
  %v1169 = vunpack.c.h.b16 %v1103
  %v1170 = vunpack.c.l.b16 %v1104
  %v1171 = vunpack.c.h.b16 %v1104
  %v1172 = vunpack.c.l.b16 %v1105
  %v1173 = vunpack.c.h.b16 %v1105
  %v1174 = vunpack.c.l.b16 %v1106
  %v1175 = vunpack.c.h.b16 %v1106
  %v1176 = vunpack.c.l.b16 %v1107
  %v1177 = vunpack.c.h.b16 %v1107
  %v1178 = vunpack.c.l.b16 %v1108
  %v1179 = vunpack.c.h.b16 %v1108
  %v1180 = vunpack.c.l.b16 %v1109
  %v1181 = vunpack.c.h.b16 %v1109
  %v1182 = vunpack.c.l.b16 %v1110
  %v1183 = vunpack.c.h.b16 %v1110
  %v1184 = vunpack.c.l.b16 %v1111
  %v1185 = vunpack.c.h.b16 %v1111
  %v1186 = vunpack.c.l.b16 %v1112
  %v1187 = vunpack.c.h.b16 %v1112
  %v1188 = vunpack.c.l.b16 %v1113
  %v1189 = vunpack.c.h.b16 %v1113
  %v1190 = vunpack.c.l.b16 %v1114
  %v1191 = vunpack.c.h.b16 %v1114
  %v1192 = vunpack.c.l.b16 %v1115
  %v1193 = vunpack.c.h.b16 %v1115
  %v1194 = vunpack.c.l.b16 %v1116
  %v1195 = vunpack.c.h.b16 %v1116
  %v1196 = vunpack.c.l.b16 %v1117
  %v1197 = vunpack.c.h.b16 %v1117
  %v1198 = vunpack.c.l.b16 %v1118
  %v1199 = vunpack.c.h.b16 %v1118
  %v1200 = vunpack.c.l.b16 %v1119
  %v1201 = vunpack.c.h.b16 %v1119
  %v1202 = vunpack.c.l.b16 %v1120
  %v1203 = vunpack.c.h.b16 %v1120
  %v1204 = vunpack.c.l.b16 %v1121
  %v1205 = vunpack.c.h.b16 %v1121
  %v1206 = vunpack.c.l.b16 %v1122
  %v1207 = vunpack.c.h.b16 %v1122
  %v1208 = vunpack.c.l.b16 %v1123
  %v1209 = vunpack.c.h.b16 %v1123
  %v1210 = vunpack.c.l.b16 %v1124
  %v1211 = vunpack.c.h.b16 %v1124
  %v1212 = vunpack.c.l.b16 %v1125
  %v1213 = vunpack.c.h.b16 %v1125
  %v1214 = vunpack.c.l.b16 %v1126
  %v1215 = vunpack.c.h.b16 %v1126
  %v1216 = vunpack.c.l.b16 %v1127
  %v1217 = vunpack.c.h.b16 %v1127
  %v1218 = vunpack.c.l.b16 %v1128
  %v1219 = vunpack.c.h.b16 %v1128
  %v1220 = vunpack.c.l.b16 %v1129
  %v1221 = vunpack.c.h.b16 %v1129
  %v1222 = vunpack.c.l.b16 %v1130
  %v1223 = vunpack.c.h.b16 %v1130
  %v1224 = vunpack.c.l.b16 %v1131
  %v1225 = vunpack.c.h.b16 %v1131
  %v1226 = vunpack.c.l.b16 %v1132
  %v1227 = vunpack.c.h.b16 %v1132
  %v1228 = vunpack.c.l.b16 %v1133
  %v1229 = vunpack.c.h.b16 %v1133
  %v1230 = vpack.c.b16 %v1166, %v1166
  %v1231 = vpack.c.b16 %v1167, %v1167
  %v1232 = vpack.c.b16 %v1168, %v1168
  %v1233 = vpack.c.b16 %v1169, %v1169
  %v1234 = vpack.c.b16 %v1170, %v1170
  %v1235 = vpack.c.b16 %v1171, %v1171
  %v1236 = vpack.c.b16 %v1172, %v1172
  %v1237 = vpack.c.b16 %v1173, %v1173
  %v1238 = vpack.c.b16 %v1174, %v1174
  %v1239 = vpack.c.b16 %v1175, %v1175
  %v1240 = vpack.c.b16 %v1176, %v1176
  %v1241 = vpack.c.b16 %v1177, %v1177
  %v1242 = vpack.c.b16 %v1178, %v1178
  %v1243 = vpack.c.b16 %v1179, %v1179
  %v1244 = vpack.c.b16 %v1180, %v1180
  %v1245 = vpack.c.b16 %v1181, %v1181
  %v1246 = vpack.c.b16 %v1182, %v1182
  %v1247 = vpack.c.b16 %v1183, %v1183
  %v1248 = vpack.c.b16 %v1184, %v1184
  %v1249 = vpack.c.b16 %v1185, %v1185
  %v1250 = vpack.c.b16 %v1186, %v1186
  %v1251 = vpack.c.b16 %v1187, %v1187
  %v1252 = vpack.c.b16 %v1188, %v1188
  %v1253 = vpack.c.b16 %v1189, %v1189
  %v1254 = vpack.c.b16 %v1190, %v1190
  %v1255 = vpack.c.b16 %v1191, %v1191
  %v1256 = vpack.c.b16 %v1192, %v1192
  %v1257 = vpack.c.b16 %v1193, %v1193
  %v1258 = vpack.c.b16 %v1194, %v1194
  %v1259 = vpack.c.b16 %v1195, %v1195
  %v1260 = vpack.c.b16 %v1196, %v1196
  %v1261 = vpack.c.b16 %v1197, %v1197
  %v1262 = vpack.c.b16 %v1198, %v1198
  %v1263 = vpack.c.b16 %v1199, %v1199
  %v1264 = vpack.c.b16 %v1200, %v1200
  %v1265 = vpack.c.b16 %v1201, %v1201
  %v1266 = vpack.c.b16 %v1202, %v1202
  %v1267 = vpack.c.b16 %v1203, %v1203
  %v1268 = vpack.c.b16 %v1204, %v1204
  %v1269 = vpack.c.b16 %v1205, %v1205
  %v1270 = vpack.c.b16 %v1206, %v1206
  %v1271 = vpack.c.b16 %v1207, %v1207
  %v1272 = vpack.c.b16 %v1208, %v1208
  %v1273 = vpack.c.b16 %v1209, %v1209
  %v1274 = vpack.c.b16 %v1210, %v1210
  %v1275 = vpack.c.b16 %v1211, %v1211
  %v1276 = vpack.c.b16 %v1212, %v1212
  %v1277 = vpack.c.b16 %v1213, %v1213
  %v1278 = vpack.c.b16 %v1214, %v1214
  %v1279 = vpack.c.b16 %v1215, %v1215
  %v1280 = vpack.c.b16 %v1216, %v1216
  %v1281 = vpack.c.b16 %v1217, %v1217
  %v1282 = vpack.c.b16 %v1218, %v1218
  %v1283 = vpack.c.b16 %v1219, %v1219
  %v1284 = vpack.c.b16 %v1220, %v1220
  %v1285 = vpack.c.b16 %v1221, %v1221
  %v1286 = vpack.c.b16 %v1222, %v1222
  %v1287 = vpack.c.b16 %v1223, %v1223
  %v1288 = vpack.c.b16 %v1224, %v1224
  %v1289 = vpack.c.b16 %v1225, %v1225
  %v1290 = vpack.c.b16 %v1226, %v1226
  %v1291 = vpack.c.b16 %v1227, %v1227
  %v1292 = vpack.c.b16 %v1228, %v1228
  %v1293 = vpack.c.b16 %v1229, %v1229
  %vm1358 = vcmask 125952
  %1359 = vst.msk [vmem:[%s3] sm:$0xf] %vm1358, %v1230
  %1360 = vst.msk [vmem:[%s3 + $0x4] sm:$0xf] %vm1358, %v1231
  %1361 = vst.msk [vmem:[%s3 + $0x8] sm:$0xf] %vm1358, %v1232
  %1362 = vst.msk [vmem:[%s3 + $0xc] sm:$0xf] %vm1358, %v1233
  %1363 = vst.msk [vmem:[%s3 + $0x10] sm:$0xf] %vm1358, %v1234
  %1364 = vst.msk [vmem:[%s3 + $0x14] sm:$0xf] %vm1358, %v1235
  %1365 = vst.msk [vmem:[%s3 + $0x18] sm:$0xf] %vm1358, %v1236
  %1366 = vst.msk [vmem:[%s3 + $0x1c] sm:$0xf] %vm1358, %v1237
  %1367 = vst.msk [vmem:[%s3 + $0x20] sm:$0xf] %vm1358, %v1238
  %1368 = vst.msk [vmem:[%s3 + $0x24] sm:$0xf] %vm1358, %v1239
  %1369 = vst.msk [vmem:[%s3 + $0x28] sm:$0xf] %vm1358, %v1240
  %1370 = vst.msk [vmem:[%s3 + $0x2c] sm:$0xf] %vm1358, %v1241
  %1371 = vst.msk [vmem:[%s3 + $0x30] sm:$0xf] %vm1358, %v1242
  %1372 = vst.msk [vmem:[%s3 + $0x34] sm:$0xf] %vm1358, %v1243
  %1373 = vst.msk [vmem:[%s3 + $0x38] sm:$0xf] %vm1358, %v1244
  %1374 = vst.msk [vmem:[%s3 + $0x3c] sm:$0xf] %vm1358, %v1245
  %1375 = vst.msk [vmem:[%s3 + $0x40] sm:$0xf] %vm1358, %v1246
  %1376 = vst.msk [vmem:[%s3 + $0x44] sm:$0xf] %vm1358, %v1247
  %1377 = vst.msk [vmem:[%s3 + $0x48] sm:$0xf] %vm1358, %v1248
  %1378 = vst.msk [vmem:[%s3 + $0x4c] sm:$0xf] %vm1358, %v1249
  %1379 = vst.msk [vmem:[%s3 + $0x50] sm:$0xf] %vm1358, %v1250
  %1380 = vst.msk [vmem:[%s3 + $0x54] sm:$0xf] %vm1358, %v1251
  %1381 = vst.msk [vmem:[%s3 + $0x58] sm:$0xf] %vm1358, %v1252
  %1382 = vst.msk [vmem:[%s3 + $0x5c] sm:$0xf] %vm1358, %v1253
  %1383 = vst.msk [vmem:[%s3 + $0x60] sm:$0xf] %vm1358, %v1254
  %1384 = vst.msk [vmem:[%s3 + $0x64] sm:$0xf] %vm1358, %v1255
  %1385 = vst.msk [vmem:[%s3 + $0x68] sm:$0xf] %vm1358, %v1256
  %1386 = vst.msk [vmem:[%s3 + $0x6c] sm:$0xf] %vm1358, %v1257
  %1387 = vst.msk [vmem:[%s3 + $0x70] sm:$0xf] %vm1358, %v1258
  %1388 = vst.msk [vmem:[%s3 + $0x74] sm:$0xf] %vm1358, %v1259
  %1389 = vst.msk [vmem:[%s3 + $0x78] sm:$0xf] %vm1358, %v1260
  %1390 = vst.msk [vmem:[%s3 + $0x7c] sm:$0xf] %vm1358, %v1261
  %1391 = vst.msk [vmem:[%s3 + $0x80] sm:$0xf] %vm1358, %v1262
  %1392 = vst.msk [vmem:[%s3 + $0x84] sm:$0xf] %vm1358, %v1263
  %1393 = vst.msk [vmem:[%s3 + $0x88] sm:$0xf] %vm1358, %v1264
  %1394 = vst.msk [vmem:[%s3 + $0x8c] sm:$0xf] %vm1358, %v1265
  %1395 = vst.msk [vmem:[%s3 + $0x90] sm:$0xf] %vm1358, %v1266
  %1396 = vst.msk [vmem:[%s3 + $0x94] sm:$0xf] %vm1358, %v1267
  %1397 = vst.msk [vmem:[%s3 + $0x98] sm:$0xf] %vm1358, %v1268
  %1398 = vst.msk [vmem:[%s3 + $0x9c] sm:$0xf] %vm1358, %v1269
  %1399 = vst.msk [vmem:[%s3 + $0xa0] sm:$0xf] %vm1358, %v1270
  %1400 = vst.msk [vmem:[%s3 + $0xa4] sm:$0xf] %vm1358, %v1271
  %1401 = vst.msk [vmem:[%s3 + $0xa8] sm:$0xf] %vm1358, %v1272
  %1402 = vst.msk [vmem:[%s3 + $0xac] sm:$0xf] %vm1358, %v1273
  %1403 = vst.msk [vmem:[%s3 + $0xb0] sm:$0xf] %vm1358, %v1274
  %1404 = vst.msk [vmem:[%s3 + $0xb4] sm:$0xf] %vm1358, %v1275
  %1405 = vst.msk [vmem:[%s3 + $0xb8] sm:$0xf] %vm1358, %v1276
  %1406 = vst.msk [vmem:[%s3 + $0xbc] sm:$0xf] %vm1358, %v1277
  %1407 = vst.msk [vmem:[%s3 + $0xc0] sm:$0xf] %vm1358, %v1278
  %1408 = vst.msk [vmem:[%s3 + $0xc4] sm:$0xf] %vm1358, %v1279
  %1409 = vst.msk [vmem:[%s3 + $0xc8] sm:$0xf] %vm1358, %v1280
  %1410 = vst.msk [vmem:[%s3 + $0xcc] sm:$0xf] %vm1358, %v1281
  %1411 = vst.msk [vmem:[%s3 + $0xd0] sm:$0xf] %vm1358, %v1282
  %1412 = vst.msk [vmem:[%s3 + $0xd4] sm:$0xf] %vm1358, %v1283
  %1413 = vst.msk [vmem:[%s3 + $0xd8] sm:$0xf] %vm1358, %v1284
  %1414 = vst.msk [vmem:[%s3 + $0xdc] sm:$0xf] %vm1358, %v1285
  %1415 = vst.msk [vmem:[%s3 + $0xe0] sm:$0xf] %vm1358, %v1286
  %1416 = vst.msk [vmem:[%s3 + $0xe4] sm:$0xf] %vm1358, %v1287
  %1417 = vst.msk [vmem:[%s3 + $0xe8] sm:$0xf] %vm1358, %v1288
  %1418 = vst.msk [vmem:[%s3 + $0xec] sm:$0xf] %vm1358, %v1289
  %1419 = vst.msk [vmem:[%s3 + $0xf0] sm:$0xf] %vm1358, %v1290
  %1420 = vst.msk [vmem:[%s3 + $0xf4] sm:$0xf] %vm1358, %v1291
  %1421 = vst.msk [vmem:[%s3 + $0xf8] sm:$0xf] %vm1358, %v1292
  %1422 = vst.msk [vmem:[%s3 + $0xfc] sm:$0xf] %vm1358, %v1293
  // Predicated region
  $region14: #{efficientnet_forward.15} parent=0 // pred_check
    _
  $region15: #{efficientnet_forward.15} parent=0 // pred_check_branch
    %1424 = sbr.rel (0) target = $region17
  $region16: #{efficientnet_forward.15} parent=0 // pred_region
    _
  $region17: #{efficientnet_forward.15} parent=0 // pred_fallthru
    _
  // Predicated region
  $region18: #{efficientnet_forward.15} parent=0 // pred_check
    _
  $region19: #{efficientnet_forward.15} parent=0 // pred_check_branch
    %1426 = sbr.rel (0) target = $region21
  $region20: #{efficientnet_forward.15} parent=0 // pred_region
    _
  $region21: #{efficientnet_forward.15} parent=0 // pred_fallthru
    _

// kernel: efficientnet_forward.16
$region0: #{efficientnet_forward.16}
  #allocation0 [shape = 'u32[]', space=smem, size = 0x4, offset = 0x4, fixed_abs, tag = 'smem constant byte address 0x4 - core index']
  #allocation1 [shape = 'u32[144,128]{1,0:T(1,128)}', space=vmem, size = 0x12000, scoped, tag = 'internal scratch']
  %s0 = inlined_call_operand.vmem [shape: bf16[2,18,18,16], index: 0, kind: input, shape index: {}]
  %s1 = inlined_call_operand.vmem [shape: f32[9,16], index: 1, kind: input, shape index: {}]
  %s2 = inlined_call_operand.vmem [shape: f32[1,16], index: 2, kind: input, shape index: {}]
  %s3 = inlined_call_operand.vmem [shape: bf16[2,16,16,16], index: 3, kind: output, shape index: {0}]
  %s4 = inlined_call_operand.vmem [shape: f32[2,1,16], index: 4, kind: output, shape index: {1}]
  %5 = xla_tuple %s3, %s4
  %s6 = sld [smem:[#allocation0]]
  $region53: #{efficientnet_forward.16} parent=0
    _
  %s8 = ssub.s32 1, %s6
  %s9 = scalar_select 0, %s8, %s6
  loop: start=0, step=1, limit=4
  $region2: #{efficientnet_forward.16} parent=0 // loop_pre_header
    _
  $region3: #{efficientnet_forward.16} parent=0 // loop_header
    %s11 = sphi 0, %s15
    %p12 = scmp.ge.s32.totalorder %s11, 4
    %s21 = sphi 0, %s23
    %s24 = sphi 0, %s21
    %s25 = sphi 0, %s24
    %s41 = sphi 0, %s25
    %s45 = sphi 0, %s45
    %s47 = sphi 0, %s45
    %s48 = sphi 0, %s47
    %s62 = sphi 0, %s48
    %s66 = sphi 0, %s66
    %s68 = sphi 0, %s66
    %s69 = sphi 0, %s68
    %s83 = sphi 0, %s69
    %s89 = sphi 0, %s91
    %s92 = sphi 0, %s89
    %s93 = sphi 0, %s92
    %s109 = sphi 0, %s93
    %s115 = sphi 0, %s117
    %s118 = sphi 0, %s115
    %s119 = sphi 0, %s118
    %s135 = sphi 0, %s119
  $region4: #{efficientnet_forward.16} parent=0 // loop_header_branch
    %14 = sbr.rel (%p12) target = $region8
  $region5: #{efficientnet_forward.16} parent=0 // loop_body
    %s16 = ssub.s32 %s11, 1
    %s17 = ssub.s32 %s11, 2
    %s18 = sadd.s32 %s11, 1
    %s19 = ssub.s32 %s11, %s18
    %p20 = scmp.eq.s32.totalorder %s19, 0
    %s22 = sadd.s32 %s21, 1
    %s23 = scalar_select %p20, %s21, %s22
    %p26 = pneg %p20
    %p27 = scmp.eq.s32.totalorder %s11, 1
    %p28 = por %p26, %p27
    %p29 = scmp.ne.s32.totalorder %s21, %s24
    %p30 = scmp.eq.s32.totalorder %s11, 0
    %p31 = por %p29, %p30
    %p32 = scmp.ne.s32.totalorder %s21, %s24
    %p33 = scmp.eq.s32.totalorder %s16, 1
    %p34 = por %p32, %p33
    %p35 = scmp.ne.s32.totalorder %s24, %s25
    %p36 = scmp.eq.s32.totalorder %s16, 0
    %p37 = por %p35, %p36
    %p38 = scmp.ne.s32.totalorder %s24, %s25
    %p39 = scmp.eq.s32.totalorder %s17, 1
    %p40 = por %p38, %p39
    %p42 = scmp.ne.s32.totalorder %s25, %s41
    %p43 = scmp.eq.s32.totalorder %s17, 0
    %p44 = por %p42, %p43
    %s46 = sadd.s32 %s45, 1
    %p49 = scmp.eq.s32.totalorder %s11, 1
    %p50 = scmp.ne.s32.totalorder %s45, %s47
    %p51 = scmp.eq.s32.totalorder %s11, 0
    %p52 = por %p50, %p51
    %p53 = scmp.ne.s32.totalorder %s45, %s47
    %p54 = scmp.eq.s32.totalorder %s16, 1
    %p55 = por %p53, %p54
    %p56 = scmp.ne.s32.totalorder %s47, %s48
    %p57 = scmp.eq.s32.totalorder %s16, 0
    %p58 = por %p56, %p57
    %p59 = scmp.ne.s32.totalorder %s47, %s48
    %p60 = scmp.eq.s32.totalorder %s17, 1
    %p61 = por %p59, %p60
    %p63 = scmp.ne.s32.totalorder %s48, %s62
    %p64 = scmp.eq.s32.totalorder %s17, 0
    %p65 = por %p63, %p64
    %s67 = sadd.s32 %s66, 1
    %p70 = scmp.eq.s32.totalorder %s11, 1
    %p71 = scmp.ne.s32.totalorder %s66, %s68
    %p72 = scmp.eq.s32.totalorder %s11, 0
    %p73 = por %p71, %p72
    %p74 = scmp.ne.s32.totalorder %s66, %s68
    %p75 = scmp.eq.s32.totalorder %s16, 1
    %p76 = por %p74, %p75
    %p77 = scmp.ne.s32.totalorder %s68, %s69
    %p78 = scmp.eq.s32.totalorder %s16, 0
    %p79 = por %p77, %p78
    %p80 = scmp.ne.s32.totalorder %s68, %s69
    %p81 = scmp.eq.s32.totalorder %s17, 1
    %p82 = por %p80, %p81
    %p84 = scmp.ne.s32.totalorder %s69, %s83
    %p85 = scmp.eq.s32.totalorder %s17, 0
    %p86 = por %p84, %p85
    %s87 = ssub.s32 %s11, %s18
    %p88 = scmp.eq.s32.totalorder %s87, 0
    %s90 = sadd.s32 %s89, 1
    %s91 = scalar_select %p88, %s89, %s90
    %p94 = pneg %p88
    %p95 = scmp.eq.s32.totalorder %s11, 1
    %p96 = por %p94, %p95
    %p97 = scmp.ne.s32.totalorder %s89, %s92
    %p98 = scmp.eq.s32.totalorder %s11, 0
    %p99 = por %p97, %p98
    %p100 = scmp.ne.s32.totalorder %s89, %s92
    %p101 = scmp.eq.s32.totalorder %s16, 1
    %p102 = por %p100, %p101
    %p103 = scmp.ne.s32.totalorder %s92, %s93
    %p104 = scmp.eq.s32.totalorder %s16, 0
    %p105 = por %p103, %p104
    %p106 = scmp.ne.s32.totalorder %s92, %s93
    %p107 = scmp.eq.s32.totalorder %s17, 1
    %p108 = por %p106, %p107
    %p110 = scmp.ne.s32.totalorder %s93, %s109
    %p111 = scmp.eq.s32.totalorder %s17, 0
    %p112 = por %p110, %p111
    %s113 = ssub.s32 %s11, %s18
    %p114 = scmp.eq.s32.totalorder %s113, 0
    %s116 = sadd.s32 %s115, 1
    %s117 = scalar_select %p114, %s115, %s116
    %p120 = pneg %p114
    %p121 = scmp.eq.s32.totalorder %s11, 1
    %p122 = por %p120, %p121
    %p123 = scmp.ne.s32.totalorder %s115, %s118
    %p124 = scmp.eq.s32.totalorder %s11, 0
    %p125 = por %p123, %p124
    %p126 = scmp.ne.s32.totalorder %s115, %s118
    %p127 = scmp.eq.s32.totalorder %s16, 1
    %p128 = por %p126, %p127
    %p129 = scmp.ne.s32.totalorder %s118, %s119
    %p130 = scmp.eq.s32.totalorder %s16, 0
    %p131 = por %p129, %p130
    %p132 = scmp.ne.s32.totalorder %s118, %s119
    %p133 = scmp.eq.s32.totalorder %s17, 1
    %p134 = por %p132, %p133
    %p136 = scmp.ne.s32.totalorder %s119, %s135
    %p137 = scmp.eq.s32.totalorder %s17, 0
    %p138 = por %p136, %p137
    %p139 = scmp.le.s32.totalorder 1, %s11
    %p140 = scmp.lt.s32.totalorder %s11, 3
    %p141 = pnand %p139, %p140
    %p142 = pneg %p141
    // Predicated region
    $region9: #{efficientnet_forward.16} parent=5 // pred_check
      _
    $region10: #{efficientnet_forward.16} parent=5 // pred_check_branch
      %144 = sbr.rel (%p141) target = $region12
    $region11: #{efficientnet_forward.16} parent=5 // pred_region
      %s145 = ssub.s32 %s11, 1
      // Predicated region
      $region13: #{efficientnet_forward.16} parent=11 // pred_check
        %p146 = pneg %p58
      $region14: #{efficientnet_forward.16} parent=11 // pred_check_branch
        %148 = sbr.rel (%p146) target = $region16
      $region15: #{efficientnet_forward.16} parent=11 // pred_region
        _
      $region16: #{efficientnet_forward.16} parent=11 // pred_fallthru
        _
      // Predicated region
      $region17: #{efficientnet_forward.16} parent=11 // pred_check
        %p149 = pneg %p79
      $region18: #{efficientnet_forward.16} parent=11 // pred_check_branch
        %151 = sbr.rel (%p149) target = $region20
      $region19: #{efficientnet_forward.16} parent=11 // pred_region
        _
      $region20: #{efficientnet_forward.16} parent=11 // pred_fallthru
        _
    $region12: #{efficientnet_forward.16} parent=5 // pred_fallthru
      _
    %p152 = scmp.lt.s32.totalorder %s11, 2
    // Predicated region
    $region21: #{efficientnet_forward.16} parent=5 // pred_check
      %p153 = pneg %p152
    $region22: #{efficientnet_forward.16} parent=5 // pred_check_branch
      %155 = sbr.rel (%p153) target = $region24
    $region23: #{efficientnet_forward.16} parent=5 // pred_region
      // Predicated region
      $region25: #{efficientnet_forward.16} parent=23 // pred_check
        %p156 = pneg %p31
      $region26: #{efficientnet_forward.16} parent=23 // pred_check_branch
        %158 = sbr.rel (%p156) target = $region28
      $region27: #{efficientnet_forward.16} parent=23 // pred_region
        %p159 = scmp.lt.s32.totalorder %s11, 1
        %s160 = scalar_select %p159, %s11, 1
        %s161 = smul.addr %s160, 54
        %s162 = smul.addr %s161, 4
        %s163 = scalar_lea.vmem %s0, %s162
      $region28: #{efficientnet_forward.16} parent=23 // pred_fallthru
        _
    $region24: #{efficientnet_forward.16} parent=5 // pred_fallthru
      _
    %p164 = scmp.le.s32.totalorder 1, %s11
    %p165 = scmp.lt.s32.totalorder %s11, 3
    %p166 = pnand %p164, %p165
    %p167 = pneg %p166
    // Predicated region
    $region29: #{efficientnet_forward.16} parent=5 // pred_check
      _
    $region30: #{efficientnet_forward.16} parent=5 // pred_check_branch
      %169 = sbr.rel (%p166) target = $region32
    $region31: #{efficientnet_forward.16} parent=5 // pred_region
      %s170 = ssub.s32 %s11, 1
      %p171 = scmp.lt.s32.totalorder %s16, 1
      %s172 = scalar_select %p171, %s16, 1
      %s173 = smul.addr %s172, 54
      %s174 = smul.addr %s173, 4
      %s175 = scalar_lea.vmem %s0, %s174
      %p176 = pneg %p37
      %p177 = pneg %p34
      %p178 = pneg %p58
      %p179 = pneg %p55
      %p180 = pneg %p79
      %p181 = pneg %p76
      %p182 = pneg %p105
      %p183 = pneg %p102
      %p184 = scmp.lt.s32.totalorder %s16, 1
      %s185 = scalar_select %p184, %s16, 1
      %s186 = smul.addr %s185, 32
      %s187 = smul.addr %s186, 4
      %s188 = scalar_lea.vmem %s3, %s187
      %p189 = pneg %p131
      %p190 = pneg %p128
      %p191 = scmp.lt.s32.totalorder %s16, 1
      %s192 = scalar_select %p191, %s16, 1
      %s193 = scalar_lea.vmem %s4, %s192
      %p194 = scmp.lt.s32.totalorder %s16, 1
      %s195 = scalar_select %p194, %s16, 1
      %s196 = smul.addr %s195, 54
      %s197 = smul.addr %s196, 4
      %s198 = scalar_lea.vmem %s0, %s197
      %p199 = scmp.lt.s32.totalorder %s16, 1
      %s200 = scalar_select %p199, %s16, 1
      %s201 = smul.addr %s200, 32
      %s202 = smul.addr %s201, 4
      %s203 = scalar_lea.vmem %s3, %s202
      %p204 = scmp.lt.s32.totalorder %s16, 1
      %s205 = scalar_select %p204, %s16, 1
      %s206 = scalar_lea.vmem %s4, %s205
      %v207 = vld [vmem:[%s1] sm:$0xff]
      %v208 = vld [vmem:[%s1 + $0x8] sm:$0x1]
      %v209 = vld [vmem:[%s198] sm:$0xf]
      %v210 = vld [vmem:[%s198 + $0x4] sm:$0xf]
      %v211 = vld [vmem:[%s198 + $0x8] sm:$0x1]
      %v212 = vld [vmem:[%s198 + $0xc] sm:$0xf]
      %v213 = vld [vmem:[%s198 + $0x10] sm:$0xf]
      %v214 = vld [vmem:[%s198 + $0x14] sm:$0x1]
      %v215 = vld [vmem:[%s198 + $0x18] sm:$0xf]
      %v216 = vld [vmem:[%s198 + $0x1c] sm:$0xf]
      %v217 = vld [vmem:[%s198 + $0x20] sm:$0x1]
      %v218 = vld [vmem:[%s198 + $0x24] sm:$0xf]
      %v219 = vld [vmem:[%s198 + $0x28] sm:$0xf]
      %v220 = vld [vmem:[%s198 + $0x2c] sm:$0x1]
      %v221 = vld [vmem:[%s198 + $0x30] sm:$0xf]
      %v222 = vld [vmem:[%s198 + $0x34] sm:$0xf]
      %v223 = vld [vmem:[%s198 + $0x38] sm:$0x1]
      %v224 = vld [vmem:[%s198 + $0x3c] sm:$0xf]
      %v225 = vld [vmem:[%s198 + $0x40] sm:$0xf]
      %v226 = vld [vmem:[%s198 + $0x44] sm:$0x1]
      %v227 = vld [vmem:[%s198 + $0x48] sm:$0xf]
      %v228 = vld [vmem:[%s198 + $0x4c] sm:$0xf]
      %v229 = vld [vmem:[%s198 + $0x50] sm:$0x1]
      %v230 = vld [vmem:[%s198 + $0x54] sm:$0xf]
      %v231 = vld [vmem:[%s198 + $0x58] sm:$0xf]
      %v232 = vld [vmem:[%s198 + $0x5c] sm:$0x1]
      %v233 = vld [vmem:[%s198 + $0x60] sm:$0xf]
      %v234 = vld [vmem:[%s198 + $0x64] sm:$0xf]
      %v235 = vld [vmem:[%s198 + $0x68] sm:$0x1]
      %v236 = vld [vmem:[%s198 + $0x6c] sm:$0xf]
      %v237 = vld [vmem:[%s198 + $0x70] sm:$0xf]
      %v238 = vld [vmem:[%s198 + $0x74] sm:$0x1]
      %v239 = vld [vmem:[%s198 + $0x78] sm:$0xf]
      %v240 = vld [vmem:[%s198 + $0x7c] sm:$0xf]
      %v241 = vld [vmem:[%s198 + $0x80] sm:$0x1]
      %v242 = vld [vmem:[%s198 + $0x84] sm:$0xf]
      %v243 = vld [vmem:[%s198 + $0x88] sm:$0xf]
      %v244 = vld [vmem:[%s198 + $0x8c] sm:$0x1]
      %v245 = vld [vmem:[%s198 + $0x90] sm:$0xf]
      %v246 = vld [vmem:[%s198 + $0x94] sm:$0xf]
      %v247 = vld [vmem:[%s198 + $0x98] sm:$0x1]
      %v248 = vld [vmem:[%s198 + $0x9c] sm:$0xf]
      %v249 = vld [vmem:[%s198 + $0xa0] sm:$0xf]
      %v250 = vld [vmem:[%s198 + $0xa4] sm:$0x1]
      %v251 = vld [vmem:[%s198 + $0xa8] sm:$0xf]
      %v252 = vld [vmem:[%s198 + $0xac] sm:$0xf]
      %v253 = vld [vmem:[%s198 + $0xb0] sm:$0x1]
      %v254 = vld [vmem:[%s198 + $0xb4] sm:$0xf]
      %v255 = vld [vmem:[%s198 + $0xb8] sm:$0xf]
      %v256 = vld [vmem:[%s198 + $0xbc] sm:$0x1]
      %v257 = vld [vmem:[%s198 + $0xc0] sm:$0xf]
      %v258 = vld [vmem:[%s198 + $0xc4] sm:$0xf]
      %v259 = vld [vmem:[%s198 + $0xc8] sm:$0x1]
      %v260 = vld [vmem:[%s198 + $0xcc] sm:$0xf]
      %v261 = vld [vmem:[%s198 + $0xd0] sm:$0xf]
      %v262 = vld [vmem:[%s198 + $0xd4] sm:$0x1]
      %v263 = vunpack.c.l.bf16 %v209
      %v264 = vunpack.c.l.bf16 %v210
      %v265 = vunpack.c.l.bf16 %v212
      %v266 = vunpack.c.l.bf16 %v213
      %v267 = vunpack.c.l.bf16 %v215
      %v268 = vunpack.c.l.bf16 %v216
      %v269 = vunpack.c.l.bf16 %v218
      %v270 = vunpack.c.l.bf16 %v219
      %v271 = vunpack.c.l.bf16 %v221
      %v272 = vunpack.c.l.bf16 %v222
      %v273 = vunpack.c.l.bf16 %v224
      %v274 = vunpack.c.l.bf16 %v225
      %v275 = vunpack.c.l.bf16 %v227
      %v276 = vunpack.c.l.bf16 %v228
      %v277 = vunpack.c.l.bf16 %v230
      %v278 = vunpack.c.l.bf16 %v231
      %v279 = vunpack.c.l.bf16 %v233
      %v280 = vunpack.c.l.bf16 %v234
      %v281 = vunpack.c.l.bf16 %v236
      %v282 = vunpack.c.l.bf16 %v237
      %v283 = vunpack.c.l.bf16 %v239
      %v284 = vunpack.c.l.bf16 %v240
      %v285 = vunpack.c.l.bf16 %v242
      %v286 = vunpack.c.l.bf16 %v243
      %v287 = vunpack.c.l.bf16 %v245
      %v288 = vunpack.c.l.bf16 %v246
      %v289 = vunpack.c.l.bf16 %v248
      %v290 = vunpack.c.l.bf16 %v249
      %v291 = vunpack.c.l.bf16 %v251
      %v292 = vunpack.c.l.bf16 %v252
      %v293 = vunpack.c.l.bf16 %v254
      %v294 = vunpack.c.l.bf16 %v255
      %v295 = vlaneseq
      %v296 = vshrl.u32 %v295, 7
      %v297 = vsub.s32 0, %v296
      %v298 = vrot.slane %v207, %v297
      %v299 = vmul.f32 %v263, %v298
      %v300 = vmul.f32 %v264, %v298
      %v301 = vmul.f32 %v265, %v298
      %v302 = vmul.f32 %v266, %v298
      %v303 = vmul.f32 %v267, %v298
      %v304 = vmul.f32 %v268, %v298
      %v305 = vmul.f32 %v269, %v298
      %v306 = vmul.f32 %v270, %v298
      %v307 = vmul.f32 %v271, %v298
      %v308 = vmul.f32 %v272, %v298
      %v309 = vmul.f32 %v273, %v298
      %v310 = vmul.f32 %v274, %v298
      %v311 = vmul.f32 %v275, %v298
      %v312 = vmul.f32 %v276, %v298
      %v313 = vmul.f32 %v277, %v298
      %v314 = vmul.f32 %v278, %v298
      %v315 = vmul.f32 %v279, %v298
      %v316 = vmul.f32 %v280, %v298
      %v317 = vmul.f32 %v281, %v298
      %v318 = vmul.f32 %v282, %v298
      %v319 = vmul.f32 %v283, %v298
      %v320 = vmul.f32 %v284, %v298
      %v321 = vmul.f32 %v285, %v298
      %v322 = vmul.f32 %v286, %v298
      %v323 = vmul.f32 %v287, %v298
      %v324 = vmul.f32 %v288, %v298
      %v325 = vmul.f32 %v289, %v298
      %v326 = vmul.f32 %v290, %v298
      %v327 = vmul.f32 %v291, %v298
      %v328 = vmul.f32 %v292, %v298
      %v329 = vmul.f32 %v293, %v298
      %v330 = vmul.f32 %v294, %v298
      %v331 = vadd.f32 %v299, 0.0
      %v332 = vadd.f32 %v300, 0.0
      %v333 = vadd.f32 %v301, 0.0
      %v334 = vadd.f32 %v302, 0.0
      %v335 = vadd.f32 %v303, 0.0
      %v336 = vadd.f32 %v304, 0.0
      %v337 = vadd.f32 %v305, 0.0
      %v338 = vadd.f32 %v306, 0.0
      %v339 = vadd.f32 %v307, 0.0
      %v340 = vadd.f32 %v308, 0.0
      %v341 = vadd.f32 %v309, 0.0
      %v342 = vadd.f32 %v310, 0.0
      %v343 = vadd.f32 %v311, 0.0
      %v344 = vadd.f32 %v312, 0.0
      %v345 = vadd.f32 %v313, 0.0
      %v346 = vadd.f32 %v314, 0.0
      %v347 = vadd.f32 %v315, 0.0
      %v348 = vadd.f32 %v316, 0.0
      %v349 = vadd.f32 %v317, 0.0
      %v350 = vadd.f32 %v318, 0.0
      %v351 = vadd.f32 %v319, 0.0
      %v352 = vadd.f32 %v320, 0.0
      %v353 = vadd.f32 %v321, 0.0
      %v354 = vadd.f32 %v322, 0.0
      %v355 = vadd.f32 %v323, 0.0
      %v356 = vadd.f32 %v324, 0.0
      %v357 = vadd.f32 %v325, 0.0
      %v358 = vadd.f32 %v326, 0.0
      %v359 = vadd.f32 %v327, 0.0
      %v360 = vadd.f32 %v328, 0.0
      %v361 = vadd.f32 %v329, 0.0
      %v362 = vadd.f32 %v330, 0.0
      %v363 = vunpack.c.l.bf16 %v257
      %v364 = vunpack.c.l.bf16 %v258
      %v365 = vlaneseq
      %v366 = vshrl.u32 %v365, 7
      %v367 = vsub.s32 3, %v366
      %v368 = vrot.slane %v207, %v367
      %v369 = vmul.f32 %v265, %v368
      %v370 = vmul.f32 %v266, %v368
      %v371 = vmul.f32 %v267, %v368
      %v372 = vmul.f32 %v268, %v368
      %v373 = vmul.f32 %v269, %v368
      %v374 = vmul.f32 %v270, %v368
      %v375 = vmul.f32 %v271, %v368
      %v376 = vmul.f32 %v272, %v368
      %v377 = vmul.f32 %v273, %v368
      %v378 = vmul.f32 %v274, %v368
      %v379 = vmul.f32 %v275, %v368
      %v380 = vmul.f32 %v276, %v368
      %v381 = vmul.f32 %v277, %v368
      %v382 = vmul.f32 %v278, %v368
      %v383 = vmul.f32 %v279, %v368
      %v384 = vmul.f32 %v280, %v368
      %v385 = vmul.f32 %v281, %v368
      %v386 = vmul.f32 %v282, %v368
      %v387 = vmul.f32 %v283, %v368
      %v388 = vmul.f32 %v284, %v368
      %v389 = vmul.f32 %v285, %v368
      %v390 = vmul.f32 %v286, %v368
      %v391 = vmul.f32 %v287, %v368
      %v392 = vmul.f32 %v288, %v368
      %v393 = vmul.f32 %v289, %v368
      %v394 = vmul.f32 %v290, %v368
      %v395 = vmul.f32 %v291, %v368
      %v396 = vmul.f32 %v292, %v368
      %v397 = vmul.f32 %v293, %v368
      %v398 = vmul.f32 %v294, %v368
      %v399 = vmul.f32 %v363, %v368
      %v400 = vmul.f32 %v364, %v368
      %v401 = vadd.f32 %v331, %v369
      %v402 = vadd.f32 %v332, %v370
      %v403 = vadd.f32 %v333, %v371
      %v404 = vadd.f32 %v334, %v372
      %v405 = vadd.f32 %v335, %v373
      %v406 = vadd.f32 %v336, %v374
      %v407 = vadd.f32 %v337, %v375
      %v408 = vadd.f32 %v338, %v376
      %v409 = vadd.f32 %v339, %v377
      %v410 = vadd.f32 %v340, %v378
      %v411 = vadd.f32 %v341, %v379
      %v412 = vadd.f32 %v342, %v380
      %v413 = vadd.f32 %v343, %v381
      %v414 = vadd.f32 %v344, %v382
      %v415 = vadd.f32 %v345, %v383
      %v416 = vadd.f32 %v346, %v384
      %v417 = vadd.f32 %v347, %v385
      %v418 = vadd.f32 %v348, %v386
      %v419 = vadd.f32 %v349, %v387
      %v420 = vadd.f32 %v350, %v388
      %v421 = vadd.f32 %v351, %v389
      %v422 = vadd.f32 %v352, %v390
      %v423 = vadd.f32 %v353, %v391
      %v424 = vadd.f32 %v354, %v392
      %v425 = vadd.f32 %v355, %v393
      %v426 = vadd.f32 %v356, %v394
      %v427 = vadd.f32 %v357, %v395
      %v428 = vadd.f32 %v358, %v396
      %v429 = vadd.f32 %v359, %v397
      %v430 = vadd.f32 %v360, %v398
      %v431 = vadd.f32 %v361, %v399
      %v432 = vadd.f32 %v362, %v400
      %v433 = vunpack.c.l.bf16 %v260
      %v434 = vunpack.c.l.bf16 %v261
      %v435 = vlaneseq
      %v436 = vshrl.u32 %v435, 7
      %v437 = vsub.s32 6, %v436
      %v438 = vrot.slane %v207, %v437
      %v439 = vmul.f32 %v267, %v438
      %v440 = vmul.f32 %v268, %v438
      %v441 = vmul.f32 %v269, %v438
      %v442 = vmul.f32 %v270, %v438
      %v443 = vmul.f32 %v271, %v438
      %v444 = vmul.f32 %v272, %v438
      %v445 = vmul.f32 %v273, %v438
      %v446 = vmul.f32 %v274, %v438
      %v447 = vmul.f32 %v275, %v438
      %v448 = vmul.f32 %v276, %v438
      %v449 = vmul.f32 %v277, %v438
      %v450 = vmul.f32 %v278, %v438
      %v451 = vmul.f32 %v279, %v438
      %v452 = vmul.f32 %v280, %v438
      %v453 = vmul.f32 %v281, %v438
      %v454 = vmul.f32 %v282, %v438
      %v455 = vmul.f32 %v283, %v438
      %v456 = vmul.f32 %v284, %v438
      %v457 = vmul.f32 %v285, %v438
      %v458 = vmul.f32 %v286, %v438
      %v459 = vmul.f32 %v287, %v438
      %v460 = vmul.f32 %v288, %v438
      %v461 = vmul.f32 %v289, %v438
      %v462 = vmul.f32 %v290, %v438
      %v463 = vmul.f32 %v291, %v438
      %v464 = vmul.f32 %v292, %v438
      %v465 = vmul.f32 %v293, %v438
      %v466 = vmul.f32 %v294, %v438
      %v467 = vmul.f32 %v363, %v438
      %v468 = vmul.f32 %v364, %v438
      %v469 = vmul.f32 %v433, %v438
      %v470 = vmul.f32 %v434, %v438
      %v471 = vadd.f32 %v401, %v439
      %v472 = vadd.f32 %v402, %v440
      %v473 = vadd.f32 %v403, %v441
      %v474 = vadd.f32 %v404, %v442
      %v475 = vadd.f32 %v405, %v443
      %v476 = vadd.f32 %v406, %v444
      %v477 = vadd.f32 %v407, %v445
      %v478 = vadd.f32 %v408, %v446
      %v479 = vadd.f32 %v409, %v447
      %v480 = vadd.f32 %v410, %v448
      %v481 = vadd.f32 %v411, %v449
      %v482 = vadd.f32 %v412, %v450
      %v483 = vadd.f32 %v413, %v451
      %v484 = vadd.f32 %v414, %v452
      %v485 = vadd.f32 %v415, %v453
      %v486 = vadd.f32 %v416, %v454
      %v487 = vadd.f32 %v417, %v455
      %v488 = vadd.f32 %v418, %v456
      %v489 = vadd.f32 %v419, %v457
      %v490 = vadd.f32 %v420, %v458
      %v491 = vadd.f32 %v421, %v459
      %v492 = vadd.f32 %v422, %v460
      %v493 = vadd.f32 %v423, %v461
      %v494 = vadd.f32 %v424, %v462
      %v495 = vadd.f32 %v425, %v463
      %v496 = vadd.f32 %v426, %v464
      %v497 = vadd.f32 %v427, %v465
      %v498 = vadd.f32 %v428, %v466
      %v499 = vadd.f32 %v429, %v467
      %v500 = vadd.f32 %v430, %v468
      %v501 = vadd.f32 %v431, %v469
      %v502 = vadd.f32 %v432, %v470
      %v503 = vunpack.c.l.bf16 %v211
      %v504 = vunpack.c.l.bf16 %v214
      %v505 = vunpack.c.l.bf16 %v217
      %v506 = vunpack.c.l.bf16 %v220
      %v507 = vunpack.c.l.bf16 %v223
      %v508 = vunpack.c.l.bf16 %v226
      %v509 = vunpack.c.l.bf16 %v229
      %v510 = vunpack.c.l.bf16 %v232
      %v511 = vunpack.c.l.bf16 %v235
      %v512 = vunpack.c.l.bf16 %v238
      %v513 = vunpack.c.l.bf16 %v241
      %v514 = vunpack.c.l.bf16 %v244
      %v515 = vunpack.c.l.bf16 %v247
      %v516 = vunpack.c.l.bf16 %v250
      %v517 = vunpack.c.l.bf16 %v253
      %v518 = vunpack.c.l.bf16 %v256
      %v519 = vlaneseq
      %v520 = vshrl.u32 %v519, 7
      %v521 = vsub.s32 1, %v520
      %v522 = vrot.slane %v207, %v521
      %v523 = vmul.f32 %v263, %v522
      %v524 = vmul.f32 %v264, %v522
      %v525 = vmul.f32 %v503, %v522
      %v526 = vmul.f32 %v265, %v522
      %v527 = vmul.f32 %v266, %v522
      %v528 = vmul.f32 %v504, %v522
      %v529 = vmul.f32 %v267, %v522
      %v530 = vmul.f32 %v268, %v522
      %v531 = vmul.f32 %v505, %v522
      %v532 = vmul.f32 %v269, %v522
      %v533 = vmul.f32 %v270, %v522
      %v534 = vmul.f32 %v506, %v522
      %v535 = vmul.f32 %v271, %v522
      %v536 = vmul.f32 %v272, %v522
      %v537 = vmul.f32 %v507, %v522
      %v538 = vmul.f32 %v273, %v522
      %v539 = vmul.f32 %v274, %v522
      %v540 = vmul.f32 %v508, %v522
      %v541 = vmul.f32 %v275, %v522
      %v542 = vmul.f32 %v276, %v522
      %v543 = vmul.f32 %v509, %v522
      %v544 = vmul.f32 %v277, %v522
      %v545 = vmul.f32 %v278, %v522
      %v546 = vmul.f32 %v510, %v522
      %v547 = vmul.f32 %v279, %v522
      %v548 = vmul.f32 %v280, %v522
      %v549 = vmul.f32 %v511, %v522
      %v550 = vmul.f32 %v281, %v522
      %v551 = vmul.f32 %v282, %v522
      %v552 = vmul.f32 %v512, %v522
      %v553 = vmul.f32 %v283, %v522
      %v554 = vmul.f32 %v284, %v522
      %v555 = vmul.f32 %v513, %v522
      %v556 = vmul.f32 %v285, %v522
      %v557 = vmul.f32 %v286, %v522
      %v558 = vmul.f32 %v514, %v522
      %v559 = vmul.f32 %v287, %v522
      %v560 = vmul.f32 %v288, %v522
      %v561 = vmul.f32 %v515, %v522
      %v562 = vmul.f32 %v289, %v522
      %v563 = vmul.f32 %v290, %v522
      %v564 = vmul.f32 %v516, %v522
      %v565 = vmul.f32 %v291, %v522
      %v566 = vmul.f32 %v292, %v522
      %v567 = vmul.f32 %v517, %v522
      %v568 = vmul.f32 %v293, %v522
      %v569 = vmul.f32 %v294, %v522
      %v570 = vmul.f32 %v518, %v522
      %vm619 = vcmask 1046528
      %v620 = vrot.slane %v523, 1
      %v621 = vrot.slane %v524, 1
      %v622 = vsel %vm619, %v620, %v621
      %v623 = vrot.slane %v525, 1
      %v624 = vsel %vm619, %v621, %v623
      %v625 = vrot.slane %v526, 1
      %v626 = vrot.slane %v527, 1
      %v627 = vsel %vm619, %v625, %v626
      %v628 = vrot.slane %v528, 1
      %v629 = vsel %vm619, %v626, %v628
      %v630 = vrot.slane %v529, 1
      %v631 = vrot.slane %v530, 1
      %v632 = vsel %vm619, %v630, %v631
      %v633 = vrot.slane %v531, 1
      %v634 = vsel %vm619, %v631, %v633
      %v635 = vrot.slane %v532, 1
      %v636 = vrot.slane %v533, 1
      %v637 = vsel %vm619, %v635, %v636
      %v638 = vrot.slane %v534, 1
      %v639 = vsel %vm619, %v636, %v638
      %v640 = vrot.slane %v535, 1
      %v641 = vrot.slane %v536, 1
      %v642 = vsel %vm619, %v640, %v641
      %v643 = vrot.slane %v537, 1
      %v644 = vsel %vm619, %v641, %v643
      %v645 = vrot.slane %v538, 1
      %v646 = vrot.slane %v539, 1
      %v647 = vsel %vm619, %v645, %v646
      %v648 = vrot.slane %v540, 1
      %v649 = vsel %vm619, %v646, %v648
      %v650 = vrot.slane %v541, 1
      %v651 = vrot.slane %v542, 1
      %v652 = vsel %vm619, %v650, %v651
      %v653 = vrot.slane %v543, 1
      %v654 = vsel %vm619, %v651, %v653
      %v655 = vrot.slane %v544, 1
      %v656 = vrot.slane %v545, 1
      %v657 = vsel %vm619, %v655, %v656
      %v658 = vrot.slane %v546, 1
      %v659 = vsel %vm619, %v656, %v658
      %v660 = vrot.slane %v547, 1
      %v661 = vrot.slane %v548, 1
      %v662 = vsel %vm619, %v660, %v661
      %v663 = vrot.slane %v549, 1
      %v664 = vsel %vm619, %v661, %v663
      %v665 = vrot.slane %v550, 1
      %v666 = vrot.slane %v551, 1
      %v667 = vsel %vm619, %v665, %v666
      %v668 = vrot.slane %v552, 1
      %v669 = vsel %vm619, %v666, %v668
      %v670 = vrot.slane %v553, 1
      %v671 = vrot.slane %v554, 1
      %v672 = vsel %vm619, %v670, %v671
      %v673 = vrot.slane %v555, 1
      %v674 = vsel %vm619, %v671, %v673
      %v675 = vrot.slane %v556, 1
      %v676 = vrot.slane %v557, 1
      %v677 = vsel %vm619, %v675, %v676
      %v678 = vrot.slane %v558, 1
      %v679 = vsel %vm619, %v676, %v678
      %v680 = vrot.slane %v559, 1
      %v681 = vrot.slane %v560, 1
      %v682 = vsel %vm619, %v680, %v681
      %v683 = vrot.slane %v561, 1
      %v684 = vsel %vm619, %v681, %v683
      %v685 = vrot.slane %v562, 1
      %v686 = vrot.slane %v563, 1
      %v687 = vsel %vm619, %v685, %v686
      %v688 = vrot.slane %v564, 1
      %v689 = vsel %vm619, %v686, %v688
      %v690 = vrot.slane %v565, 1
      %v691 = vrot.slane %v566, 1
      %v692 = vsel %vm619, %v690, %v691
      %v693 = vrot.slane %v567, 1
      %v694 = vsel %vm619, %v691, %v693
      %v695 = vrot.slane %v568, 1
      %v696 = vrot.slane %v569, 1
      %v697 = vsel %vm619, %v695, %v696
      %v698 = vrot.slane %v570, 1
      %v699 = vsel %vm619, %v696, %v698
      %v732 = vadd.f32 %v471, %v622
      %v733 = vadd.f32 %v472, %v624
      %v734 = vadd.f32 %v473, %v627
      %v735 = vadd.f32 %v474, %v629
      %v736 = vadd.f32 %v475, %v632
      %v737 = vadd.f32 %v476, %v634
      %v738 = vadd.f32 %v477, %v637
      %v739 = vadd.f32 %v478, %v639
      %v740 = vadd.f32 %v479, %v642
      %v741 = vadd.f32 %v480, %v644
      %v742 = vadd.f32 %v481, %v647
      %v743 = vadd.f32 %v482, %v649
      %v744 = vadd.f32 %v483, %v652
      %v745 = vadd.f32 %v484, %v654
      %v746 = vadd.f32 %v485, %v657
      %v747 = vadd.f32 %v486, %v659
      %v748 = vadd.f32 %v487, %v662
      %v749 = vadd.f32 %v488, %v664
      %v750 = vadd.f32 %v489, %v667
      %v751 = vadd.f32 %v490, %v669
      %v752 = vadd.f32 %v491, %v672
      %v753 = vadd.f32 %v492, %v674
      %v754 = vadd.f32 %v493, %v677
      %v755 = vadd.f32 %v494, %v679
      %v756 = vadd.f32 %v495, %v682
      %v757 = vadd.f32 %v496, %v684
      %v758 = vadd.f32 %v497, %v687
      %v759 = vadd.f32 %v498, %v689
      %v760 = vadd.f32 %v499, %v692
      %v761 = vadd.f32 %v500, %v694
      %v762 = vadd.f32 %v501, %v697
      %v763 = vadd.f32 %v502, %v699
      %v764 = vunpack.c.l.bf16 %v259
      %v765 = vlaneseq
      %v766 = vshrl.u32 %v765, 7
      %v767 = vsub.s32 4, %v766
      %v768 = vrot.slane %v207, %v767
      %v769 = vmul.f32 %v265, %v768
      %v770 = vmul.f32 %v266, %v768
      %v771 = vmul.f32 %v504, %v768
      %v772 = vmul.f32 %v267, %v768
      %v773 = vmul.f32 %v268, %v768
      %v774 = vmul.f32 %v505, %v768
      %v775 = vmul.f32 %v269, %v768
      %v776 = vmul.f32 %v270, %v768
      %v777 = vmul.f32 %v506, %v768
      %v778 = vmul.f32 %v271, %v768
      %v779 = vmul.f32 %v272, %v768
      %v780 = vmul.f32 %v507, %v768
      %v781 = vmul.f32 %v273, %v768
      %v782 = vmul.f32 %v274, %v768
      %v783 = vmul.f32 %v508, %v768
      %v784 = vmul.f32 %v275, %v768
      %v785 = vmul.f32 %v276, %v768
      %v786 = vmul.f32 %v509, %v768
      %v787 = vmul.f32 %v277, %v768
      %v788 = vmul.f32 %v278, %v768
      %v789 = vmul.f32 %v510, %v768
      %v790 = vmul.f32 %v279, %v768
      %v791 = vmul.f32 %v280, %v768
      %v792 = vmul.f32 %v511, %v768
      %v793 = vmul.f32 %v281, %v768
      %v794 = vmul.f32 %v282, %v768
      %v795 = vmul.f32 %v512, %v768
      %v796 = vmul.f32 %v283, %v768
      %v797 = vmul.f32 %v284, %v768
      %v798 = vmul.f32 %v513, %v768
      %v799 = vmul.f32 %v285, %v768
      %v800 = vmul.f32 %v286, %v768
      %v801 = vmul.f32 %v514, %v768
      %v802 = vmul.f32 %v287, %v768
      %v803 = vmul.f32 %v288, %v768
      %v804 = vmul.f32 %v515, %v768
      %v805 = vmul.f32 %v289, %v768
      %v806 = vmul.f32 %v290, %v768
      %v807 = vmul.f32 %v516, %v768
      %v808 = vmul.f32 %v291, %v768
      %v809 = vmul.f32 %v292, %v768
      %v810 = vmul.f32 %v517, %v768
      %v811 = vmul.f32 %v293, %v768
      %v812 = vmul.f32 %v294, %v768
      %v813 = vmul.f32 %v518, %v768
      %v814 = vmul.f32 %v363, %v768
      %v815 = vmul.f32 %v364, %v768
      %v816 = vmul.f32 %v764, %v768
      %v865 = vrot.slane %v769, 1
      %v866 = vrot.slane %v770, 1
      %v867 = vsel %vm619, %v865, %v866
      %v868 = vrot.slane %v771, 1
      %v869 = vsel %vm619, %v866, %v868
      %v870 = vrot.slane %v772, 1
      %v871 = vrot.slane %v773, 1
      %v872 = vsel %vm619, %v870, %v871
      %v873 = vrot.slane %v774, 1
      %v874 = vsel %vm619, %v871, %v873
      %v875 = vrot.slane %v775, 1
      %v876 = vrot.slane %v776, 1
      %v877 = vsel %vm619, %v875, %v876
      %v878 = vrot.slane %v777, 1
      %v879 = vsel %vm619, %v876, %v878
      %v880 = vrot.slane %v778, 1
      %v881 = vrot.slane %v779, 1
      %v882 = vsel %vm619, %v880, %v881
      %v883 = vrot.slane %v780, 1
      %v884 = vsel %vm619, %v881, %v883
      %v885 = vrot.slane %v781, 1
      %v886 = vrot.slane %v782, 1
      %v887 = vsel %vm619, %v885, %v886
      %v888 = vrot.slane %v783, 1
      %v889 = vsel %vm619, %v886, %v888
      %v890 = vrot.slane %v784, 1
      %v891 = vrot.slane %v785, 1
      %v892 = vsel %vm619, %v890, %v891
      %v893 = vrot.slane %v786, 1
      %v894 = vsel %vm619, %v891, %v893
      %v895 = vrot.slane %v787, 1
      %v896 = vrot.slane %v788, 1
      %v897 = vsel %vm619, %v895, %v896
      %v898 = vrot.slane %v789, 1
      %v899 = vsel %vm619, %v896, %v898
      %v900 = vrot.slane %v790, 1
      %v901 = vrot.slane %v791, 1
      %v902 = vsel %vm619, %v900, %v901
      %v903 = vrot.slane %v792, 1
      %v904 = vsel %vm619, %v901, %v903
      %v905 = vrot.slane %v793, 1
      %v906 = vrot.slane %v794, 1
      %v907 = vsel %vm619, %v905, %v906
      %v908 = vrot.slane %v795, 1
      %v909 = vsel %vm619, %v906, %v908
      %v910 = vrot.slane %v796, 1
      %v911 = vrot.slane %v797, 1
      %v912 = vsel %vm619, %v910, %v911
      %v913 = vrot.slane %v798, 1
      %v914 = vsel %vm619, %v911, %v913
      %v915 = vrot.slane %v799, 1
      %v916 = vrot.slane %v800, 1
      %v917 = vsel %vm619, %v915, %v916
      %v918 = vrot.slane %v801, 1
      %v919 = vsel %vm619, %v916, %v918
      %v920 = vrot.slane %v802, 1
      %v921 = vrot.slane %v803, 1
      %v922 = vsel %vm619, %v920, %v921
      %v923 = vrot.slane %v804, 1
      %v924 = vsel %vm619, %v921, %v923
      %v925 = vrot.slane %v805, 1
      %v926 = vrot.slane %v806, 1
      %v927 = vsel %vm619, %v925, %v926
      %v928 = vrot.slane %v807, 1
      %v929 = vsel %vm619, %v926, %v928
      %v930 = vrot.slane %v808, 1
      %v931 = vrot.slane %v809, 1
      %v932 = vsel %vm619, %v930, %v931
      %v933 = vrot.slane %v810, 1
      %v934 = vsel %vm619, %v931, %v933
      %v935 = vrot.slane %v811, 1
      %v936 = vrot.slane %v812, 1
      %v937 = vsel %vm619, %v935, %v936
      %v938 = vrot.slane %v813, 1
      %v939 = vsel %vm619, %v936, %v938
      %v940 = vrot.slane %v814, 1
      %v941 = vrot.slane %v815, 1
      %v942 = vsel %vm619, %v940, %v941
      %v943 = vrot.slane %v816, 1
      %v944 = vsel %vm619, %v941, %v943
      %v977 = vadd.f32 %v732, %v867
      %v978 = vadd.f32 %v733, %v869
      %v979 = vadd.f32 %v734, %v872
      %v980 = vadd.f32 %v735, %v874
      %v981 = vadd.f32 %v736, %v877
      %v982 = vadd.f32 %v737, %v879
      %v983 = vadd.f32 %v738, %v882
      %v984 = vadd.f32 %v739, %v884
      %v985 = vadd.f32 %v740, %v887
      %v986 = vadd.f32 %v741, %v889
      %v987 = vadd.f32 %v742, %v892
      %v988 = vadd.f32 %v743, %v894
      %v989 = vadd.f32 %v744, %v897
      %v990 = vadd.f32 %v745, %v899
      %v991 = vadd.f32 %v746, %v902
      %v992 = vadd.f32 %v747, %v904
      %v993 = vadd.f32 %v748, %v907
      %v994 = vadd.f32 %v749, %v909
      %v995 = vadd.f32 %v750, %v912
      %v996 = vadd.f32 %v751, %v914
      %v997 = vadd.f32 %v752, %v917
      %v998 = vadd.f32 %v753, %v919
      %v999 = vadd.f32 %v754, %v922
      %v1000 = vadd.f32 %v755, %v924
      %v1001 = vadd.f32 %v756, %v927
      %v1002 = vadd.f32 %v757, %v929
      %v1003 = vadd.f32 %v758, %v932
      %v1004 = vadd.f32 %v759, %v934
      %v1005 = vadd.f32 %v760, %v937
      %v1006 = vadd.f32 %v761, %v939
      %v1007 = vadd.f32 %v762, %v942
      %v1008 = vadd.f32 %v763, %v944
      %v1009 = vunpack.c.l.bf16 %v262
      %v1010 = vlaneseq
      %v1011 = vshrl.u32 %v1010, 7
      %v1012 = vsub.s32 7, %v1011
      %v1013 = vrot.slane %v207, %v1012
      %v1014 = vmul.f32 %v267, %v1013
      %v1015 = vmul.f32 %v268, %v1013
      %v1016 = vmul.f32 %v505, %v1013
      %v1017 = vmul.f32 %v269, %v1013
      %v1018 = vmul.f32 %v270, %v1013
      %v1019 = vmul.f32 %v506, %v1013
      %v1020 = vmul.f32 %v271, %v1013
      %v1021 = vmul.f32 %v272, %v1013
      %v1022 = vmul.f32 %v507, %v1013
      %v1023 = vmul.f32 %v273, %v1013
      %v1024 = vmul.f32 %v274, %v1013
      %v1025 = vmul.f32 %v508, %v1013
      %v1026 = vmul.f32 %v275, %v1013
      %v1027 = vmul.f32 %v276, %v1013
      %v1028 = vmul.f32 %v509, %v1013
      %v1029 = vmul.f32 %v277, %v1013
      %v1030 = vmul.f32 %v278, %v1013
      %v1031 = vmul.f32 %v510, %v1013
      %v1032 = vmul.f32 %v279, %v1013
      %v1033 = vmul.f32 %v280, %v1013
      %v1034 = vmul.f32 %v511, %v1013
      %v1035 = vmul.f32 %v281, %v1013
      %v1036 = vmul.f32 %v282, %v1013
      %v1037 = vmul.f32 %v512, %v1013
      %v1038 = vmul.f32 %v283, %v1013
      %v1039 = vmul.f32 %v284, %v1013
      %v1040 = vmul.f32 %v513, %v1013
      %v1041 = vmul.f32 %v285, %v1013
      %v1042 = vmul.f32 %v286, %v1013
      %v1043 = vmul.f32 %v514, %v1013
      %v1044 = vmul.f32 %v287, %v1013
      %v1045 = vmul.f32 %v288, %v1013
      %v1046 = vmul.f32 %v515, %v1013
      %v1047 = vmul.f32 %v289, %v1013
      %v1048 = vmul.f32 %v290, %v1013
      %v1049 = vmul.f32 %v516, %v1013
      %v1050 = vmul.f32 %v291, %v1013
      %v1051 = vmul.f32 %v292, %v1013
      %v1052 = vmul.f32 %v517, %v1013
      %v1053 = vmul.f32 %v293, %v1013
      %v1054 = vmul.f32 %v294, %v1013
      %v1055 = vmul.f32 %v518, %v1013
      %v1056 = vmul.f32 %v363, %v1013
      %v1057 = vmul.f32 %v364, %v1013
      %v1058 = vmul.f32 %v764, %v1013
      %v1059 = vmul.f32 %v433, %v1013
      %v1060 = vmul.f32 %v434, %v1013
      %v1061 = vmul.f32 %v1009, %v1013
      %v1110 = vrot.slane %v1014, 1
      %v1111 = vrot.slane %v1015, 1
      %v1112 = vsel %vm619, %v1110, %v1111
      %v1113 = vrot.slane %v1016, 1
      %v1114 = vsel %vm619, %v1111, %v1113
      %v1115 = vrot.slane %v1017, 1
      %v1116 = vrot.slane %v1018, 1
      %v1117 = vsel %vm619, %v1115, %v1116
      %v1118 = vrot.slane %v1019, 1
      %v1119 = vsel %vm619, %v1116, %v1118
      %v1120 = vrot.slane %v1020, 1
      %v1121 = vrot.slane %v1021, 1
      %v1122 = vsel %vm619, %v1120, %v1121
      %v1123 = vrot.slane %v1022, 1
      %v1124 = vsel %vm619, %v1121, %v1123
      %v1125 = vrot.slane %v1023, 1
      %v1126 = vrot.slane %v1024, 1
      %v1127 = vsel %vm619, %v1125, %v1126
      %v1128 = vrot.slane %v1025, 1
      %v1129 = vsel %vm619, %v1126, %v1128
      %v1130 = vrot.slane %v1026, 1
      %v1131 = vrot.slane %v1027, 1
      %v1132 = vsel %vm619, %v1130, %v1131
      %v1133 = vrot.slane %v1028, 1
      %v1134 = vsel %vm619, %v1131, %v1133
      %v1135 = vrot.slane %v1029, 1
      %v1136 = vrot.slane %v1030, 1
      %v1137 = vsel %vm619, %v1135, %v1136
      %v1138 = vrot.slane %v1031, 1
      %v1139 = vsel %vm619, %v1136, %v1138
      %v1140 = vrot.slane %v1032, 1
      %v1141 = vrot.slane %v1033, 1
      %v1142 = vsel %vm619, %v1140, %v1141
      %v1143 = vrot.slane %v1034, 1
      %v1144 = vsel %vm619, %v1141, %v1143
      %v1145 = vrot.slane %v1035, 1
      %v1146 = vrot.slane %v1036, 1
      %v1147 = vsel %vm619, %v1145, %v1146
      %v1148 = vrot.slane %v1037, 1
      %v1149 = vsel %vm619, %v1146, %v1148
      %v1150 = vrot.slane %v1038, 1
      %v1151 = vrot.slane %v1039, 1
      %v1152 = vsel %vm619, %v1150, %v1151
      %v1153 = vrot.slane %v1040, 1
      %v1154 = vsel %vm619, %v1151, %v1153
      %v1155 = vrot.slane %v1041, 1
      %v1156 = vrot.slane %v1042, 1
      %v1157 = vsel %vm619, %v1155, %v1156
      %v1158 = vrot.slane %v1043, 1
      %v1159 = vsel %vm619, %v1156, %v1158
      %v1160 = vrot.slane %v1044, 1
      %v1161 = vrot.slane %v1045, 1
      %v1162 = vsel %vm619, %v1160, %v1161
      %v1163 = vrot.slane %v1046, 1
      %v1164 = vsel %vm619, %v1161, %v1163
      %v1165 = vrot.slane %v1047, 1
      %v1166 = vrot.slane %v1048, 1
      %v1167 = vsel %vm619, %v1165, %v1166
      %v1168 = vrot.slane %v1049, 1
      %v1169 = vsel %vm619, %v1166, %v1168
      %v1170 = vrot.slane %v1050, 1
      %v1171 = vrot.slane %v1051, 1
      %v1172 = vsel %vm619, %v1170, %v1171
      %v1173 = vrot.slane %v1052, 1
      %v1174 = vsel %vm619, %v1171, %v1173
      %v1175 = vrot.slane %v1053, 1
      %v1176 = vrot.slane %v1054, 1
      %v1177 = vsel %vm619, %v1175, %v1176
      %v1178 = vrot.slane %v1055, 1
      %v1179 = vsel %vm619, %v1176, %v1178
      %v1180 = vrot.slane %v1056, 1
      %v1181 = vrot.slane %v1057, 1
      %v1182 = vsel %vm619, %v1180, %v1181
      %v1183 = vrot.slane %v1058, 1
      %v1184 = vsel %vm619, %v1181, %v1183
      %v1185 = vrot.slane %v1059, 1
      %v1186 = vrot.slane %v1060, 1
      %v1187 = vsel %vm619, %v1185, %v1186
      %v1188 = vrot.slane %v1061, 1
      %v1189 = vsel %vm619, %v1186, %v1188
      %v1222 = vadd.f32 %v977, %v1112
      %v1223 = vadd.f32 %v978, %v1114
      %v1224 = vadd.f32 %v979, %v1117
      %v1225 = vadd.f32 %v980, %v1119
      %v1226 = vadd.f32 %v981, %v1122
      %v1227 = vadd.f32 %v982, %v1124
      %v1228 = vadd.f32 %v983, %v1127
      %v1229 = vadd.f32 %v984, %v1129
      %v1230 = vadd.f32 %v985, %v1132
      %v1231 = vadd.f32 %v986, %v1134
      %v1232 = vadd.f32 %v987, %v1137
      %v1233 = vadd.f32 %v988, %v1139
      %v1234 = vadd.f32 %v989, %v1142
      %v1235 = vadd.f32 %v990, %v1144
      %v1236 = vadd.f32 %v991, %v1147
      %v1237 = vadd.f32 %v992, %v1149
      %v1238 = vadd.f32 %v993, %v1152
      %v1239 = vadd.f32 %v994, %v1154
      %v1240 = vadd.f32 %v995, %v1157
      %v1241 = vadd.f32 %v996, %v1159
      %v1242 = vadd.f32 %v997, %v1162
      %v1243 = vadd.f32 %v998, %v1164
      %v1244 = vadd.f32 %v999, %v1167
      %v1245 = vadd.f32 %v1000, %v1169
      %v1246 = vadd.f32 %v1001, %v1172
      %v1247 = vadd.f32 %v1002, %v1174
      %v1248 = vadd.f32 %v1003, %v1177
      %v1249 = vadd.f32 %v1004, %v1179
      %v1250 = vadd.f32 %v1005, %v1182
      %v1251 = vadd.f32 %v1006, %v1184
      %v1252 = vadd.f32 %v1007, %v1187
      %v1253 = vadd.f32 %v1008, %v1189
      %v1254 = vlaneseq
      %v1255 = vshrl.u32 %v1254, 7
      %v1256 = vsub.s32 2, %v1255
      %v1257 = vrot.slane %v207, %v1256
      %v1258 = vmul.f32 %v263, %v1257
      %v1259 = vmul.f32 %v264, %v1257
      %v1260 = vmul.f32 %v503, %v1257
      %v1261 = vmul.f32 %v265, %v1257
      %v1262 = vmul.f32 %v266, %v1257
      %v1263 = vmul.f32 %v504, %v1257
      %v1264 = vmul.f32 %v267, %v1257
      %v1265 = vmul.f32 %v268, %v1257
      %v1266 = vmul.f32 %v505, %v1257
      %v1267 = vmul.f32 %v269, %v1257
      %v1268 = vmul.f32 %v270, %v1257
      %v1269 = vmul.f32 %v506, %v1257
      %v1270 = vmul.f32 %v271, %v1257
      %v1271 = vmul.f32 %v272, %v1257
      %v1272 = vmul.f32 %v507, %v1257
      %v1273 = vmul.f32 %v273, %v1257
      %v1274 = vmul.f32 %v274, %v1257
      %v1275 = vmul.f32 %v508, %v1257
      %v1276 = vmul.f32 %v275, %v1257
      %v1277 = vmul.f32 %v276, %v1257
      %v1278 = vmul.f32 %v509, %v1257
      %v1279 = vmul.f32 %v277, %v1257
      %v1280 = vmul.f32 %v278, %v1257
      %v1281 = vmul.f32 %v510, %v1257
      %v1282 = vmul.f32 %v279, %v1257
      %v1283 = vmul.f32 %v280, %v1257
      %v1284 = vmul.f32 %v511, %v1257
      %v1285 = vmul.f32 %v281, %v1257
      %v1286 = vmul.f32 %v282, %v1257
      %v1287 = vmul.f32 %v512, %v1257
      %v1288 = vmul.f32 %v283, %v1257
      %v1289 = vmul.f32 %v284, %v1257
      %v1290 = vmul.f32 %v513, %v1257
      %v1291 = vmul.f32 %v285, %v1257
      %v1292 = vmul.f32 %v286, %v1257
      %v1293 = vmul.f32 %v514, %v1257
      %v1294 = vmul.f32 %v287, %v1257
      %v1295 = vmul.f32 %v288, %v1257
      %v1296 = vmul.f32 %v515, %v1257
      %v1297 = vmul.f32 %v289, %v1257
      %v1298 = vmul.f32 %v290, %v1257
      %v1299 = vmul.f32 %v516, %v1257
      %v1300 = vmul.f32 %v291, %v1257
      %v1301 = vmul.f32 %v292, %v1257
      %v1302 = vmul.f32 %v517, %v1257
      %v1303 = vmul.f32 %v293, %v1257
      %v1304 = vmul.f32 %v294, %v1257
      %v1305 = vmul.f32 %v518, %v1257
      %vm1354 = vcmask 1045504
      %v1355 = vrot.slane %v1258, 2
      %v1356 = vrot.slane %v1259, 2
      %v1357 = vsel %vm1354, %v1355, %v1356
      %v1358 = vrot.slane %v1260, 2
      %v1359 = vsel %vm1354, %v1356, %v1358
      %v1360 = vrot.slane %v1261, 2
      %v1361 = vrot.slane %v1262, 2
      %v1362 = vsel %vm1354, %v1360, %v1361
      %v1363 = vrot.slane %v1263, 2
      %v1364 = vsel %vm1354, %v1361, %v1363
      %v1365 = vrot.slane %v1264, 2
      %v1366 = vrot.slane %v1265, 2
      %v1367 = vsel %vm1354, %v1365, %v1366
      %v1368 = vrot.slane %v1266, 2
      %v1369 = vsel %vm1354, %v1366, %v1368
      %v1370 = vrot.slane %v1267, 2
      %v1371 = vrot.slane %v1268, 2
      %v1372 = vsel %vm1354, %v1370, %v1371
      %v1373 = vrot.slane %v1269, 2
      %v1374 = vsel %vm1354, %v1371, %v1373
      %v1375 = vrot.slane %v1270, 2
      %v1376 = vrot.slane %v1271, 2
      %v1377 = vsel %vm1354, %v1375, %v1376
      %v1378 = vrot.slane %v1272, 2
      %v1379 = vsel %vm1354, %v1376, %v1378
      %v1380 = vrot.slane %v1273, 2
      %v1381 = vrot.slane %v1274, 2
      %v1382 = vsel %vm1354, %v1380, %v1381
      %v1383 = vrot.slane %v1275, 2
      %v1384 = vsel %vm1354, %v1381, %v1383
      %v1385 = vrot.slane %v1276, 2
      %v1386 = vrot.slane %v1277, 2
      %v1387 = vsel %vm1354, %v1385, %v1386
      %v1388 = vrot.slane %v1278, 2
      %v1389 = vsel %vm1354, %v1386, %v1388
      %v1390 = vrot.slane %v1279, 2
      %v1391 = vrot.slane %v1280, 2
      %v1392 = vsel %vm1354, %v1390, %v1391
      %v1393 = vrot.slane %v1281, 2
      %v1394 = vsel %vm1354, %v1391, %v1393
      %v1395 = vrot.slane %v1282, 2
      %v1396 = vrot.slane %v1283, 2
      %v1397 = vsel %vm1354, %v1395, %v1396
      %v1398 = vrot.slane %v1284, 2
      %v1399 = vsel %vm1354, %v1396, %v1398
      %v1400 = vrot.slane %v1285, 2
      %v1401 = vrot.slane %v1286, 2
      %v1402 = vsel %vm1354, %v1400, %v1401
      %v1403 = vrot.slane %v1287, 2
      %v1404 = vsel %vm1354, %v1401, %v1403
      %v1405 = vrot.slane %v1288, 2
      %v1406 = vrot.slane %v1289, 2
      %v1407 = vsel %vm1354, %v1405, %v1406
      %v1408 = vrot.slane %v1290, 2
      %v1409 = vsel %vm1354, %v1406, %v1408
      %v1410 = vrot.slane %v1291, 2
      %v1411 = vrot.slane %v1292, 2
      %v1412 = vsel %vm1354, %v1410, %v1411
      %v1413 = vrot.slane %v1293, 2
      %v1414 = vsel %vm1354, %v1411, %v1413
      %v1415 = vrot.slane %v1294, 2
      %v1416 = vrot.slane %v1295, 2
      %v1417 = vsel %vm1354, %v1415, %v1416
      %v1418 = vrot.slane %v1296, 2
      %v1419 = vsel %vm1354, %v1416, %v1418
      %v1420 = vrot.slane %v1297, 2
      %v1421 = vrot.slane %v1298, 2
      %v1422 = vsel %vm1354, %v1420, %v1421
      %v1423 = vrot.slane %v1299, 2
      %v1424 = vsel %vm1354, %v1421, %v1423
      %v1425 = vrot.slane %v1300, 2
      %v1426 = vrot.slane %v1301, 2
      %v1427 = vsel %vm1354, %v1425, %v1426
      %v1428 = vrot.slane %v1302, 2
      %v1429 = vsel %vm1354, %v1426, %v1428
      %v1430 = vrot.slane %v1303, 2
      %v1431 = vrot.slane %v1304, 2
      %v1432 = vsel %vm1354, %v1430, %v1431
      %v1433 = vrot.slane %v1305, 2
      %v1434 = vsel %vm1354, %v1431, %v1433
      %v1467 = vadd.f32 %v1222, %v1357
      %v1468 = vadd.f32 %v1223, %v1359
      %v1469 = vadd.f32 %v1224, %v1362
      %v1470 = vadd.f32 %v1225, %v1364
      %v1471 = vadd.f32 %v1226, %v1367
      %v1472 = vadd.f32 %v1227, %v1369
      %v1473 = vadd.f32 %v1228, %v1372
      %v1474 = vadd.f32 %v1229, %v1374
      %v1475 = vadd.f32 %v1230, %v1377
      %v1476 = vadd.f32 %v1231, %v1379
      %v1477 = vadd.f32 %v1232, %v1382
      %v1478 = vadd.f32 %v1233, %v1384
      %v1479 = vadd.f32 %v1234, %v1387
      %v1480 = vadd.f32 %v1235, %v1389
      %v1481 = vadd.f32 %v1236, %v1392
      %v1482 = vadd.f32 %v1237, %v1394
      %v1483 = vadd.f32 %v1238, %v1397
      %v1484 = vadd.f32 %v1239, %v1399
      %v1485 = vadd.f32 %v1240, %v1402
      %v1486 = vadd.f32 %v1241, %v1404
      %v1487 = vadd.f32 %v1242, %v1407
      %v1488 = vadd.f32 %v1243, %v1409
      %v1489 = vadd.f32 %v1244, %v1412
      %v1490 = vadd.f32 %v1245, %v1414
      %v1491 = vadd.f32 %v1246, %v1417
      %v1492 = vadd.f32 %v1247, %v1419
      %v1493 = vadd.f32 %v1248, %v1422
      %v1494 = vadd.f32 %v1249, %v1424
      %v1495 = vadd.f32 %v1250, %v1427
      %v1496 = vadd.f32 %v1251, %v1429
      %v1497 = vadd.f32 %v1252, %v1432
      %v1498 = vadd.f32 %v1253, %v1434
      %v1499 = vlaneseq
      %v1500 = vshrl.u32 %v1499, 7
      %v1501 = vsub.s32 5, %v1500
      %v1502 = vrot.slane %v207, %v1501
      %v1503 = vmul.f32 %v265, %v1502
      %v1504 = vmul.f32 %v266, %v1502
      %v1505 = vmul.f32 %v504, %v1502
      %v1506 = vmul.f32 %v267, %v1502
      %v1507 = vmul.f32 %v268, %v1502
      %v1508 = vmul.f32 %v505, %v1502
      %v1509 = vmul.f32 %v269, %v1502
      %v1510 = vmul.f32 %v270, %v1502
      %v1511 = vmul.f32 %v506, %v1502
      %v1512 = vmul.f32 %v271, %v1502
      %v1513 = vmul.f32 %v272, %v1502
      %v1514 = vmul.f32 %v507, %v1502
      %v1515 = vmul.f32 %v273, %v1502
      %v1516 = vmul.f32 %v274, %v1502
      %v1517 = vmul.f32 %v508, %v1502
      %v1518 = vmul.f32 %v275, %v1502
      %v1519 = vmul.f32 %v276, %v1502
      %v1520 = vmul.f32 %v509, %v1502
      %v1521 = vmul.f32 %v277, %v1502
      %v1522 = vmul.f32 %v278, %v1502
      %v1523 = vmul.f32 %v510, %v1502
      %v1524 = vmul.f32 %v279, %v1502
      %v1525 = vmul.f32 %v280, %v1502
      %v1526 = vmul.f32 %v511, %v1502
      %v1527 = vmul.f32 %v281, %v1502
      %v1528 = vmul.f32 %v282, %v1502
      %v1529 = vmul.f32 %v512, %v1502
      %v1530 = vmul.f32 %v283, %v1502
      %v1531 = vmul.f32 %v284, %v1502
      %v1532 = vmul.f32 %v513, %v1502
      %v1533 = vmul.f32 %v285, %v1502
      %v1534 = vmul.f32 %v286, %v1502
      %v1535 = vmul.f32 %v514, %v1502
      %v1536 = vmul.f32 %v287, %v1502
      %v1537 = vmul.f32 %v288, %v1502
      %v1538 = vmul.f32 %v515, %v1502
      %v1539 = vmul.f32 %v289, %v1502
      %v1540 = vmul.f32 %v290, %v1502
      %v1541 = vmul.f32 %v516, %v1502
      %v1542 = vmul.f32 %v291, %v1502
      %v1543 = vmul.f32 %v292, %v1502
      %v1544 = vmul.f32 %v517, %v1502
      %v1545 = vmul.f32 %v293, %v1502
      %v1546 = vmul.f32 %v294, %v1502
      %v1547 = vmul.f32 %v518, %v1502
      %v1548 = vmul.f32 %v363, %v1502
      %v1549 = vmul.f32 %v364, %v1502
      %v1550 = vmul.f32 %v764, %v1502
      %v1599 = vrot.slane %v1503, 2
      %v1600 = vrot.slane %v1504, 2
      %v1601 = vsel %vm1354, %v1599, %v1600
      %v1602 = vrot.slane %v1505, 2
      %v1603 = vsel %vm1354, %v1600, %v1602
      %v1604 = vrot.slane %v1506, 2
      %v1605 = vrot.slane %v1507, 2
      %v1606 = vsel %vm1354, %v1604, %v1605
      %v1607 = vrot.slane %v1508, 2
      %v1608 = vsel %vm1354, %v1605, %v1607
      %v1609 = vrot.slane %v1509, 2
      %v1610 = vrot.slane %v1510, 2
      %v1611 = vsel %vm1354, %v1609, %v1610
      %v1612 = vrot.slane %v1511, 2
      %v1613 = vsel %vm1354, %v1610, %v1612
      %v1614 = vrot.slane %v1512, 2
      %v1615 = vrot.slane %v1513, 2
      %v1616 = vsel %vm1354, %v1614, %v1615
      %v1617 = vrot.slane %v1514, 2
      %v1618 = vsel %vm1354, %v1615, %v1617
      %v1619 = vrot.slane %v1515, 2
      %v1620 = vrot.slane %v1516, 2
      %v1621 = vsel %vm1354, %v1619, %v1620
      %v1622 = vrot.slane %v1517, 2
      %v1623 = vsel %vm1354, %v1620, %v1622
      %v1624 = vrot.slane %v1518, 2
      %v1625 = vrot.slane %v1519, 2
      %v1626 = vsel %vm1354, %v1624, %v1625
      %v1627 = vrot.slane %v1520, 2
      %v1628 = vsel %vm1354, %v1625, %v1627
      %v1629 = vrot.slane %v1521, 2
      %v1630 = vrot.slane %v1522, 2
      %v1631 = vsel %vm1354, %v1629, %v1630
      %v1632 = vrot.slane %v1523, 2
      %v1633 = vsel %vm1354, %v1630, %v1632
      %v1634 = vrot.slane %v1524, 2
      %v1635 = vrot.slane %v1525, 2
      %v1636 = vsel %vm1354, %v1634, %v1635
      %v1637 = vrot.slane %v1526, 2
      %v1638 = vsel %vm1354, %v1635, %v1637
      %v1639 = vrot.slane %v1527, 2
      %v1640 = vrot.slane %v1528, 2
      %v1641 = vsel %vm1354, %v1639, %v1640
      %v1642 = vrot.slane %v1529, 2
      %v1643 = vsel %vm1354, %v1640, %v1642
      %v1644 = vrot.slane %v1530, 2
      %v1645 = vrot.slane %v1531, 2
      %v1646 = vsel %vm1354, %v1644, %v1645
      %v1647 = vrot.slane %v1532, 2
      %v1648 = vsel %vm1354, %v1645, %v1647
      %v1649 = vrot.slane %v1533, 2
      %v1650 = vrot.slane %v1534, 2
      %v1651 = vsel %vm1354, %v1649, %v1650
      %v1652 = vrot.slane %v1535, 2
      %v1653 = vsel %vm1354, %v1650, %v1652
      %v1654 = vrot.slane %v1536, 2
      %v1655 = vrot.slane %v1537, 2
      %v1656 = vsel %vm1354, %v1654, %v1655
      %v1657 = vrot.slane %v1538, 2
      %v1658 = vsel %vm1354, %v1655, %v1657
      %v1659 = vrot.slane %v1539, 2
      %v1660 = vrot.slane %v1540, 2
      %v1661 = vsel %vm1354, %v1659, %v1660
      %v1662 = vrot.slane %v1541, 2
      %v1663 = vsel %vm1354, %v1660, %v1662
      %v1664 = vrot.slane %v1542, 2
      %v1665 = vrot.slane %v1543, 2
      %v1666 = vsel %vm1354, %v1664, %v1665
      %v1667 = vrot.slane %v1544, 2
      %v1668 = vsel %vm1354, %v1665, %v1667
      %v1669 = vrot.slane %v1545, 2
      %v1670 = vrot.slane %v1546, 2
      %v1671 = vsel %vm1354, %v1669, %v1670
      %v1672 = vrot.slane %v1547, 2
      %v1673 = vsel %vm1354, %v1670, %v1672
      %v1674 = vrot.slane %v1548, 2
      %v1675 = vrot.slane %v1549, 2
      %v1676 = vsel %vm1354, %v1674, %v1675
      %v1677 = vrot.slane %v1550, 2
      %v1678 = vsel %vm1354, %v1675, %v1677
      %v1711 = vadd.f32 %v1467, %v1601
      %v1712 = vadd.f32 %v1468, %v1603
      %v1713 = vadd.f32 %v1469, %v1606
      %v1714 = vadd.f32 %v1470, %v1608
      %v1715 = vadd.f32 %v1471, %v1611
      %v1716 = vadd.f32 %v1472, %v1613
      %v1717 = vadd.f32 %v1473, %v1616
      %v1718 = vadd.f32 %v1474, %v1618
      %v1719 = vadd.f32 %v1475, %v1621
      %v1720 = vadd.f32 %v1476, %v1623
      %v1721 = vadd.f32 %v1477, %v1626
      %v1722 = vadd.f32 %v1478, %v1628
      %v1723 = vadd.f32 %v1479, %v1631
      %v1724 = vadd.f32 %v1480, %v1633
      %v1725 = vadd.f32 %v1481, %v1636
      %v1726 = vadd.f32 %v1482, %v1638
      %v1727 = vadd.f32 %v1483, %v1641
      %v1728 = vadd.f32 %v1484, %v1643
      %v1729 = vadd.f32 %v1485, %v1646
      %v1730 = vadd.f32 %v1486, %v1648
      %v1731 = vadd.f32 %v1487, %v1651
      %v1732 = vadd.f32 %v1488, %v1653
      %v1733 = vadd.f32 %v1489, %v1656
      %v1734 = vadd.f32 %v1490, %v1658
      %v1735 = vadd.f32 %v1491, %v1661
      %v1736 = vadd.f32 %v1492, %v1663
      %v1737 = vadd.f32 %v1493, %v1666
      %v1738 = vadd.f32 %v1494, %v1668
      %v1739 = vadd.f32 %v1495, %v1671
      %v1740 = vadd.f32 %v1496, %v1673
      %v1741 = vadd.f32 %v1497, %v1676
      %v1742 = vadd.f32 %v1498, %v1678
      %v1743 = vlaneseq
      %v1744 = vshrl.u32 %v1743, 7
      %v1745 = vsub.s32 0, %v1744
      %v1746 = vrot.slane %v208, %v1745
      %v1747 = vmul.f32 %v267, %v1746
      %v1748 = vmul.f32 %v268, %v1746
      %v1749 = vmul.f32 %v505, %v1746
      %v1750 = vmul.f32 %v269, %v1746
      %v1751 = vmul.f32 %v270, %v1746
      %v1752 = vmul.f32 %v506, %v1746
      %v1753 = vmul.f32 %v271, %v1746
      %v1754 = vmul.f32 %v272, %v1746
      %v1755 = vmul.f32 %v507, %v1746
      %v1756 = vmul.f32 %v273, %v1746
      %v1757 = vmul.f32 %v274, %v1746
      %v1758 = vmul.f32 %v508, %v1746
      %v1759 = vmul.f32 %v275, %v1746
      %v1760 = vmul.f32 %v276, %v1746
      %v1761 = vmul.f32 %v509, %v1746
      %v1762 = vmul.f32 %v277, %v1746
      %v1763 = vmul.f32 %v278, %v1746
      %v1764 = vmul.f32 %v510, %v1746
      %v1765 = vmul.f32 %v279, %v1746
      %v1766 = vmul.f32 %v280, %v1746
      %v1767 = vmul.f32 %v511, %v1746
      %v1768 = vmul.f32 %v281, %v1746
      %v1769 = vmul.f32 %v282, %v1746
      %v1770 = vmul.f32 %v512, %v1746
      %v1771 = vmul.f32 %v283, %v1746
      %v1772 = vmul.f32 %v284, %v1746
      %v1773 = vmul.f32 %v513, %v1746
      %v1774 = vmul.f32 %v285, %v1746
      %v1775 = vmul.f32 %v286, %v1746
      %v1776 = vmul.f32 %v514, %v1746
      %v1777 = vmul.f32 %v287, %v1746
      %v1778 = vmul.f32 %v288, %v1746
      %v1779 = vmul.f32 %v515, %v1746
      %v1780 = vmul.f32 %v289, %v1746
      %v1781 = vmul.f32 %v290, %v1746
      %v1782 = vmul.f32 %v516, %v1746
      %v1783 = vmul.f32 %v291, %v1746
      %v1784 = vmul.f32 %v292, %v1746
      %v1785 = vmul.f32 %v517, %v1746
      %v1786 = vmul.f32 %v293, %v1746
      %v1787 = vmul.f32 %v294, %v1746
      %v1788 = vmul.f32 %v518, %v1746
      %v1789 = vmul.f32 %v363, %v1746
      %v1790 = vmul.f32 %v364, %v1746
      %v1791 = vmul.f32 %v764, %v1746
      %v1792 = vmul.f32 %v433, %v1746
      %v1793 = vmul.f32 %v434, %v1746
      %v1794 = vmul.f32 %v1009, %v1746
      %v1843 = vrot.slane %v1747, 2
      %v1844 = vrot.slane %v1748, 2
      %v1845 = vsel %vm1354, %v1843, %v1844
      %v1846 = vrot.slane %v1749, 2
      %v1847 = vsel %vm1354, %v1844, %v1846
      %v1848 = vrot.slane %v1750, 2
      %v1849 = vrot.slane %v1751, 2
      %v1850 = vsel %vm1354, %v1848, %v1849
      %v1851 = vrot.slane %v1752, 2
      %v1852 = vsel %vm1354, %v1849, %v1851
      %v1853 = vrot.slane %v1753, 2
      %v1854 = vrot.slane %v1754, 2
      %v1855 = vsel %vm1354, %v1853, %v1854
      %v1856 = vrot.slane %v1755, 2
      %v1857 = vsel %vm1354, %v1854, %v1856
      %v1858 = vrot.slane %v1756, 2
      %v1859 = vrot.slane %v1757, 2
      %v1860 = vsel %vm1354, %v1858, %v1859
      %v1861 = vrot.slane %v1758, 2
      %v1862 = vsel %vm1354, %v1859, %v1861
      %v1863 = vrot.slane %v1759, 2
      %v1864 = vrot.slane %v1760, 2
      %v1865 = vsel %vm1354, %v1863, %v1864
      %v1866 = vrot.slane %v1761, 2
      %v1867 = vsel %vm1354, %v1864, %v1866
      %v1868 = vrot.slane %v1762, 2
      %v1869 = vrot.slane %v1763, 2
      %v1870 = vsel %vm1354, %v1868, %v1869
      %v1871 = vrot.slane %v1764, 2
      %v1872 = vsel %vm1354, %v1869, %v1871
      %v1873 = vrot.slane %v1765, 2
      %v1874 = vrot.slane %v1766, 2
      %v1875 = vsel %vm1354, %v1873, %v1874
      %v1876 = vrot.slane %v1767, 2
      %v1877 = vsel %vm1354, %v1874, %v1876
      %v1878 = vrot.slane %v1768, 2
      %v1879 = vrot.slane %v1769, 2
      %v1880 = vsel %vm1354, %v1878, %v1879
      %v1881 = vrot.slane %v1770, 2
      %v1882 = vsel %vm1354, %v1879, %v1881
      %v1883 = vrot.slane %v1771, 2
      %v1884 = vrot.slane %v1772, 2
      %v1885 = vsel %vm1354, %v1883, %v1884
      %v1886 = vrot.slane %v1773, 2
      %v1887 = vsel %vm1354, %v1884, %v1886
      %v1888 = vrot.slane %v1774, 2
      %v1889 = vrot.slane %v1775, 2
      %v1890 = vsel %vm1354, %v1888, %v1889
      %v1891 = vrot.slane %v1776, 2
      %v1892 = vsel %vm1354, %v1889, %v1891
      %v1893 = vrot.slane %v1777, 2
      %v1894 = vrot.slane %v1778, 2
      %v1895 = vsel %vm1354, %v1893, %v1894
      %v1896 = vrot.slane %v1779, 2
      %v1897 = vsel %vm1354, %v1894, %v1896
      %v1898 = vrot.slane %v1780, 2
      %v1899 = vrot.slane %v1781, 2
      %v1900 = vsel %vm1354, %v1898, %v1899
      %v1901 = vrot.slane %v1782, 2
      %v1902 = vsel %vm1354, %v1899, %v1901
      %v1903 = vrot.slane %v1783, 2
      %v1904 = vrot.slane %v1784, 2
      %v1905 = vsel %vm1354, %v1903, %v1904
      %v1906 = vrot.slane %v1785, 2
      %v1907 = vsel %vm1354, %v1904, %v1906
      %v1908 = vrot.slane %v1786, 2
      %v1909 = vrot.slane %v1787, 2
      %v1910 = vsel %vm1354, %v1908, %v1909
      %v1911 = vrot.slane %v1788, 2
      %v1912 = vsel %vm1354, %v1909, %v1911
      %v1913 = vrot.slane %v1789, 2
      %v1914 = vrot.slane %v1790, 2
      %v1915 = vsel %vm1354, %v1913, %v1914
      %v1916 = vrot.slane %v1791, 2
      %v1917 = vsel %vm1354, %v1914, %v1916
      %v1918 = vrot.slane %v1792, 2
      %v1919 = vrot.slane %v1793, 2
      %v1920 = vsel %vm1354, %v1918, %v1919
      %v1921 = vrot.slane %v1794, 2
      %v1922 = vsel %vm1354, %v1919, %v1921
      %v1955 = vadd.f32 %v1711, %v1845
      %v1956 = vadd.f32 %v1712, %v1847
      %v1957 = vadd.f32 %v1713, %v1850
      %v1958 = vadd.f32 %v1714, %v1852
      %v1959 = vadd.f32 %v1715, %v1855
      %v1960 = vadd.f32 %v1716, %v1857
      %v1961 = vadd.f32 %v1717, %v1860
      %v1962 = vadd.f32 %v1718, %v1862
      %v1963 = vadd.f32 %v1719, %v1865
      %v1964 = vadd.f32 %v1720, %v1867
      %v1965 = vadd.f32 %v1721, %v1870
      %v1966 = vadd.f32 %v1722, %v1872
      %v1967 = vadd.f32 %v1723, %v1875
      %v1968 = vadd.f32 %v1724, %v1877
      %v1969 = vadd.f32 %v1725, %v1880
      %v1970 = vadd.f32 %v1726, %v1882
      %v1971 = vadd.f32 %v1727, %v1885
      %v1972 = vadd.f32 %v1728, %v1887
      %v1973 = vadd.f32 %v1729, %v1890
      %v1974 = vadd.f32 %v1730, %v1892
      %v1975 = vadd.f32 %v1731, %v1895
      %v1976 = vadd.f32 %v1732, %v1897
      %v1977 = vadd.f32 %v1733, %v1900
      %v1978 = vadd.f32 %v1734, %v1902
      %v1979 = vadd.f32 %v1735, %v1905
      %v1980 = vadd.f32 %v1736, %v1907
      %v1981 = vadd.f32 %v1737, %v1910
      %v1982 = vadd.f32 %v1738, %v1912
      %v1983 = vadd.f32 %v1739, %v1915
      %v1984 = vadd.f32 %v1740, %v1917
      %v1985 = vadd.f32 %v1741, %v1920
      %v1986 = vadd.f32 %v1742, %v1922
      %v1987 = vld [vmem:[%s2] sm:$0x1]
      %v1989 = vlaneseq
      %v1990 = vshrl.u32 %v1989, 7
      %v1991 = vsub.s32 0, %v1990
      %v1992 = vrot.slane %v1987, %v1991
      %v1994 = vadd.f32 %v1955, %v1992
      %v1995 = vadd.f32 %v1956, %v1992
      %v1996 = vadd.f32 %v1957, %v1992
      %v1997 = vadd.f32 %v1958, %v1992
      %v1998 = vadd.f32 %v1959, %v1992
      %v1999 = vadd.f32 %v1960, %v1992
      %v2000 = vadd.f32 %v1961, %v1992
      %v2001 = vadd.f32 %v1962, %v1992
      %v2002 = vadd.f32 %v1963, %v1992
      %v2003 = vadd.f32 %v1964, %v1992
      %v2004 = vadd.f32 %v1965, %v1992
      %v2005 = vadd.f32 %v1966, %v1992
      %v2006 = vadd.f32 %v1967, %v1992
      %v2007 = vadd.f32 %v1968, %v1992
      %v2008 = vadd.f32 %v1969, %v1992
      %v2009 = vadd.f32 %v1970, %v1992
      %v2010 = vadd.f32 %v1971, %v1992
      %v2011 = vadd.f32 %v1972, %v1992
      %v2012 = vadd.f32 %v1973, %v1992
      %v2013 = vadd.f32 %v1974, %v1992
      %v2014 = vadd.f32 %v1975, %v1992
      %v2015 = vadd.f32 %v1976, %v1992
      %v2016 = vadd.f32 %v1977, %v1992
      %v2017 = vadd.f32 %v1978, %v1992
      %v2018 = vadd.f32 %v1979, %v1992
      %v2019 = vadd.f32 %v1980, %v1992
      %v2020 = vadd.f32 %v1981, %v1992
      %v2021 = vadd.f32 %v1982, %v1992
      %v2022 = vadd.f32 %v1983, %v1992
      %v2023 = vadd.f32 %v1984, %v1992
      %v2024 = vadd.f32 %v1985, %v1992
      %v2025 = vadd.f32 %v1986, %v1992
      %v2026 = vxor.u32 %v1994, 2147483648
      %v2027 = vxor.u32 %v1995, 2147483648
      %v2028 = vxor.u32 %v1996, 2147483648
      %v2029 = vxor.u32 %v1997, 2147483648
      %v2030 = vxor.u32 %v1998, 2147483648
      %v2031 = vxor.u32 %v1999, 2147483648
      %v2032 = vxor.u32 %v2000, 2147483648
      %v2033 = vxor.u32 %v2001, 2147483648
      %v2034 = vxor.u32 %v2002, 2147483648
      %v2035 = vxor.u32 %v2003, 2147483648
      %v2036 = vxor.u32 %v2004, 2147483648
      %v2037 = vxor.u32 %v2005, 2147483648
      %v2038 = vxor.u32 %v2006, 2147483648
      %v2039 = vxor.u32 %v2007, 2147483648
      %v2040 = vxor.u32 %v2008, 2147483648
      %v2041 = vxor.u32 %v2009, 2147483648
      %v2042 = vxor.u32 %v2010, 2147483648
      %v2043 = vxor.u32 %v2011, 2147483648
      %v2044 = vxor.u32 %v2012, 2147483648
      %v2045 = vxor.u32 %v2013, 2147483648
      %v2046 = vxor.u32 %v2014, 2147483648
      %v2047 = vxor.u32 %v2015, 2147483648
      %v2048 = vxor.u32 %v2016, 2147483648
      %v2049 = vxor.u32 %v2017, 2147483648
      %v2050 = vxor.u32 %v2018, 2147483648
      %v2051 = vxor.u32 %v2019, 2147483648
      %v2052 = vxor.u32 %v2020, 2147483648
      %v2053 = vxor.u32 %v2021, 2147483648
      %v2054 = vxor.u32 %v2022, 2147483648
      %v2055 = vxor.u32 %v2023, 2147483648
      %v2056 = vxor.u32 %v2024, 2147483648
      %v2057 = vxor.u32 %v2025, 2147483648
      %v2058 = vmul.f32 %v2026, 1.442695
      %v2059 = vpow.pop %v2058
      %v2060 = vmul.f32 %v2027, 1.442695
      %v2061 = vpow.pop %v2060
      %v2062 = vmul.f32 %v2028, 1.442695
      %v2063 = vpow.pop %v2062
      %v2064 = vmul.f32 %v2029, 1.442695
      %v2065 = vpow.pop %v2064
      %v2066 = vmul.f32 %v2030, 1.442695
      %v2067 = vpow.pop %v2066
      %v2068 = vmul.f32 %v2031, 1.442695
      %v2069 = vpow.pop %v2068
      %v2070 = vmul.f32 %v2032, 1.442695
      %v2071 = vpow.pop %v2070
      %v2072 = vmul.f32 %v2033, 1.442695
      %v2073 = vpow.pop %v2072
      %v2074 = vmul.f32 %v2034, 1.442695
      %v2075 = vpow.pop %v2074
      %v2076 = vmul.f32 %v2035, 1.442695
      %v2077 = vpow.pop %v2076
      %v2078 = vmul.f32 %v2036, 1.442695
      %v2079 = vpow.pop %v2078
      %v2080 = vmul.f32 %v2037, 1.442695
      %v2081 = vpow.pop %v2080
      %v2082 = vmul.f32 %v2038, 1.442695
      %v2083 = vpow.pop %v2082
      %v2084 = vmul.f32 %v2039, 1.442695
      %v2085 = vpow.pop %v2084
      %v2086 = vmul.f32 %v2040, 1.442695
      %v2087 = vpow.pop %v2086
      %v2088 = vmul.f32 %v2041, 1.442695
      %v2089 = vpow.pop %v2088
      %v2090 = vmul.f32 %v2042, 1.442695
      %v2091 = vpow.pop %v2090
      %v2092 = vmul.f32 %v2043, 1.442695
      %v2093 = vpow.pop %v2092
      %v2094 = vmul.f32 %v2044, 1.442695
      %v2095 = vpow.pop %v2094
      %v2096 = vmul.f32 %v2045, 1.442695
      %v2097 = vpow.pop %v2096
      %v2098 = vmul.f32 %v2046, 1.442695
      %v2099 = vpow.pop %v2098
      %v2100 = vmul.f32 %v2047, 1.442695
      %v2101 = vpow.pop %v2100
      %v2102 = vmul.f32 %v2048, 1.442695
      %v2103 = vpow.pop %v2102
      %v2104 = vmul.f32 %v2049, 1.442695
      %v2105 = vpow.pop %v2104
      %v2106 = vmul.f32 %v2050, 1.442695
      %v2107 = vpow.pop %v2106
      %v2108 = vmul.f32 %v2051, 1.442695
      %v2109 = vpow.pop %v2108
      %v2110 = vmul.f32 %v2052, 1.442695
      %v2111 = vpow.pop %v2110
      %v2112 = vmul.f32 %v2053, 1.442695
      %v2113 = vpow.pop %v2112
      %v2114 = vmul.f32 %v2054, 1.442695
      %v2115 = vpow.pop %v2114
      %v2116 = vmul.f32 %v2055, 1.442695
      %v2117 = vpow.pop %v2116
      %v2118 = vmul.f32 %v2056, 1.442695
      %v2119 = vpow.pop %v2118
      %v2120 = vmul.f32 %v2057, 1.442695
      %v2121 = vpow.pop %v2120
      %v2122 = vadd.f32 %v2059, 1.0
      %v2123 = vadd.f32 %v2061, 1.0
      %v2124 = vadd.f32 %v2063, 1.0
      %v2125 = vadd.f32 %v2065, 1.0
      %v2126 = vadd.f32 %v2067, 1.0
      %v2127 = vadd.f32 %v2069, 1.0
      %v2128 = vadd.f32 %v2071, 1.0
      %v2129 = vadd.f32 %v2073, 1.0
      %v2130 = vadd.f32 %v2075, 1.0
      %v2131 = vadd.f32 %v2077, 1.0
      %v2132 = vadd.f32 %v2079, 1.0
      %v2133 = vadd.f32 %v2081, 1.0
      %v2134 = vadd.f32 %v2083, 1.0
      %v2135 = vadd.f32 %v2085, 1.0
      %v2136 = vadd.f32 %v2087, 1.0
      %v2137 = vadd.f32 %v2089, 1.0
      %v2138 = vadd.f32 %v2091, 1.0
      %v2139 = vadd.f32 %v2093, 1.0
      %v2140 = vadd.f32 %v2095, 1.0
      %v2141 = vadd.f32 %v2097, 1.0
      %v2142 = vadd.f32 %v2099, 1.0
      %v2143 = vadd.f32 %v2101, 1.0
      %v2144 = vadd.f32 %v2103, 1.0
      %v2145 = vadd.f32 %v2105, 1.0
      %v2146 = vadd.f32 %v2107, 1.0
      %v2147 = vadd.f32 %v2109, 1.0
      %v2148 = vadd.f32 %v2111, 1.0
      %v2149 = vadd.f32 %v2113, 1.0
      %v2150 = vadd.f32 %v2115, 1.0
      %v2151 = vadd.f32 %v2117, 1.0
      %v2152 = vadd.f32 %v2119, 1.0
      %v2153 = vadd.f32 %v2121, 1.0
      %v2154 = vrcp.pop %v2122
      %v2155 = vmul.f32 1.0, %v2154
      %v2156 = vrcp.pop %v2123
      %v2157 = vmul.f32 1.0, %v2156
      %v2158 = vrcp.pop %v2124
      %v2159 = vmul.f32 1.0, %v2158
      %v2160 = vrcp.pop %v2125
      %v2161 = vmul.f32 1.0, %v2160
      %v2162 = vrcp.pop %v2126
      %v2163 = vmul.f32 1.0, %v2162
      %v2164 = vrcp.pop %v2127
      %v2165 = vmul.f32 1.0, %v2164
      %v2166 = vrcp.pop %v2128
      %v2167 = vmul.f32 1.0, %v2166
      %v2168 = vrcp.pop %v2129
      %v2169 = vmul.f32 1.0, %v2168
      %v2170 = vrcp.pop %v2130
      %v2171 = vmul.f32 1.0, %v2170
      %v2172 = vrcp.pop %v2131
      %v2173 = vmul.f32 1.0, %v2172
      %v2174 = vrcp.pop %v2132
      %v2175 = vmul.f32 1.0, %v2174
      %v2176 = vrcp.pop %v2133
      %v2177 = vmul.f32 1.0, %v2176
      %v2178 = vrcp.pop %v2134
      %v2179 = vmul.f32 1.0, %v2178
      %v2180 = vrcp.pop %v2135
      %v2181 = vmul.f32 1.0, %v2180
      %v2182 = vrcp.pop %v2136
      %v2183 = vmul.f32 1.0, %v2182
      %v2184 = vrcp.pop %v2137
      %v2185 = vmul.f32 1.0, %v2184
      %v2186 = vrcp.pop %v2138
      %v2187 = vmul.f32 1.0, %v2186
      %v2188 = vrcp.pop %v2139
      %v2189 = vmul.f32 1.0, %v2188
      %v2190 = vrcp.pop %v2140
      %v2191 = vmul.f32 1.0, %v2190
      %v2192 = vrcp.pop %v2141
      %v2193 = vmul.f32 1.0, %v2192
      %v2194 = vrcp.pop %v2142
      %v2195 = vmul.f32 1.0, %v2194
      %v2196 = vrcp.pop %v2143
      %v2197 = vmul.f32 1.0, %v2196
      %v2198 = vrcp.pop %v2144
      %v2199 = vmul.f32 1.0, %v2198
      %v2200 = vrcp.pop %v2145
      %v2201 = vmul.f32 1.0, %v2200
      %v2202 = vrcp.pop %v2146
      %v2203 = vmul.f32 1.0, %v2202
      %v2204 = vrcp.pop %v2147
      %v2205 = vmul.f32 1.0, %v2204
      %v2206 = vrcp.pop %v2148
      %v2207 = vmul.f32 1.0, %v2206
      %v2208 = vrcp.pop %v2149
      %v2209 = vmul.f32 1.0, %v2208
      %v2210 = vrcp.pop %v2150
      %v2211 = vmul.f32 1.0, %v2210
      %v2212 = vrcp.pop %v2151
      %v2213 = vmul.f32 1.0, %v2212
      %v2214 = vrcp.pop %v2152
      %v2215 = vmul.f32 1.0, %v2214
      %v2216 = vrcp.pop %v2153
      %v2217 = vmul.f32 1.0, %v2216
      %v2218 = vmul.f32 %v1994, %v2155
      %v2219 = vmul.f32 %v1995, %v2157
      %v2220 = vmul.f32 %v1996, %v2159
      %v2221 = vmul.f32 %v1997, %v2161
      %v2222 = vmul.f32 %v1998, %v2163
      %v2223 = vmul.f32 %v1999, %v2165
      %v2224 = vmul.f32 %v2000, %v2167
      %v2225 = vmul.f32 %v2001, %v2169
      %v2226 = vmul.f32 %v2002, %v2171
      %v2227 = vmul.f32 %v2003, %v2173
      %v2228 = vmul.f32 %v2004, %v2175
      %v2229 = vmul.f32 %v2005, %v2177
      %v2230 = vmul.f32 %v2006, %v2179
      %v2231 = vmul.f32 %v2007, %v2181
      %v2232 = vmul.f32 %v2008, %v2183
      %v2233 = vmul.f32 %v2009, %v2185
      %v2234 = vmul.f32 %v2010, %v2187
      %v2235 = vmul.f32 %v2011, %v2189
      %v2236 = vmul.f32 %v2012, %v2191
      %v2237 = vmul.f32 %v2013, %v2193
      %v2238 = vmul.f32 %v2014, %v2195
      %v2239 = vmul.f32 %v2015, %v2197
      %v2240 = vmul.f32 %v2016, %v2199
      %v2241 = vmul.f32 %v2017, %v2201
      %v2242 = vmul.f32 %v2018, %v2203
      %v2243 = vmul.f32 %v2019, %v2205
      %v2244 = vmul.f32 %v2020, %v2207
      %v2245 = vmul.f32 %v2021, %v2209
      %v2246 = vmul.f32 %v2022, %v2211
      %v2247 = vmul.f32 %v2023, %v2213
      %v2248 = vmul.f32 %v2024, %v2215
      %v2249 = vmul.f32 %v2025, %v2217
      %v2250 = vpack.c.bf16 %v2219, %v2218
      %v2251 = vpack.c.bf16 %v2221, %v2220
      %v2252 = vpack.c.bf16 %v2223, %v2222
      %v2253 = vpack.c.bf16 %v2225, %v2224
      %v2254 = vpack.c.bf16 %v2227, %v2226
      %v2255 = vpack.c.bf16 %v2229, %v2228
      %v2256 = vpack.c.bf16 %v2231, %v2230
      %v2257 = vpack.c.bf16 %v2233, %v2232
      %v2258 = vpack.c.bf16 %v2235, %v2234
      %v2259 = vpack.c.bf16 %v2237, %v2236
      %v2260 = vpack.c.bf16 %v2239, %v2238
      %v2261 = vpack.c.bf16 %v2241, %v2240
      %v2262 = vpack.c.bf16 %v2243, %v2242
      %v2263 = vpack.c.bf16 %v2245, %v2244
      %v2264 = vpack.c.bf16 %v2247, %v2246
      %v2265 = vpack.c.bf16 %v2249, %v2248
      %v2282 = vunpack.c.l.b16 %v2250
      %v2283 = vunpack.c.h.b16 %v2250
      %v2284 = vunpack.c.l.b16 %v2251
      %v2285 = vunpack.c.h.b16 %v2251
      %v2286 = vunpack.c.l.b16 %v2252
      %v2287 = vunpack.c.h.b16 %v2252
      %v2288 = vunpack.c.l.b16 %v2253
      %v2289 = vunpack.c.h.b16 %v2253
      %v2290 = vunpack.c.l.b16 %v2254
      %v2291 = vunpack.c.h.b16 %v2254
      %v2292 = vunpack.c.l.b16 %v2255
      %v2293 = vunpack.c.h.b16 %v2255
      %v2294 = vunpack.c.l.b16 %v2256
      %v2295 = vunpack.c.h.b16 %v2256
      %v2296 = vunpack.c.l.b16 %v2257
      %v2297 = vunpack.c.h.b16 %v2257
      %v2298 = vunpack.c.l.b16 %v2258
      %v2299 = vunpack.c.h.b16 %v2258
      %v2300 = vunpack.c.l.b16 %v2259
      %v2301 = vunpack.c.h.b16 %v2259
      %v2302 = vunpack.c.l.b16 %v2260
      %v2303 = vunpack.c.h.b16 %v2260
      %v2304 = vunpack.c.l.b16 %v2261
      %v2305 = vunpack.c.h.b16 %v2261
      %v2306 = vunpack.c.l.b16 %v2262
      %v2307 = vunpack.c.h.b16 %v2262
      %v2308 = vunpack.c.l.b16 %v2263
      %v2309 = vunpack.c.h.b16 %v2263
      %v2310 = vunpack.c.l.b16 %v2264
      %v2311 = vunpack.c.h.b16 %v2264
      %v2312 = vunpack.c.l.b16 %v2265
      %v2313 = vunpack.c.h.b16 %v2265
      %v2314 = vpack.c.b16 %v2282, %v2282
      %v2315 = vpack.c.b16 %v2283, %v2283
      %v2316 = vpack.c.b16 %v2284, %v2284
      %v2317 = vpack.c.b16 %v2285, %v2285
      %v2318 = vpack.c.b16 %v2286, %v2286
      %v2319 = vpack.c.b16 %v2287, %v2287
      %v2320 = vpack.c.b16 %v2288, %v2288
      %v2321 = vpack.c.b16 %v2289, %v2289
      %v2322 = vpack.c.b16 %v2290, %v2290
      %v2323 = vpack.c.b16 %v2291, %v2291
      %v2324 = vpack.c.b16 %v2292, %v2292
      %v2325 = vpack.c.b16 %v2293, %v2293
      %v2326 = vpack.c.b16 %v2294, %v2294
      %v2327 = vpack.c.b16 %v2295, %v2295
      %v2328 = vpack.c.b16 %v2296, %v2296
      %v2329 = vpack.c.b16 %v2297, %v2297
      %v2330 = vpack.c.b16 %v2298, %v2298
      %v2331 = vpack.c.b16 %v2299, %v2299
      %v2332 = vpack.c.b16 %v2300, %v2300
      %v2333 = vpack.c.b16 %v2301, %v2301
      %v2334 = vpack.c.b16 %v2302, %v2302
      %v2335 = vpack.c.b16 %v2303, %v2303
      %v2336 = vpack.c.b16 %v2304, %v2304
      %v2337 = vpack.c.b16 %v2305, %v2305
      %v2338 = vpack.c.b16 %v2306, %v2306
      %v2339 = vpack.c.b16 %v2307, %v2307
      %v2340 = vpack.c.b16 %v2308, %v2308
      %v2341 = vpack.c.b16 %v2309, %v2309
      %v2342 = vpack.c.b16 %v2310, %v2310
      %v2343 = vpack.c.b16 %v2311, %v2311
      %v2344 = vpack.c.b16 %v2312, %v2312
      %v2345 = vpack.c.b16 %v2313, %v2313
      %vm2378 = vcmask 125952
      %2379 = vst.msk [vmem:[%s203] sm:$0xf] %vm2378, %v2314
      %2380 = vst.msk [vmem:[%s203 + $0x4] sm:$0xf] %vm2378, %v2315
      %2381 = vst.msk [vmem:[%s203 + $0x8] sm:$0xf] %vm2378, %v2316
      %2382 = vst.msk [vmem:[%s203 + $0xc] sm:$0xf] %vm2378, %v2317
      %2383 = vst.msk [vmem:[%s203 + $0x10] sm:$0xf] %vm2378, %v2318
      %2384 = vst.msk [vmem:[%s203 + $0x14] sm:$0xf] %vm2378, %v2319
      %2385 = vst.msk [vmem:[%s203 + $0x18] sm:$0xf] %vm2378, %v2320
      %2386 = vst.msk [vmem:[%s203 + $0x1c] sm:$0xf] %vm2378, %v2321
      %2387 = vst.msk [vmem:[%s203 + $0x20] sm:$0xf] %vm2378, %v2322
      %2388 = vst.msk [vmem:[%s203 + $0x24] sm:$0xf] %vm2378, %v2323
      %2389 = vst.msk [vmem:[%s203 + $0x28] sm:$0xf] %vm2378, %v2324
      %2390 = vst.msk [vmem:[%s203 + $0x2c] sm:$0xf] %vm2378, %v2325
      %2391 = vst.msk [vmem:[%s203 + $0x30] sm:$0xf] %vm2378, %v2326
      %2392 = vst.msk [vmem:[%s203 + $0x34] sm:$0xf] %vm2378, %v2327
      %2393 = vst.msk [vmem:[%s203 + $0x38] sm:$0xf] %vm2378, %v2328
      %2394 = vst.msk [vmem:[%s203 + $0x3c] sm:$0xf] %vm2378, %v2329
      %2395 = vst.msk [vmem:[%s203 + $0x40] sm:$0xf] %vm2378, %v2330
      %2396 = vst.msk [vmem:[%s203 + $0x44] sm:$0xf] %vm2378, %v2331
      %2397 = vst.msk [vmem:[%s203 + $0x48] sm:$0xf] %vm2378, %v2332
      %2398 = vst.msk [vmem:[%s203 + $0x4c] sm:$0xf] %vm2378, %v2333
      %2399 = vst.msk [vmem:[%s203 + $0x50] sm:$0xf] %vm2378, %v2334
      %2400 = vst.msk [vmem:[%s203 + $0x54] sm:$0xf] %vm2378, %v2335
      %2401 = vst.msk [vmem:[%s203 + $0x58] sm:$0xf] %vm2378, %v2336
      %2402 = vst.msk [vmem:[%s203 + $0x5c] sm:$0xf] %vm2378, %v2337
      %2403 = vst.msk [vmem:[%s203 + $0x60] sm:$0xf] %vm2378, %v2338
      %2404 = vst.msk [vmem:[%s203 + $0x64] sm:$0xf] %vm2378, %v2339
      %2405 = vst.msk [vmem:[%s203 + $0x68] sm:$0xf] %vm2378, %v2340
      %2406 = vst.msk [vmem:[%s203 + $0x6c] sm:$0xf] %vm2378, %v2341
      %2407 = vst.msk [vmem:[%s203 + $0x70] sm:$0xf] %vm2378, %v2342
      %2408 = vst.msk [vmem:[%s203 + $0x74] sm:$0xf] %vm2378, %v2343
      %2409 = vst.msk [vmem:[%s203 + $0x78] sm:$0xf] %vm2378, %v2344
      %2410 = vst.msk [vmem:[%s203 + $0x7c] sm:$0xf] %vm2378, %v2345
      %vm2411 = vcmask 130048
      %v2412 = vsel %vm2411, %v2218, 0.0
      %v2413 = vsel %vm2411, %v2219, 0.0
      %v2414 = vadd.f32 %v2412, %v2413
      %v2415 = vrot.slane %v2414, 4
      %v2416 = vadd.f32 %v2414, %v2415
      %v2417 = vrot.slane %v2416, 2
      %v2418 = vadd.f32 %v2416, %v2417
      %v2419 = vrot.slane %v2418, 1
      %v2420 = vadd.f32 %v2418, %v2419
      %v2421 = vsel %vm2411, %v2220, 0.0
      %v2422 = vsel %vm2411, %v2221, 0.0
      %v2423 = vadd.f32 %v2421, %v2422
      %v2424 = vrot.slane %v2423, 4
      %v2425 = vadd.f32 %v2423, %v2424
      %v2426 = vrot.slane %v2425, 2
      %v2427 = vadd.f32 %v2425, %v2426
      %v2428 = vrot.slane %v2427, 1
      %v2429 = vadd.f32 %v2427, %v2428
      %v2430 = vsel %vm2411, %v2222, 0.0
      %v2431 = vsel %vm2411, %v2223, 0.0
      %v2432 = vadd.f32 %v2430, %v2431
      %v2433 = vrot.slane %v2432, 4
      %v2434 = vadd.f32 %v2432, %v2433
      %v2435 = vrot.slane %v2434, 2
      %v2436 = vadd.f32 %v2434, %v2435
      %v2437 = vrot.slane %v2436, 1
      %v2438 = vadd.f32 %v2436, %v2437
      %v2439 = vsel %vm2411, %v2224, 0.0
      %v2440 = vsel %vm2411, %v2225, 0.0
      %v2441 = vadd.f32 %v2439, %v2440
      %v2442 = vrot.slane %v2441, 4
      %v2443 = vadd.f32 %v2441, %v2442
      %v2444 = vrot.slane %v2443, 2
      %v2445 = vadd.f32 %v2443, %v2444
      %v2446 = vrot.slane %v2445, 1
      %v2447 = vadd.f32 %v2445, %v2446
      %v2448 = vsel %vm2411, %v2226, 0.0
      %v2449 = vsel %vm2411, %v2227, 0.0
      %v2450 = vadd.f32 %v2448, %v2449
      %v2451 = vrot.slane %v2450, 4
      %v2452 = vadd.f32 %v2450, %v2451
      %v2453 = vrot.slane %v2452, 2
      %v2454 = vadd.f32 %v2452, %v2453
      %v2455 = vrot.slane %v2454, 1
      %v2456 = vadd.f32 %v2454, %v2455
      %v2457 = vsel %vm2411, %v2228, 0.0
      %v2458 = vsel %vm2411, %v2229, 0.0
      %v2459 = vadd.f32 %v2457, %v2458
      %v2460 = vrot.slane %v2459, 4
      %v2461 = vadd.f32 %v2459, %v2460
      %v2462 = vrot.slane %v2461, 2
      %v2463 = vadd.f32 %v2461, %v2462
      %v2464 = vrot.slane %v2463, 1
      %v2465 = vadd.f32 %v2463, %v2464
      %v2466 = vsel %vm2411, %v2230, 0.0
      %v2467 = vsel %vm2411, %v2231, 0.0
      %v2468 = vadd.f32 %v2466, %v2467
      %v2469 = vrot.slane %v2468, 4
      %v2470 = vadd.f32 %v2468, %v2469
      %v2471 = vrot.slane %v2470, 2
      %v2472 = vadd.f32 %v2470, %v2471
      %v2473 = vrot.slane %v2472, 1
      %v2474 = vadd.f32 %v2472, %v2473
      %v2475 = vsel %vm2411, %v2232, 0.0
      %v2476 = vsel %vm2411, %v2233, 0.0
      %v2477 = vadd.f32 %v2475, %v2476
      %v2478 = vrot.slane %v2477, 4
      %v2479 = vadd.f32 %v2477, %v2478
      %v2480 = vrot.slane %v2479, 2
      %v2481 = vadd.f32 %v2479, %v2480
      %v2482 = vrot.slane %v2481, 1
      %v2483 = vadd.f32 %v2481, %v2482
      %v2484 = vsel %vm2411, %v2234, 0.0
      %v2485 = vsel %vm2411, %v2235, 0.0
      %v2486 = vadd.f32 %v2484, %v2485
      %v2487 = vrot.slane %v2486, 4
      %v2488 = vadd.f32 %v2486, %v2487
      %v2489 = vrot.slane %v2488, 2
      %v2490 = vadd.f32 %v2488, %v2489
      %v2491 = vrot.slane %v2490, 1
      %v2492 = vadd.f32 %v2490, %v2491
      %v2493 = vsel %vm2411, %v2236, 0.0
      %v2494 = vsel %vm2411, %v2237, 0.0
      %v2495 = vadd.f32 %v2493, %v2494
      %v2496 = vrot.slane %v2495, 4
      %v2497 = vadd.f32 %v2495, %v2496
      %v2498 = vrot.slane %v2497, 2
      %v2499 = vadd.f32 %v2497, %v2498
      %v2500 = vrot.slane %v2499, 1
      %v2501 = vadd.f32 %v2499, %v2500
      %v2502 = vsel %vm2411, %v2238, 0.0
      %v2503 = vsel %vm2411, %v2239, 0.0
      %v2504 = vadd.f32 %v2502, %v2503
      %v2505 = vrot.slane %v2504, 4
      %v2506 = vadd.f32 %v2504, %v2505
      %v2507 = vrot.slane %v2506, 2
      %v2508 = vadd.f32 %v2506, %v2507
      %v2509 = vrot.slane %v2508, 1
      %v2510 = vadd.f32 %v2508, %v2509
      %v2511 = vsel %vm2411, %v2240, 0.0
      %v2512 = vsel %vm2411, %v2241, 0.0
      %v2513 = vadd.f32 %v2511, %v2512
      %v2514 = vrot.slane %v2513, 4
      %v2515 = vadd.f32 %v2513, %v2514
      %v2516 = vrot.slane %v2515, 2
      %v2517 = vadd.f32 %v2515, %v2516
      %v2518 = vrot.slane %v2517, 1
      %v2519 = vadd.f32 %v2517, %v2518
      %v2520 = vsel %vm2411, %v2242, 0.0
      %v2521 = vsel %vm2411, %v2243, 0.0
      %v2522 = vadd.f32 %v2520, %v2521
      %v2523 = vrot.slane %v2522, 4
      %v2524 = vadd.f32 %v2522, %v2523
      %v2525 = vrot.slane %v2524, 2
      %v2526 = vadd.f32 %v2524, %v2525
      %v2527 = vrot.slane %v2526, 1
      %v2528 = vadd.f32 %v2526, %v2527
      %v2529 = vsel %vm2411, %v2244, 0.0
      %v2530 = vsel %vm2411, %v2245, 0.0
      %v2531 = vadd.f32 %v2529, %v2530
      %v2532 = vrot.slane %v2531, 4
      %v2533 = vadd.f32 %v2531, %v2532
      %v2534 = vrot.slane %v2533, 2
      %v2535 = vadd.f32 %v2533, %v2534
      %v2536 = vrot.slane %v2535, 1
      %v2537 = vadd.f32 %v2535, %v2536
      %v2538 = vsel %vm2411, %v2246, 0.0
      %v2539 = vsel %vm2411, %v2247, 0.0
      %v2540 = vadd.f32 %v2538, %v2539
      %v2541 = vrot.slane %v2540, 4
      %v2542 = vadd.f32 %v2540, %v2541
      %v2543 = vrot.slane %v2542, 2
      %v2544 = vadd.f32 %v2542, %v2543
      %v2545 = vrot.slane %v2544, 1
      %v2546 = vadd.f32 %v2544, %v2545
      %v2547 = vsel %vm2411, %v2248, 0.0
      %v2548 = vsel %vm2411, %v2249, 0.0
      %v2549 = vadd.f32 %v2547, %v2548
      %v2550 = vrot.slane %v2549, 4
      %v2551 = vadd.f32 %v2549, %v2550
      %v2552 = vrot.slane %v2551, 2
      %v2553 = vadd.f32 %v2551, %v2552
      %v2554 = vrot.slane %v2553, 1
      %v2555 = vadd.f32 %v2553, %v2554
      %v2556 = vsel %vm2411, %v2420, 0.0
      %v2557 = vsel %vm2411, %v2429, 0.0
      %v2558 = vadd.f32 %v2556, %v2557
      %v2559 = vsel %vm2411, %v2438, 0.0
      %v2560 = vadd.f32 %v2558, %v2559
      %v2561 = vsel %vm2411, %v2447, 0.0
      %v2562 = vadd.f32 %v2560, %v2561
      %v2563 = vsel %vm2411, %v2456, 0.0
      %v2564 = vadd.f32 %v2562, %v2563
      %v2565 = vsel %vm2411, %v2465, 0.0
      %v2566 = vadd.f32 %v2564, %v2565
      %v2567 = vsel %vm2411, %v2474, 0.0
      %v2568 = vadd.f32 %v2566, %v2567
      %v2569 = vsel %vm2411, %v2483, 0.0
      %v2570 = vadd.f32 %v2568, %v2569
      %v2571 = vsel %vm2411, %v2492, 0.0
      %v2572 = vadd.f32 %v2570, %v2571
      %v2573 = vsel %vm2411, %v2501, 0.0
      %v2574 = vadd.f32 %v2572, %v2573
      %v2575 = vsel %vm2411, %v2510, 0.0
      %v2576 = vadd.f32 %v2574, %v2575
      %v2577 = vsel %vm2411, %v2519, 0.0
      %v2578 = vadd.f32 %v2576, %v2577
      %v2579 = vsel %vm2411, %v2528, 0.0
      %v2580 = vadd.f32 %v2578, %v2579
      %v2581 = vsel %vm2411, %v2537, 0.0
      %v2582 = vadd.f32 %v2580, %v2581
      %v2583 = vsel %vm2411, %v2546, 0.0
      %v2584 = vadd.f32 %v2582, %v2583
      %v2585 = vsel %vm2411, %v2555, 0.0
      %v2586 = vadd.f32 %v2584, %v2585
      %vm2587 = vcmask 122880
      %2588 = vst.msk [vmem:[%s206] sm:$0x1] %vm2587, %v2586
      %p2589 = scmp.lt.s32.totalorder %s16, 1
      %s2590 = scalar_select %p2589, %s16, 1
      %s2591 = smul.addr %s2590, 32
      %s2592 = smul.addr %s2591, 4
      %s2593 = scalar_lea.vmem %s3, %s2592
      %p2594 = scmp.lt.s32.totalorder %s16, 1
      %s2595 = scalar_select %p2594, %s16, 1
      %s2596 = scalar_lea.vmem %s4, %s2595
      // Predicated region
      $region33: #{efficientnet_forward.16} parent=31 // pred_check
        %p2597 = pneg %p102
      $region34: #{efficientnet_forward.16} parent=31 // pred_check_branch
        %2599 = sbr.rel (%p2597) target = $region36
      $region35: #{efficientnet_forward.16} parent=31 // pred_region
        _
      $region36: #{efficientnet_forward.16} parent=31 // pred_fallthru
        _
      // Predicated region
      $region37: #{efficientnet_forward.16} parent=31 // pred_check
        %p2600 = pneg %p128
      $region38: #{efficientnet_forward.16} parent=31 // pred_check_branch
        %2602 = sbr.rel (%p2600) target = $region40
      $region39: #{efficientnet_forward.16} parent=31 // pred_region
        _
      $region40: #{efficientnet_forward.16} parent=31 // pred_fallthru
        _
    $region32: #{efficientnet_forward.16} parent=5 // pred_fallthru
      _
    %p2603 = scmp.le.s32.totalorder 2, %s11
    // Predicated region
    $region41: #{efficientnet_forward.16} parent=5 // pred_check
      %p2604 = pneg %p2603
    $region42: #{efficientnet_forward.16} parent=5 // pred_check_branch
      %2606 = sbr.rel (%p2604) target = $region44
    $region43: #{efficientnet_forward.16} parent=5 // pred_region
      %s2607 = ssub.s32 %s11, 2
      // Predicated region
      $region45: #{efficientnet_forward.16} parent=43 // pred_check
        %p2608 = pneg %p108
      $region46: #{efficientnet_forward.16} parent=43 // pred_check_branch
        %2610 = sbr.rel (%p2608) target = $region48
      $region47: #{efficientnet_forward.16} parent=43 // pred_region
        %p2611 = scmp.lt.s32.totalorder %s17, 1
        %s2612 = scalar_select %p2611, %s17, 1
        %s2613 = smul.addr %s2612, 32
        %s2614 = smul.addr %s2613, 4
        %s2615 = scalar_lea.vmem %s3, %s2614
      $region48: #{efficientnet_forward.16} parent=43 // pred_fallthru
        _
      // Predicated region
      $region49: #{efficientnet_forward.16} parent=43 // pred_check
        %p2616 = pneg %p134
      $region50: #{efficientnet_forward.16} parent=43 // pred_check_branch
        %2618 = sbr.rel (%p2616) target = $region52
      $region51: #{efficientnet_forward.16} parent=43 // pred_region
        %p2619 = scmp.lt.s32.totalorder %s17, 1
        %s2620 = scalar_select %p2619, %s17, 1
        %s2621 = scalar_lea.vmem %s4, %s2620
      $region52: #{efficientnet_forward.16} parent=43 // pred_fallthru
        _
    $region44: #{efficientnet_forward.16} parent=5 // pred_fallthru
      _
  $region6: #{efficientnet_forward.16} parent=0 // loop_footer
    %s15 = sadd.s32 1, %s11
  $region7: #{efficientnet_forward.16} parent=0 // loop_footer_branch
    %10 = sbr.rel target = $region3
  $region8: #{efficientnet_forward.16} parent=0 // loop_exit
    _

// kernel: efficientnet_forward.18
$region0: #{efficientnet_forward.18}
  #allocation0 [shape = 'u32[]', space=smem, size = 0x4, offset = 0x4, fixed_abs, tag = 'smem constant byte address 0x4 - core index']
  #allocation1 [shape = 'u32[144,128]{1,0:T(1,128)}', space=vmem, size = 0x12000, scoped, tag = 'internal scratch']
  %s0 = inlined_call_operand.vmem [shape: bf16[2,256,16], index: 0, kind: input, shape index: {}]
  %s1 = inlined_call_operand.vmem [shape: bf16[2,1,16], index: 1, kind: input, shape index: {}]
  %s2 = inlined_call_operand.vmem [shape: bf16[16,16], index: 2, kind: input, shape index: {}]
  %s3 = inlined_call_operand.vmem [shape: f32[1,16], index: 3, kind: input, shape index: {}]
  %s4 = inlined_call_operand.vmem [shape: bf16[2,256,16], index: 4, kind: input, shape index: {}]
  %s5 = inlined_call_operand.vmem [shape: bf16[2,256,16], index: 5, kind: output, shape index: {}]
  %s6 = sld [smem:[#allocation0]]
  $region53: #{efficientnet_forward.18} parent=0
    _
  %s8 = ssub.s32 1, %s6
  %s9 = scalar_select 0, %s8, %s6
  loop: start=0, step=1, limit=4
  $region2: #{efficientnet_forward.18} parent=0 // loop_pre_header
    _
  $region3: #{efficientnet_forward.18} parent=0 // loop_header
    %s11 = sphi 0, %s15
    %p12 = scmp.ge.s32.totalorder %s11, 4
    %s18 = sphi 0, %s30
    %s19 = sphi 0, %s26
    %s20 = sphi 0, %s18
    %s21 = sphi 0, %s19
    %s22 = sphi 0, %s20
    %s23 = sphi 0, %s21
    %s35 = sphi 0, %s37
    %s38 = sphi 0, %s35
    %s39 = sphi 0, %s38
    %s55 = sphi 0, %s39
    %s61 = sphi 0, %s63
    %s64 = sphi 0, %s61
    %s65 = sphi 0, %s64
    %s81 = sphi 0, %s65
    %s85 = sphi 0, %s85
    %s87 = sphi 0, %s85
    %s88 = sphi 0, %s87
    %s102 = sphi 0, %s88
    %s106 = sphi 0, %s106
    %s108 = sphi 0, %s106
    %s109 = sphi 0, %s108
    %s123 = sphi 0, %s109
    %s131 = sphi 0, %s133
    %s134 = sphi 0, %s131
    %s135 = sphi 0, %s134
    %s151 = sphi 0, %s135
    %s159 = sphi 0, %s161
    %s162 = sphi 0, %s159
    %s163 = sphi 0, %s162
    %s179 = sphi 0, %s163
  $region4: #{efficientnet_forward.18} parent=0 // loop_header_branch
    %14 = sbr.rel (%p12) target = $region8
  $region5: #{efficientnet_forward.18} parent=0 // loop_body
    %s16 = ssub.s32 %s11, 1
    %s17 = ssub.s32 %s11, 2
    %s24 = sadd.s32 1, %s19
    %p25 = scmp.ge.s32.totalorder %s24, 1
    %s26 = scalar_select %p25, 0, %s24
    %s27 = sadd.s32 1, %s18
    %s28 = scalar_select %p25, %s27, %s18
    %p29 = scmp.ge.s32.totalorder %s28, 2
    %s30 = scalar_select %p29, 0, %s28
    %s31 = ssub.s32 %s18, %s30
    %s32 = ssub.s32 %s19, %s26
    %s33 = sor.u32 %s31, %s32
    %p34 = scmp.eq.s32.totalorder %s33, 0
    %s36 = sadd.s32 %s35, 1
    %s37 = scalar_select %p34, %s35, %s36
    %p40 = pneg %p34
    %p41 = scmp.eq.s32.totalorder %s11, 1
    %p42 = por %p40, %p41
    %p43 = scmp.ne.s32.totalorder %s35, %s38
    %p44 = scmp.eq.s32.totalorder %s11, 0
    %p45 = por %p43, %p44
    %p46 = scmp.ne.s32.totalorder %s35, %s38
    %p47 = scmp.eq.s32.totalorder %s16, 1
    %p48 = por %p46, %p47
    %p49 = scmp.ne.s32.totalorder %s38, %s39
    %p50 = scmp.eq.s32.totalorder %s16, 0
    %p51 = por %p49, %p50
    %p52 = scmp.ne.s32.totalorder %s38, %s39
    %p53 = scmp.eq.s32.totalorder %s17, 1
    %p54 = por %p52, %p53
    %p56 = scmp.ne.s32.totalorder %s39, %s55
    %p57 = scmp.eq.s32.totalorder %s17, 0
    %p58 = por %p56, %p57
    %s59 = ssub.s32 %s18, %s30
    %p60 = scmp.eq.s32.totalorder %s59, 0
    %s62 = sadd.s32 %s61, 1
    %s63 = scalar_select %p60, %s61, %s62
    %p66 = pneg %p60
    %p67 = scmp.eq.s32.totalorder %s11, 1
    %p68 = por %p66, %p67
    %p69 = scmp.ne.s32.totalorder %s61, %s64
    %p70 = scmp.eq.s32.totalorder %s11, 0
    %p71 = por %p69, %p70
    %p72 = scmp.ne.s32.totalorder %s61, %s64
    %p73 = scmp.eq.s32.totalorder %s16, 1
    %p74 = por %p72, %p73
    %p75 = scmp.ne.s32.totalorder %s64, %s65
    %p76 = scmp.eq.s32.totalorder %s16, 0
    %p77 = por %p75, %p76
    %p78 = scmp.ne.s32.totalorder %s64, %s65
    %p79 = scmp.eq.s32.totalorder %s17, 1
    %p80 = por %p78, %p79
    %p82 = scmp.ne.s32.totalorder %s65, %s81
    %p83 = scmp.eq.s32.totalorder %s17, 0
    %p84 = por %p82, %p83
    %s86 = sadd.s32 %s85, 1
    %p89 = scmp.eq.s32.totalorder %s11, 1
    %p90 = scmp.ne.s32.totalorder %s85, %s87
    %p91 = scmp.eq.s32.totalorder %s11, 0
    %p92 = por %p90, %p91
    %p93 = scmp.ne.s32.totalorder %s85, %s87
    %p94 = scmp.eq.s32.totalorder %s16, 1
    %p95 = por %p93, %p94
    %p96 = scmp.ne.s32.totalorder %s87, %s88
    %p97 = scmp.eq.s32.totalorder %s16, 0
    %p98 = por %p96, %p97
    %p99 = scmp.ne.s32.totalorder %s87, %s88
    %p100 = scmp.eq.s32.totalorder %s17, 1
    %p101 = por %p99, %p100
    %p103 = scmp.ne.s32.totalorder %s88, %s102
    %p104 = scmp.eq.s32.totalorder %s17, 0
    %p105 = por %p103, %p104
    %s107 = sadd.s32 %s106, 1
    %p110 = scmp.eq.s32.totalorder %s11, 1
    %p111 = scmp.ne.s32.totalorder %s106, %s108
    %p112 = scmp.eq.s32.totalorder %s11, 0
    %p113 = por %p111, %p112
    %p114 = scmp.ne.s32.totalorder %s106, %s108
    %p115 = scmp.eq.s32.totalorder %s16, 1
    %p116 = por %p114, %p115
    %p117 = scmp.ne.s32.totalorder %s108, %s109
    %p118 = scmp.eq.s32.totalorder %s16, 0
    %p119 = por %p117, %p118
    %p120 = scmp.ne.s32.totalorder %s108, %s109
    %p121 = scmp.eq.s32.totalorder %s17, 1
    %p122 = por %p120, %p121
    %p124 = scmp.ne.s32.totalorder %s109, %s123
    %p125 = scmp.eq.s32.totalorder %s17, 0
    %p126 = por %p124, %p125
    %s127 = ssub.s32 %s18, %s30
    %s128 = ssub.s32 %s19, %s26
    %s129 = sor.u32 %s127, %s128
    %p130 = scmp.eq.s32.totalorder %s129, 0
    %s132 = sadd.s32 %s131, 1
    %s133 = scalar_select %p130, %s131, %s132
    %p136 = pneg %p130
    %p137 = scmp.eq.s32.totalorder %s11, 1
    %p138 = por %p136, %p137
    %p139 = scmp.ne.s32.totalorder %s131, %s134
    %p140 = scmp.eq.s32.totalorder %s11, 0
    %p141 = por %p139, %p140
    %p142 = scmp.ne.s32.totalorder %s131, %s134
    %p143 = scmp.eq.s32.totalorder %s16, 1
    %p144 = por %p142, %p143
    %p145 = scmp.ne.s32.totalorder %s134, %s135
    %p146 = scmp.eq.s32.totalorder %s16, 0
    %p147 = por %p145, %p146
    %p148 = scmp.ne.s32.totalorder %s134, %s135
    %p149 = scmp.eq.s32.totalorder %s17, 1
    %p150 = por %p148, %p149
    %p152 = scmp.ne.s32.totalorder %s135, %s151
    %p153 = scmp.eq.s32.totalorder %s17, 0
    %p154 = por %p152, %p153
    %s155 = ssub.s32 %s18, %s30
    %s156 = ssub.s32 %s19, %s26
    %s157 = sor.u32 %s155, %s156
    %p158 = scmp.eq.s32.totalorder %s157, 0
    %s160 = sadd.s32 %s159, 1
    %s161 = scalar_select %p158, %s159, %s160
    %p164 = pneg %p158
    %p165 = scmp.eq.s32.totalorder %s11, 1
    %p166 = por %p164, %p165
    %p167 = scmp.ne.s32.totalorder %s159, %s162
    %p168 = scmp.eq.s32.totalorder %s11, 0
    %p169 = por %p167, %p168
    %p170 = scmp.ne.s32.totalorder %s159, %s162
    %p171 = scmp.eq.s32.totalorder %s16, 1
    %p172 = por %p170, %p171
    %p173 = scmp.ne.s32.totalorder %s162, %s163
    %p174 = scmp.eq.s32.totalorder %s16, 0
    %p175 = por %p173, %p174
    %p176 = scmp.ne.s32.totalorder %s162, %s163
    %p177 = scmp.eq.s32.totalorder %s17, 1
    %p178 = por %p176, %p177
    %p180 = scmp.ne.s32.totalorder %s163, %s179
    %p181 = scmp.eq.s32.totalorder %s17, 0
    %p182 = por %p180, %p181
    %p183 = scmp.le.s32.totalorder 1, %s11
    %p184 = scmp.lt.s32.totalorder %s11, 3
    %p185 = pnand %p183, %p184
    %p186 = pneg %p185
    // Predicated region
    $region9: #{efficientnet_forward.18} parent=5 // pred_check
      _
    $region10: #{efficientnet_forward.18} parent=5 // pred_check_branch
      %188 = sbr.rel (%p185) target = $region12
    $region11: #{efficientnet_forward.18} parent=5 // pred_region
      %s189 = ssub.s32 %s11, 1
      // Predicated region
      $region13: #{efficientnet_forward.18} parent=11 // pred_check
        %p190 = pneg %p98
      $region14: #{efficientnet_forward.18} parent=11 // pred_check_branch
        %192 = sbr.rel (%p190) target = $region16
      $region15: #{efficientnet_forward.18} parent=11 // pred_region
        _
      $region16: #{efficientnet_forward.18} parent=11 // pred_fallthru
        _
      // Predicated region
      $region17: #{efficientnet_forward.18} parent=11 // pred_check
        %p193 = pneg %p119
      $region18: #{efficientnet_forward.18} parent=11 // pred_check_branch
        %195 = sbr.rel (%p193) target = $region20
      $region19: #{efficientnet_forward.18} parent=11 // pred_region
        _
      $region20: #{efficientnet_forward.18} parent=11 // pred_fallthru
        _
    $region12: #{efficientnet_forward.18} parent=5 // pred_fallthru
      _
    %p196 = scmp.lt.s32.totalorder %s11, 2
    // Predicated region
    $region21: #{efficientnet_forward.18} parent=5 // pred_check
      %p197 = pneg %p196
    $region22: #{efficientnet_forward.18} parent=5 // pred_check_branch
      %199 = sbr.rel (%p197) target = $region24
    $region23: #{efficientnet_forward.18} parent=5 // pred_region
      // Predicated region
      $region25: #{efficientnet_forward.18} parent=23 // pred_check
        %p200 = pneg %p45
      $region26: #{efficientnet_forward.18} parent=23 // pred_check_branch
        %202 = sbr.rel (%p200) target = $region28
      $region27: #{efficientnet_forward.18} parent=23 // pred_region
        %s203 = smul.u32 32, %s19
        %p204 = scmp.lt.s32.totalorder %s18, 1
        %s205 = scalar_select %p204, %s18, 1
        %p206 = scmp.lt.s32.totalorder %s203, 31
        %s207 = scalar_select %p206, %s203, 31
        %s208 = smul.addr %s205, 32
        %s209 = sadd.s32 %s207, %s208
        %s210 = smul.addr %s209, 4
        %s211 = scalar_lea.vmem %s0, %s210
        %s212 = smul.u32 32, %s19
      $region28: #{efficientnet_forward.18} parent=23 // pred_fallthru
        _
      // Predicated region
      $region29: #{efficientnet_forward.18} parent=23 // pred_check
        %p213 = pneg %p71
      $region30: #{efficientnet_forward.18} parent=23 // pred_check_branch
        %215 = sbr.rel (%p213) target = $region32
      $region31: #{efficientnet_forward.18} parent=23 // pred_region
        %p216 = scmp.lt.s32.totalorder %s18, 1
        %s217 = scalar_select %p216, %s18, 1
        %s218 = scalar_lea.vmem %s1, %s217
      $region32: #{efficientnet_forward.18} parent=23 // pred_fallthru
        _
      // Predicated region
      $region33: #{efficientnet_forward.18} parent=23 // pred_check
        %p219 = pneg %p141
      $region34: #{efficientnet_forward.18} parent=23 // pred_check_branch
        %221 = sbr.rel (%p219) target = $region36
      $region35: #{efficientnet_forward.18} parent=23 // pred_region
        %s222 = smul.u32 32, %s19
        %p223 = scmp.lt.s32.totalorder %s18, 1
        %s224 = scalar_select %p223, %s18, 1
        %p225 = scmp.lt.s32.totalorder %s222, 31
        %s226 = scalar_select %p225, %s222, 31
        %s227 = smul.addr %s224, 32
        %s228 = sadd.s32 %s226, %s227
        %s229 = smul.addr %s228, 4
        %s230 = scalar_lea.vmem %s4, %s229
        %s231 = smul.u32 32, %s19
      $region36: #{efficientnet_forward.18} parent=23 // pred_fallthru
        _
    $region24: #{efficientnet_forward.18} parent=5 // pred_fallthru
      _
    %p232 = scmp.le.s32.totalorder 1, %s11
    %p233 = scmp.lt.s32.totalorder %s11, 3
    %p234 = pnand %p232, %p233
    %p235 = pneg %p234
    // Predicated region
    $region37: #{efficientnet_forward.18} parent=5 // pred_check
      _
    $region38: #{efficientnet_forward.18} parent=5 // pred_check_branch
      %237 = sbr.rel (%p234) target = $region40
    $region39: #{efficientnet_forward.18} parent=5 // pred_region
      %s238 = ssub.s32 %s11, 1
      %s239 = smul.u32 32, %s21
      %p240 = scmp.lt.s32.totalorder %s20, 1
      %s241 = scalar_select %p240, %s20, 1
      %p242 = scmp.lt.s32.totalorder %s239, 31
      %s243 = scalar_select %p242, %s239, 31
      %s244 = smul.addr %s241, 32
      %s245 = sadd.s32 %s243, %s244
      %s246 = smul.addr %s245, 4
      %s247 = scalar_lea.vmem %s0, %s246
      %p248 = pneg %p51
      %p249 = pneg %p48
      %p250 = scmp.lt.s32.totalorder %s20, 1
      %s251 = scalar_select %p250, %s20, 1
      %s252 = scalar_lea.vmem %s1, %s251
      %p253 = pneg %p77
      %p254 = pneg %p74
      %p255 = pneg %p98
      %p256 = pneg %p95
      %p257 = pneg %p119
      %p258 = pneg %p116
      %s259 = smul.u32 32, %s21
      %p260 = scmp.lt.s32.totalorder %s20, 1
      %s261 = scalar_select %p260, %s20, 1
      %p262 = scmp.lt.s32.totalorder %s259, 31
      %s263 = scalar_select %p262, %s259, 31
      %s264 = smul.addr %s261, 32
      %s265 = sadd.s32 %s263, %s264
      %s266 = smul.addr %s265, 4
      %s267 = scalar_lea.vmem %s4, %s266
      %p268 = pneg %p147
      %p269 = pneg %p144
      %p270 = pneg %p175
      %p271 = pneg %p172
      %s272 = smul.u32 32, %s21
      %p273 = scmp.lt.s32.totalorder %s20, 1
      %s274 = scalar_select %p273, %s20, 1
      %p275 = scmp.lt.s32.totalorder %s272, 31
      %s276 = scalar_select %p275, %s272, 31
      %s277 = smul.addr %s274, 32
      %s278 = sadd.s32 %s276, %s277
      %s279 = smul.addr %s278, 4
      %s280 = scalar_lea.vmem %s5, %s279
      %s281 = smul.u32 32, %s21
      %p282 = scmp.lt.s32.totalorder %s20, 1
      %s283 = scalar_select %p282, %s20, 1
      %p284 = scmp.lt.s32.totalorder %s281, 31
      %s285 = scalar_select %p284, %s281, 31
      %s286 = smul.addr %s283, 32
      %s287 = sadd.s32 %s285, %s286
      %s288 = smul.addr %s287, 4
      %s289 = scalar_lea.vmem %s0, %s288
      %s290 = smul.u32 32, %s21
      %p291 = scmp.lt.s32.totalorder %s20, 1
      %s292 = scalar_select %p291, %s20, 1
      %s293 = scalar_lea.vmem %s1, %s292
      %s294 = smul.u32 32, %s21
      %p295 = scmp.lt.s32.totalorder %s20, 1
      %s296 = scalar_select %p295, %s20, 1
      %p297 = scmp.lt.s32.totalorder %s294, 31
      %s298 = scalar_select %p297, %s294, 31
      %s299 = smul.addr %s296, 32
      %s300 = sadd.s32 %s298, %s299
      %s301 = smul.addr %s300, 4
      %s302 = scalar_lea.vmem %s4, %s301
      %s303 = smul.u32 32, %s21
      %s304 = smul.u32 32, %s21
      %p305 = scmp.lt.s32.totalorder %s20, 1
      %s306 = scalar_select %p305, %s20, 1
      %p307 = scmp.lt.s32.totalorder %s304, 31
      %s308 = scalar_select %p307, %s304, 31
      %s309 = smul.addr %s306, 32
      %s310 = sadd.s32 %s308, %s309
      %s311 = smul.addr %s310, 4
      %s312 = scalar_lea.vmem %s5, %s311
      %s313 = smul.u32 32, %s21
      %v315 = vld [vmem:[%s289] sm:$0xf]
      %v316 = vld [vmem:[%s289 + $0x4] sm:$0xf]
      %v317 = vld [vmem:[%s289 + $0x8] sm:$0xf]
      %v318 = vld [vmem:[%s289 + $0xc] sm:$0xf]
      %v319 = vld [vmem:[%s289 + $0x10] sm:$0xf]
      %v320 = vld [vmem:[%s289 + $0x14] sm:$0xf]
      %v321 = vld [vmem:[%s289 + $0x18] sm:$0xf]
      %v322 = vld [vmem:[%s289 + $0x1c] sm:$0xf]
      %v323 = vld [vmem:[%s289 + $0x20] sm:$0xf]
      %v324 = vld [vmem:[%s289 + $0x24] sm:$0xf]
      %v325 = vld [vmem:[%s289 + $0x28] sm:$0xf]
      %v326 = vld [vmem:[%s289 + $0x2c] sm:$0xf]
      %v327 = vld [vmem:[%s289 + $0x30] sm:$0xf]
      %v328 = vld [vmem:[%s289 + $0x34] sm:$0xf]
      %v329 = vld [vmem:[%s289 + $0x38] sm:$0xf]
      %v330 = vld [vmem:[%s289 + $0x3c] sm:$0xf]
      %v331 = vld [vmem:[%s289 + $0x40] sm:$0xf]
      %v332 = vld [vmem:[%s289 + $0x44] sm:$0xf]
      %v333 = vld [vmem:[%s289 + $0x48] sm:$0xf]
      %v334 = vld [vmem:[%s289 + $0x4c] sm:$0xf]
      %v335 = vld [vmem:[%s289 + $0x50] sm:$0xf]
      %v336 = vld [vmem:[%s289 + $0x54] sm:$0xf]
      %v337 = vld [vmem:[%s289 + $0x58] sm:$0xf]
      %v338 = vld [vmem:[%s289 + $0x5c] sm:$0xf]
      %v339 = vld [vmem:[%s289 + $0x60] sm:$0xf]
      %v340 = vld [vmem:[%s289 + $0x64] sm:$0xf]
      %v341 = vld [vmem:[%s289 + $0x68] sm:$0xf]
      %v342 = vld [vmem:[%s289 + $0x6c] sm:$0xf]
      %v343 = vld [vmem:[%s289 + $0x70] sm:$0xf]
      %v344 = vld [vmem:[%s289 + $0x74] sm:$0xf]
      %v345 = vld [vmem:[%s289 + $0x78] sm:$0xf]
      %v346 = vld [vmem:[%s289 + $0x7c] sm:$0xf]
      %v347 = vld [vmem:[%s293] sm:$0x1]
      %v349 = vpack.i.b16 %v347, %v347
      %v351 = vlaneseq
      %v352 = vshrl.u32 %v351, 7
      %v353 = vsub.s32 0, %v352
      %v354 = vrot.slane %v349, %v353
      %v356 = vunpack.c.l.b16 %v354
      %v357 = vpack.c.b16 %v356, %v356
      %v359 = vmul.bf16 %v315, %v357
      %v360 = vmul.bf16 %v316, %v357
      %v361 = vmul.bf16 %v317, %v357
      %v362 = vmul.bf16 %v318, %v357
      %v363 = vmul.bf16 %v319, %v357
      %v364 = vmul.bf16 %v320, %v357
      %v365 = vmul.bf16 %v321, %v357
      %v366 = vmul.bf16 %v322, %v357
      %v367 = vmul.bf16 %v323, %v357
      %v368 = vmul.bf16 %v324, %v357
      %v369 = vmul.bf16 %v325, %v357
      %v370 = vmul.bf16 %v326, %v357
      %v371 = vmul.bf16 %v327, %v357
      %v372 = vmul.bf16 %v328, %v357
      %v373 = vmul.bf16 %v329, %v357
      %v374 = vmul.bf16 %v330, %v357
      %v375 = vmul.bf16 %v331, %v357
      %v376 = vmul.bf16 %v332, %v357
      %v377 = vmul.bf16 %v333, %v357
      %v378 = vmul.bf16 %v334, %v357
      %v379 = vmul.bf16 %v335, %v357
      %v380 = vmul.bf16 %v336, %v357
      %v381 = vmul.bf16 %v337, %v357
      %v382 = vmul.bf16 %v338, %v357
      %v383 = vmul.bf16 %v339, %v357
      %v384 = vmul.bf16 %v340, %v357
      %v385 = vmul.bf16 %v341, %v357
      %v386 = vmul.bf16 %v342, %v357
      %v387 = vmul.bf16 %v343, %v357
      %v388 = vmul.bf16 %v344, %v357
      %v389 = vmul.bf16 %v345, %v357
      %v390 = vmul.bf16 %v346, %v357
      %v391 = vld [vmem:[%s2] sm:$0xf]
      %v392 = vld [vmem:[%s2 + $0x4] sm:$0xf]
      %v393 = vld [vmem:[%s3] sm:$0x1]
      %v395 = vlaneseq
      %v396 = vshrl.u32 %v395, 7
      %v397 = vsub.s32 0, %v396
      %v398 = vrot.slane %v393, %v397
      %v432 = vunpack.c.l.b16 %v359
      %v433 = vunpack.c.l.b16 %v360
      %v434 = vunpack.c.l.b16 %v361
      %v435 = vunpack.c.l.b16 %v362
      %v436 = vunpack.c.l.b16 %v363
      %v437 = vunpack.c.l.b16 %v364
      %v438 = vunpack.c.l.b16 %v365
      %v439 = vunpack.c.l.b16 %v366
      %v440 = vunpack.c.l.b16 %v367
      %v441 = vunpack.c.l.b16 %v368
      %v442 = vunpack.c.l.b16 %v369
      %v443 = vunpack.c.l.b16 %v370
      %v444 = vunpack.c.l.b16 %v371
      %v445 = vunpack.c.l.b16 %v372
      %v446 = vunpack.c.l.b16 %v373
      %v447 = vunpack.c.l.b16 %v374
      %v448 = vunpack.c.l.b16 %v375
      %v449 = vunpack.c.l.b16 %v376
      %v450 = vunpack.c.l.b16 %v377
      %v451 = vunpack.c.l.b16 %v378
      %v452 = vunpack.c.l.b16 %v379
      %v453 = vunpack.c.l.b16 %v380
      %v454 = vunpack.c.l.b16 %v381
      %v455 = vunpack.c.l.b16 %v382
      %v456 = vunpack.c.l.b16 %v383
      %v457 = vunpack.c.l.b16 %v384
      %v458 = vunpack.c.l.b16 %v385
      %v459 = vunpack.c.l.b16 %v386
      %v460 = vunpack.c.l.b16 %v387
      %v461 = vunpack.c.l.b16 %v388
      %v462 = vunpack.c.l.b16 %v389
      %v463 = vunpack.c.l.b16 %v390
      %v464 = vpack.c.b16 %v433, %v432
      %v465 = vpack.c.b16 %v435, %v434
      %v466 = vpack.c.b16 %v437, %v436
      %v467 = vpack.c.b16 %v439, %v438
      %v468 = vpack.c.b16 %v441, %v440
      %v469 = vpack.c.b16 %v443, %v442
      %v470 = vpack.c.b16 %v445, %v444
      %v471 = vpack.c.b16 %v447, %v446
      %v472 = vpack.c.b16 %v449, %v448
      %v473 = vpack.c.b16 %v451, %v450
      %v474 = vpack.c.b16 %v453, %v452
      %v475 = vpack.c.b16 %v455, %v454
      %v476 = vpack.c.b16 %v457, %v456
      %v477 = vpack.c.b16 %v459, %v458
      %v478 = vpack.c.b16 %v461, %v460
      %v479 = vpack.c.b16 %v463, %v462
      %v482 = vunpack.c.l.b16 %v391
      %v483 = vunpack.c.l.b16 %v392
      %v484 = vpack.c.b16 %v483, %v482
      %vm486 = vcmask 130048
      %v488 = vsel %vm486, %v464, 0
      %v491 = vsel %vm486, %v465, 0
      %v494 = vsel %vm486, %v466, 0
      %v497 = vsel %vm486, %v467, 0
      %v500 = vsel %vm486, %v468, 0
      %v503 = vsel %vm486, %v469, 0
      %v506 = vsel %vm486, %v470, 0
      %v509 = vsel %vm486, %v471, 0
      %v512 = vsel %vm486, %v472, 0
      %v515 = vsel %vm486, %v473, 0
      %v518 = vsel %vm486, %v474, 0
      %v521 = vsel %vm486, %v475, 0
      %v524 = vsel %vm486, %v476, 0
      %v527 = vsel %vm486, %v477, 0
      %v530 = vsel %vm486, %v478, 0
      %v533 = vsel %vm486, %v479, 0
      %535 = vmatprep.subr.bf16.mxu0 0
      %536 = vmatpush1.bf16.msra.mxu0 %v484
      %537 = vmatprep.subr.bf16.mxu0 0
      %538 = vmatpush1.bf16.msra.mxu0 0
      %539 = vmatprep.subr.bf16.mxu0 0
      %540 = vmatpush1.bf16.msra.mxu0 0
      %541 = vmatprep.subr.bf16.mxu0 0
      %542 = vmatpush1.bf16.msra.mxu0 0
      %543 = vmatprep.subr.bf16.mxu0 0
      %544 = vmatpush1.bf16.msra.mxu0 0
      %545 = vmatprep.subr.bf16.mxu0 0
      %546 = vmatpush1.bf16.msra.mxu0 0
      %547 = vmatprep.subr.bf16.mxu0 0
      %548 = vmatpush1.bf16.msra.mxu0 0
      %549 = vmatprep.subr.bf16.mxu0 0
      %550 = vmatpush1.bf16.msra.mxu0 0
      %551 = vmatprep.subr.bf16.mxu0 0
      %552 = vmatpush1.bf16.msra.mxu0 0
      %553 = vmatprep.subr.bf16.mxu0 0
      %554 = vmatpush1.bf16.msra.mxu0 0
      %555 = vmatprep.subr.bf16.mxu0 0
      %556 = vmatpush1.bf16.msra.mxu0 0
      %557 = vmatprep.subr.bf16.mxu0 0
      %558 = vmatpush1.bf16.msra.mxu0 0
      %559 = vmatprep.subr.bf16.mxu0 0
      %560 = vmatpush1.bf16.msra.mxu0 0
      %561 = vmatprep.subr.bf16.mxu0 0
      %562 = vmatpush1.bf16.msra.mxu0 0
      %563 = vmatprep.subr.bf16.mxu0 0
      %564 = vmatpush1.bf16.msra.mxu0 0
      %565 = vmatprep.subr.bf16.mxu0 0
      %566 = vmatpush1.bf16.msra.mxu0 0
      %567 = vmatprep.mubr.bf16.mxu0 0
      %568 = vmatmul.mubr.bf16.gmra.mrb[0].mxu0 %v488
      %v569 = vpop.f32.mrb[0].mxu0
      %v570 = vadd.f32 %v398, %v569
      %v571 = vpop.f32.mrb[0].mxu0
      %v572 = vpop.f32.mrb[0].mxu0
      %v573 = vadd.f32 %v398, %v572
      %v574 = vpop.f32.mrb[0].mxu0
      %575 = vmatprep.mubr.bf16.mxu0 0
      %576 = vmatmul.mubr.bf16.gmra.mrb[0].mxu0 %v491
      %v577 = vpop.f32.mrb[0].mxu0
      %v578 = vadd.f32 %v398, %v577
      %v579 = vpop.f32.mrb[0].mxu0
      %v580 = vpop.f32.mrb[0].mxu0
      %v581 = vadd.f32 %v398, %v580
      %v582 = vpop.f32.mrb[0].mxu0
      %583 = vmatprep.mubr.bf16.mxu0 0
      %584 = vmatmul.mubr.bf16.gmra.mrb[0].mxu0 %v494
      %v585 = vpop.f32.mrb[0].mxu0
      %v586 = vadd.f32 %v398, %v585
      %v587 = vpop.f32.mrb[0].mxu0
      %v588 = vpop.f32.mrb[0].mxu0
      %v589 = vadd.f32 %v398, %v588
      %v590 = vpop.f32.mrb[0].mxu0
      %591 = vmatprep.mubr.bf16.mxu0 0
      %592 = vmatmul.mubr.bf16.gmra.mrb[0].mxu0 %v497
      %v593 = vpop.f32.mrb[0].mxu0
      %v594 = vadd.f32 %v398, %v593
      %v595 = vpop.f32.mrb[0].mxu0
      %v596 = vpop.f32.mrb[0].mxu0
      %v597 = vadd.f32 %v398, %v596
      %v598 = vpop.f32.mrb[0].mxu0
      %599 = vmatprep.mubr.bf16.mxu0 0
      %600 = vmatmul.mubr.bf16.gmra.mrb[0].mxu0 %v500
      %v601 = vpop.f32.mrb[0].mxu0
      %v602 = vadd.f32 %v398, %v601
      %v603 = vpop.f32.mrb[0].mxu0
      %v604 = vpop.f32.mrb[0].mxu0
      %v605 = vadd.f32 %v398, %v604
      %v606 = vpop.f32.mrb[0].mxu0
      %607 = vmatprep.mubr.bf16.mxu0 0
      %608 = vmatmul.mubr.bf16.gmra.mrb[0].mxu0 %v503
      %v609 = vpop.f32.mrb[0].mxu0
      %v610 = vadd.f32 %v398, %v609
      %v611 = vpop.f32.mrb[0].mxu0
      %v612 = vpop.f32.mrb[0].mxu0
      %v613 = vadd.f32 %v398, %v612
      %v614 = vpop.f32.mrb[0].mxu0
      %615 = vmatprep.mubr.bf16.mxu0 0
      %616 = vmatmul.mubr.bf16.gmra.mrb[0].mxu0 %v506
      %v617 = vpop.f32.mrb[0].mxu0
      %v618 = vadd.f32 %v398, %v617
      %v619 = vpop.f32.mrb[0].mxu0
      %v620 = vpop.f32.mrb[0].mxu0
      %v621 = vadd.f32 %v398, %v620
      %v622 = vpop.f32.mrb[0].mxu0
      %623 = vmatprep.mubr.bf16.mxu0 0
      %624 = vmatmul.mubr.bf16.gmra.mrb[0].mxu0 %v509
      %v625 = vpop.f32.mrb[0].mxu0
      %v626 = vadd.f32 %v398, %v625
      %v627 = vpop.f32.mrb[0].mxu0
      %v628 = vpop.f32.mrb[0].mxu0
      %v629 = vadd.f32 %v398, %v628
      %v630 = vpop.f32.mrb[0].mxu0
      %631 = vmatprep.mubr.bf16.mxu0 0
      %632 = vmatmul.mubr.bf16.gmra.mrb[0].mxu0 %v512
      %v633 = vpop.f32.mrb[0].mxu0
      %v634 = vadd.f32 %v398, %v633
      %v635 = vpop.f32.mrb[0].mxu0
      %v636 = vpop.f32.mrb[0].mxu0
      %v637 = vadd.f32 %v398, %v636
      %v638 = vpop.f32.mrb[0].mxu0
      %639 = vmatprep.mubr.bf16.mxu0 0
      %640 = vmatmul.mubr.bf16.gmra.mrb[0].mxu0 %v515
      %v641 = vpop.f32.mrb[0].mxu0
      %v642 = vadd.f32 %v398, %v641
      %v643 = vpop.f32.mrb[0].mxu0
      %v644 = vpop.f32.mrb[0].mxu0
      %v645 = vadd.f32 %v398, %v644
      %v646 = vpop.f32.mrb[0].mxu0
      %647 = vmatprep.mubr.bf16.mxu0 0
      %648 = vmatmul.mubr.bf16.gmra.mrb[0].mxu0 %v518
      %v649 = vpop.f32.mrb[0].mxu0
      %v650 = vadd.f32 %v398, %v649
      %v651 = vpop.f32.mrb[0].mxu0
      %v652 = vpop.f32.mrb[0].mxu0
      %v653 = vadd.f32 %v398, %v652
      %v654 = vpop.f32.mrb[0].mxu0
      %655 = vmatprep.mubr.bf16.mxu0 0
      %656 = vmatmul.mubr.bf16.gmra.mrb[0].mxu0 %v521
      %v657 = vpop.f32.mrb[0].mxu0
      %v658 = vadd.f32 %v398, %v657
      %v659 = vpop.f32.mrb[0].mxu0
      %v660 = vpop.f32.mrb[0].mxu0
      %v661 = vadd.f32 %v398, %v660
      %v662 = vpop.f32.mrb[0].mxu0
      %663 = vmatprep.mubr.bf16.mxu0 0
      %664 = vmatmul.mubr.bf16.gmra.mrb[0].mxu0 %v524
      %v665 = vpop.f32.mrb[0].mxu0
      %v666 = vadd.f32 %v398, %v665
      %v667 = vpop.f32.mrb[0].mxu0
      %v668 = vpop.f32.mrb[0].mxu0
      %v669 = vadd.f32 %v398, %v668
      %v670 = vpop.f32.mrb[0].mxu0
      %671 = vmatprep.mubr.bf16.mxu0 0
      %672 = vmatmul.mubr.bf16.gmra.mrb[0].mxu0 %v527
      %v673 = vpop.f32.mrb[0].mxu0
      %v674 = vadd.f32 %v398, %v673
      %v675 = vpop.f32.mrb[0].mxu0
      %v676 = vpop.f32.mrb[0].mxu0
      %v677 = vadd.f32 %v398, %v676
      %v678 = vpop.f32.mrb[0].mxu0
      %679 = vmatprep.mubr.bf16.mxu0 0
      %680 = vmatmul.mubr.bf16.gmra.mrb[0].mxu0 %v530
      %v681 = vpop.f32.mrb[0].mxu0
      %v682 = vadd.f32 %v398, %v681
      %v683 = vpop.f32.mrb[0].mxu0
      %v684 = vpop.f32.mrb[0].mxu0
      %v685 = vadd.f32 %v398, %v684
      %v686 = vpop.f32.mrb[0].mxu0
      %687 = vmatprep.mubr.bf16.mxu0 0
      %688 = vmatmul.mubr.bf16.gmra.mrb[0].mxu0 %v533
      %v689 = vpop.f32.mrb[0].mxu0
      %v690 = vadd.f32 %v398, %v689
      %v691 = vpop.f32.mrb[0].mxu0
      %v692 = vpop.f32.mrb[0].mxu0
      %v693 = vadd.f32 %v398, %v692
      %v694 = vpop.f32.mrb[0].mxu0
      %695 = vdwg.mxu0
      %v696 = vld [vmem:[%s302] sm:$0xf]
      %v697 = vld [vmem:[%s302 + $0x4] sm:$0xf]
      %v698 = vld [vmem:[%s302 + $0x8] sm:$0xf]
      %v699 = vld [vmem:[%s302 + $0xc] sm:$0xf]
      %v700 = vld [vmem:[%s302 + $0x10] sm:$0xf]
      %v701 = vld [vmem:[%s302 + $0x14] sm:$0xf]
      %v702 = vld [vmem:[%s302 + $0x18] sm:$0xf]
      %v703 = vld [vmem:[%s302 + $0x1c] sm:$0xf]
      %v704 = vld [vmem:[%s302 + $0x20] sm:$0xf]
      %v705 = vld [vmem:[%s302 + $0x24] sm:$0xf]
      %v706 = vld [vmem:[%s302 + $0x28] sm:$0xf]
      %v707 = vld [vmem:[%s302 + $0x2c] sm:$0xf]
      %v708 = vld [vmem:[%s302 + $0x30] sm:$0xf]
      %v709 = vld [vmem:[%s302 + $0x34] sm:$0xf]
      %v710 = vld [vmem:[%s302 + $0x38] sm:$0xf]
      %v711 = vld [vmem:[%s302 + $0x3c] sm:$0xf]
      %v712 = vld [vmem:[%s302 + $0x40] sm:$0xf]
      %v713 = vld [vmem:[%s302 + $0x44] sm:$0xf]
      %v714 = vld [vmem:[%s302 + $0x48] sm:$0xf]
      %v715 = vld [vmem:[%s302 + $0x4c] sm:$0xf]
      %v716 = vld [vmem:[%s302 + $0x50] sm:$0xf]
      %v717 = vld [vmem:[%s302 + $0x54] sm:$0xf]
      %v718 = vld [vmem:[%s302 + $0x58] sm:$0xf]
      %v719 = vld [vmem:[%s302 + $0x5c] sm:$0xf]
      %v720 = vld [vmem:[%s302 + $0x60] sm:$0xf]
      %v721 = vld [vmem:[%s302 + $0x64] sm:$0xf]
      %v722 = vld [vmem:[%s302 + $0x68] sm:$0xf]
      %v723 = vld [vmem:[%s302 + $0x6c] sm:$0xf]
      %v724 = vld [vmem:[%s302 + $0x70] sm:$0xf]
      %v725 = vld [vmem:[%s302 + $0x74] sm:$0xf]
      %v726 = vld [vmem:[%s302 + $0x78] sm:$0xf]
      %v727 = vld [vmem:[%s302 + $0x7c] sm:$0xf]
      %v728 = vunpack.c.l.bf16 %v696
      %v729 = vunpack.c.l.bf16 %v697
      %v730 = vunpack.c.l.bf16 %v698
      %v731 = vunpack.c.l.bf16 %v699
      %v732 = vunpack.c.l.bf16 %v700
      %v733 = vunpack.c.l.bf16 %v701
      %v734 = vunpack.c.l.bf16 %v702
      %v735 = vunpack.c.l.bf16 %v703
      %v736 = vunpack.c.l.bf16 %v704
      %v737 = vunpack.c.l.bf16 %v705
      %v738 = vunpack.c.l.bf16 %v706
      %v739 = vunpack.c.l.bf16 %v707
      %v740 = vunpack.c.l.bf16 %v708
      %v741 = vunpack.c.l.bf16 %v709
      %v742 = vunpack.c.l.bf16 %v710
      %v743 = vunpack.c.l.bf16 %v711
      %v744 = vunpack.c.l.bf16 %v712
      %v745 = vunpack.c.l.bf16 %v713
      %v746 = vunpack.c.l.bf16 %v714
      %v747 = vunpack.c.l.bf16 %v715
      %v748 = vunpack.c.l.bf16 %v716
      %v749 = vunpack.c.l.bf16 %v717
      %v750 = vunpack.c.l.bf16 %v718
      %v751 = vunpack.c.l.bf16 %v719
      %v752 = vunpack.c.l.bf16 %v720
      %v753 = vunpack.c.l.bf16 %v721
      %v754 = vunpack.c.l.bf16 %v722
      %v755 = vunpack.c.l.bf16 %v723
      %v756 = vunpack.c.l.bf16 %v724
      %v757 = vunpack.c.l.bf16 %v725
      %v758 = vunpack.c.l.bf16 %v726
      %v759 = vunpack.c.l.bf16 %v727
      %v760 = vadd.f32 %v570, %v728
      %v761 = vadd.f32 %v573, %v729
      %v762 = vadd.f32 %v578, %v730
      %v763 = vadd.f32 %v581, %v731
      %v764 = vadd.f32 %v586, %v732
      %v765 = vadd.f32 %v589, %v733
      %v766 = vadd.f32 %v594, %v734
      %v767 = vadd.f32 %v597, %v735
      %v768 = vadd.f32 %v602, %v736
      %v769 = vadd.f32 %v605, %v737
      %v770 = vadd.f32 %v610, %v738
      %v771 = vadd.f32 %v613, %v739
      %v772 = vadd.f32 %v618, %v740
      %v773 = vadd.f32 %v621, %v741
      %v774 = vadd.f32 %v626, %v742
      %v775 = vadd.f32 %v629, %v743
      %v776 = vadd.f32 %v634, %v744
      %v777 = vadd.f32 %v637, %v745
      %v778 = vadd.f32 %v642, %v746
      %v779 = vadd.f32 %v645, %v747
      %v780 = vadd.f32 %v650, %v748
      %v781 = vadd.f32 %v653, %v749
      %v782 = vadd.f32 %v658, %v750
      %v783 = vadd.f32 %v661, %v751
      %v784 = vadd.f32 %v666, %v752
      %v785 = vadd.f32 %v669, %v753
      %v786 = vadd.f32 %v674, %v754
      %v787 = vadd.f32 %v677, %v755
      %v788 = vadd.f32 %v682, %v756
      %v789 = vadd.f32 %v685, %v757
      %v790 = vadd.f32 %v690, %v758
      %v791 = vadd.f32 %v693, %v759
      %v792 = vpack.c.bf16 %v761, %v760
      %v793 = vpack.c.bf16 %v763, %v762
      %v794 = vpack.c.bf16 %v765, %v764
      %v795 = vpack.c.bf16 %v767, %v766
      %v796 = vpack.c.bf16 %v769, %v768
      %v797 = vpack.c.bf16 %v771, %v770
      %v798 = vpack.c.bf16 %v773, %v772
      %v799 = vpack.c.bf16 %v775, %v774
      %v800 = vpack.c.bf16 %v777, %v776
      %v801 = vpack.c.bf16 %v779, %v778
      %v802 = vpack.c.bf16 %v781, %v780
      %v803 = vpack.c.bf16 %v783, %v782
      %v804 = vpack.c.bf16 %v785, %v784
      %v805 = vpack.c.bf16 %v787, %v786
      %v806 = vpack.c.bf16 %v789, %v788
      %v807 = vpack.c.bf16 %v791, %v790
      %v824 = vunpack.c.l.b16 %v792
      %v825 = vunpack.c.h.b16 %v792
      %v826 = vunpack.c.l.b16 %v793
      %v827 = vunpack.c.h.b16 %v793
      %v828 = vunpack.c.l.b16 %v794
      %v829 = vunpack.c.h.b16 %v794
      %v830 = vunpack.c.l.b16 %v795
      %v831 = vunpack.c.h.b16 %v795
      %v832 = vunpack.c.l.b16 %v796
      %v833 = vunpack.c.h.b16 %v796
      %v834 = vunpack.c.l.b16 %v797
      %v835 = vunpack.c.h.b16 %v797
      %v836 = vunpack.c.l.b16 %v798
      %v837 = vunpack.c.h.b16 %v798
      %v838 = vunpack.c.l.b16 %v799
      %v839 = vunpack.c.h.b16 %v799
      %v840 = vunpack.c.l.b16 %v800
      %v841 = vunpack.c.h.b16 %v800
      %v842 = vunpack.c.l.b16 %v801
      %v843 = vunpack.c.h.b16 %v801
      %v844 = vunpack.c.l.b16 %v802
      %v845 = vunpack.c.h.b16 %v802
      %v846 = vunpack.c.l.b16 %v803
      %v847 = vunpack.c.h.b16 %v803
      %v848 = vunpack.c.l.b16 %v804
      %v849 = vunpack.c.h.b16 %v804
      %v850 = vunpack.c.l.b16 %v805
      %v851 = vunpack.c.h.b16 %v805
      %v852 = vunpack.c.l.b16 %v806
      %v853 = vunpack.c.h.b16 %v806
      %v854 = vunpack.c.l.b16 %v807
      %v855 = vunpack.c.h.b16 %v807
      %v856 = vpack.c.b16 %v824, %v824
      %v857 = vpack.c.b16 %v825, %v825
      %v858 = vpack.c.b16 %v826, %v826
      %v859 = vpack.c.b16 %v827, %v827
      %v860 = vpack.c.b16 %v828, %v828
      %v861 = vpack.c.b16 %v829, %v829
      %v862 = vpack.c.b16 %v830, %v830
      %v863 = vpack.c.b16 %v831, %v831
      %v864 = vpack.c.b16 %v832, %v832
      %v865 = vpack.c.b16 %v833, %v833
      %v866 = vpack.c.b16 %v834, %v834
      %v867 = vpack.c.b16 %v835, %v835
      %v868 = vpack.c.b16 %v836, %v836
      %v869 = vpack.c.b16 %v837, %v837
      %v870 = vpack.c.b16 %v838, %v838
      %v871 = vpack.c.b16 %v839, %v839
      %v872 = vpack.c.b16 %v840, %v840
      %v873 = vpack.c.b16 %v841, %v841
      %v874 = vpack.c.b16 %v842, %v842
      %v875 = vpack.c.b16 %v843, %v843
      %v876 = vpack.c.b16 %v844, %v844
      %v877 = vpack.c.b16 %v845, %v845
      %v878 = vpack.c.b16 %v846, %v846
      %v879 = vpack.c.b16 %v847, %v847
      %v880 = vpack.c.b16 %v848, %v848
      %v881 = vpack.c.b16 %v849, %v849
      %v882 = vpack.c.b16 %v850, %v850
      %v883 = vpack.c.b16 %v851, %v851
      %v884 = vpack.c.b16 %v852, %v852
      %v885 = vpack.c.b16 %v853, %v853
      %v886 = vpack.c.b16 %v854, %v854
      %v887 = vpack.c.b16 %v855, %v855
      %vm920 = vcmask 125952
      %921 = vst.msk [vmem:[%s312] sm:$0xf] %vm920, %v856
      %922 = vst.msk [vmem:[%s312 + $0x4] sm:$0xf] %vm920, %v857
      %923 = vst.msk [vmem:[%s312 + $0x8] sm:$0xf] %vm920, %v858
      %924 = vst.msk [vmem:[%s312 + $0xc] sm:$0xf] %vm920, %v859
      %925 = vst.msk [vmem:[%s312 + $0x10] sm:$0xf] %vm920, %v860
      %926 = vst.msk [vmem:[%s312 + $0x14] sm:$0xf] %vm920, %v861
      %927 = vst.msk [vmem:[%s312 + $0x18] sm:$0xf] %vm920, %v862
      %928 = vst.msk [vmem:[%s312 + $0x1c] sm:$0xf] %vm920, %v863
      %929 = vst.msk [vmem:[%s312 + $0x20] sm:$0xf] %vm920, %v864
      %930 = vst.msk [vmem:[%s312 + $0x24] sm:$0xf] %vm920, %v865
      %931 = vst.msk [vmem:[%s312 + $0x28] sm:$0xf] %vm920, %v866
      %932 = vst.msk [vmem:[%s312 + $0x2c] sm:$0xf] %vm920, %v867
      %933 = vst.msk [vmem:[%s312 + $0x30] sm:$0xf] %vm920, %v868
      %934 = vst.msk [vmem:[%s312 + $0x34] sm:$0xf] %vm920, %v869
      %935 = vst.msk [vmem:[%s312 + $0x38] sm:$0xf] %vm920, %v870
      %936 = vst.msk [vmem:[%s312 + $0x3c] sm:$0xf] %vm920, %v871
      %937 = vst.msk [vmem:[%s312 + $0x40] sm:$0xf] %vm920, %v872
      %938 = vst.msk [vmem:[%s312 + $0x44] sm:$0xf] %vm920, %v873
      %939 = vst.msk [vmem:[%s312 + $0x48] sm:$0xf] %vm920, %v874
      %940 = vst.msk [vmem:[%s312 + $0x4c] sm:$0xf] %vm920, %v875
      %941 = vst.msk [vmem:[%s312 + $0x50] sm:$0xf] %vm920, %v876
      %942 = vst.msk [vmem:[%s312 + $0x54] sm:$0xf] %vm920, %v877
      %943 = vst.msk [vmem:[%s312 + $0x58] sm:$0xf] %vm920, %v878
      %944 = vst.msk [vmem:[%s312 + $0x5c] sm:$0xf] %vm920, %v879
      %945 = vst.msk [vmem:[%s312 + $0x60] sm:$0xf] %vm920, %v880
      %946 = vst.msk [vmem:[%s312 + $0x64] sm:$0xf] %vm920, %v881
      %947 = vst.msk [vmem:[%s312 + $0x68] sm:$0xf] %vm920, %v882
      %948 = vst.msk [vmem:[%s312 + $0x6c] sm:$0xf] %vm920, %v883
      %949 = vst.msk [vmem:[%s312 + $0x70] sm:$0xf] %vm920, %v884
      %950 = vst.msk [vmem:[%s312 + $0x74] sm:$0xf] %vm920, %v885
      %951 = vst.msk [vmem:[%s312 + $0x78] sm:$0xf] %vm920, %v886
      %952 = vst.msk [vmem:[%s312 + $0x7c] sm:$0xf] %vm920, %v887
      %s953 = smul.u32 32, %s21
      %p954 = scmp.lt.s32.totalorder %s20, 1
      %s955 = scalar_select %p954, %s20, 1
      %p956 = scmp.lt.s32.totalorder %s953, 31
      %s957 = scalar_select %p956, %s953, 31
      %s958 = smul.addr %s955, 32
      %s959 = sadd.s32 %s957, %s958
      %s960 = smul.addr %s959, 4
      %s961 = scalar_lea.vmem %s5, %s960
      // Predicated region
      $region41: #{efficientnet_forward.18} parent=39 // pred_check
        %p962 = pneg %p172
      $region42: #{efficientnet_forward.18} parent=39 // pred_check_branch
        %964 = sbr.rel (%p962) target = $region44
      $region43: #{efficientnet_forward.18} parent=39 // pred_region
        %s965 = smul.u32 32, %s21
      $region44: #{efficientnet_forward.18} parent=39 // pred_fallthru
        _
    $region40: #{efficientnet_forward.18} parent=5 // pred_fallthru
      _
    %p966 = scmp.le.s32.totalorder 2, %s11
    // Predicated region
    $region45: #{efficientnet_forward.18} parent=5 // pred_check
      %p967 = pneg %p966
    $region46: #{efficientnet_forward.18} parent=5 // pred_check_branch
      %969 = sbr.rel (%p967) target = $region48
    $region47: #{efficientnet_forward.18} parent=5 // pred_region
      %s970 = ssub.s32 %s11, 2
      // Predicated region
      $region49: #{efficientnet_forward.18} parent=47 // pred_check
        %p971 = pneg %p178
      $region50: #{efficientnet_forward.18} parent=47 // pred_check_branch
        %973 = sbr.rel (%p971) target = $region52
      $region51: #{efficientnet_forward.18} parent=47 // pred_region
        %s974 = smul.u32 32, %s23
        %p975 = scmp.lt.s32.totalorder %s22, 1
        %s976 = scalar_select %p975, %s22, 1
        %p977 = scmp.lt.s32.totalorder %s974, 31
        %s978 = scalar_select %p977, %s974, 31
        %s979 = smul.addr %s976, 32
        %s980 = sadd.s32 %s978, %s979
        %s981 = smul.addr %s980, 4
        %s982 = scalar_lea.vmem %s5, %s981
      $region52: #{efficientnet_forward.18} parent=47 // pred_fallthru
        _
    $region48: #{efficientnet_forward.18} parent=5 // pred_fallthru
      _
  $region6: #{efficientnet_forward.18} parent=0 // loop_footer
    %s15 = sadd.s32 1, %s11
  $region7: #{efficientnet_forward.18} parent=0 // loop_footer_branch
    %10 = sbr.rel target = $region3
  $region8: #{efficientnet_forward.18} parent=0 // loop_exit
    _

// kernel: efficientnet_forward.19
$region0: #{efficientnet_forward.19}
  #allocation0 [shape = 'u32[]', space=smem, size = 0x4, offset = 0x4, fixed_abs, tag = 'smem constant byte address 0x4 - core index']
  #allocation1 [shape = 'u32[144,128]{1,0:T(1,128)}', space=vmem, size = 0x12000, scoped, tag = 'internal scratch']
  %s0 = inlined_call_operand.vmem [shape: bf16[512,16], index: 0, kind: input, shape index: {}]
  %s1 = inlined_call_operand.vmem [shape: bf16[16,64], index: 1, kind: input, shape index: {}]
  %s2 = inlined_call_operand.vmem [shape: f32[1,64], index: 2, kind: input, shape index: {}]
  %s3 = inlined_call_operand.vmem [shape: bf16[512,64], index: 3, kind: output, shape index: {}]
  %s4 = sld [smem:[#allocation0]]
  $region22: #{efficientnet_forward.19} parent=0
    _
  %s6 = ssub.s32 1, %s4
  %s7 = scalar_select 0, %s6, %s4
  // Predicated region
  $region2: #{efficientnet_forward.19} parent=0 // pred_check
    _
  $region3: #{efficientnet_forward.19} parent=0 // pred_check_branch
    %9 = sbr.rel (0) target = $region5
  $region4: #{efficientnet_forward.19} parent=0 // pred_region
    _
  $region5: #{efficientnet_forward.19} parent=0 // pred_fallthru
    _
  // Predicated region
  $region6: #{efficientnet_forward.19} parent=0 // pred_check
    _
  $region7: #{efficientnet_forward.19} parent=0 // pred_check_branch
    %11 = sbr.rel (0) target = $region9
  $region8: #{efficientnet_forward.19} parent=0 // pred_region
    _
  $region9: #{efficientnet_forward.19} parent=0 // pred_fallthru
    _
  // Predicated region
  $region10: #{efficientnet_forward.19} parent=0 // pred_check
    _
  $region11: #{efficientnet_forward.19} parent=0 // pred_check_branch
    %13 = sbr.rel (0) target = $region13
  $region12: #{efficientnet_forward.19} parent=0 // pred_region
    _
  $region13: #{efficientnet_forward.19} parent=0 // pred_fallthru
    _
  %v15 = vld [vmem:[%s0] sm:$0xf]
  %v16 = vld [vmem:[%s0 + $0x4] sm:$0xf]
  %v17 = vld [vmem:[%s0 + $0x8] sm:$0xf]
  %v18 = vld [vmem:[%s0 + $0xc] sm:$0xf]
  %v19 = vld [vmem:[%s0 + $0x10] sm:$0xf]
  %v20 = vld [vmem:[%s0 + $0x14] sm:$0xf]
  %v21 = vld [vmem:[%s0 + $0x18] sm:$0xf]
  %v22 = vld [vmem:[%s0 + $0x1c] sm:$0xf]
  %v23 = vld [vmem:[%s0 + $0x20] sm:$0xf]
  %v24 = vld [vmem:[%s0 + $0x24] sm:$0xf]
  %v25 = vld [vmem:[%s0 + $0x28] sm:$0xf]
  %v26 = vld [vmem:[%s0 + $0x2c] sm:$0xf]
  %v27 = vld [vmem:[%s0 + $0x30] sm:$0xf]
  %v28 = vld [vmem:[%s0 + $0x34] sm:$0xf]
  %v29 = vld [vmem:[%s0 + $0x38] sm:$0xf]
  %v30 = vld [vmem:[%s0 + $0x3c] sm:$0xf]
  %v31 = vld [vmem:[%s0 + $0x40] sm:$0xf]
  %v32 = vld [vmem:[%s0 + $0x44] sm:$0xf]
  %v33 = vld [vmem:[%s0 + $0x48] sm:$0xf]
  %v34 = vld [vmem:[%s0 + $0x4c] sm:$0xf]
  %v35 = vld [vmem:[%s0 + $0x50] sm:$0xf]
  %v36 = vld [vmem:[%s0 + $0x54] sm:$0xf]
  %v37 = vld [vmem:[%s0 + $0x58] sm:$0xf]
  %v38 = vld [vmem:[%s0 + $0x5c] sm:$0xf]
  %v39 = vld [vmem:[%s0 + $0x60] sm:$0xf]
  %v40 = vld [vmem:[%s0 + $0x64] sm:$0xf]
  %v41 = vld [vmem:[%s0 + $0x68] sm:$0xf]
  %v42 = vld [vmem:[%s0 + $0x6c] sm:$0xf]
  %v43 = vld [vmem:[%s0 + $0x70] sm:$0xf]
  %v44 = vld [vmem:[%s0 + $0x74] sm:$0xf]
  %v45 = vld [vmem:[%s0 + $0x78] sm:$0xf]
  %v46 = vld [vmem:[%s0 + $0x7c] sm:$0xf]
  %v47 = vld [vmem:[%s0 + $0x80] sm:$0xf]
  %v48 = vld [vmem:[%s0 + $0x84] sm:$0xf]
  %v49 = vld [vmem:[%s0 + $0x88] sm:$0xf]
  %v50 = vld [vmem:[%s0 + $0x8c] sm:$0xf]
  %v51 = vld [vmem:[%s0 + $0x90] sm:$0xf]
  %v52 = vld [vmem:[%s0 + $0x94] sm:$0xf]
  %v53 = vld [vmem:[%s0 + $0x98] sm:$0xf]
  %v54 = vld [vmem:[%s0 + $0x9c] sm:$0xf]
  %v55 = vld [vmem:[%s0 + $0xa0] sm:$0xf]
  %v56 = vld [vmem:[%s0 + $0xa4] sm:$0xf]
  %v57 = vld [vmem:[%s0 + $0xa8] sm:$0xf]
  %v58 = vld [vmem:[%s0 + $0xac] sm:$0xf]
  %v59 = vld [vmem:[%s0 + $0xb0] sm:$0xf]
  %v60 = vld [vmem:[%s0 + $0xb4] sm:$0xf]
  %v61 = vld [vmem:[%s0 + $0xb8] sm:$0xf]
  %v62 = vld [vmem:[%s0 + $0xbc] sm:$0xf]
  %v63 = vld [vmem:[%s0 + $0xc0] sm:$0xf]
  %v64 = vld [vmem:[%s0 + $0xc4] sm:$0xf]
  %v65 = vld [vmem:[%s0 + $0xc8] sm:$0xf]
  %v66 = vld [vmem:[%s0 + $0xcc] sm:$0xf]
  %v67 = vld [vmem:[%s0 + $0xd0] sm:$0xf]
  %v68 = vld [vmem:[%s0 + $0xd4] sm:$0xf]
  %v69 = vld [vmem:[%s0 + $0xd8] sm:$0xf]
  %v70 = vld [vmem:[%s0 + $0xdc] sm:$0xf]
  %v71 = vld [vmem:[%s0 + $0xe0] sm:$0xf]
  %v72 = vld [vmem:[%s0 + $0xe4] sm:$0xf]
  %v73 = vld [vmem:[%s0 + $0xe8] sm:$0xf]
  %v74 = vld [vmem:[%s0 + $0xec] sm:$0xf]
  %v75 = vld [vmem:[%s0 + $0xf0] sm:$0xf]
  %v76 = vld [vmem:[%s0 + $0xf4] sm:$0xf]
  %v77 = vld [vmem:[%s0 + $0xf8] sm:$0xf]
  %v78 = vld [vmem:[%s0 + $0xfc] sm:$0xf]
  %v79 = vld [vmem:[%s1] sm:$0xf]
  %v80 = vld [vmem:[%s1 + $0x4] sm:$0xf]
  %v81 = vld [vmem:[%s2] sm:$0x1]
  %v83 = vlaneseq
  %v84 = vshrl.u32 %v83, 7
  %v85 = vsub.s32 0, %v84
  %v86 = vrot.slane %v81, %v85
  %v152 = vunpack.c.l.b16 %v15
  %v153 = vunpack.c.l.b16 %v16
  %v154 = vunpack.c.l.b16 %v17
  %v155 = vunpack.c.l.b16 %v18
  %v156 = vunpack.c.l.b16 %v19
  %v157 = vunpack.c.l.b16 %v20
  %v158 = vunpack.c.l.b16 %v21
  %v159 = vunpack.c.l.b16 %v22
  %v160 = vunpack.c.l.b16 %v23
  %v161 = vunpack.c.l.b16 %v24
  %v162 = vunpack.c.l.b16 %v25
  %v163 = vunpack.c.l.b16 %v26
  %v164 = vunpack.c.l.b16 %v27
  %v165 = vunpack.c.l.b16 %v28
  %v166 = vunpack.c.l.b16 %v29
  %v167 = vunpack.c.l.b16 %v30
  %v168 = vunpack.c.l.b16 %v31
  %v169 = vunpack.c.l.b16 %v32
  %v170 = vunpack.c.l.b16 %v33
  %v171 = vunpack.c.l.b16 %v34
  %v172 = vunpack.c.l.b16 %v35
  %v173 = vunpack.c.l.b16 %v36
  %v174 = vunpack.c.l.b16 %v37
  %v175 = vunpack.c.l.b16 %v38
  %v176 = vunpack.c.l.b16 %v39
  %v177 = vunpack.c.l.b16 %v40
  %v178 = vunpack.c.l.b16 %v41
  %v179 = vunpack.c.l.b16 %v42
  %v180 = vunpack.c.l.b16 %v43
  %v181 = vunpack.c.l.b16 %v44
  %v182 = vunpack.c.l.b16 %v45
  %v183 = vunpack.c.l.b16 %v46
  %v184 = vunpack.c.l.b16 %v47
  %v185 = vunpack.c.l.b16 %v48
  %v186 = vunpack.c.l.b16 %v49
  %v187 = vunpack.c.l.b16 %v50
  %v188 = vunpack.c.l.b16 %v51
  %v189 = vunpack.c.l.b16 %v52
  %v190 = vunpack.c.l.b16 %v53
  %v191 = vunpack.c.l.b16 %v54
  %v192 = vunpack.c.l.b16 %v55
  %v193 = vunpack.c.l.b16 %v56
  %v194 = vunpack.c.l.b16 %v57
  %v195 = vunpack.c.l.b16 %v58
  %v196 = vunpack.c.l.b16 %v59
  %v197 = vunpack.c.l.b16 %v60
  %v198 = vunpack.c.l.b16 %v61
  %v199 = vunpack.c.l.b16 %v62
  %v200 = vunpack.c.l.b16 %v63
  %v201 = vunpack.c.l.b16 %v64
  %v202 = vunpack.c.l.b16 %v65
  %v203 = vunpack.c.l.b16 %v66
  %v204 = vunpack.c.l.b16 %v67
  %v205 = vunpack.c.l.b16 %v68
  %v206 = vunpack.c.l.b16 %v69
  %v207 = vunpack.c.l.b16 %v70
  %v208 = vunpack.c.l.b16 %v71
  %v209 = vunpack.c.l.b16 %v72
  %v210 = vunpack.c.l.b16 %v73
  %v211 = vunpack.c.l.b16 %v74
  %v212 = vunpack.c.l.b16 %v75
  %v213 = vunpack.c.l.b16 %v76
  %v214 = vunpack.c.l.b16 %v77
  %v215 = vunpack.c.l.b16 %v78
  %v216 = vpack.c.b16 %v153, %v152
  %v217 = vpack.c.b16 %v155, %v154
  %v218 = vpack.c.b16 %v157, %v156
  %v219 = vpack.c.b16 %v159, %v158
  %v220 = vpack.c.b16 %v161, %v160
  %v221 = vpack.c.b16 %v163, %v162
  %v222 = vpack.c.b16 %v165, %v164
  %v223 = vpack.c.b16 %v167, %v166
  %v224 = vpack.c.b16 %v169, %v168
  %v225 = vpack.c.b16 %v171, %v170
  %v226 = vpack.c.b16 %v173, %v172
  %v227 = vpack.c.b16 %v175, %v174
  %v228 = vpack.c.b16 %v177, %v176
  %v229 = vpack.c.b16 %v179, %v178
  %v230 = vpack.c.b16 %v181, %v180
  %v231 = vpack.c.b16 %v183, %v182
  %v232 = vpack.c.b16 %v185, %v184
  %v233 = vpack.c.b16 %v187, %v186
  %v234 = vpack.c.b16 %v189, %v188
  %v235 = vpack.c.b16 %v191, %v190
  %v236 = vpack.c.b16 %v193, %v192
  %v237 = vpack.c.b16 %v195, %v194
  %v238 = vpack.c.b16 %v197, %v196
  %v239 = vpack.c.b16 %v199, %v198
  %v240 = vpack.c.b16 %v201, %v200
  %v241 = vpack.c.b16 %v203, %v202
  %v242 = vpack.c.b16 %v205, %v204
  %v243 = vpack.c.b16 %v207, %v206
  %v244 = vpack.c.b16 %v209, %v208
  %v245 = vpack.c.b16 %v211, %v210
  %v246 = vpack.c.b16 %v213, %v212
  %v247 = vpack.c.b16 %v215, %v214
  %v250 = vunpack.c.l.b16 %v79
  %v251 = vunpack.c.l.b16 %v80
  %v252 = vpack.c.b16 %v251, %v250
  %vm254 = vcmask 130048
  %v256 = vsel %vm254, %v216, 0
  %v259 = vsel %vm254, %v217, 0
  %v262 = vsel %vm254, %v218, 0
  %v265 = vsel %vm254, %v219, 0
  %v268 = vsel %vm254, %v220, 0
  %v271 = vsel %vm254, %v221, 0
  %v274 = vsel %vm254, %v222, 0
  %v277 = vsel %vm254, %v223, 0
  %v280 = vsel %vm254, %v224, 0
  %v283 = vsel %vm254, %v225, 0
  %v286 = vsel %vm254, %v226, 0
  %v289 = vsel %vm254, %v227, 0
  %v292 = vsel %vm254, %v228, 0
  %v295 = vsel %vm254, %v229, 0
  %v298 = vsel %vm254, %v230, 0
  %v301 = vsel %vm254, %v231, 0
  %v304 = vsel %vm254, %v232, 0
  %v307 = vsel %vm254, %v233, 0
  %v310 = vsel %vm254, %v234, 0
  %v313 = vsel %vm254, %v235, 0
  %v316 = vsel %vm254, %v236, 0
  %v319 = vsel %vm254, %v237, 0
  %v322 = vsel %vm254, %v238, 0
  %v325 = vsel %vm254, %v239, 0
  %v328 = vsel %vm254, %v240, 0
  %v331 = vsel %vm254, %v241, 0
  %v334 = vsel %vm254, %v242, 0
  %v337 = vsel %vm254, %v243, 0
  %v340 = vsel %vm254, %v244, 0
  %v343 = vsel %vm254, %v245, 0
  %v346 = vsel %vm254, %v246, 0
  %v349 = vsel %vm254, %v247, 0
  %351 = vmatprep.subr.bf16.mxu0 0
  %352 = vmatpush1.bf16.msra.mxu0 %v252
  %353 = vmatprep.subr.bf16.mxu0 0
  %354 = vmatpush1.bf16.msra.mxu0 0
  %355 = vmatprep.subr.bf16.mxu0 0
  %356 = vmatpush1.bf16.msra.mxu0 0
  %357 = vmatprep.subr.bf16.mxu0 0
  %358 = vmatpush1.bf16.msra.mxu0 0
  %359 = vmatprep.subr.bf16.mxu0 0
  %360 = vmatpush1.bf16.msra.mxu0 0
  %361 = vmatprep.subr.bf16.mxu0 0
  %362 = vmatpush1.bf16.msra.mxu0 0
  %363 = vmatprep.subr.bf16.mxu0 0
  %364 = vmatpush1.bf16.msra.mxu0 0
  %365 = vmatprep.subr.bf16.mxu0 0
  %366 = vmatpush1.bf16.msra.mxu0 0
  %367 = vmatprep.subr.bf16.mxu0 0
  %368 = vmatpush1.bf16.msra.mxu0 0
  %369 = vmatprep.subr.bf16.mxu0 0
  %370 = vmatpush1.bf16.msra.mxu0 0
  %371 = vmatprep.subr.bf16.mxu0 0
  %372 = vmatpush1.bf16.msra.mxu0 0
  %373 = vmatprep.subr.bf16.mxu0 0
  %374 = vmatpush1.bf16.msra.mxu0 0
  %375 = vmatprep.subr.bf16.mxu0 0
  %376 = vmatpush1.bf16.msra.mxu0 0
  %377 = vmatprep.subr.bf16.mxu0 0
  %378 = vmatpush1.bf16.msra.mxu0 0
  %379 = vmatprep.subr.bf16.mxu0 0
  %380 = vmatpush1.bf16.msra.mxu0 0
  %381 = vmatprep.subr.bf16.mxu0 0
  %382 = vmatpush1.bf16.msra.mxu0 0
  %383 = vmatprep.mubr.bf16.mxu0 0
  %384 = vmatmul.mubr.bf16.gmra.mrb[0].mxu0 %v256
  %v385 = vpop.f32.mrb[0].mxu0
  %v386 = vadd.f32 %v86, %v385
  %v387 = vpop.f32.mrb[0].mxu0
  %v388 = vpop.f32.mrb[0].mxu0
  %v389 = vadd.f32 %v86, %v388
  %v390 = vpop.f32.mrb[0].mxu0
  %391 = vmatprep.mubr.bf16.mxu0 0
  %392 = vmatmul.mubr.bf16.gmra.mrb[0].mxu0 %v259
  %v393 = vpop.f32.mrb[0].mxu0
  %v394 = vadd.f32 %v86, %v393
  %v395 = vpop.f32.mrb[0].mxu0
  %v396 = vpop.f32.mrb[0].mxu0
  %v397 = vadd.f32 %v86, %v396
  %v398 = vpop.f32.mrb[0].mxu0
  %399 = vmatprep.mubr.bf16.mxu0 0
  %400 = vmatmul.mubr.bf16.gmra.mrb[0].mxu0 %v262
  %v401 = vpop.f32.mrb[0].mxu0
  %v402 = vadd.f32 %v86, %v401
  %v403 = vpop.f32.mrb[0].mxu0
  %v404 = vpop.f32.mrb[0].mxu0
  %v405 = vadd.f32 %v86, %v404
  %v406 = vpop.f32.mrb[0].mxu0
  %407 = vmatprep.mubr.bf16.mxu0 0
  %408 = vmatmul.mubr.bf16.gmra.mrb[0].mxu0 %v265
  %v409 = vpop.f32.mrb[0].mxu0
  %v410 = vadd.f32 %v86, %v409
  %v411 = vpop.f32.mrb[0].mxu0
  %v412 = vpop.f32.mrb[0].mxu0
  %v413 = vadd.f32 %v86, %v412
  %v414 = vpop.f32.mrb[0].mxu0
  %415 = vmatprep.mubr.bf16.mxu0 0
  %416 = vmatmul.mubr.bf16.gmra.mrb[0].mxu0 %v268
  %v417 = vpop.f32.mrb[0].mxu0
  %v418 = vadd.f32 %v86, %v417
  %v419 = vpop.f32.mrb[0].mxu0
  %v420 = vpop.f32.mrb[0].mxu0
  %v421 = vadd.f32 %v86, %v420
  %v422 = vpop.f32.mrb[0].mxu0
  %423 = vmatprep.mubr.bf16.mxu0 0
  %424 = vmatmul.mubr.bf16.gmra.mrb[0].mxu0 %v271
  %v425 = vpop.f32.mrb[0].mxu0
  %v426 = vadd.f32 %v86, %v425
  %v427 = vpop.f32.mrb[0].mxu0
  %v428 = vpop.f32.mrb[0].mxu0
  %v429 = vadd.f32 %v86, %v428
  %v430 = vpop.f32.mrb[0].mxu0
  %431 = vmatprep.mubr.bf16.mxu0 0
  %432 = vmatmul.mubr.bf16.gmra.mrb[0].mxu0 %v274
  %v433 = vpop.f32.mrb[0].mxu0
  %v434 = vadd.f32 %v86, %v433
  %v435 = vpop.f32.mrb[0].mxu0
  %v436 = vpop.f32.mrb[0].mxu0
  %v437 = vadd.f32 %v86, %v436
  %v438 = vpop.f32.mrb[0].mxu0
  %439 = vmatprep.mubr.bf16.mxu0 0
  %440 = vmatmul.mubr.bf16.gmra.mrb[0].mxu0 %v277
  %v441 = vpop.f32.mrb[0].mxu0
  %v442 = vadd.f32 %v86, %v441
  %v443 = vpop.f32.mrb[0].mxu0
  %v444 = vpop.f32.mrb[0].mxu0
  %v445 = vadd.f32 %v86, %v444
  %v446 = vpop.f32.mrb[0].mxu0
  %447 = vmatprep.mubr.bf16.mxu0 0
  %448 = vmatmul.mubr.bf16.gmra.mrb[0].mxu0 %v280
  %v449 = vpop.f32.mrb[0].mxu0
  %v450 = vadd.f32 %v86, %v449
  %v451 = vpop.f32.mrb[0].mxu0
  %v452 = vpop.f32.mrb[0].mxu0
  %v453 = vadd.f32 %v86, %v452
  %v454 = vpop.f32.mrb[0].mxu0
  %455 = vmatprep.mubr.bf16.mxu0 0
  %456 = vmatmul.mubr.bf16.gmra.mrb[0].mxu0 %v283
  %v457 = vpop.f32.mrb[0].mxu0
  %v458 = vadd.f32 %v86, %v457
  %v459 = vpop.f32.mrb[0].mxu0
  %v460 = vpop.f32.mrb[0].mxu0
  %v461 = vadd.f32 %v86, %v460
  %v462 = vpop.f32.mrb[0].mxu0
  %463 = vmatprep.mubr.bf16.mxu0 0
  %464 = vmatmul.mubr.bf16.gmra.mrb[0].mxu0 %v286
  %v465 = vpop.f32.mrb[0].mxu0
  %v466 = vadd.f32 %v86, %v465
  %v467 = vpop.f32.mrb[0].mxu0
  %v468 = vpop.f32.mrb[0].mxu0
  %v469 = vadd.f32 %v86, %v468
  %v470 = vpop.f32.mrb[0].mxu0
  %471 = vmatprep.mubr.bf16.mxu0 0
  %472 = vmatmul.mubr.bf16.gmra.mrb[0].mxu0 %v289
  %v473 = vpop.f32.mrb[0].mxu0
  %v474 = vadd.f32 %v86, %v473
  %v475 = vpop.f32.mrb[0].mxu0
  %v476 = vpop.f32.mrb[0].mxu0
  %v477 = vadd.f32 %v86, %v476
  %v478 = vpop.f32.mrb[0].mxu0
  %479 = vmatprep.mubr.bf16.mxu0 0
  %480 = vmatmul.mubr.bf16.gmra.mrb[0].mxu0 %v292
  %v481 = vpop.f32.mrb[0].mxu0
  %v482 = vadd.f32 %v86, %v481
  %v483 = vpop.f32.mrb[0].mxu0
  %v484 = vpop.f32.mrb[0].mxu0
  %v485 = vadd.f32 %v86, %v484
  %v486 = vpop.f32.mrb[0].mxu0
  %487 = vmatprep.mubr.bf16.mxu0 0
  %488 = vmatmul.mubr.bf16.gmra.mrb[0].mxu0 %v295
  %v489 = vpop.f32.mrb[0].mxu0
  %v490 = vadd.f32 %v86, %v489
  %v491 = vpop.f32.mrb[0].mxu0
  %v492 = vpop.f32.mrb[0].mxu0
  %v493 = vadd.f32 %v86, %v492
  %v494 = vpop.f32.mrb[0].mxu0
  %495 = vmatprep.mubr.bf16.mxu0 0
  %496 = vmatmul.mubr.bf16.gmra.mrb[0].mxu0 %v298
  %v497 = vpop.f32.mrb[0].mxu0
  %v498 = vadd.f32 %v86, %v497
  %v499 = vpop.f32.mrb[0].mxu0
  %v500 = vpop.f32.mrb[0].mxu0
  %v501 = vadd.f32 %v86, %v500
  %v502 = vpop.f32.mrb[0].mxu0
  %503 = vmatprep.mubr.bf16.mxu0 0
  %504 = vmatmul.mubr.bf16.gmra.mrb[0].mxu0 %v301
  %v505 = vpop.f32.mrb[0].mxu0
  %v506 = vadd.f32 %v86, %v505
  %v507 = vpop.f32.mrb[0].mxu0
  %v508 = vpop.f32.mrb[0].mxu0
  %v509 = vadd.f32 %v86, %v508
  %v510 = vpop.f32.mrb[0].mxu0
  %511 = vmatprep.mubr.bf16.mxu0 0
  %512 = vmatmul.mubr.bf16.gmra.mrb[0].mxu0 %v304
  %v513 = vpop.f32.mrb[0].mxu0
  %v514 = vadd.f32 %v86, %v513
  %v515 = vpop.f32.mrb[0].mxu0
  %v516 = vpop.f32.mrb[0].mxu0
  %v517 = vadd.f32 %v86, %v516
  %v518 = vpop.f32.mrb[0].mxu0
  %519 = vmatprep.mubr.bf16.mxu0 0
  %520 = vmatmul.mubr.bf16.gmra.mrb[0].mxu0 %v307
  %v521 = vpop.f32.mrb[0].mxu0
  %v522 = vadd.f32 %v86, %v521
  %v523 = vpop.f32.mrb[0].mxu0
  %v524 = vpop.f32.mrb[0].mxu0
  %v525 = vadd.f32 %v86, %v524
  %v526 = vpop.f32.mrb[0].mxu0
  %527 = vmatprep.mubr.bf16.mxu0 0
  %528 = vmatmul.mubr.bf16.gmra.mrb[0].mxu0 %v310
  %v529 = vpop.f32.mrb[0].mxu0
  %v530 = vadd.f32 %v86, %v529
  %v531 = vpop.f32.mrb[0].mxu0
  %v532 = vpop.f32.mrb[0].mxu0
  %v533 = vadd.f32 %v86, %v532
  %v534 = vpop.f32.mrb[0].mxu0
  %535 = vmatprep.mubr.bf16.mxu0 0
  %536 = vmatmul.mubr.bf16.gmra.mrb[0].mxu0 %v313
  %v537 = vpop.f32.mrb[0].mxu0
  %v538 = vadd.f32 %v86, %v537
  %v539 = vpop.f32.mrb[0].mxu0
  %v540 = vpop.f32.mrb[0].mxu0
  %v541 = vadd.f32 %v86, %v540
  %v542 = vpop.f32.mrb[0].mxu0
  %543 = vmatprep.mubr.bf16.mxu0 0
  %544 = vmatmul.mubr.bf16.gmra.mrb[0].mxu0 %v316
  %v545 = vpop.f32.mrb[0].mxu0
  %v546 = vadd.f32 %v86, %v545
  %v547 = vpop.f32.mrb[0].mxu0
  %v548 = vpop.f32.mrb[0].mxu0
  %v549 = vadd.f32 %v86, %v548
  %v550 = vpop.f32.mrb[0].mxu0
  %551 = vmatprep.mubr.bf16.mxu0 0
  %552 = vmatmul.mubr.bf16.gmra.mrb[0].mxu0 %v319
  %v553 = vpop.f32.mrb[0].mxu0
  %v554 = vadd.f32 %v86, %v553
  %v555 = vpop.f32.mrb[0].mxu0
  %v556 = vpop.f32.mrb[0].mxu0
  %v557 = vadd.f32 %v86, %v556
  %v558 = vpop.f32.mrb[0].mxu0
  %559 = vmatprep.mubr.bf16.mxu0 0
  %560 = vmatmul.mubr.bf16.gmra.mrb[0].mxu0 %v322
  %v561 = vpop.f32.mrb[0].mxu0
  %v562 = vadd.f32 %v86, %v561
  %v563 = vpop.f32.mrb[0].mxu0
  %v564 = vpop.f32.mrb[0].mxu0
  %v565 = vadd.f32 %v86, %v564
  %v566 = vpop.f32.mrb[0].mxu0
  %567 = vmatprep.mubr.bf16.mxu0 0
  %568 = vmatmul.mubr.bf16.gmra.mrb[0].mxu0 %v325
  %v569 = vpop.f32.mrb[0].mxu0
  %v570 = vadd.f32 %v86, %v569
  %v571 = vpop.f32.mrb[0].mxu0
  %v572 = vpop.f32.mrb[0].mxu0
  %v573 = vadd.f32 %v86, %v572
  %v574 = vpop.f32.mrb[0].mxu0
  %575 = vmatprep.mubr.bf16.mxu0 0
  %576 = vmatmul.mubr.bf16.gmra.mrb[0].mxu0 %v328
  %v577 = vpop.f32.mrb[0].mxu0
  %v578 = vadd.f32 %v86, %v577
  %v579 = vpop.f32.mrb[0].mxu0
  %v580 = vpop.f32.mrb[0].mxu0
  %v581 = vadd.f32 %v86, %v580
  %v582 = vpop.f32.mrb[0].mxu0
  %583 = vmatprep.mubr.bf16.mxu0 0
  %584 = vmatmul.mubr.bf16.gmra.mrb[0].mxu0 %v331
  %v585 = vpop.f32.mrb[0].mxu0
  %v586 = vadd.f32 %v86, %v585
  %v587 = vpop.f32.mrb[0].mxu0
  %v588 = vpop.f32.mrb[0].mxu0
  %v589 = vadd.f32 %v86, %v588
  %v590 = vpop.f32.mrb[0].mxu0
  %591 = vmatprep.mubr.bf16.mxu0 0
  %592 = vmatmul.mubr.bf16.gmra.mrb[0].mxu0 %v334
  %v593 = vpop.f32.mrb[0].mxu0
  %v594 = vadd.f32 %v86, %v593
  %v595 = vpop.f32.mrb[0].mxu0
  %v596 = vpop.f32.mrb[0].mxu0
  %v597 = vadd.f32 %v86, %v596
  %v598 = vpop.f32.mrb[0].mxu0
  %599 = vmatprep.mubr.bf16.mxu0 0
  %600 = vmatmul.mubr.bf16.gmra.mrb[0].mxu0 %v337
  %v601 = vpop.f32.mrb[0].mxu0
  %v602 = vadd.f32 %v86, %v601
  %v603 = vpop.f32.mrb[0].mxu0
  %v604 = vpop.f32.mrb[0].mxu0
  %v605 = vadd.f32 %v86, %v604
  %v606 = vpop.f32.mrb[0].mxu0
  %607 = vmatprep.mubr.bf16.mxu0 0
  %608 = vmatmul.mubr.bf16.gmra.mrb[0].mxu0 %v340
  %v609 = vpop.f32.mrb[0].mxu0
  %v610 = vadd.f32 %v86, %v609
  %v611 = vpop.f32.mrb[0].mxu0
  %v612 = vpop.f32.mrb[0].mxu0
  %v613 = vadd.f32 %v86, %v612
  %v614 = vpop.f32.mrb[0].mxu0
  %615 = vmatprep.mubr.bf16.mxu0 0
  %616 = vmatmul.mubr.bf16.gmra.mrb[0].mxu0 %v343
  %v617 = vpop.f32.mrb[0].mxu0
  %v618 = vadd.f32 %v86, %v617
  %v619 = vpop.f32.mrb[0].mxu0
  %v620 = vpop.f32.mrb[0].mxu0
  %v621 = vadd.f32 %v86, %v620
  %v622 = vpop.f32.mrb[0].mxu0
  %623 = vmatprep.mubr.bf16.mxu0 0
  %624 = vmatmul.mubr.bf16.gmra.mrb[0].mxu0 %v346
  %v625 = vpop.f32.mrb[0].mxu0
  %v626 = vadd.f32 %v86, %v625
  %v627 = vpop.f32.mrb[0].mxu0
  %v628 = vpop.f32.mrb[0].mxu0
  %v629 = vadd.f32 %v86, %v628
  %v630 = vpop.f32.mrb[0].mxu0
  %631 = vmatprep.mubr.bf16.mxu0 0
  %632 = vmatmul.mubr.bf16.gmra.mrb[0].mxu0 %v349
  %v633 = vpop.f32.mrb[0].mxu0
  %v634 = vadd.f32 %v86, %v633
  %v635 = vpop.f32.mrb[0].mxu0
  %v636 = vpop.f32.mrb[0].mxu0
  %v637 = vadd.f32 %v86, %v636
  %v638 = vpop.f32.mrb[0].mxu0
  %639 = vdwg.mxu0
  %v640 = vxor.u32 %v386, 2147483648
  %v641 = vxor.u32 %v389, 2147483648
  %v642 = vxor.u32 %v394, 2147483648
  %v643 = vxor.u32 %v397, 2147483648
  %v644 = vxor.u32 %v402, 2147483648
  %v645 = vxor.u32 %v405, 2147483648
  %v646 = vxor.u32 %v410, 2147483648
  %v647 = vxor.u32 %v413, 2147483648
  %v648 = vxor.u32 %v418, 2147483648
  %v649 = vxor.u32 %v421, 2147483648
  %v650 = vxor.u32 %v426, 2147483648
  %v651 = vxor.u32 %v429, 2147483648
  %v652 = vxor.u32 %v434, 2147483648
  %v653 = vxor.u32 %v437, 2147483648
  %v654 = vxor.u32 %v442, 2147483648
  %v655 = vxor.u32 %v445, 2147483648
  %v656 = vxor.u32 %v450, 2147483648
  %v657 = vxor.u32 %v453, 2147483648
  %v658 = vxor.u32 %v458, 2147483648
  %v659 = vxor.u32 %v461, 2147483648
  %v660 = vxor.u32 %v466, 2147483648
  %v661 = vxor.u32 %v469, 2147483648
  %v662 = vxor.u32 %v474, 2147483648
  %v663 = vxor.u32 %v477, 2147483648
  %v664 = vxor.u32 %v482, 2147483648
  %v665 = vxor.u32 %v485, 2147483648
  %v666 = vxor.u32 %v490, 2147483648
  %v667 = vxor.u32 %v493, 2147483648
  %v668 = vxor.u32 %v498, 2147483648
  %v669 = vxor.u32 %v501, 2147483648
  %v670 = vxor.u32 %v506, 2147483648
  %v671 = vxor.u32 %v509, 2147483648
  %v672 = vxor.u32 %v514, 2147483648
  %v673 = vxor.u32 %v517, 2147483648
  %v674 = vxor.u32 %v522, 2147483648
  %v675 = vxor.u32 %v525, 2147483648
  %v676 = vxor.u32 %v530, 2147483648
  %v677 = vxor.u32 %v533, 2147483648
  %v678 = vxor.u32 %v538, 2147483648
  %v679 = vxor.u32 %v541, 2147483648
  %v680 = vxor.u32 %v546, 2147483648
  %v681 = vxor.u32 %v549, 2147483648
  %v682 = vxor.u32 %v554, 2147483648
  %v683 = vxor.u32 %v557, 2147483648
  %v684 = vxor.u32 %v562, 2147483648
  %v685 = vxor.u32 %v565, 2147483648
  %v686 = vxor.u32 %v570, 2147483648
  %v687 = vxor.u32 %v573, 2147483648
  %v688 = vxor.u32 %v578, 2147483648
  %v689 = vxor.u32 %v581, 2147483648
  %v690 = vxor.u32 %v586, 2147483648
  %v691 = vxor.u32 %v589, 2147483648
  %v692 = vxor.u32 %v594, 2147483648
  %v693 = vxor.u32 %v597, 2147483648
  %v694 = vxor.u32 %v602, 2147483648
  %v695 = vxor.u32 %v605, 2147483648
  %v696 = vxor.u32 %v610, 2147483648
  %v697 = vxor.u32 %v613, 2147483648
  %v698 = vxor.u32 %v618, 2147483648
  %v699 = vxor.u32 %v621, 2147483648
  %v700 = vxor.u32 %v626, 2147483648
  %v701 = vxor.u32 %v629, 2147483648
  %v702 = vxor.u32 %v634, 2147483648
  %v703 = vxor.u32 %v637, 2147483648
  %v704 = vmul.f32 %v640, 1.442695
  %v705 = vpow.pop %v704
  %v706 = vmul.f32 %v641, 1.442695
  %v707 = vpow.pop %v706
  %v708 = vmul.f32 %v642, 1.442695
  %v709 = vpow.pop %v708
  %v710 = vmul.f32 %v643, 1.442695
  %v711 = vpow.pop %v710
  %v712 = vmul.f32 %v644, 1.442695
  %v713 = vpow.pop %v712
  %v714 = vmul.f32 %v645, 1.442695
  %v715 = vpow.pop %v714
  %v716 = vmul.f32 %v646, 1.442695
  %v717 = vpow.pop %v716
  %v718 = vmul.f32 %v647, 1.442695
  %v719 = vpow.pop %v718
  %v720 = vmul.f32 %v648, 1.442695
  %v721 = vpow.pop %v720
  %v722 = vmul.f32 %v649, 1.442695
  %v723 = vpow.pop %v722
  %v724 = vmul.f32 %v650, 1.442695
  %v725 = vpow.pop %v724
  %v726 = vmul.f32 %v651, 1.442695
  %v727 = vpow.pop %v726
  %v728 = vmul.f32 %v652, 1.442695
  %v729 = vpow.pop %v728
  %v730 = vmul.f32 %v653, 1.442695
  %v731 = vpow.pop %v730
  %v732 = vmul.f32 %v654, 1.442695
  %v733 = vpow.pop %v732
  %v734 = vmul.f32 %v655, 1.442695
  %v735 = vpow.pop %v734
  %v736 = vmul.f32 %v656, 1.442695
  %v737 = vpow.pop %v736
  %v738 = vmul.f32 %v657, 1.442695
  %v739 = vpow.pop %v738
  %v740 = vmul.f32 %v658, 1.442695
  %v741 = vpow.pop %v740
  %v742 = vmul.f32 %v659, 1.442695
  %v743 = vpow.pop %v742
  %v744 = vmul.f32 %v660, 1.442695
  %v745 = vpow.pop %v744
  %v746 = vmul.f32 %v661, 1.442695
  %v747 = vpow.pop %v746
  %v748 = vmul.f32 %v662, 1.442695
  %v749 = vpow.pop %v748
  %v750 = vmul.f32 %v663, 1.442695
  %v751 = vpow.pop %v750
  %v752 = vmul.f32 %v664, 1.442695
  %v753 = vpow.pop %v752
  %v754 = vmul.f32 %v665, 1.442695
  %v755 = vpow.pop %v754
  %v756 = vmul.f32 %v666, 1.442695
  %v757 = vpow.pop %v756
  %v758 = vmul.f32 %v667, 1.442695
  %v759 = vpow.pop %v758
  %v760 = vmul.f32 %v668, 1.442695
  %v761 = vpow.pop %v760
  %v762 = vmul.f32 %v669, 1.442695
  %v763 = vpow.pop %v762
  %v764 = vmul.f32 %v670, 1.442695
  %v765 = vpow.pop %v764
  %v766 = vmul.f32 %v671, 1.442695
  %v767 = vpow.pop %v766
  %v768 = vmul.f32 %v672, 1.442695
  %v769 = vpow.pop %v768
  %v770 = vmul.f32 %v673, 1.442695
  %v771 = vpow.pop %v770
  %v772 = vmul.f32 %v674, 1.442695
  %v773 = vpow.pop %v772
  %v774 = vmul.f32 %v675, 1.442695
  %v775 = vpow.pop %v774
  %v776 = vmul.f32 %v676, 1.442695
  %v777 = vpow.pop %v776
  %v778 = vmul.f32 %v677, 1.442695
  %v779 = vpow.pop %v778
  %v780 = vmul.f32 %v678, 1.442695
  %v781 = vpow.pop %v780
  %v782 = vmul.f32 %v679, 1.442695
  %v783 = vpow.pop %v782
  %v784 = vmul.f32 %v680, 1.442695
  %v785 = vpow.pop %v784
  %v786 = vmul.f32 %v681, 1.442695
  %v787 = vpow.pop %v786
  %v788 = vmul.f32 %v682, 1.442695
  %v789 = vpow.pop %v788
  %v790 = vmul.f32 %v683, 1.442695
  %v791 = vpow.pop %v790
  %v792 = vmul.f32 %v684, 1.442695
  %v793 = vpow.pop %v792
  %v794 = vmul.f32 %v685, 1.442695
  %v795 = vpow.pop %v794
  %v796 = vmul.f32 %v686, 1.442695
  %v797 = vpow.pop %v796
  %v798 = vmul.f32 %v687, 1.442695
  %v799 = vpow.pop %v798
  %v800 = vmul.f32 %v688, 1.442695
  %v801 = vpow.pop %v800
  %v802 = vmul.f32 %v689, 1.442695
  %v803 = vpow.pop %v802
  %v804 = vmul.f32 %v690, 1.442695
  %v805 = vpow.pop %v804
  %v806 = vmul.f32 %v691, 1.442695
  %v807 = vpow.pop %v806
  %v808 = vmul.f32 %v692, 1.442695
  %v809 = vpow.pop %v808
  %v810 = vmul.f32 %v693, 1.442695
  %v811 = vpow.pop %v810
  %v812 = vmul.f32 %v694, 1.442695
  %v813 = vpow.pop %v812
  %v814 = vmul.f32 %v695, 1.442695
  %v815 = vpow.pop %v814
  %v816 = vmul.f32 %v696, 1.442695
  %v817 = vpow.pop %v816
  %v818 = vmul.f32 %v697, 1.442695
  %v819 = vpow.pop %v818
  %v820 = vmul.f32 %v698, 1.442695
  %v821 = vpow.pop %v820
  %v822 = vmul.f32 %v699, 1.442695
  %v823 = vpow.pop %v822
  %v824 = vmul.f32 %v700, 1.442695
  %v825 = vpow.pop %v824
  %v826 = vmul.f32 %v701, 1.442695
  %v827 = vpow.pop %v826
  %v828 = vmul.f32 %v702, 1.442695
  %v829 = vpow.pop %v828
  %v830 = vmul.f32 %v703, 1.442695
  %v831 = vpow.pop %v830
  %v832 = vadd.f32 %v705, 1.0
  %v833 = vadd.f32 %v707, 1.0
  %v834 = vadd.f32 %v709, 1.0
  %v835 = vadd.f32 %v711, 1.0
  %v836 = vadd.f32 %v713, 1.0
  %v837 = vadd.f32 %v715, 1.0
  %v838 = vadd.f32 %v717, 1.0
  %v839 = vadd.f32 %v719, 1.0
  %v840 = vadd.f32 %v721, 1.0
  %v841 = vadd.f32 %v723, 1.0
  %v842 = vadd.f32 %v725, 1.0
  %v843 = vadd.f32 %v727, 1.0
  %v844 = vadd.f32 %v729, 1.0
  %v845 = vadd.f32 %v731, 1.0
  %v846 = vadd.f32 %v733, 1.0
  %v847 = vadd.f32 %v735, 1.0
  %v848 = vadd.f32 %v737, 1.0
  %v849 = vadd.f32 %v739, 1.0
  %v850 = vadd.f32 %v741, 1.0
  %v851 = vadd.f32 %v743, 1.0
  %v852 = vadd.f32 %v745, 1.0
  %v853 = vadd.f32 %v747, 1.0
  %v854 = vadd.f32 %v749, 1.0
  %v855 = vadd.f32 %v751, 1.0
  %v856 = vadd.f32 %v753, 1.0
  %v857 = vadd.f32 %v755, 1.0
  %v858 = vadd.f32 %v757, 1.0
  %v859 = vadd.f32 %v759, 1.0
  %v860 = vadd.f32 %v761, 1.0
  %v861 = vadd.f32 %v763, 1.0
  %v862 = vadd.f32 %v765, 1.0
  %v863 = vadd.f32 %v767, 1.0
  %v864 = vadd.f32 %v769, 1.0
  %v865 = vadd.f32 %v771, 1.0
  %v866 = vadd.f32 %v773, 1.0
  %v867 = vadd.f32 %v775, 1.0
  %v868 = vadd.f32 %v777, 1.0
  %v869 = vadd.f32 %v779, 1.0
  %v870 = vadd.f32 %v781, 1.0
  %v871 = vadd.f32 %v783, 1.0
  %v872 = vadd.f32 %v785, 1.0
  %v873 = vadd.f32 %v787, 1.0
  %v874 = vadd.f32 %v789, 1.0
  %v875 = vadd.f32 %v791, 1.0
  %v876 = vadd.f32 %v793, 1.0
  %v877 = vadd.f32 %v795, 1.0
  %v878 = vadd.f32 %v797, 1.0
  %v879 = vadd.f32 %v799, 1.0
  %v880 = vadd.f32 %v801, 1.0
  %v881 = vadd.f32 %v803, 1.0
  %v882 = vadd.f32 %v805, 1.0
  %v883 = vadd.f32 %v807, 1.0
  %v884 = vadd.f32 %v809, 1.0
  %v885 = vadd.f32 %v811, 1.0
  %v886 = vadd.f32 %v813, 1.0
  %v887 = vadd.f32 %v815, 1.0
  %v888 = vadd.f32 %v817, 1.0
  %v889 = vadd.f32 %v819, 1.0
  %v890 = vadd.f32 %v821, 1.0
  %v891 = vadd.f32 %v823, 1.0
  %v892 = vadd.f32 %v825, 1.0
  %v893 = vadd.f32 %v827, 1.0
  %v894 = vadd.f32 %v829, 1.0
  %v895 = vadd.f32 %v831, 1.0
  %v896 = vrcp.pop %v832
  %v897 = vmul.f32 1.0, %v896
  %v898 = vrcp.pop %v833
  %v899 = vmul.f32 1.0, %v898
  %v900 = vrcp.pop %v834
  %v901 = vmul.f32 1.0, %v900
  %v902 = vrcp.pop %v835
  %v903 = vmul.f32 1.0, %v902
  %v904 = vrcp.pop %v836
  %v905 = vmul.f32 1.0, %v904
  %v906 = vrcp.pop %v837
  %v907 = vmul.f32 1.0, %v906
  %v908 = vrcp.pop %v838
  %v909 = vmul.f32 1.0, %v908
  %v910 = vrcp.pop %v839
  %v911 = vmul.f32 1.0, %v910
  %v912 = vrcp.pop %v840
  %v913 = vmul.f32 1.0, %v912
  %v914 = vrcp.pop %v841
  %v915 = vmul.f32 1.0, %v914
  %v916 = vrcp.pop %v842
  %v917 = vmul.f32 1.0, %v916
  %v918 = vrcp.pop %v843
  %v919 = vmul.f32 1.0, %v918
  %v920 = vrcp.pop %v844
  %v921 = vmul.f32 1.0, %v920
  %v922 = vrcp.pop %v845
  %v923 = vmul.f32 1.0, %v922
  %v924 = vrcp.pop %v846
  %v925 = vmul.f32 1.0, %v924
  %v926 = vrcp.pop %v847
  %v927 = vmul.f32 1.0, %v926
  %v928 = vrcp.pop %v848
  %v929 = vmul.f32 1.0, %v928
  %v930 = vrcp.pop %v849
  %v931 = vmul.f32 1.0, %v930
  %v932 = vrcp.pop %v850
  %v933 = vmul.f32 1.0, %v932
  %v934 = vrcp.pop %v851
  %v935 = vmul.f32 1.0, %v934
  %v936 = vrcp.pop %v852
  %v937 = vmul.f32 1.0, %v936
  %v938 = vrcp.pop %v853
  %v939 = vmul.f32 1.0, %v938
  %v940 = vrcp.pop %v854
  %v941 = vmul.f32 1.0, %v940
  %v942 = vrcp.pop %v855
  %v943 = vmul.f32 1.0, %v942
  %v944 = vrcp.pop %v856
  %v945 = vmul.f32 1.0, %v944
  %v946 = vrcp.pop %v857
  %v947 = vmul.f32 1.0, %v946
  %v948 = vrcp.pop %v858
  %v949 = vmul.f32 1.0, %v948
  %v950 = vrcp.pop %v859
  %v951 = vmul.f32 1.0, %v950
  %v952 = vrcp.pop %v860
  %v953 = vmul.f32 1.0, %v952
  %v954 = vrcp.pop %v861
  %v955 = vmul.f32 1.0, %v954
  %v956 = vrcp.pop %v862
  %v957 = vmul.f32 1.0, %v956
  %v958 = vrcp.pop %v863
  %v959 = vmul.f32 1.0, %v958
  %v960 = vrcp.pop %v864
  %v961 = vmul.f32 1.0, %v960
  %v962 = vrcp.pop %v865
  %v963 = vmul.f32 1.0, %v962
  %v964 = vrcp.pop %v866
  %v965 = vmul.f32 1.0, %v964
  %v966 = vrcp.pop %v867
  %v967 = vmul.f32 1.0, %v966
  %v968 = vrcp.pop %v868
  %v969 = vmul.f32 1.0, %v968
  %v970 = vrcp.pop %v869
  %v971 = vmul.f32 1.0, %v970
  %v972 = vrcp.pop %v870
  %v973 = vmul.f32 1.0, %v972
  %v974 = vrcp.pop %v871
  %v975 = vmul.f32 1.0, %v974
  %v976 = vrcp.pop %v872
  %v977 = vmul.f32 1.0, %v976
  %v978 = vrcp.pop %v873
  %v979 = vmul.f32 1.0, %v978
  %v980 = vrcp.pop %v874
  %v981 = vmul.f32 1.0, %v980
  %v982 = vrcp.pop %v875
  %v983 = vmul.f32 1.0, %v982
  %v984 = vrcp.pop %v876
  %v985 = vmul.f32 1.0, %v984
  %v986 = vrcp.pop %v877
  %v987 = vmul.f32 1.0, %v986
  %v988 = vrcp.pop %v878
  %v989 = vmul.f32 1.0, %v988
  %v990 = vrcp.pop %v879
  %v991 = vmul.f32 1.0, %v990
  %v992 = vrcp.pop %v880
  %v993 = vmul.f32 1.0, %v992
  %v994 = vrcp.pop %v881
  %v995 = vmul.f32 1.0, %v994
  %v996 = vrcp.pop %v882
  %v997 = vmul.f32 1.0, %v996
  %v998 = vrcp.pop %v883
  %v999 = vmul.f32 1.0, %v998
  %v1000 = vrcp.pop %v884
  %v1001 = vmul.f32 1.0, %v1000
  %v1002 = vrcp.pop %v885
  %v1003 = vmul.f32 1.0, %v1002
  %v1004 = vrcp.pop %v886
  %v1005 = vmul.f32 1.0, %v1004
  %v1006 = vrcp.pop %v887
  %v1007 = vmul.f32 1.0, %v1006
  %v1008 = vrcp.pop %v888
  %v1009 = vmul.f32 1.0, %v1008
  %v1010 = vrcp.pop %v889
  %v1011 = vmul.f32 1.0, %v1010
  %v1012 = vrcp.pop %v890
  %v1013 = vmul.f32 1.0, %v1012
  %v1014 = vrcp.pop %v891
  %v1015 = vmul.f32 1.0, %v1014
  %v1016 = vrcp.pop %v892
  %v1017 = vmul.f32 1.0, %v1016
  %v1018 = vrcp.pop %v893
  %v1019 = vmul.f32 1.0, %v1018
  %v1020 = vrcp.pop %v894
  %v1021 = vmul.f32 1.0, %v1020
  %v1022 = vrcp.pop %v895
  %v1023 = vmul.f32 1.0, %v1022
  %v1024 = vmul.f32 %v386, %v897
  %v1025 = vmul.f32 %v389, %v899
  %v1026 = vmul.f32 %v394, %v901
  %v1027 = vmul.f32 %v397, %v903
  %v1028 = vmul.f32 %v402, %v905
  %v1029 = vmul.f32 %v405, %v907
  %v1030 = vmul.f32 %v410, %v909
  %v1031 = vmul.f32 %v413, %v911
  %v1032 = vmul.f32 %v418, %v913
  %v1033 = vmul.f32 %v421, %v915
  %v1034 = vmul.f32 %v426, %v917
  %v1035 = vmul.f32 %v429, %v919
  %v1036 = vmul.f32 %v434, %v921
  %v1037 = vmul.f32 %v437, %v923
  %v1038 = vmul.f32 %v442, %v925
  %v1039 = vmul.f32 %v445, %v927
  %v1040 = vmul.f32 %v450, %v929
  %v1041 = vmul.f32 %v453, %v931
  %v1042 = vmul.f32 %v458, %v933
  %v1043 = vmul.f32 %v461, %v935
  %v1044 = vmul.f32 %v466, %v937
  %v1045 = vmul.f32 %v469, %v939
  %v1046 = vmul.f32 %v474, %v941
  %v1047 = vmul.f32 %v477, %v943
  %v1048 = vmul.f32 %v482, %v945
  %v1049 = vmul.f32 %v485, %v947
  %v1050 = vmul.f32 %v490, %v949
  %v1051 = vmul.f32 %v493, %v951
  %v1052 = vmul.f32 %v498, %v953
  %v1053 = vmul.f32 %v501, %v955
  %v1054 = vmul.f32 %v506, %v957
  %v1055 = vmul.f32 %v509, %v959
  %v1056 = vmul.f32 %v514, %v961
  %v1057 = vmul.f32 %v517, %v963
  %v1058 = vmul.f32 %v522, %v965
  %v1059 = vmul.f32 %v525, %v967
  %v1060 = vmul.f32 %v530, %v969
  %v1061 = vmul.f32 %v533, %v971
  %v1062 = vmul.f32 %v538, %v973
  %v1063 = vmul.f32 %v541, %v975
  %v1064 = vmul.f32 %v546, %v977
  %v1065 = vmul.f32 %v549, %v979
  %v1066 = vmul.f32 %v554, %v981
  %v1067 = vmul.f32 %v557, %v983
  %v1068 = vmul.f32 %v562, %v985
  %v1069 = vmul.f32 %v565, %v987
  %v1070 = vmul.f32 %v570, %v989
  %v1071 = vmul.f32 %v573, %v991
  %v1072 = vmul.f32 %v578, %v993
  %v1073 = vmul.f32 %v581, %v995
  %v1074 = vmul.f32 %v586, %v997
  %v1075 = vmul.f32 %v589, %v999
  %v1076 = vmul.f32 %v594, %v1001
  %v1077 = vmul.f32 %v597, %v1003
  %v1078 = vmul.f32 %v602, %v1005
  %v1079 = vmul.f32 %v605, %v1007
  %v1080 = vmul.f32 %v610, %v1009
  %v1081 = vmul.f32 %v613, %v1011
  %v1082 = vmul.f32 %v618, %v1013
  %v1083 = vmul.f32 %v621, %v1015
  %v1084 = vmul.f32 %v626, %v1017
  %v1085 = vmul.f32 %v629, %v1019
  %v1086 = vmul.f32 %v634, %v1021
  %v1087 = vmul.f32 %v637, %v1023
  %v1088 = vpack.c.bf16 %v1025, %v1024
  %v1089 = vpack.c.bf16 %v1027, %v1026
  %v1090 = vpack.c.bf16 %v1029, %v1028
  %v1091 = vpack.c.bf16 %v1031, %v1030
  %v1092 = vpack.c.bf16 %v1033, %v1032
  %v1093 = vpack.c.bf16 %v1035, %v1034
  %v1094 = vpack.c.bf16 %v1037, %v1036
  %v1095 = vpack.c.bf16 %v1039, %v1038
  %v1096 = vpack.c.bf16 %v1041, %v1040
  %v1097 = vpack.c.bf16 %v1043, %v1042
  %v1098 = vpack.c.bf16 %v1045, %v1044
  %v1099 = vpack.c.bf16 %v1047, %v1046
  %v1100 = vpack.c.bf16 %v1049, %v1048
  %v1101 = vpack.c.bf16 %v1051, %v1050
  %v1102 = vpack.c.bf16 %v1053, %v1052
  %v1103 = vpack.c.bf16 %v1055, %v1054
  %v1104 = vpack.c.bf16 %v1057, %v1056
  %v1105 = vpack.c.bf16 %v1059, %v1058
  %v1106 = vpack.c.bf16 %v1061, %v1060
  %v1107 = vpack.c.bf16 %v1063, %v1062
  %v1108 = vpack.c.bf16 %v1065, %v1064
  %v1109 = vpack.c.bf16 %v1067, %v1066
  %v1110 = vpack.c.bf16 %v1069, %v1068
  %v1111 = vpack.c.bf16 %v1071, %v1070
  %v1112 = vpack.c.bf16 %v1073, %v1072
  %v1113 = vpack.c.bf16 %v1075, %v1074
  %v1114 = vpack.c.bf16 %v1077, %v1076
  %v1115 = vpack.c.bf16 %v1079, %v1078
  %v1116 = vpack.c.bf16 %v1081, %v1080
  %v1117 = vpack.c.bf16 %v1083, %v1082
  %v1118 = vpack.c.bf16 %v1085, %v1084
  %v1119 = vpack.c.bf16 %v1087, %v1086
  %v1152 = vunpack.c.l.b16 %v1088
  %v1153 = vunpack.c.h.b16 %v1088
  %v1154 = vunpack.c.l.b16 %v1089
  %v1155 = vunpack.c.h.b16 %v1089
  %v1156 = vunpack.c.l.b16 %v1090
  %v1157 = vunpack.c.h.b16 %v1090
  %v1158 = vunpack.c.l.b16 %v1091
  %v1159 = vunpack.c.h.b16 %v1091
  %v1160 = vunpack.c.l.b16 %v1092
  %v1161 = vunpack.c.h.b16 %v1092
  %v1162 = vunpack.c.l.b16 %v1093
  %v1163 = vunpack.c.h.b16 %v1093
  %v1164 = vunpack.c.l.b16 %v1094
  %v1165 = vunpack.c.h.b16 %v1094
  %v1166 = vunpack.c.l.b16 %v1095
  %v1167 = vunpack.c.h.b16 %v1095
  %v1168 = vunpack.c.l.b16 %v1096
  %v1169 = vunpack.c.h.b16 %v1096
  %v1170 = vunpack.c.l.b16 %v1097
  %v1171 = vunpack.c.h.b16 %v1097
  %v1172 = vunpack.c.l.b16 %v1098
  %v1173 = vunpack.c.h.b16 %v1098
  %v1174 = vunpack.c.l.b16 %v1099
  %v1175 = vunpack.c.h.b16 %v1099
  %v1176 = vunpack.c.l.b16 %v1100
  %v1177 = vunpack.c.h.b16 %v1100
  %v1178 = vunpack.c.l.b16 %v1101
  %v1179 = vunpack.c.h.b16 %v1101
  %v1180 = vunpack.c.l.b16 %v1102
  %v1181 = vunpack.c.h.b16 %v1102
  %v1182 = vunpack.c.l.b16 %v1103
  %v1183 = vunpack.c.h.b16 %v1103
  %v1184 = vunpack.c.l.b16 %v1104
  %v1185 = vunpack.c.h.b16 %v1104
  %v1186 = vunpack.c.l.b16 %v1105
  %v1187 = vunpack.c.h.b16 %v1105
  %v1188 = vunpack.c.l.b16 %v1106
  %v1189 = vunpack.c.h.b16 %v1106
  %v1190 = vunpack.c.l.b16 %v1107
  %v1191 = vunpack.c.h.b16 %v1107
  %v1192 = vunpack.c.l.b16 %v1108
  %v1193 = vunpack.c.h.b16 %v1108
  %v1194 = vunpack.c.l.b16 %v1109
  %v1195 = vunpack.c.h.b16 %v1109
  %v1196 = vunpack.c.l.b16 %v1110
  %v1197 = vunpack.c.h.b16 %v1110
  %v1198 = vunpack.c.l.b16 %v1111
  %v1199 = vunpack.c.h.b16 %v1111
  %v1200 = vunpack.c.l.b16 %v1112
  %v1201 = vunpack.c.h.b16 %v1112
  %v1202 = vunpack.c.l.b16 %v1113
  %v1203 = vunpack.c.h.b16 %v1113
  %v1204 = vunpack.c.l.b16 %v1114
  %v1205 = vunpack.c.h.b16 %v1114
  %v1206 = vunpack.c.l.b16 %v1115
  %v1207 = vunpack.c.h.b16 %v1115
  %v1208 = vunpack.c.l.b16 %v1116
  %v1209 = vunpack.c.h.b16 %v1116
  %v1210 = vunpack.c.l.b16 %v1117
  %v1211 = vunpack.c.h.b16 %v1117
  %v1212 = vunpack.c.l.b16 %v1118
  %v1213 = vunpack.c.h.b16 %v1118
  %v1214 = vunpack.c.l.b16 %v1119
  %v1215 = vunpack.c.h.b16 %v1119
  %v1216 = vpack.c.b16 %v1152, %v1152
  %v1217 = vpack.c.b16 %v1153, %v1153
  %v1218 = vpack.c.b16 %v1154, %v1154
  %v1219 = vpack.c.b16 %v1155, %v1155
  %v1220 = vpack.c.b16 %v1156, %v1156
  %v1221 = vpack.c.b16 %v1157, %v1157
  %v1222 = vpack.c.b16 %v1158, %v1158
  %v1223 = vpack.c.b16 %v1159, %v1159
  %v1224 = vpack.c.b16 %v1160, %v1160
  %v1225 = vpack.c.b16 %v1161, %v1161
  %v1226 = vpack.c.b16 %v1162, %v1162
  %v1227 = vpack.c.b16 %v1163, %v1163
  %v1228 = vpack.c.b16 %v1164, %v1164
  %v1229 = vpack.c.b16 %v1165, %v1165
  %v1230 = vpack.c.b16 %v1166, %v1166
  %v1231 = vpack.c.b16 %v1167, %v1167
  %v1232 = vpack.c.b16 %v1168, %v1168
  %v1233 = vpack.c.b16 %v1169, %v1169
  %v1234 = vpack.c.b16 %v1170, %v1170
  %v1235 = vpack.c.b16 %v1171, %v1171
  %v1236 = vpack.c.b16 %v1172, %v1172
  %v1237 = vpack.c.b16 %v1173, %v1173
  %v1238 = vpack.c.b16 %v1174, %v1174
  %v1239 = vpack.c.b16 %v1175, %v1175
  %v1240 = vpack.c.b16 %v1176, %v1176
  %v1241 = vpack.c.b16 %v1177, %v1177
  %v1242 = vpack.c.b16 %v1178, %v1178
  %v1243 = vpack.c.b16 %v1179, %v1179
  %v1244 = vpack.c.b16 %v1180, %v1180
  %v1245 = vpack.c.b16 %v1181, %v1181
  %v1246 = vpack.c.b16 %v1182, %v1182
  %v1247 = vpack.c.b16 %v1183, %v1183
  %v1248 = vpack.c.b16 %v1184, %v1184
  %v1249 = vpack.c.b16 %v1185, %v1185
  %v1250 = vpack.c.b16 %v1186, %v1186
  %v1251 = vpack.c.b16 %v1187, %v1187
  %v1252 = vpack.c.b16 %v1188, %v1188
  %v1253 = vpack.c.b16 %v1189, %v1189
  %v1254 = vpack.c.b16 %v1190, %v1190
  %v1255 = vpack.c.b16 %v1191, %v1191
  %v1256 = vpack.c.b16 %v1192, %v1192
  %v1257 = vpack.c.b16 %v1193, %v1193
  %v1258 = vpack.c.b16 %v1194, %v1194
  %v1259 = vpack.c.b16 %v1195, %v1195
  %v1260 = vpack.c.b16 %v1196, %v1196
  %v1261 = vpack.c.b16 %v1197, %v1197
  %v1262 = vpack.c.b16 %v1198, %v1198
  %v1263 = vpack.c.b16 %v1199, %v1199
  %v1264 = vpack.c.b16 %v1200, %v1200
  %v1265 = vpack.c.b16 %v1201, %v1201
  %v1266 = vpack.c.b16 %v1202, %v1202
  %v1267 = vpack.c.b16 %v1203, %v1203
  %v1268 = vpack.c.b16 %v1204, %v1204
  %v1269 = vpack.c.b16 %v1205, %v1205
  %v1270 = vpack.c.b16 %v1206, %v1206
  %v1271 = vpack.c.b16 %v1207, %v1207
  %v1272 = vpack.c.b16 %v1208, %v1208
  %v1273 = vpack.c.b16 %v1209, %v1209
  %v1274 = vpack.c.b16 %v1210, %v1210
  %v1275 = vpack.c.b16 %v1211, %v1211
  %v1276 = vpack.c.b16 %v1212, %v1212
  %v1277 = vpack.c.b16 %v1213, %v1213
  %v1278 = vpack.c.b16 %v1214, %v1214
  %v1279 = vpack.c.b16 %v1215, %v1215
  %vm1344 = vcmask 519168
  %1345 = vst.msk [vmem:[%s3] sm:$0xf] %vm1344, %v1216
  %1346 = vst.msk [vmem:[%s3 + $0x4] sm:$0xf] %vm1344, %v1217
  %1347 = vst.msk [vmem:[%s3 + $0x8] sm:$0xf] %vm1344, %v1218
  %1348 = vst.msk [vmem:[%s3 + $0xc] sm:$0xf] %vm1344, %v1219
  %1349 = vst.msk [vmem:[%s3 + $0x10] sm:$0xf] %vm1344, %v1220
  %1350 = vst.msk [vmem:[%s3 + $0x14] sm:$0xf] %vm1344, %v1221
  %1351 = vst.msk [vmem:[%s3 + $0x18] sm:$0xf] %vm1344, %v1222
  %1352 = vst.msk [vmem:[%s3 + $0x1c] sm:$0xf] %vm1344, %v1223
  %1353 = vst.msk [vmem:[%s3 + $0x20] sm:$0xf] %vm1344, %v1224
  %1354 = vst.msk [vmem:[%s3 + $0x24] sm:$0xf] %vm1344, %v1225
  %1355 = vst.msk [vmem:[%s3 + $0x28] sm:$0xf] %vm1344, %v1226
  %1356 = vst.msk [vmem:[%s3 + $0x2c] sm:$0xf] %vm1344, %v1227
  %1357 = vst.msk [vmem:[%s3 + $0x30] sm:$0xf] %vm1344, %v1228
  %1358 = vst.msk [vmem:[%s3 + $0x34] sm:$0xf] %vm1344, %v1229
  %1359 = vst.msk [vmem:[%s3 + $0x38] sm:$0xf] %vm1344, %v1230
  %1360 = vst.msk [vmem:[%s3 + $0x3c] sm:$0xf] %vm1344, %v1231
  %1361 = vst.msk [vmem:[%s3 + $0x40] sm:$0xf] %vm1344, %v1232
  %1362 = vst.msk [vmem:[%s3 + $0x44] sm:$0xf] %vm1344, %v1233
  %1363 = vst.msk [vmem:[%s3 + $0x48] sm:$0xf] %vm1344, %v1234
  %1364 = vst.msk [vmem:[%s3 + $0x4c] sm:$0xf] %vm1344, %v1235
  %1365 = vst.msk [vmem:[%s3 + $0x50] sm:$0xf] %vm1344, %v1236
  %1366 = vst.msk [vmem:[%s3 + $0x54] sm:$0xf] %vm1344, %v1237
  %1367 = vst.msk [vmem:[%s3 + $0x58] sm:$0xf] %vm1344, %v1238
  %1368 = vst.msk [vmem:[%s3 + $0x5c] sm:$0xf] %vm1344, %v1239
  %1369 = vst.msk [vmem:[%s3 + $0x60] sm:$0xf] %vm1344, %v1240
  %1370 = vst.msk [vmem:[%s3 + $0x64] sm:$0xf] %vm1344, %v1241
  %1371 = vst.msk [vmem:[%s3 + $0x68] sm:$0xf] %vm1344, %v1242
  %1372 = vst.msk [vmem:[%s3 + $0x6c] sm:$0xf] %vm1344, %v1243
  %1373 = vst.msk [vmem:[%s3 + $0x70] sm:$0xf] %vm1344, %v1244
  %1374 = vst.msk [vmem:[%s3 + $0x74] sm:$0xf] %vm1344, %v1245
  %1375 = vst.msk [vmem:[%s3 + $0x78] sm:$0xf] %vm1344, %v1246
  %1376 = vst.msk [vmem:[%s3 + $0x7c] sm:$0xf] %vm1344, %v1247
  %1377 = vst.msk [vmem:[%s3 + $0x80] sm:$0xf] %vm1344, %v1248
  %1378 = vst.msk [vmem:[%s3 + $0x84] sm:$0xf] %vm1344, %v1249
  %1379 = vst.msk [vmem:[%s3 + $0x88] sm:$0xf] %vm1344, %v1250
  %1380 = vst.msk [vmem:[%s3 + $0x8c] sm:$0xf] %vm1344, %v1251
  %1381 = vst.msk [vmem:[%s3 + $0x90] sm:$0xf] %vm1344, %v1252
  %1382 = vst.msk [vmem:[%s3 + $0x94] sm:$0xf] %vm1344, %v1253
  %1383 = vst.msk [vmem:[%s3 + $0x98] sm:$0xf] %vm1344, %v1254
  %1384 = vst.msk [vmem:[%s3 + $0x9c] sm:$0xf] %vm1344, %v1255
  %1385 = vst.msk [vmem:[%s3 + $0xa0] sm:$0xf] %vm1344, %v1256
  %1386 = vst.msk [vmem:[%s3 + $0xa4] sm:$0xf] %vm1344, %v1257
  %1387 = vst.msk [vmem:[%s3 + $0xa8] sm:$0xf] %vm1344, %v1258
  %1388 = vst.msk [vmem:[%s3 + $0xac] sm:$0xf] %vm1344, %v1259
  %1389 = vst.msk [vmem:[%s3 + $0xb0] sm:$0xf] %vm1344, %v1260
  %1390 = vst.msk [vmem:[%s3 + $0xb4] sm:$0xf] %vm1344, %v1261
  %1391 = vst.msk [vmem:[%s3 + $0xb8] sm:$0xf] %vm1344, %v1262
  %1392 = vst.msk [vmem:[%s3 + $0xbc] sm:$0xf] %vm1344, %v1263
  %1393 = vst.msk [vmem:[%s3 + $0xc0] sm:$0xf] %vm1344, %v1264
  %1394 = vst.msk [vmem:[%s3 + $0xc4] sm:$0xf] %vm1344, %v1265
  %1395 = vst.msk [vmem:[%s3 + $0xc8] sm:$0xf] %vm1344, %v1266
  %1396 = vst.msk [vmem:[%s3 + $0xcc] sm:$0xf] %vm1344, %v1267
  %1397 = vst.msk [vmem:[%s3 + $0xd0] sm:$0xf] %vm1344, %v1268
  %1398 = vst.msk [vmem:[%s3 + $0xd4] sm:$0xf] %vm1344, %v1269
  %1399 = vst.msk [vmem:[%s3 + $0xd8] sm:$0xf] %vm1344, %v1270
  %1400 = vst.msk [vmem:[%s3 + $0xdc] sm:$0xf] %vm1344, %v1271
  %1401 = vst.msk [vmem:[%s3 + $0xe0] sm:$0xf] %vm1344, %v1272
  %1402 = vst.msk [vmem:[%s3 + $0xe4] sm:$0xf] %vm1344, %v1273
  %1403 = vst.msk [vmem:[%s3 + $0xe8] sm:$0xf] %vm1344, %v1274
  %1404 = vst.msk [vmem:[%s3 + $0xec] sm:$0xf] %vm1344, %v1275
  %1405 = vst.msk [vmem:[%s3 + $0xf0] sm:$0xf] %vm1344, %v1276
  %1406 = vst.msk [vmem:[%s3 + $0xf4] sm:$0xf] %vm1344, %v1277
  %1407 = vst.msk [vmem:[%s3 + $0xf8] sm:$0xf] %vm1344, %v1278
  %1408 = vst.msk [vmem:[%s3 + $0xfc] sm:$0xf] %vm1344, %v1279
  // Predicated region
  $region14: #{efficientnet_forward.19} parent=0 // pred_check
    _
  $region15: #{efficientnet_forward.19} parent=0 // pred_check_branch
    %1410 = sbr.rel (0) target = $region17
  $region16: #{efficientnet_forward.19} parent=0 // pred_region
    _
  $region17: #{efficientnet_forward.19} parent=0 // pred_fallthru
    _
  // Predicated region
  $region18: #{efficientnet_forward.19} parent=0 // pred_check
    _
  $region19: #{efficientnet_forward.19} parent=0 // pred_check_branch
    %1412 = sbr.rel (0) target = $region21
  $region20: #{efficientnet_forward.19} parent=0 // pred_region
    _
  $region21: #{efficientnet_forward.19} parent=0 // pred_fallthru
    _

// kernel: efficientnet_forward.20
$region0: #{efficientnet_forward.20}
  #allocation0 [shape = 'u32[]', space=smem, size = 0x4, offset = 0x4, fixed_abs, tag = 'smem constant byte address 0x4 - core index']
  #allocation1 [shape = 'u32[144,128]{1,0:T(1,128)}', space=vmem, size = 0x12000, scoped, tag = 'internal scratch']
  %s0 = inlined_call_operand.vmem [shape: bf16[2,36,9,64], index: 0, kind: input, shape index: {}]
  %s1 = inlined_call_operand.vmem [shape: f32[9,64], index: 1, kind: input, shape index: {}]
  %s2 = inlined_call_operand.vmem [shape: f32[1,64], index: 2, kind: input, shape index: {}]
  %s3 = inlined_call_operand.vmem [shape: bf16[2,8,8,64], index: 3, kind: output, shape index: {0}]
  %s4 = inlined_call_operand.vmem [shape: f32[2,1,64], index: 4, kind: output, shape index: {1}]
  %5 = xla_tuple %s3, %s4
  %s6 = sld [smem:[#allocation0]]
  $region53: #{efficientnet_forward.20} parent=0
    _
  %s8 = ssub.s32 1, %s6
  %s9 = scalar_select 0, %s8, %s6
  loop: start=0, step=1, limit=4
  $region2: #{efficientnet_forward.20} parent=0 // loop_pre_header
    _
  $region3: #{efficientnet_forward.20} parent=0 // loop_header
    %s11 = sphi 0, %s15
    %p12 = scmp.ge.s32.totalorder %s11, 4
    %s21 = sphi 0, %s23
    %s24 = sphi 0, %s21
    %s25 = sphi 0, %s24
    %s41 = sphi 0, %s25
    %s45 = sphi 0, %s45
    %s47 = sphi 0, %s45
    %s48 = sphi 0, %s47
    %s62 = sphi 0, %s48
    %s66 = sphi 0, %s66
    %s68 = sphi 0, %s66
    %s69 = sphi 0, %s68
    %s83 = sphi 0, %s69
    %s89 = sphi 0, %s91
    %s92 = sphi 0, %s89
    %s93 = sphi 0, %s92
    %s109 = sphi 0, %s93
    %s115 = sphi 0, %s117
    %s118 = sphi 0, %s115
    %s119 = sphi 0, %s118
    %s135 = sphi 0, %s119
  $region4: #{efficientnet_forward.20} parent=0 // loop_header_branch
    %14 = sbr.rel (%p12) target = $region8
  $region5: #{efficientnet_forward.20} parent=0 // loop_body
    %s16 = ssub.s32 %s11, 1
    %s17 = ssub.s32 %s11, 2
    %s18 = sadd.s32 %s11, 1
    %s19 = ssub.s32 %s11, %s18
    %p20 = scmp.eq.s32.totalorder %s19, 0
    %s22 = sadd.s32 %s21, 1
    %s23 = scalar_select %p20, %s21, %s22
    %p26 = pneg %p20
    %p27 = scmp.eq.s32.totalorder %s11, 1
    %p28 = por %p26, %p27
    %p29 = scmp.ne.s32.totalorder %s21, %s24
    %p30 = scmp.eq.s32.totalorder %s11, 0
    %p31 = por %p29, %p30
    %p32 = scmp.ne.s32.totalorder %s21, %s24
    %p33 = scmp.eq.s32.totalorder %s16, 1
    %p34 = por %p32, %p33
    %p35 = scmp.ne.s32.totalorder %s24, %s25
    %p36 = scmp.eq.s32.totalorder %s16, 0
    %p37 = por %p35, %p36
    %p38 = scmp.ne.s32.totalorder %s24, %s25
    %p39 = scmp.eq.s32.totalorder %s17, 1
    %p40 = por %p38, %p39
    %p42 = scmp.ne.s32.totalorder %s25, %s41
    %p43 = scmp.eq.s32.totalorder %s17, 0
    %p44 = por %p42, %p43
    %s46 = sadd.s32 %s45, 1
    %p49 = scmp.eq.s32.totalorder %s11, 1
    %p50 = scmp.ne.s32.totalorder %s45, %s47
    %p51 = scmp.eq.s32.totalorder %s11, 0
    %p52 = por %p50, %p51
    %p53 = scmp.ne.s32.totalorder %s45, %s47
    %p54 = scmp.eq.s32.totalorder %s16, 1
    %p55 = por %p53, %p54
    %p56 = scmp.ne.s32.totalorder %s47, %s48
    %p57 = scmp.eq.s32.totalorder %s16, 0
    %p58 = por %p56, %p57
    %p59 = scmp.ne.s32.totalorder %s47, %s48
    %p60 = scmp.eq.s32.totalorder %s17, 1
    %p61 = por %p59, %p60
    %p63 = scmp.ne.s32.totalorder %s48, %s62
    %p64 = scmp.eq.s32.totalorder %s17, 0
    %p65 = por %p63, %p64
    %s67 = sadd.s32 %s66, 1
    %p70 = scmp.eq.s32.totalorder %s11, 1
    %p71 = scmp.ne.s32.totalorder %s66, %s68
    %p72 = scmp.eq.s32.totalorder %s11, 0
    %p73 = por %p71, %p72
    %p74 = scmp.ne.s32.totalorder %s66, %s68
    %p75 = scmp.eq.s32.totalorder %s16, 1
    %p76 = por %p74, %p75
    %p77 = scmp.ne.s32.totalorder %s68, %s69
    %p78 = scmp.eq.s32.totalorder %s16, 0
    %p79 = por %p77, %p78
    %p80 = scmp.ne.s32.totalorder %s68, %s69
    %p81 = scmp.eq.s32.totalorder %s17, 1
    %p82 = por %p80, %p81
    %p84 = scmp.ne.s32.totalorder %s69, %s83
    %p85 = scmp.eq.s32.totalorder %s17, 0
    %p86 = por %p84, %p85
    %s87 = ssub.s32 %s11, %s18
    %p88 = scmp.eq.s32.totalorder %s87, 0
    %s90 = sadd.s32 %s89, 1
    %s91 = scalar_select %p88, %s89, %s90
    %p94 = pneg %p88
    %p95 = scmp.eq.s32.totalorder %s11, 1
    %p96 = por %p94, %p95
    %p97 = scmp.ne.s32.totalorder %s89, %s92
    %p98 = scmp.eq.s32.totalorder %s11, 0
    %p99 = por %p97, %p98
    %p100 = scmp.ne.s32.totalorder %s89, %s92
    %p101 = scmp.eq.s32.totalorder %s16, 1
    %p102 = por %p100, %p101
    %p103 = scmp.ne.s32.totalorder %s92, %s93
    %p104 = scmp.eq.s32.totalorder %s16, 0
    %p105 = por %p103, %p104
    %p106 = scmp.ne.s32.totalorder %s92, %s93
    %p107 = scmp.eq.s32.totalorder %s17, 1
    %p108 = por %p106, %p107
    %p110 = scmp.ne.s32.totalorder %s93, %s109
    %p111 = scmp.eq.s32.totalorder %s17, 0
    %p112 = por %p110, %p111
    %s113 = ssub.s32 %s11, %s18
    %p114 = scmp.eq.s32.totalorder %s113, 0
    %s116 = sadd.s32 %s115, 1
    %s117 = scalar_select %p114, %s115, %s116
    %p120 = pneg %p114
    %p121 = scmp.eq.s32.totalorder %s11, 1
    %p122 = por %p120, %p121
    %p123 = scmp.ne.s32.totalorder %s115, %s118
    %p124 = scmp.eq.s32.totalorder %s11, 0
    %p125 = por %p123, %p124
    %p126 = scmp.ne.s32.totalorder %s115, %s118
    %p127 = scmp.eq.s32.totalorder %s16, 1
    %p128 = por %p126, %p127
    %p129 = scmp.ne.s32.totalorder %s118, %s119
    %p130 = scmp.eq.s32.totalorder %s16, 0
    %p131 = por %p129, %p130
    %p132 = scmp.ne.s32.totalorder %s118, %s119
    %p133 = scmp.eq.s32.totalorder %s17, 1
    %p134 = por %p132, %p133
    %p136 = scmp.ne.s32.totalorder %s119, %s135
    %p137 = scmp.eq.s32.totalorder %s17, 0
    %p138 = por %p136, %p137
    %p139 = scmp.le.s32.totalorder 1, %s11
    %p140 = scmp.lt.s32.totalorder %s11, 3
    %p141 = pnand %p139, %p140
    %p142 = pneg %p141
    // Predicated region
    $region9: #{efficientnet_forward.20} parent=5 // pred_check
      _
    $region10: #{efficientnet_forward.20} parent=5 // pred_check_branch
      %144 = sbr.rel (%p141) target = $region12
    $region11: #{efficientnet_forward.20} parent=5 // pred_region
      %s145 = ssub.s32 %s11, 1
      // Predicated region
      $region13: #{efficientnet_forward.20} parent=11 // pred_check
        %p146 = pneg %p58
      $region14: #{efficientnet_forward.20} parent=11 // pred_check_branch
        %148 = sbr.rel (%p146) target = $region16
      $region15: #{efficientnet_forward.20} parent=11 // pred_region
        _
      $region16: #{efficientnet_forward.20} parent=11 // pred_fallthru
        _
      // Predicated region
      $region17: #{efficientnet_forward.20} parent=11 // pred_check
        %p149 = pneg %p79
      $region18: #{efficientnet_forward.20} parent=11 // pred_check_branch
        %151 = sbr.rel (%p149) target = $region20
      $region19: #{efficientnet_forward.20} parent=11 // pred_region
        _
      $region20: #{efficientnet_forward.20} parent=11 // pred_fallthru
        _
    $region12: #{efficientnet_forward.20} parent=5 // pred_fallthru
      _
    %p152 = scmp.lt.s32.totalorder %s11, 2
    // Predicated region
    $region21: #{efficientnet_forward.20} parent=5 // pred_check
      %p153 = pneg %p152
    $region22: #{efficientnet_forward.20} parent=5 // pred_check_branch
      %155 = sbr.rel (%p153) target = $region24
    $region23: #{efficientnet_forward.20} parent=5 // pred_region
      // Predicated region
      $region25: #{efficientnet_forward.20} parent=23 // pred_check
        %p156 = pneg %p31
      $region26: #{efficientnet_forward.20} parent=23 // pred_check_branch
        %158 = sbr.rel (%p156) target = $region28
      $region27: #{efficientnet_forward.20} parent=23 // pred_region
        %p159 = scmp.lt.s32.totalorder %s11, 1
        %s160 = scalar_select %p159, %s11, 1
        %s161 = smul.addr %s160, 72
        %s162 = smul.addr %s161, 4
        %s163 = scalar_lea.vmem %s0, %s162
      $region28: #{efficientnet_forward.20} parent=23 // pred_fallthru
        _
    $region24: #{efficientnet_forward.20} parent=5 // pred_fallthru
      _
    %p164 = scmp.le.s32.totalorder 1, %s11
    %p165 = scmp.lt.s32.totalorder %s11, 3
    %p166 = pnand %p164, %p165
    %p167 = pneg %p166
    // Predicated region
    $region29: #{efficientnet_forward.20} parent=5 // pred_check
      _
    $region30: #{efficientnet_forward.20} parent=5 // pred_check_branch
      %169 = sbr.rel (%p166) target = $region32
    $region31: #{efficientnet_forward.20} parent=5 // pred_region
      %s170 = ssub.s32 %s11, 1
      %p171 = scmp.lt.s32.totalorder %s16, 1
      %s172 = scalar_select %p171, %s16, 1
      %s173 = smul.addr %s172, 72
      %s174 = smul.addr %s173, 4
      %s175 = scalar_lea.vmem %s0, %s174
      %p176 = pneg %p37
      %p177 = pneg %p34
      %p178 = pneg %p58
      %p179 = pneg %p55
      %p180 = pneg %p79
      %p181 = pneg %p76
      %p182 = pneg %p105
      %p183 = pneg %p102
      %p184 = scmp.lt.s32.totalorder %s16, 1
      %s185 = scalar_select %p184, %s16, 1
      %s186 = smul.addr %s185, 8
      %s187 = smul.addr %s186, 4
      %s188 = scalar_lea.vmem %s3, %s187
      %p189 = pneg %p131
      %p190 = pneg %p128
      %p191 = scmp.lt.s32.totalorder %s16, 1
      %s192 = scalar_select %p191, %s16, 1
      %s193 = scalar_lea.vmem %s4, %s192
      %p194 = scmp.lt.s32.totalorder %s16, 1
      %s195 = scalar_select %p194, %s16, 1
      %s196 = smul.addr %s195, 72
      %s197 = smul.addr %s196, 4
      %s198 = scalar_lea.vmem %s0, %s197
      %p199 = scmp.lt.s32.totalorder %s16, 1
      %s200 = scalar_select %p199, %s16, 1
      %s201 = smul.addr %s200, 8
      %s202 = smul.addr %s201, 4
      %s203 = scalar_lea.vmem %s3, %s202
      %p204 = scmp.lt.s32.totalorder %s16, 1
      %s205 = scalar_select %p204, %s16, 1
      %s206 = scalar_lea.vmem %s4, %s205
      %v207 = vld [vmem:[%s1] sm:$0xff]
      %v208 = vld [vmem:[%s1 + $0x8] sm:$0x1]
      %v209 = vld [vmem:[%s198] sm:$0xf]
      %v210 = vld [vmem:[%s198 + $0x4] sm:$0x1]
      %v211 = vld [vmem:[%s198 + $0x8] sm:$0xf]
      %v212 = vld [vmem:[%s198 + $0xc] sm:$0x1]
      %v213 = vld [vmem:[%s198 + $0x10] sm:$0xf]
      %v214 = vld [vmem:[%s198 + $0x14] sm:$0x1]
      %v215 = vld [vmem:[%s198 + $0x18] sm:$0xf]
      %v216 = vld [vmem:[%s198 + $0x1c] sm:$0x1]
      %v217 = vld [vmem:[%s198 + $0x20] sm:$0xf]
      %v218 = vld [vmem:[%s198 + $0x24] sm:$0x1]
      %v219 = vld [vmem:[%s198 + $0x28] sm:$0xf]
      %v220 = vld [vmem:[%s198 + $0x2c] sm:$0x1]
      %v221 = vld [vmem:[%s198 + $0x30] sm:$0xf]
      %v222 = vld [vmem:[%s198 + $0x34] sm:$0x1]
      %v223 = vld [vmem:[%s198 + $0x38] sm:$0xf]
      %v224 = vld [vmem:[%s198 + $0x3c] sm:$0x1]
      %v225 = vld [vmem:[%s198 + $0x40] sm:$0xf]
      %v226 = vld [vmem:[%s198 + $0x44] sm:$0x1]
      %v227 = vld [vmem:[%s198 + $0x48] sm:$0xf]
      %v228 = vld [vmem:[%s198 + $0x50] sm:$0xf]
      %v229 = vld [vmem:[%s198 + $0x58] sm:$0xf]
      %v230 = vld [vmem:[%s198 + $0x60] sm:$0xf]
      %v231 = vld [vmem:[%s198 + $0x68] sm:$0xf]
      %v232 = vld [vmem:[%s198 + $0x70] sm:$0xf]
      %v233 = vld [vmem:[%s198 + $0x78] sm:$0xf]
      %v234 = vld [vmem:[%s198 + $0x80] sm:$0xf]
      %v235 = vld [vmem:[%s198 + $0x88] sm:$0xf]
      %v236 = vld [vmem:[%s198 + $0x90] sm:$0xf]
      %v237 = vld [vmem:[%s198 + $0x94] sm:$0x1]
      %v238 = vld [vmem:[%s198 + $0x98] sm:$0xf]
      %v239 = vld [vmem:[%s198 + $0x9c] sm:$0x1]
      %v240 = vld [vmem:[%s198 + $0xa0] sm:$0xf]
      %v241 = vld [vmem:[%s198 + $0xa4] sm:$0x1]
      %v242 = vld [vmem:[%s198 + $0xa8] sm:$0xf]
      %v243 = vld [vmem:[%s198 + $0xac] sm:$0x1]
      %v244 = vld [vmem:[%s198 + $0xb0] sm:$0xf]
      %v245 = vld [vmem:[%s198 + $0xb4] sm:$0x1]
      %v246 = vld [vmem:[%s198 + $0xb8] sm:$0xf]
      %v247 = vld [vmem:[%s198 + $0xbc] sm:$0x1]
      %v248 = vld [vmem:[%s198 + $0xc0] sm:$0xf]
      %v249 = vld [vmem:[%s198 + $0xc4] sm:$0x1]
      %v250 = vld [vmem:[%s198 + $0xc8] sm:$0xf]
      %v251 = vld [vmem:[%s198 + $0xcc] sm:$0x1]
      %v252 = vld [vmem:[%s198 + $0xd8] sm:$0xf]
      %v253 = vld [vmem:[%s198 + $0xe0] sm:$0xf]
      %v254 = vld [vmem:[%s198 + $0xe8] sm:$0xf]
      %v255 = vld [vmem:[%s198 + $0xf0] sm:$0xf]
      %v256 = vld [vmem:[%s198 + $0xf8] sm:$0xf]
      %v257 = vld [vmem:[%s198 + $0x100] sm:$0xf]
      %v258 = vld [vmem:[%s198 + $0x108] sm:$0xf]
      %v259 = vld [vmem:[%s198 + $0x110] sm:$0xf]
      %v260 = vunpack.c.l.bf16 %v209
      %v261 = vunpack.c.l.bf16 %v211
      %v262 = vunpack.c.l.bf16 %v213
      %v263 = vunpack.c.l.bf16 %v215
      %v264 = vunpack.c.l.bf16 %v217
      %v265 = vunpack.c.l.bf16 %v219
      %v266 = vunpack.c.l.bf16 %v221
      %v267 = vunpack.c.l.bf16 %v223
      %v268 = vlaneseq
      %v269 = vshrl.u32 %v268, 7
      %v270 = vsub.s32 0, %v269
      %v271 = vrot.slane %v207, %v270
      %v272 = vmul.f32 %v260, %v271
      %v273 = vmul.f32 %v261, %v271
      %v274 = vmul.f32 %v262, %v271
      %v275 = vmul.f32 %v263, %v271
      %v276 = vmul.f32 %v264, %v271
      %v277 = vmul.f32 %v265, %v271
      %v278 = vmul.f32 %v266, %v271
      %v279 = vmul.f32 %v267, %v271
      %v280 = vadd.f32 %v272, 0.0
      %v281 = vadd.f32 %v273, 0.0
      %v282 = vadd.f32 %v274, 0.0
      %v283 = vadd.f32 %v275, 0.0
      %v284 = vadd.f32 %v276, 0.0
      %v285 = vadd.f32 %v277, 0.0
      %v286 = vadd.f32 %v278, 0.0
      %v287 = vadd.f32 %v279, 0.0
      %v288 = vunpack.c.l.bf16 %v225
      %v289 = vlaneseq
      %v290 = vshrl.u32 %v289, 7
      %v291 = vsub.s32 6, %v290
      %v292 = vrot.slane %v207, %v291
      %v293 = vmul.f32 %v261, %v292
      %v294 = vmul.f32 %v262, %v292
      %v295 = vmul.f32 %v263, %v292
      %v296 = vmul.f32 %v264, %v292
      %v297 = vmul.f32 %v265, %v292
      %v298 = vmul.f32 %v266, %v292
      %v299 = vmul.f32 %v267, %v292
      %v300 = vmul.f32 %v288, %v292
      %v301 = vadd.f32 %v280, %v293
      %v302 = vadd.f32 %v281, %v294
      %v303 = vadd.f32 %v282, %v295
      %v304 = vadd.f32 %v283, %v296
      %v305 = vadd.f32 %v284, %v297
      %v306 = vadd.f32 %v285, %v298
      %v307 = vadd.f32 %v286, %v299
      %v308 = vadd.f32 %v287, %v300
      %v309 = vunpack.c.l.bf16 %v236
      %v310 = vunpack.c.l.bf16 %v238
      %v311 = vunpack.c.l.bf16 %v240
      %v312 = vunpack.c.l.bf16 %v242
      %v313 = vunpack.c.l.bf16 %v244
      %v314 = vunpack.c.l.bf16 %v246
      %v315 = vunpack.c.l.bf16 %v248
      %v316 = vunpack.c.l.bf16 %v250
      %v317 = vlaneseq
      %v318 = vshrl.u32 %v317, 7
      %v319 = vsub.s32 3, %v318
      %v320 = vrot.slane %v207, %v319
      %v321 = vmul.f32 %v309, %v320
      %v322 = vmul.f32 %v310, %v320
      %v323 = vmul.f32 %v311, %v320
      %v324 = vmul.f32 %v312, %v320
      %v325 = vmul.f32 %v313, %v320
      %v326 = vmul.f32 %v314, %v320
      %v327 = vmul.f32 %v315, %v320
      %v328 = vmul.f32 %v316, %v320
      %v329 = vadd.f32 %v301, %v321
      %v330 = vadd.f32 %v302, %v322
      %v331 = vadd.f32 %v303, %v323
      %v332 = vadd.f32 %v304, %v324
      %v333 = vadd.f32 %v305, %v325
      %v334 = vadd.f32 %v306, %v326
      %v335 = vadd.f32 %v307, %v327
      %v336 = vadd.f32 %v308, %v328
      %v337 = vunpack.c.l.bf16 %v227
      %v338 = vunpack.c.l.bf16 %v228
      %v339 = vunpack.c.l.bf16 %v229
      %v340 = vunpack.c.l.bf16 %v230
      %v341 = vunpack.c.l.bf16 %v231
      %v342 = vunpack.c.l.bf16 %v232
      %v343 = vunpack.c.l.bf16 %v233
      %v344 = vunpack.c.l.bf16 %v234
      %v345 = vlaneseq
      %v346 = vshrl.u32 %v345, 7
      %v347 = vsub.s32 1, %v346
      %v348 = vrot.slane %v207, %v347
      %v349 = vmul.f32 %v337, %v348
      %v350 = vmul.f32 %v338, %v348
      %v351 = vmul.f32 %v339, %v348
      %v352 = vmul.f32 %v340, %v348
      %v353 = vmul.f32 %v341, %v348
      %v354 = vmul.f32 %v342, %v348
      %v355 = vmul.f32 %v343, %v348
      %v356 = vmul.f32 %v344, %v348
      %v357 = vadd.f32 %v329, %v349
      %v358 = vadd.f32 %v330, %v350
      %v359 = vadd.f32 %v331, %v351
      %v360 = vadd.f32 %v332, %v352
      %v361 = vadd.f32 %v333, %v353
      %v362 = vadd.f32 %v334, %v354
      %v363 = vadd.f32 %v335, %v355
      %v364 = vadd.f32 %v336, %v356
      %v365 = vunpack.c.l.bf16 %v235
      %v366 = vlaneseq
      %v367 = vshrl.u32 %v366, 7
      %v368 = vsub.s32 7, %v367
      %v369 = vrot.slane %v207, %v368
      %v370 = vmul.f32 %v338, %v369
      %v371 = vmul.f32 %v339, %v369
      %v372 = vmul.f32 %v340, %v369
      %v373 = vmul.f32 %v341, %v369
      %v374 = vmul.f32 %v342, %v369
      %v375 = vmul.f32 %v343, %v369
      %v376 = vmul.f32 %v344, %v369
      %v377 = vmul.f32 %v365, %v369
      %v378 = vadd.f32 %v357, %v370
      %v379 = vadd.f32 %v358, %v371
      %v380 = vadd.f32 %v359, %v372
      %v381 = vadd.f32 %v360, %v373
      %v382 = vadd.f32 %v361, %v374
      %v383 = vadd.f32 %v362, %v375
      %v384 = vadd.f32 %v363, %v376
      %v385 = vadd.f32 %v364, %v377
      %v386 = vunpack.c.l.bf16 %v252
      %v387 = vunpack.c.l.bf16 %v253
      %v388 = vunpack.c.l.bf16 %v254
      %v389 = vunpack.c.l.bf16 %v255
      %v390 = vunpack.c.l.bf16 %v256
      %v391 = vunpack.c.l.bf16 %v257
      %v392 = vunpack.c.l.bf16 %v258
      %v393 = vunpack.c.l.bf16 %v259
      %v394 = vlaneseq
      %v395 = vshrl.u32 %v394, 7
      %v396 = vsub.s32 4, %v395
      %v397 = vrot.slane %v207, %v396
      %v398 = vmul.f32 %v386, %v397
      %v399 = vmul.f32 %v387, %v397
      %v400 = vmul.f32 %v388, %v397
      %v401 = vmul.f32 %v389, %v397
      %v402 = vmul.f32 %v390, %v397
      %v403 = vmul.f32 %v391, %v397
      %v404 = vmul.f32 %v392, %v397
      %v405 = vmul.f32 %v393, %v397
      %v406 = vadd.f32 %v378, %v398
      %v407 = vadd.f32 %v379, %v399
      %v408 = vadd.f32 %v380, %v400
      %v409 = vadd.f32 %v381, %v401
      %v410 = vadd.f32 %v382, %v402
      %v411 = vadd.f32 %v383, %v403
      %v412 = vadd.f32 %v384, %v404
      %v413 = vadd.f32 %v385, %v405
      %v414 = vunpack.c.l.bf16 %v210
      %v415 = vunpack.c.l.bf16 %v212
      %v416 = vunpack.c.l.bf16 %v214
      %v417 = vunpack.c.l.bf16 %v216
      %v418 = vunpack.c.l.bf16 %v218
      %v419 = vunpack.c.l.bf16 %v220
      %v420 = vunpack.c.l.bf16 %v222
      %v421 = vunpack.c.l.bf16 %v224
      %v422 = vlaneseq
      %v423 = vshrl.u32 %v422, 7
      %v424 = vsub.s32 2, %v423
      %v425 = vrot.slane %v207, %v424
      %v426 = vmul.f32 %v260, %v425
      %v427 = vmul.f32 %v414, %v425
      %v428 = vmul.f32 %v261, %v425
      %v429 = vmul.f32 %v415, %v425
      %v430 = vmul.f32 %v262, %v425
      %v431 = vmul.f32 %v416, %v425
      %v432 = vmul.f32 %v263, %v425
      %v433 = vmul.f32 %v417, %v425
      %v434 = vmul.f32 %v264, %v425
      %v435 = vmul.f32 %v418, %v425
      %v436 = vmul.f32 %v265, %v425
      %v437 = vmul.f32 %v419, %v425
      %v438 = vmul.f32 %v266, %v425
      %v439 = vmul.f32 %v420, %v425
      %v440 = vmul.f32 %v267, %v425
      %v441 = vmul.f32 %v421, %v425
      %vm458 = vcmask 1046528
      %v459 = vrot.slane %v426, 1
      %v460 = vrot.slane %v427, 1
      %v461 = vsel %vm458, %v459, %v460
      %v462 = vrot.slane %v428, 1
      %v463 = vrot.slane %v429, 1
      %v464 = vsel %vm458, %v462, %v463
      %v465 = vrot.slane %v430, 1
      %v466 = vrot.slane %v431, 1
      %v467 = vsel %vm458, %v465, %v466
      %v468 = vrot.slane %v432, 1
      %v469 = vrot.slane %v433, 1
      %v470 = vsel %vm458, %v468, %v469
      %v471 = vrot.slane %v434, 1
      %v472 = vrot.slane %v435, 1
      %v473 = vsel %vm458, %v471, %v472
      %v474 = vrot.slane %v436, 1
      %v475 = vrot.slane %v437, 1
      %v476 = vsel %vm458, %v474, %v475
      %v477 = vrot.slane %v438, 1
      %v478 = vrot.slane %v439, 1
      %v479 = vsel %vm458, %v477, %v478
      %v480 = vrot.slane %v440, 1
      %v481 = vrot.slane %v441, 1
      %v482 = vsel %vm458, %v480, %v481
      %v491 = vadd.f32 %v406, %v461
      %v492 = vadd.f32 %v407, %v464
      %v493 = vadd.f32 %v408, %v467
      %v494 = vadd.f32 %v409, %v470
      %v495 = vadd.f32 %v410, %v473
      %v496 = vadd.f32 %v411, %v476
      %v497 = vadd.f32 %v412, %v479
      %v498 = vadd.f32 %v413, %v482
      %v499 = vunpack.c.l.bf16 %v226
      %v500 = vlaneseq
      %v501 = vshrl.u32 %v500, 7
      %v502 = vsub.s32 0, %v501
      %v503 = vrot.slane %v208, %v502
      %v504 = vmul.f32 %v261, %v503
      %v505 = vmul.f32 %v415, %v503
      %v506 = vmul.f32 %v262, %v503
      %v507 = vmul.f32 %v416, %v503
      %v508 = vmul.f32 %v263, %v503
      %v509 = vmul.f32 %v417, %v503
      %v510 = vmul.f32 %v264, %v503
      %v511 = vmul.f32 %v418, %v503
      %v512 = vmul.f32 %v265, %v503
      %v513 = vmul.f32 %v419, %v503
      %v514 = vmul.f32 %v266, %v503
      %v515 = vmul.f32 %v420, %v503
      %v516 = vmul.f32 %v267, %v503
      %v517 = vmul.f32 %v421, %v503
      %v518 = vmul.f32 %v288, %v503
      %v519 = vmul.f32 %v499, %v503
      %v536 = vrot.slane %v504, 1
      %v537 = vrot.slane %v505, 1
      %v538 = vsel %vm458, %v536, %v537
      %v539 = vrot.slane %v506, 1
      %v540 = vrot.slane %v507, 1
      %v541 = vsel %vm458, %v539, %v540
      %v542 = vrot.slane %v508, 1
      %v543 = vrot.slane %v509, 1
      %v544 = vsel %vm458, %v542, %v543
      %v545 = vrot.slane %v510, 1
      %v546 = vrot.slane %v511, 1
      %v547 = vsel %vm458, %v545, %v546
      %v548 = vrot.slane %v512, 1
      %v549 = vrot.slane %v513, 1
      %v550 = vsel %vm458, %v548, %v549
      %v551 = vrot.slane %v514, 1
      %v552 = vrot.slane %v515, 1
      %v553 = vsel %vm458, %v551, %v552
      %v554 = vrot.slane %v516, 1
      %v555 = vrot.slane %v517, 1
      %v556 = vsel %vm458, %v554, %v555
      %v557 = vrot.slane %v518, 1
      %v558 = vrot.slane %v519, 1
      %v559 = vsel %vm458, %v557, %v558
      %v568 = vadd.f32 %v491, %v538
      %v569 = vadd.f32 %v492, %v541
      %v570 = vadd.f32 %v493, %v544
      %v571 = vadd.f32 %v494, %v547
      %v572 = vadd.f32 %v495, %v550
      %v573 = vadd.f32 %v496, %v553
      %v574 = vadd.f32 %v497, %v556
      %v575 = vadd.f32 %v498, %v559
      %v576 = vunpack.c.l.bf16 %v237
      %v577 = vunpack.c.l.bf16 %v239
      %v578 = vunpack.c.l.bf16 %v241
      %v579 = vunpack.c.l.bf16 %v243
      %v580 = vunpack.c.l.bf16 %v245
      %v581 = vunpack.c.l.bf16 %v247
      %v582 = vunpack.c.l.bf16 %v249
      %v583 = vunpack.c.l.bf16 %v251
      %v584 = vlaneseq
      %v585 = vshrl.u32 %v584, 7
      %v586 = vsub.s32 5, %v585
      %v587 = vrot.slane %v207, %v586
      %v588 = vmul.f32 %v309, %v587
      %v589 = vmul.f32 %v576, %v587
      %v590 = vmul.f32 %v310, %v587
      %v591 = vmul.f32 %v577, %v587
      %v592 = vmul.f32 %v311, %v587
      %v593 = vmul.f32 %v578, %v587
      %v594 = vmul.f32 %v312, %v587
      %v595 = vmul.f32 %v579, %v587
      %v596 = vmul.f32 %v313, %v587
      %v597 = vmul.f32 %v580, %v587
      %v598 = vmul.f32 %v314, %v587
      %v599 = vmul.f32 %v581, %v587
      %v600 = vmul.f32 %v315, %v587
      %v601 = vmul.f32 %v582, %v587
      %v602 = vmul.f32 %v316, %v587
      %v603 = vmul.f32 %v583, %v587
      %v620 = vrot.slane %v588, 1
      %v621 = vrot.slane %v589, 1
      %v622 = vsel %vm458, %v620, %v621
      %v623 = vrot.slane %v590, 1
      %v624 = vrot.slane %v591, 1
      %v625 = vsel %vm458, %v623, %v624
      %v626 = vrot.slane %v592, 1
      %v627 = vrot.slane %v593, 1
      %v628 = vsel %vm458, %v626, %v627
      %v629 = vrot.slane %v594, 1
      %v630 = vrot.slane %v595, 1
      %v631 = vsel %vm458, %v629, %v630
      %v632 = vrot.slane %v596, 1
      %v633 = vrot.slane %v597, 1
      %v634 = vsel %vm458, %v632, %v633
      %v635 = vrot.slane %v598, 1
      %v636 = vrot.slane %v599, 1
      %v637 = vsel %vm458, %v635, %v636
      %v638 = vrot.slane %v600, 1
      %v639 = vrot.slane %v601, 1
      %v640 = vsel %vm458, %v638, %v639
      %v641 = vrot.slane %v602, 1
      %v642 = vrot.slane %v603, 1
      %v643 = vsel %vm458, %v641, %v642
      %v652 = vadd.f32 %v568, %v622
      %v653 = vadd.f32 %v569, %v625
      %v654 = vadd.f32 %v570, %v628
      %v655 = vadd.f32 %v571, %v631
      %v656 = vadd.f32 %v572, %v634
      %v657 = vadd.f32 %v573, %v637
      %v658 = vadd.f32 %v574, %v640
      %v659 = vadd.f32 %v575, %v643
      %v660 = vld [vmem:[%s2] sm:$0x1]
      %v662 = vlaneseq
      %v663 = vshrl.u32 %v662, 7
      %v664 = vsub.s32 0, %v663
      %v665 = vrot.slane %v660, %v664
      %v667 = vadd.f32 %v652, %v665
      %v668 = vadd.f32 %v653, %v665
      %v669 = vadd.f32 %v654, %v665
      %v670 = vadd.f32 %v655, %v665
      %v671 = vadd.f32 %v656, %v665
      %v672 = vadd.f32 %v657, %v665
      %v673 = vadd.f32 %v658, %v665
      %v674 = vadd.f32 %v659, %v665
      %v675 = vxor.u32 %v667, 2147483648
      %v676 = vxor.u32 %v668, 2147483648
      %v677 = vxor.u32 %v669, 2147483648
      %v678 = vxor.u32 %v670, 2147483648
      %v679 = vxor.u32 %v671, 2147483648
      %v680 = vxor.u32 %v672, 2147483648
      %v681 = vxor.u32 %v673, 2147483648
      %v682 = vxor.u32 %v674, 2147483648
      %v683 = vmul.f32 %v675, 1.442695
      %v684 = vpow.pop %v683
      %v685 = vmul.f32 %v676, 1.442695
      %v686 = vpow.pop %v685
      %v687 = vmul.f32 %v677, 1.442695
      %v688 = vpow.pop %v687
      %v689 = vmul.f32 %v678, 1.442695
      %v690 = vpow.pop %v689
      %v691 = vmul.f32 %v679, 1.442695
      %v692 = vpow.pop %v691
      %v693 = vmul.f32 %v680, 1.442695
      %v694 = vpow.pop %v693
      %v695 = vmul.f32 %v681, 1.442695
      %v696 = vpow.pop %v695
      %v697 = vmul.f32 %v682, 1.442695
      %v698 = vpow.pop %v697
      %v699 = vadd.f32 %v684, 1.0
      %v700 = vadd.f32 %v686, 1.0
      %v701 = vadd.f32 %v688, 1.0
      %v702 = vadd.f32 %v690, 1.0
      %v703 = vadd.f32 %v692, 1.0
      %v704 = vadd.f32 %v694, 1.0
      %v705 = vadd.f32 %v696, 1.0
      %v706 = vadd.f32 %v698, 1.0
      %v707 = vrcp.pop %v699
      %v708 = vmul.f32 1.0, %v707
      %v709 = vrcp.pop %v700
      %v710 = vmul.f32 1.0, %v709
      %v711 = vrcp.pop %v701
      %v712 = vmul.f32 1.0, %v711
      %v713 = vrcp.pop %v702
      %v714 = vmul.f32 1.0, %v713
      %v715 = vrcp.pop %v703
      %v716 = vmul.f32 1.0, %v715
      %v717 = vrcp.pop %v704
      %v718 = vmul.f32 1.0, %v717
      %v719 = vrcp.pop %v705
      %v720 = vmul.f32 1.0, %v719
      %v721 = vrcp.pop %v706
      %v722 = vmul.f32 1.0, %v721
      %v723 = vmul.f32 %v667, %v708
      %v724 = vmul.f32 %v668, %v710
      %v725 = vmul.f32 %v669, %v712
      %v726 = vmul.f32 %v670, %v714
      %v727 = vmul.f32 %v671, %v716
      %v728 = vmul.f32 %v672, %v718
      %v729 = vmul.f32 %v673, %v720
      %v730 = vmul.f32 %v674, %v722
      %v731 = vpack.c.bf16 %v723, %v723
      %v732 = vpack.c.bf16 %v724, %v724
      %v733 = vpack.c.bf16 %v725, %v725
      %v734 = vpack.c.bf16 %v726, %v726
      %v735 = vpack.c.bf16 %v727, %v727
      %v736 = vpack.c.bf16 %v728, %v728
      %v737 = vpack.c.bf16 %v729, %v729
      %v738 = vpack.c.bf16 %v730, %v730
      %vm739 = vcmask 519168
      %740 = vst.msk [vmem:[%s203] sm:$0xf] %vm739, %v731
      %741 = vst.msk [vmem:[%s203 + $0x4] sm:$0xf] %vm739, %v732
      %742 = vst.msk [vmem:[%s203 + $0x8] sm:$0xf] %vm739, %v733
      %743 = vst.msk [vmem:[%s203 + $0xc] sm:$0xf] %vm739, %v734
      %744 = vst.msk [vmem:[%s203 + $0x10] sm:$0xf] %vm739, %v735
      %745 = vst.msk [vmem:[%s203 + $0x14] sm:$0xf] %vm739, %v736
      %746 = vst.msk [vmem:[%s203 + $0x18] sm:$0xf] %vm739, %v737
      %747 = vst.msk [vmem:[%s203 + $0x1c] sm:$0xf] %vm739, %v738
      %vm748 = vcmask 523264
      %v749 = vsel %vm748, %v723, 0.0
      %v750 = vrot.slane %v749, 4
      %v751 = vadd.f32 %v749, %v750
      %v752 = vrot.slane %v751, 2
      %v753 = vadd.f32 %v751, %v752
      %v754 = vrot.slane %v753, 1
      %v755 = vadd.f32 %v753, %v754
      %v756 = vsel %vm748, %v724, 0.0
      %v757 = vrot.slane %v756, 4
      %v758 = vadd.f32 %v756, %v757
      %v759 = vrot.slane %v758, 2
      %v760 = vadd.f32 %v758, %v759
      %v761 = vrot.slane %v760, 1
      %v762 = vadd.f32 %v760, %v761
      %v763 = vsel %vm748, %v725, 0.0
      %v764 = vrot.slane %v763, 4
      %v765 = vadd.f32 %v763, %v764
      %v766 = vrot.slane %v765, 2
      %v767 = vadd.f32 %v765, %v766
      %v768 = vrot.slane %v767, 1
      %v769 = vadd.f32 %v767, %v768
      %v770 = vsel %vm748, %v726, 0.0
      %v771 = vrot.slane %v770, 4
      %v772 = vadd.f32 %v770, %v771
      %v773 = vrot.slane %v772, 2
      %v774 = vadd.f32 %v772, %v773
      %v775 = vrot.slane %v774, 1
      %v776 = vadd.f32 %v774, %v775
      %v777 = vsel %vm748, %v727, 0.0
      %v778 = vrot.slane %v777, 4
      %v779 = vadd.f32 %v777, %v778
      %v780 = vrot.slane %v779, 2
      %v781 = vadd.f32 %v779, %v780
      %v782 = vrot.slane %v781, 1
      %v783 = vadd.f32 %v781, %v782
      %v784 = vsel %vm748, %v728, 0.0
      %v785 = vrot.slane %v784, 4
      %v786 = vadd.f32 %v784, %v785
      %v787 = vrot.slane %v786, 2
      %v788 = vadd.f32 %v786, %v787
      %v789 = vrot.slane %v788, 1
      %v790 = vadd.f32 %v788, %v789
      %v791 = vsel %vm748, %v729, 0.0
      %v792 = vrot.slane %v791, 4
      %v793 = vadd.f32 %v791, %v792
      %v794 = vrot.slane %v793, 2
      %v795 = vadd.f32 %v793, %v794
      %v796 = vrot.slane %v795, 1
      %v797 = vadd.f32 %v795, %v796
      %v798 = vsel %vm748, %v730, 0.0
      %v799 = vrot.slane %v798, 4
      %v800 = vadd.f32 %v798, %v799
      %v801 = vrot.slane %v800, 2
      %v802 = vadd.f32 %v800, %v801
      %v803 = vrot.slane %v802, 1
      %v804 = vadd.f32 %v802, %v803
      %v805 = vsel %vm748, %v755, 0.0
      %v806 = vsel %vm748, %v762, 0.0
      %v807 = vadd.f32 %v805, %v806
      %v808 = vsel %vm748, %v769, 0.0
      %v809 = vadd.f32 %v807, %v808
      %v810 = vsel %vm748, %v776, 0.0
      %v811 = vadd.f32 %v809, %v810
      %v812 = vsel %vm748, %v783, 0.0
      %v813 = vadd.f32 %v811, %v812
      %v814 = vsel %vm748, %v790, 0.0
      %v815 = vadd.f32 %v813, %v814
      %v816 = vsel %vm748, %v797, 0.0
      %v817 = vadd.f32 %v815, %v816
      %v818 = vsel %vm748, %v804, 0.0
      %v819 = vadd.f32 %v817, %v818
      %vm820 = vcmask 516096
      %821 = vst.msk [vmem:[%s206] sm:$0x1] %vm820, %v819
      %p822 = scmp.lt.s32.totalorder %s16, 1
      %s823 = scalar_select %p822, %s16, 1
      %s824 = smul.addr %s823, 8
      %s825 = smul.addr %s824, 4
      %s826 = scalar_lea.vmem %s3, %s825
      %p827 = scmp.lt.s32.totalorder %s16, 1
      %s828 = scalar_select %p827, %s16, 1
      %s829 = scalar_lea.vmem %s4, %s828
      // Predicated region
      $region33: #{efficientnet_forward.20} parent=31 // pred_check
        %p830 = pneg %p102
      $region34: #{efficientnet_forward.20} parent=31 // pred_check_branch
        %832 = sbr.rel (%p830) target = $region36
      $region35: #{efficientnet_forward.20} parent=31 // pred_region
        _
      $region36: #{efficientnet_forward.20} parent=31 // pred_fallthru
        _
      // Predicated region
      $region37: #{efficientnet_forward.20} parent=31 // pred_check
        %p833 = pneg %p128
      $region38: #{efficientnet_forward.20} parent=31 // pred_check_branch
        %835 = sbr.rel (%p833) target = $region40
      $region39: #{efficientnet_forward.20} parent=31 // pred_region
        _
      $region40: #{efficientnet_forward.20} parent=31 // pred_fallthru
        _
    $region32: #{efficientnet_forward.20} parent=5 // pred_fallthru
      _
    %p836 = scmp.le.s32.totalorder 2, %s11
    // Predicated region
    $region41: #{efficientnet_forward.20} parent=5 // pred_check
      %p837 = pneg %p836
    $region42: #{efficientnet_forward.20} parent=5 // pred_check_branch
      %839 = sbr.rel (%p837) target = $region44
    $region43: #{efficientnet_forward.20} parent=5 // pred_region
      %s840 = ssub.s32 %s11, 2
      // Predicated region
      $region45: #{efficientnet_forward.20} parent=43 // pred_check
        %p841 = pneg %p108
      $region46: #{efficientnet_forward.20} parent=43 // pred_check_branch
        %843 = sbr.rel (%p841) target = $region48
      $region47: #{efficientnet_forward.20} parent=43 // pred_region
        %p844 = scmp.lt.s32.totalorder %s17, 1
        %s845 = scalar_select %p844, %s17, 1
        %s846 = smul.addr %s845, 8
        %s847 = smul.addr %s846, 4
        %s848 = scalar_lea.vmem %s3, %s847
      $region48: #{efficientnet_forward.20} parent=43 // pred_fallthru
        _
      // Predicated region
      $region49: #{efficientnet_forward.20} parent=43 // pred_check
        %p849 = pneg %p134
      $region50: #{efficientnet_forward.20} parent=43 // pred_check_branch
        %851 = sbr.rel (%p849) target = $region52
      $region51: #{efficientnet_forward.20} parent=43 // pred_region
        %p852 = scmp.lt.s32.totalorder %s17, 1
        %s853 = scalar_select %p852, %s17, 1
        %s854 = scalar_lea.vmem %s4, %s853
      $region52: #{efficientnet_forward.20} parent=43 // pred_fallthru
        _
    $region44: #{efficientnet_forward.20} parent=5 // pred_fallthru
      _
  $region6: #{efficientnet_forward.20} parent=0 // loop_footer
    %s15 = sadd.s32 1, %s11
  $region7: #{efficientnet_forward.20} parent=0 // loop_footer_branch
    %10 = sbr.rel target = $region3
  $region8: #{efficientnet_forward.20} parent=0 // loop_exit
    _

// kernel: efficientnet_forward.21
$region0: #{efficientnet_forward.21}
  #allocation0 [shape = 'u32[]', space=smem, size = 0x4, offset = 0x4, fixed_abs, tag = 'smem constant byte address 0x4 - core index']
  #allocation1 [shape = 'u32[144,128]{1,0:T(1,128)}', space=vmem, size = 0x12000, scoped, tag = 'internal scratch']
  %s0 = inlined_call_operand.vmem [shape: f32[2,64], index: 0, kind: input, shape index: {}]
  %s1 = inlined_call_operand.vmem [shape: bf16[64,4], index: 1, kind: input, shape index: {}]
  %s2 = inlined_call_operand.vmem [shape: f32[1,4], index: 2, kind: input, shape index: {}]
  %s3 = inlined_call_operand.vmem [shape: bf16[4,64], index: 3, kind: input, shape index: {}]
  %s4 = inlined_call_operand.vmem [shape: f32[1,64], index: 4, kind: input, shape index: {}]
  %s5 = inlined_call_operand.vmem [shape: bf16[2,64], index: 5, kind: output, shape index: {}]
  %s6 = sld [smem:[#allocation0]]
  $region30: #{efficientnet_forward.21} parent=0
    _
  %s8 = ssub.s32 1, %s6
  %s9 = scalar_select 0, %s8, %s6
  // Predicated region
  $region2: #{efficientnet_forward.21} parent=0 // pred_check
    _
  $region3: #{efficientnet_forward.21} parent=0 // pred_check_branch
    %11 = sbr.rel (0) target = $region5
  $region4: #{efficientnet_forward.21} parent=0 // pred_region
    _
  $region5: #{efficientnet_forward.21} parent=0 // pred_fallthru
    _
  // Predicated region
  $region6: #{efficientnet_forward.21} parent=0 // pred_check
    _
  $region7: #{efficientnet_forward.21} parent=0 // pred_check_branch
    %13 = sbr.rel (0) target = $region9
  $region8: #{efficientnet_forward.21} parent=0 // pred_region
    _
  $region9: #{efficientnet_forward.21} parent=0 // pred_fallthru
    _
  // Predicated region
  $region10: #{efficientnet_forward.21} parent=0 // pred_check
    _
  $region11: #{efficientnet_forward.21} parent=0 // pred_check_branch
    %15 = sbr.rel (0) target = $region13
  $region12: #{efficientnet_forward.21} parent=0 // pred_region
    _
  $region13: #{efficientnet_forward.21} parent=0 // pred_fallthru
    _
  // Predicated region
  $region14: #{efficientnet_forward.21} parent=0 // pred_check
    _
  $region15: #{efficientnet_forward.21} parent=0 // pred_check_branch
    %17 = sbr.rel (0) target = $region17
  $region16: #{efficientnet_forward.21} parent=0 // pred_region
    _
  $region17: #{efficientnet_forward.21} parent=0 // pred_fallthru
    _
  // Predicated region
  $region18: #{efficientnet_forward.21} parent=0 // pred_check
    _
  $region19: #{efficientnet_forward.21} parent=0 // pred_check_branch
    %19 = sbr.rel (0) target = $region21
  $region20: #{efficientnet_forward.21} parent=0 // pred_region
    _
  $region21: #{efficientnet_forward.21} parent=0 // pred_fallthru
    _
  %v21 = vld [vmem:[%s0] sm:$0x3]
  %v22 = vmul.f32 %v21, 0.015625
  %v23 = vpack.c.bf16 %v22, %v22
  %v24 = vld [vmem:[%s1] sm:$0xf]
  %v25 = vld [vmem:[%s1 + $0x4] sm:$0xf]
  %v26 = vld [vmem:[%s1 + $0x8] sm:$0xf]
  %v27 = vld [vmem:[%s1 + $0xc] sm:$0xf]
  %v28 = vld [vmem:[%s1 + $0x10] sm:$0xf]
  %v29 = vld [vmem:[%s1 + $0x14] sm:$0xf]
  %v30 = vld [vmem:[%s1 + $0x18] sm:$0xf]
  %v31 = vld [vmem:[%s1 + $0x1c] sm:$0xf]
  %v32 = vld [vmem:[%s2] sm:$0x1]
  %v34 = vlaneseq
  %v35 = vshrl.u32 %v34, 7
  %v36 = vsub.s32 0, %v35
  %v37 = vrot.slane %v32, %v36
  %v47 = vunpack.c.l.b16 %v24
  %v48 = vunpack.c.l.b16 %v25
  %v49 = vunpack.c.l.b16 %v26
  %v50 = vunpack.c.l.b16 %v27
  %v51 = vunpack.c.l.b16 %v28
  %v52 = vunpack.c.l.b16 %v29
  %v53 = vunpack.c.l.b16 %v30
  %v54 = vunpack.c.l.b16 %v31
  %v55 = vpack.c.b16 %v48, %v47
  %v56 = vpack.c.b16 %v50, %v49
  %v57 = vpack.c.b16 %v52, %v51
  %v58 = vpack.c.b16 %v54, %v53
  %vm63 = vcmask 523264
  %v65 = vsel %vm63, %v23, 0
  %67 = vmatprep.subr.bf16.mxu0 0
  %68 = vmatpush1.bf16.msra.mxu0 %v55
  %69 = vmatprep.subr.bf16.mxu0 0
  %70 = vmatpush1.bf16.msra.mxu0 %v56
  %71 = vmatprep.subr.bf16.mxu0 0
  %72 = vmatpush1.bf16.msra.mxu0 %v57
  %73 = vmatprep.subr.bf16.mxu0 0
  %74 = vmatpush1.bf16.msra.mxu0 %v58
  %75 = vmatprep.subr.bf16.mxu0 0
  %76 = vmatpush1.bf16.msra.mxu0 0
  %77 = vmatprep.subr.bf16.mxu0 0
  %78 = vmatpush1.bf16.msra.mxu0 0
  %79 = vmatprep.subr.bf16.mxu0 0
  %80 = vmatpush1.bf16.msra.mxu0 0
  %81 = vmatprep.subr.bf16.mxu0 0
  %82 = vmatpush1.bf16.msra.mxu0 0
  %83 = vmatprep.subr.bf16.mxu0 0
  %84 = vmatpush1.bf16.msra.mxu0 0
  %85 = vmatprep.subr.bf16.mxu0 0
  %86 = vmatpush1.bf16.msra.mxu0 0
  %87 = vmatprep.subr.bf16.mxu0 0
  %88 = vmatpush1.bf16.msra.mxu0 0
  %89 = vmatprep.subr.bf16.mxu0 0
  %90 = vmatpush1.bf16.msra.mxu0 0
  %91 = vmatprep.subr.bf16.mxu0 0
  %92 = vmatpush1.bf16.msra.mxu0 0
  %93 = vmatprep.subr.bf16.mxu0 0
  %94 = vmatpush1.bf16.msra.mxu0 0
  %95 = vmatprep.subr.bf16.mxu0 0
  %96 = vmatpush1.bf16.msra.mxu0 0
  %97 = vmatprep.subr.bf16.mxu0 0
  %98 = vmatpush1.bf16.msra.mxu0 0
  %99 = vmatprep.mubr.bf16.mxu0 0
  %100 = vmatmul.mubr.bf16.gmra.mrb[0].mxu0 %v65
  %v101 = vpop.f32.mrb[0].mxu0
  %v102 = vadd.f32 %v37, %v101
  %v103 = vpop.f32.mrb[0].mxu0
  %v104 = vpop.f32.mrb[0].mxu0
  %v105 = vpop.f32.mrb[0].mxu0
  %106 = vdwg.mxu0
  %v107 = vxor.u32 %v102, 2147483648
  %v108 = vmul.f32 %v107, 1.442695
  %v109 = vpow.pop %v108
  %v110 = vadd.f32 %v109, 1.0
  %v111 = vrcp.pop %v110
  %v112 = vmul.f32 1.0, %v111
  %v113 = vmul.f32 %v102, %v112
  %v114 = vpack.c.bf16 %v113, %v113
  %v115 = vld [vmem:[%s3] sm:$0x3]
  %v116 = vld [vmem:[%s4] sm:$0x1]
  %v118 = vlaneseq
  %v119 = vshrl.u32 %v118, 7
  %v120 = vsub.s32 0, %v119
  %v121 = vrot.slane %v116, %v120
  %vm123 = vcmask 31744
  %v125 = vsel %vm123, %v114, 0
  %vm127 = vcmask 1041408
  %v129 = vsel %vm127, %v115, 0
  %131 = vmatprep.subr.bf16.mxu0 0
  %132 = vmatpush1.bf16.msra.mxu0 %v129
  %133 = vmatprep.subr.bf16.mxu0 0
  %134 = vmatpush1.bf16.msra.mxu0 0
  %135 = vmatprep.subr.bf16.mxu0 0
  %136 = vmatpush1.bf16.msra.mxu0 0
  %137 = vmatprep.subr.bf16.mxu0 0
  %138 = vmatpush1.bf16.msra.mxu0 0
  %139 = vmatprep.subr.bf16.mxu0 0
  %140 = vmatpush1.bf16.msra.mxu0 0
  %141 = vmatprep.subr.bf16.mxu0 0
  %142 = vmatpush1.bf16.msra.mxu0 0
  %143 = vmatprep.subr.bf16.mxu0 0
  %144 = vmatpush1.bf16.msra.mxu0 0
  %145 = vmatprep.subr.bf16.mxu0 0
  %146 = vmatpush1.bf16.msra.mxu0 0
  %147 = vmatprep.subr.bf16.mxu0 0
  %148 = vmatpush1.bf16.msra.mxu0 0
  %149 = vmatprep.subr.bf16.mxu0 0
  %150 = vmatpush1.bf16.msra.mxu0 0
  %151 = vmatprep.subr.bf16.mxu0 0
  %152 = vmatpush1.bf16.msra.mxu0 0
  %153 = vmatprep.subr.bf16.mxu0 0
  %154 = vmatpush1.bf16.msra.mxu0 0
  %155 = vmatprep.subr.bf16.mxu0 0
  %156 = vmatpush1.bf16.msra.mxu0 0
  %157 = vmatprep.subr.bf16.mxu0 0
  %158 = vmatpush1.bf16.msra.mxu0 0
  %159 = vmatprep.subr.bf16.mxu0 0
  %160 = vmatpush1.bf16.msra.mxu0 0
  %161 = vmatprep.subr.bf16.mxu0 0
  %162 = vmatpush1.bf16.msra.mxu0 0
  %163 = vmatprep.mubr.bf16.mxu0 0
  %164 = vmatmul.mubr.bf16.gmra.mrb[0].mxu0 %v125
  %v165 = vpop.f32.mrb[0].mxu0
  %v166 = vadd.f32 %v121, %v165
  %v167 = vpop.f32.mrb[0].mxu0
  %v168 = vpop.f32.mrb[0].mxu0
  %v169 = vpop.f32.mrb[0].mxu0
  %170 = vdwg.mxu0
  %v171 = vxor.u32 %v166, 2147483648
  %v172 = vmul.f32 %v171, 1.442695
  %v173 = vpow.pop %v172
  %v174 = vadd.f32 %v173, 1.0
  %v175 = vrcp.pop %v174
  %v176 = vmul.f32 1.0, %v175
  %v177 = vpack.c.bf16 %v176, %v176
  %vm178 = vcmask 516096
  %179 = vst.msk [vmem:[%s5] sm:$0x1] %vm178, %v177
  // Predicated region
  $region22: #{efficientnet_forward.21} parent=0 // pred_check
    _
  $region23: #{efficientnet_forward.21} parent=0 // pred_check_branch
    %181 = sbr.rel (0) target = $region25
  $region24: #{efficientnet_forward.21} parent=0 // pred_region
    _
  $region25: #{efficientnet_forward.21} parent=0 // pred_fallthru
    _
  // Predicated region
  $region26: #{efficientnet_forward.21} parent=0 // pred_check
    _
  $region27: #{efficientnet_forward.21} parent=0 // pred_check_branch
    %183 = sbr.rel (0) target = $region29
  $region28: #{efficientnet_forward.21} parent=0 // pred_region
    _
  $region29: #{efficientnet_forward.21} parent=0 // pred_fallthru
    _

// kernel: efficientnet_forward.22
$region0: #{efficientnet_forward.22}
  #allocation0 [shape = 'u32[]', space=smem, size = 0x4, offset = 0x4, fixed_abs, tag = 'smem constant byte address 0x4 - core index']
  #allocation1 [shape = 'u32[144,128]{1,0:T(1,128)}', space=vmem, size = 0x12000, scoped, tag = 'internal scratch']
  %s0 = inlined_call_operand.vmem [shape: bf16[2,64,64], index: 0, kind: input, shape index: {}]
  %s1 = inlined_call_operand.vmem [shape: bf16[2,1,64], index: 1, kind: input, shape index: {}]
  %s2 = inlined_call_operand.vmem [shape: bf16[64,24], index: 2, kind: input, shape index: {}]
  %s3 = inlined_call_operand.vmem [shape: f32[1,24], index: 3, kind: input, shape index: {}]
  %s4 = inlined_call_operand.vmem [shape: bf16[2,64,24], index: 4, kind: output, shape index: {}]
  %s5 = sld [smem:[#allocation0]]
  $region49: #{efficientnet_forward.22} parent=0
    _
  %s7 = ssub.s32 1, %s5
  %s8 = scalar_select 0, %s7, %s5
  loop: start=0, step=1, limit=4
  $region2: #{efficientnet_forward.22} parent=0 // loop_pre_header
    _
  $region3: #{efficientnet_forward.22} parent=0 // loop_header
    %s10 = sphi 0, %s14
    %p11 = scmp.ge.s32.totalorder %s10, 4
    %s17 = sphi 0, %s29
    %s18 = sphi 0, %s25
    %s19 = sphi 0, %s17
    %s20 = sphi 0, %s18
    %s21 = sphi 0, %s19
    %s22 = sphi 0, %s20
    %s34 = sphi 0, %s36
    %s37 = sphi 0, %s34
    %s38 = sphi 0, %s37
    %s54 = sphi 0, %s38
    %s60 = sphi 0, %s62
    %s63 = sphi 0, %s60
    %s64 = sphi 0, %s63
    %s80 = sphi 0, %s64
    %s84 = sphi 0, %s84
    %s86 = sphi 0, %s84
    %s87 = sphi 0, %s86
    %s101 = sphi 0, %s87
    %s105 = sphi 0, %s105
    %s107 = sphi 0, %s105
    %s108 = sphi 0, %s107
    %s122 = sphi 0, %s108
    %s130 = sphi 0, %s132
    %s133 = sphi 0, %s130
    %s134 = sphi 0, %s133
    %s150 = sphi 0, %s134
  $region4: #{efficientnet_forward.22} parent=0 // loop_header_branch
    %13 = sbr.rel (%p11) target = $region8
  $region5: #{efficientnet_forward.22} parent=0 // loop_body
    %s15 = ssub.s32 %s10, 1
    %s16 = ssub.s32 %s10, 2
    %s23 = sadd.s32 1, %s18
    %p24 = scmp.ge.s32.totalorder %s23, 1
    %s25 = scalar_select %p24, 0, %s23
    %s26 = sadd.s32 1, %s17
    %s27 = scalar_select %p24, %s26, %s17
    %p28 = scmp.ge.s32.totalorder %s27, 2
    %s29 = scalar_select %p28, 0, %s27
    %s30 = ssub.s32 %s17, %s29
    %s31 = ssub.s32 %s18, %s25
    %s32 = sor.u32 %s30, %s31
    %p33 = scmp.eq.s32.totalorder %s32, 0
    %s35 = sadd.s32 %s34, 1
    %s36 = scalar_select %p33, %s34, %s35
    %p39 = pneg %p33
    %p40 = scmp.eq.s32.totalorder %s10, 1
    %p41 = por %p39, %p40
    %p42 = scmp.ne.s32.totalorder %s34, %s37
    %p43 = scmp.eq.s32.totalorder %s10, 0
    %p44 = por %p42, %p43
    %p45 = scmp.ne.s32.totalorder %s34, %s37
    %p46 = scmp.eq.s32.totalorder %s15, 1
    %p47 = por %p45, %p46
    %p48 = scmp.ne.s32.totalorder %s37, %s38
    %p49 = scmp.eq.s32.totalorder %s15, 0
    %p50 = por %p48, %p49
    %p51 = scmp.ne.s32.totalorder %s37, %s38
    %p52 = scmp.eq.s32.totalorder %s16, 1
    %p53 = por %p51, %p52
    %p55 = scmp.ne.s32.totalorder %s38, %s54
    %p56 = scmp.eq.s32.totalorder %s16, 0
    %p57 = por %p55, %p56
    %s58 = ssub.s32 %s17, %s29
    %p59 = scmp.eq.s32.totalorder %s58, 0
    %s61 = sadd.s32 %s60, 1
    %s62 = scalar_select %p59, %s60, %s61
    %p65 = pneg %p59
    %p66 = scmp.eq.s32.totalorder %s10, 1
    %p67 = por %p65, %p66
    %p68 = scmp.ne.s32.totalorder %s60, %s63
    %p69 = scmp.eq.s32.totalorder %s10, 0
    %p70 = por %p68, %p69
    %p71 = scmp.ne.s32.totalorder %s60, %s63
    %p72 = scmp.eq.s32.totalorder %s15, 1
    %p73 = por %p71, %p72
    %p74 = scmp.ne.s32.totalorder %s63, %s64
    %p75 = scmp.eq.s32.totalorder %s15, 0
    %p76 = por %p74, %p75
    %p77 = scmp.ne.s32.totalorder %s63, %s64
    %p78 = scmp.eq.s32.totalorder %s16, 1
    %p79 = por %p77, %p78
    %p81 = scmp.ne.s32.totalorder %s64, %s80
    %p82 = scmp.eq.s32.totalorder %s16, 0
    %p83 = por %p81, %p82
    %s85 = sadd.s32 %s84, 1
    %p88 = scmp.eq.s32.totalorder %s10, 1
    %p89 = scmp.ne.s32.totalorder %s84, %s86
    %p90 = scmp.eq.s32.totalorder %s10, 0
    %p91 = por %p89, %p90
    %p92 = scmp.ne.s32.totalorder %s84, %s86
    %p93 = scmp.eq.s32.totalorder %s15, 1
    %p94 = por %p92, %p93
    %p95 = scmp.ne.s32.totalorder %s86, %s87
    %p96 = scmp.eq.s32.totalorder %s15, 0
    %p97 = por %p95, %p96
    %p98 = scmp.ne.s32.totalorder %s86, %s87
    %p99 = scmp.eq.s32.totalorder %s16, 1
    %p100 = por %p98, %p99
    %p102 = scmp.ne.s32.totalorder %s87, %s101
    %p103 = scmp.eq.s32.totalorder %s16, 0
    %p104 = por %p102, %p103
    %s106 = sadd.s32 %s105, 1
    %p109 = scmp.eq.s32.totalorder %s10, 1
    %p110 = scmp.ne.s32.totalorder %s105, %s107
    %p111 = scmp.eq.s32.totalorder %s10, 0
    %p112 = por %p110, %p111
    %p113 = scmp.ne.s32.totalorder %s105, %s107
    %p114 = scmp.eq.s32.totalorder %s15, 1
    %p115 = por %p113, %p114
    %p116 = scmp.ne.s32.totalorder %s107, %s108
    %p117 = scmp.eq.s32.totalorder %s15, 0
    %p118 = por %p116, %p117
    %p119 = scmp.ne.s32.totalorder %s107, %s108
    %p120 = scmp.eq.s32.totalorder %s16, 1
    %p121 = por %p119, %p120
    %p123 = scmp.ne.s32.totalorder %s108, %s122
    %p124 = scmp.eq.s32.totalorder %s16, 0
    %p125 = por %p123, %p124
    %s126 = ssub.s32 %s17, %s29
    %s127 = ssub.s32 %s18, %s25
    %s128 = sor.u32 %s126, %s127
    %p129 = scmp.eq.s32.totalorder %s128, 0
    %s131 = sadd.s32 %s130, 1
    %s132 = scalar_select %p129, %s130, %s131
    %p135 = pneg %p129
    %p136 = scmp.eq.s32.totalorder %s10, 1
    %p137 = por %p135, %p136
    %p138 = scmp.ne.s32.totalorder %s130, %s133
    %p139 = scmp.eq.s32.totalorder %s10, 0
    %p140 = por %p138, %p139
    %p141 = scmp.ne.s32.totalorder %s130, %s133
    %p142 = scmp.eq.s32.totalorder %s15, 1
    %p143 = por %p141, %p142
    %p144 = scmp.ne.s32.totalorder %s133, %s134
    %p145 = scmp.eq.s32.totalorder %s15, 0
    %p146 = por %p144, %p145
    %p147 = scmp.ne.s32.totalorder %s133, %s134
    %p148 = scmp.eq.s32.totalorder %s16, 1
    %p149 = por %p147, %p148
    %p151 = scmp.ne.s32.totalorder %s134, %s150
    %p152 = scmp.eq.s32.totalorder %s16, 0
    %p153 = por %p151, %p152
    %p154 = scmp.le.s32.totalorder 1, %s10
    %p155 = scmp.lt.s32.totalorder %s10, 3
    %p156 = pnand %p154, %p155
    %p157 = pneg %p156
    // Predicated region
    $region9: #{efficientnet_forward.22} parent=5 // pred_check
      _
    $region10: #{efficientnet_forward.22} parent=5 // pred_check_branch
      %159 = sbr.rel (%p156) target = $region12
    $region11: #{efficientnet_forward.22} parent=5 // pred_region
      %s160 = ssub.s32 %s10, 1
      // Predicated region
      $region13: #{efficientnet_forward.22} parent=11 // pred_check
        %p161 = pneg %p97
      $region14: #{efficientnet_forward.22} parent=11 // pred_check_branch
        %163 = sbr.rel (%p161) target = $region16
      $region15: #{efficientnet_forward.22} parent=11 // pred_region
        _
      $region16: #{efficientnet_forward.22} parent=11 // pred_fallthru
        _
      // Predicated region
      $region17: #{efficientnet_forward.22} parent=11 // pred_check
        %p164 = pneg %p118
      $region18: #{efficientnet_forward.22} parent=11 // pred_check_branch
        %166 = sbr.rel (%p164) target = $region20
      $region19: #{efficientnet_forward.22} parent=11 // pred_region
        _
      $region20: #{efficientnet_forward.22} parent=11 // pred_fallthru
        _
    $region12: #{efficientnet_forward.22} parent=5 // pred_fallthru
      _
    %p167 = scmp.lt.s32.totalorder %s10, 2
    // Predicated region
    $region21: #{efficientnet_forward.22} parent=5 // pred_check
      %p168 = pneg %p167
    $region22: #{efficientnet_forward.22} parent=5 // pred_check_branch
      %170 = sbr.rel (%p168) target = $region24
    $region23: #{efficientnet_forward.22} parent=5 // pred_region
      // Predicated region
      $region25: #{efficientnet_forward.22} parent=23 // pred_check
        %p171 = pneg %p44
      $region26: #{efficientnet_forward.22} parent=23 // pred_check_branch
        %173 = sbr.rel (%p171) target = $region28
      $region27: #{efficientnet_forward.22} parent=23 // pred_region
        %s174 = smul.u32 8, %s18
        %p175 = scmp.lt.s32.totalorder %s17, 1
        %s176 = scalar_select %p175, %s17, 1
        %p177 = scmp.lt.s32.totalorder %s174, 7
        %s178 = scalar_select %p177, %s174, 7
        %s179 = smul.addr %s176, 8
        %s180 = sadd.s32 %s178, %s179
        %s181 = smul.addr %s180, 4
        %s182 = scalar_lea.vmem %s0, %s181
        %s183 = smul.u32 8, %s18
      $region28: #{efficientnet_forward.22} parent=23 // pred_fallthru
        _
      // Predicated region
      $region29: #{efficientnet_forward.22} parent=23 // pred_check
        %p184 = pneg %p70
      $region30: #{efficientnet_forward.22} parent=23 // pred_check_branch
        %186 = sbr.rel (%p184) target = $region32
      $region31: #{efficientnet_forward.22} parent=23 // pred_region
        %p187 = scmp.lt.s32.totalorder %s17, 1
        %s188 = scalar_select %p187, %s17, 1
        %s189 = scalar_lea.vmem %s1, %s188
      $region32: #{efficientnet_forward.22} parent=23 // pred_fallthru
        _
    $region24: #{efficientnet_forward.22} parent=5 // pred_fallthru
      _
    %p190 = scmp.le.s32.totalorder 1, %s10
    %p191 = scmp.lt.s32.totalorder %s10, 3
    %p192 = pnand %p190, %p191
    %p193 = pneg %p192
    // Predicated region
    $region33: #{efficientnet_forward.22} parent=5 // pred_check
      _
    $region34: #{efficientnet_forward.22} parent=5 // pred_check_branch
      %195 = sbr.rel (%p192) target = $region36
    $region35: #{efficientnet_forward.22} parent=5 // pred_region
      %s196 = ssub.s32 %s10, 1
      %s197 = smul.u32 8, %s20
      %p198 = scmp.lt.s32.totalorder %s19, 1
      %s199 = scalar_select %p198, %s19, 1
      %p200 = scmp.lt.s32.totalorder %s197, 7
      %s201 = scalar_select %p200, %s197, 7
      %s202 = smul.addr %s199, 8
      %s203 = sadd.s32 %s201, %s202
      %s204 = smul.addr %s203, 4
      %s205 = scalar_lea.vmem %s0, %s204
      %p206 = pneg %p50
      %p207 = pneg %p47
      %p208 = scmp.lt.s32.totalorder %s19, 1
      %s209 = scalar_select %p208, %s19, 1
      %s210 = scalar_lea.vmem %s1, %s209
      %p211 = pneg %p76
      %p212 = pneg %p73
      %p213 = pneg %p97
      %p214 = pneg %p94
      %p215 = pneg %p118
      %p216 = pneg %p115
      %p217 = pneg %p146
      %p218 = pneg %p143
      %s219 = smul.u32 8, %s20
      %p220 = scmp.lt.s32.totalorder %s19, 1
      %s221 = scalar_select %p220, %s19, 1
      %p222 = scmp.lt.s32.totalorder %s219, 7
      %s223 = scalar_select %p222, %s219, 7
      %s224 = smul.addr %s221, 8
      %s225 = sadd.s32 %s223, %s224
      %s226 = smul.addr %s225, 4
      %s227 = scalar_lea.vmem %s4, %s226
      %s228 = smul.u32 8, %s20
      %p229 = scmp.lt.s32.totalorder %s19, 1
      %s230 = scalar_select %p229, %s19, 1
      %p231 = scmp.lt.s32.totalorder %s228, 7
      %s232 = scalar_select %p231, %s228, 7
      %s233 = smul.addr %s230, 8
      %s234 = sadd.s32 %s232, %s233
      %s235 = smul.addr %s234, 4
      %s236 = scalar_lea.vmem %s0, %s235
      %s237 = smul.u32 8, %s20
      %p238 = scmp.lt.s32.totalorder %s19, 1
      %s239 = scalar_select %p238, %s19, 1
      %s240 = scalar_lea.vmem %s1, %s239
      %s241 = smul.u32 8, %s20
      %p242 = scmp.lt.s32.totalorder %s19, 1
      %s243 = scalar_select %p242, %s19, 1
      %p244 = scmp.lt.s32.totalorder %s241, 7
      %s245 = scalar_select %p244, %s241, 7
      %s246 = smul.addr %s243, 8
      %s247 = sadd.s32 %s245, %s246
      %s248 = smul.addr %s247, 4
      %s249 = scalar_lea.vmem %s4, %s248
      %s250 = smul.u32 8, %s20
      %v252 = vld [vmem:[%s236] sm:$0xf]
      %v253 = vld [vmem:[%s236 + $0x4] sm:$0xf]
      %v254 = vld [vmem:[%s236 + $0x8] sm:$0xf]
      %v255 = vld [vmem:[%s236 + $0xc] sm:$0xf]
      %v256 = vld [vmem:[%s236 + $0x10] sm:$0xf]
      %v257 = vld [vmem:[%s236 + $0x14] sm:$0xf]
      %v258 = vld [vmem:[%s236 + $0x18] sm:$0xf]
      %v259 = vld [vmem:[%s236 + $0x1c] sm:$0xf]
      %v260 = vld [vmem:[%s240] sm:$0x1]
      %v262 = vpack.i.b16 %v260, %v260
      %v264 = vlaneseq
      %v265 = vshrl.u32 %v264, 7
      %v266 = vsub.s32 0, %v265
      %v267 = vrot.slane %v262, %v266
      %v269 = vunpack.c.l.b16 %v267
      %v270 = vpack.c.b16 %v269, %v269
      %v272 = vmul.bf16 %v252, %v270
      %v273 = vmul.bf16 %v253, %v270
      %v274 = vmul.bf16 %v254, %v270
      %v275 = vmul.bf16 %v255, %v270
      %v276 = vmul.bf16 %v256, %v270
      %v277 = vmul.bf16 %v257, %v270
      %v278 = vmul.bf16 %v258, %v270
      %v279 = vmul.bf16 %v259, %v270
      %v280 = vld [vmem:[%s2] sm:$0xf]
      %v281 = vld [vmem:[%s2 + $0x4] sm:$0xf]
      %v282 = vld [vmem:[%s2 + $0x8] sm:$0xf]
      %v283 = vld [vmem:[%s2 + $0xc] sm:$0xf]
      %v284 = vld [vmem:[%s2 + $0x10] sm:$0xf]
      %v285 = vld [vmem:[%s2 + $0x14] sm:$0xf]
      %v286 = vld [vmem:[%s2 + $0x18] sm:$0xf]
      %v287 = vld [vmem:[%s2 + $0x1c] sm:$0xf]
      %v288 = vld [vmem:[%s3] sm:$0x1]
      %v290 = vlaneseq
      %v291 = vshrl.u32 %v290, 7
      %v292 = vsub.s32 0, %v291
      %v293 = vrot.slane %v288, %v292
      %v303 = vunpack.c.l.b16 %v272
      %v304 = vunpack.c.l.b16 %v273
      %v305 = vunpack.c.l.b16 %v274
      %v306 = vunpack.c.l.b16 %v275
      %v307 = vunpack.c.l.b16 %v276
      %v308 = vunpack.c.l.b16 %v277
      %v309 = vunpack.c.l.b16 %v278
      %v310 = vunpack.c.l.b16 %v279
      %v311 = vpack.c.b16 %v304, %v303
      %v312 = vpack.c.b16 %v306, %v305
      %v313 = vpack.c.b16 %v308, %v307
      %v314 = vpack.c.b16 %v310, %v309
      %v323 = vunpack.c.l.b16 %v280
      %v324 = vunpack.c.l.b16 %v281
      %v325 = vunpack.c.l.b16 %v282
      %v326 = vunpack.c.l.b16 %v283
      %v327 = vunpack.c.l.b16 %v284
      %v328 = vunpack.c.l.b16 %v285
      %v329 = vunpack.c.l.b16 %v286
      %v330 = vunpack.c.l.b16 %v287
      %v331 = vpack.c.b16 %v324, %v323
      %v332 = vpack.c.b16 %v326, %v325
      %v333 = vpack.c.b16 %v328, %v327
      %v334 = vpack.c.b16 %v330, %v329
      %vm339 = vcmask 523264
      %v341 = vsel %vm339, %v311, 0
      %v344 = vsel %vm339, %v312, 0
      %v347 = vsel %vm339, %v313, 0
      %v350 = vsel %vm339, %v314, 0
      %352 = vmatprep.subr.bf16.mxu0 0
      %353 = vmatpush1.bf16.msra.mxu0 %v331
      %354 = vmatprep.subr.bf16.mxu0 0
      %355 = vmatpush1.bf16.msra.mxu0 %v332
      %356 = vmatprep.subr.bf16.mxu0 0
      %357 = vmatpush1.bf16.msra.mxu0 %v333
      %358 = vmatprep.subr.bf16.mxu0 0
      %359 = vmatpush1.bf16.msra.mxu0 %v334
      %360 = vmatprep.subr.bf16.mxu0 0
      %361 = vmatpush1.bf16.msra.mxu0 0
      %362 = vmatprep.subr.bf16.mxu0 0
      %363 = vmatpush1.bf16.msra.mxu0 0
      %364 = vmatprep.subr.bf16.mxu0 0
      %365 = vmatpush1.bf16.msra.mxu0 0
      %366 = vmatprep.subr.bf16.mxu0 0
      %367 = vmatpush1.bf16.msra.mxu0 0
      %368 = vmatprep.subr.bf16.mxu0 0
      %369 = vmatpush1.bf16.msra.mxu0 0
      %370 = vmatprep.subr.bf16.mxu0 0
      %371 = vmatpush1.bf16.msra.mxu0 0
      %372 = vmatprep.subr.bf16.mxu0 0
      %373 = vmatpush1.bf16.msra.mxu0 0
      %374 = vmatprep.subr.bf16.mxu0 0
      %375 = vmatpush1.bf16.msra.mxu0 0
      %376 = vmatprep.subr.bf16.mxu0 0
      %377 = vmatpush1.bf16.msra.mxu0 0
      %378 = vmatprep.subr.bf16.mxu0 0
      %379 = vmatpush1.bf16.msra.mxu0 0
      %380 = vmatprep.subr.bf16.mxu0 0
      %381 = vmatpush1.bf16.msra.mxu0 0
      %382 = vmatprep.subr.bf16.mxu0 0
      %383 = vmatpush1.bf16.msra.mxu0 0
      %384 = vmatprep.mubr.bf16.mxu0 0
      %385 = vmatmul.mubr.bf16.gmra.mrb[0].mxu0 %v341
      %v386 = vpop.f32.mrb[0].mxu0
      %v387 = vadd.f32 %v293, %v386
      %v388 = vpop.f32.mrb[0].mxu0
      %v389 = vpop.f32.mrb[0].mxu0
      %v390 = vadd.f32 %v293, %v389
      %v391 = vpop.f32.mrb[0].mxu0
      %392 = vmatprep.mubr.bf16.mxu0 0
      %393 = vmatmul.mubr.bf16.gmra.mrb[0].mxu0 %v344
      %v394 = vpop.f32.mrb[0].mxu0
      %v395 = vadd.f32 %v293, %v394
      %v396 = vpop.f32.mrb[0].mxu0
      %v397 = vpop.f32.mrb[0].mxu0
      %v398 = vadd.f32 %v293, %v397
      %v399 = vpop.f32.mrb[0].mxu0
      %400 = vmatprep.mubr.bf16.mxu0 0
      %401 = vmatmul.mubr.bf16.gmra.mrb[0].mxu0 %v347
      %v402 = vpop.f32.mrb[0].mxu0
      %v403 = vadd.f32 %v293, %v402
      %v404 = vpop.f32.mrb[0].mxu0
      %v405 = vpop.f32.mrb[0].mxu0
      %v406 = vadd.f32 %v293, %v405
      %v407 = vpop.f32.mrb[0].mxu0
      %408 = vmatprep.mubr.bf16.mxu0 0
      %409 = vmatmul.mubr.bf16.gmra.mrb[0].mxu0 %v350
      %v410 = vpop.f32.mrb[0].mxu0
      %v411 = vadd.f32 %v293, %v410
      %v412 = vpop.f32.mrb[0].mxu0
      %v413 = vpop.f32.mrb[0].mxu0
      %v414 = vadd.f32 %v293, %v413
      %v415 = vpop.f32.mrb[0].mxu0
      %416 = vdwg.mxu0
      %v417 = vpack.c.bf16 %v390, %v387
      %v418 = vpack.c.bf16 %v398, %v395
      %v419 = vpack.c.bf16 %v406, %v403
      %v420 = vpack.c.bf16 %v414, %v411
      %v425 = vunpack.c.l.b16 %v417
      %v426 = vunpack.c.h.b16 %v417
      %v427 = vunpack.c.l.b16 %v418
      %v428 = vunpack.c.h.b16 %v418
      %v429 = vunpack.c.l.b16 %v419
      %v430 = vunpack.c.h.b16 %v419
      %v431 = vunpack.c.l.b16 %v420
      %v432 = vunpack.c.h.b16 %v420
      %v433 = vpack.c.b16 %v425, %v425
      %v434 = vpack.c.b16 %v426, %v426
      %v435 = vpack.c.b16 %v427, %v427
      %v436 = vpack.c.b16 %v428, %v428
      %v437 = vpack.c.b16 %v429, %v429
      %v438 = vpack.c.b16 %v430, %v430
      %v439 = vpack.c.b16 %v431, %v431
      %v440 = vpack.c.b16 %v432, %v432
      %vm449 = vcmask 191488
      %450 = vst.msk [vmem:[%s249] sm:$0xf] %vm449, %v433
      %451 = vst.msk [vmem:[%s249 + $0x4] sm:$0xf] %vm449, %v434
      %452 = vst.msk [vmem:[%s249 + $0x8] sm:$0xf] %vm449, %v435
      %453 = vst.msk [vmem:[%s249 + $0xc] sm:$0xf] %vm449, %v436
      %454 = vst.msk [vmem:[%s249 + $0x10] sm:$0xf] %vm449, %v437
      %455 = vst.msk [vmem:[%s249 + $0x14] sm:$0xf] %vm449, %v438
      %456 = vst.msk [vmem:[%s249 + $0x18] sm:$0xf] %vm449, %v439
      %457 = vst.msk [vmem:[%s249 + $0x1c] sm:$0xf] %vm449, %v440
      %s458 = smul.u32 8, %s20
      %p459 = scmp.lt.s32.totalorder %s19, 1
      %s460 = scalar_select %p459, %s19, 1
      %p461 = scmp.lt.s32.totalorder %s458, 7
      %s462 = scalar_select %p461, %s458, 7
      %s463 = smul.addr %s460, 8
      %s464 = sadd.s32 %s462, %s463
      %s465 = smul.addr %s464, 4
      %s466 = scalar_lea.vmem %s4, %s465
      // Predicated region
      $region37: #{efficientnet_forward.22} parent=35 // pred_check
        %p467 = pneg %p143
      $region38: #{efficientnet_forward.22} parent=35 // pred_check_branch
        %469 = sbr.rel (%p467) target = $region40
      $region39: #{efficientnet_forward.22} parent=35 // pred_region
        %s470 = smul.u32 8, %s20
      $region40: #{efficientnet_forward.22} parent=35 // pred_fallthru
        _
    $region36: #{efficientnet_forward.22} parent=5 // pred_fallthru
      _
    %p471 = scmp.le.s32.totalorder 2, %s10
    // Predicated region
    $region41: #{efficientnet_forward.22} parent=5 // pred_check
      %p472 = pneg %p471
    $region42: #{efficientnet_forward.22} parent=5 // pred_check_branch
      %474 = sbr.rel (%p472) target = $region44
    $region43: #{efficientnet_forward.22} parent=5 // pred_region
      %s475 = ssub.s32 %s10, 2
      // Predicated region
      $region45: #{efficientnet_forward.22} parent=43 // pred_check
        %p476 = pneg %p149
      $region46: #{efficientnet_forward.22} parent=43 // pred_check_branch
        %478 = sbr.rel (%p476) target = $region48
      $region47: #{efficientnet_forward.22} parent=43 // pred_region
        %s479 = smul.u32 8, %s22
        %p480 = scmp.lt.s32.totalorder %s21, 1
        %s481 = scalar_select %p480, %s21, 1
        %p482 = scmp.lt.s32.totalorder %s479, 7
        %s483 = scalar_select %p482, %s479, 7
        %s484 = smul.addr %s481, 8
        %s485 = sadd.s32 %s483, %s484
        %s486 = smul.addr %s485, 4
        %s487 = scalar_lea.vmem %s4, %s486
      $region48: #{efficientnet_forward.22} parent=43 // pred_fallthru
        _
    $region44: #{efficientnet_forward.22} parent=5 // pred_fallthru
      _
  $region6: #{efficientnet_forward.22} parent=0 // loop_footer
    %s14 = sadd.s32 1, %s10
  $region7: #{efficientnet_forward.22} parent=0 // loop_footer_branch
    %9 = sbr.rel target = $region3
  $region8: #{efficientnet_forward.22} parent=0 // loop_exit
    _

// kernel: efficientnet_forward.23
$region0: #{efficientnet_forward.23}
  #allocation0 [shape = 'u32[]', space=smem, size = 0x4, offset = 0x4, fixed_abs, tag = 'smem constant byte address 0x4 - core index']
  #allocation1 [shape = 'u32[144,128]{1,0:T(1,128)}', space=vmem, size = 0x12000, scoped, tag = 'internal scratch']
  %s0 = inlined_call_operand.vmem [shape: bf16[128,24], index: 0, kind: input, shape index: {}]
  %s1 = inlined_call_operand.vmem [shape: bf16[24,96], index: 1, kind: input, shape index: {}]
  %s2 = inlined_call_operand.vmem [shape: f32[1,96], index: 2, kind: input, shape index: {}]
  %s3 = inlined_call_operand.vmem [shape: bf16[128,96], index: 3, kind: output, shape index: {}]
  %s4 = sld [smem:[#allocation0]]
  $region22: #{efficientnet_forward.23} parent=0
    _
  %s6 = ssub.s32 1, %s4
  %s7 = scalar_select 0, %s6, %s4
  // Predicated region
  $region2: #{efficientnet_forward.23} parent=0 // pred_check
    _
  $region3: #{efficientnet_forward.23} parent=0 // pred_check_branch
    %9 = sbr.rel (0) target = $region5
  $region4: #{efficientnet_forward.23} parent=0 // pred_region
    _
  $region5: #{efficientnet_forward.23} parent=0 // pred_fallthru
    _
  // Predicated region
  $region6: #{efficientnet_forward.23} parent=0 // pred_check
    _
  $region7: #{efficientnet_forward.23} parent=0 // pred_check_branch
    %11 = sbr.rel (0) target = $region9
  $region8: #{efficientnet_forward.23} parent=0 // pred_region
    _
  $region9: #{efficientnet_forward.23} parent=0 // pred_fallthru
    _
  // Predicated region
  $region10: #{efficientnet_forward.23} parent=0 // pred_check
    _
  $region11: #{efficientnet_forward.23} parent=0 // pred_check_branch
    %13 = sbr.rel (0) target = $region13
  $region12: #{efficientnet_forward.23} parent=0 // pred_region
    _
  $region13: #{efficientnet_forward.23} parent=0 // pred_fallthru
    _
  %v15 = vld [vmem:[%s0] sm:$0xf]
  %v16 = vld [vmem:[%s0 + $0x4] sm:$0xf]
  %v17 = vld [vmem:[%s0 + $0x8] sm:$0xf]
  %v18 = vld [vmem:[%s0 + $0xc] sm:$0xf]
  %v19 = vld [vmem:[%s0 + $0x10] sm:$0xf]
  %v20 = vld [vmem:[%s0 + $0x14] sm:$0xf]
  %v21 = vld [vmem:[%s0 + $0x18] sm:$0xf]
  %v22 = vld [vmem:[%s0 + $0x1c] sm:$0xf]
  %v23 = vld [vmem:[%s0 + $0x20] sm:$0xf]
  %v24 = vld [vmem:[%s0 + $0x24] sm:$0xf]
  %v25 = vld [vmem:[%s0 + $0x28] sm:$0xf]
  %v26 = vld [vmem:[%s0 + $0x2c] sm:$0xf]
  %v27 = vld [vmem:[%s0 + $0x30] sm:$0xf]
  %v28 = vld [vmem:[%s0 + $0x34] sm:$0xf]
  %v29 = vld [vmem:[%s0 + $0x38] sm:$0xf]
  %v30 = vld [vmem:[%s0 + $0x3c] sm:$0xf]
  %v31 = vld [vmem:[%s1] sm:$0xf]
  %v32 = vld [vmem:[%s1 + $0x4] sm:$0xf]
  %v33 = vld [vmem:[%s1 + $0x8] sm:$0xf]
  %v34 = vld [vmem:[%s2] sm:$0x1]
  %v36 = vlaneseq
  %v37 = vshrl.u32 %v36, 7
  %v38 = vsub.s32 0, %v37
  %v39 = vrot.slane %v34, %v38
  %v57 = vunpack.c.l.b16 %v15
  %v58 = vunpack.c.l.b16 %v16
  %v59 = vunpack.c.l.b16 %v17
  %v60 = vunpack.c.l.b16 %v18
  %v61 = vunpack.c.l.b16 %v19
  %v62 = vunpack.c.l.b16 %v20
  %v63 = vunpack.c.l.b16 %v21
  %v64 = vunpack.c.l.b16 %v22
  %v65 = vunpack.c.l.b16 %v23
  %v66 = vunpack.c.l.b16 %v24
  %v67 = vunpack.c.l.b16 %v25
  %v68 = vunpack.c.l.b16 %v26
  %v69 = vunpack.c.l.b16 %v27
  %v70 = vunpack.c.l.b16 %v28
  %v71 = vunpack.c.l.b16 %v29
  %v72 = vunpack.c.l.b16 %v30
  %v73 = vpack.c.b16 %v58, %v57
  %v74 = vpack.c.b16 %v60, %v59
  %v75 = vpack.c.b16 %v62, %v61
  %v76 = vpack.c.b16 %v64, %v63
  %v77 = vpack.c.b16 %v66, %v65
  %v78 = vpack.c.b16 %v68, %v67
  %v79 = vpack.c.b16 %v70, %v69
  %v80 = vpack.c.b16 %v72, %v71
  %v84 = vunpack.c.l.b16 %v31
  %v85 = vunpack.c.l.b16 %v32
  %v86 = vunpack.c.l.b16 %v33
  %v87 = vpack.c.b16 %v85, %v84
  %v88 = vpack.c.b16 %v86, %v86
  %vm90 = vcmask 195584
  %v92 = vsel %vm90, %v73, 0
  %v95 = vsel %vm90, %v74, 0
  %v98 = vsel %vm90, %v75, 0
  %v101 = vsel %vm90, %v76, 0
  %v104 = vsel %vm90, %v77, 0
  %v107 = vsel %vm90, %v78, 0
  %v110 = vsel %vm90, %v79, 0
  %v113 = vsel %vm90, %v80, 0
  %vm115 = vcmask 1043456
  %v117 = vsel %vm115, %v88, 0
  %119 = vmatprep.subr.bf16.mxu0 0
  %120 = vmatpush1.bf16.msra.mxu0 %v87
  %121 = vmatprep.subr.bf16.mxu0 0
  %122 = vmatpush1.bf16.msra.mxu0 %v117
  %123 = vmatprep.subr.bf16.mxu0 0
  %124 = vmatpush1.bf16.msra.mxu0 0
  %125 = vmatprep.subr.bf16.mxu0 0
  %126 = vmatpush1.bf16.msra.mxu0 0
  %127 = vmatprep.subr.bf16.mxu0 0
  %128 = vmatpush1.bf16.msra.mxu0 0
  %129 = vmatprep.subr.bf16.mxu0 0
  %130 = vmatpush1.bf16.msra.mxu0 0
  %131 = vmatprep.subr.bf16.mxu0 0
  %132 = vmatpush1.bf16.msra.mxu0 0
  %133 = vmatprep.subr.bf16.mxu0 0
  %134 = vmatpush1.bf16.msra.mxu0 0
  %135 = vmatprep.subr.bf16.mxu0 0
  %136 = vmatpush1.bf16.msra.mxu0 0
  %137 = vmatprep.subr.bf16.mxu0 0
  %138 = vmatpush1.bf16.msra.mxu0 0
  %139 = vmatprep.subr.bf16.mxu0 0
  %140 = vmatpush1.bf16.msra.mxu0 0
  %141 = vmatprep.subr.bf16.mxu0 0
  %142 = vmatpush1.bf16.msra.mxu0 0
  %143 = vmatprep.subr.bf16.mxu0 0
  %144 = vmatpush1.bf16.msra.mxu0 0
  %145 = vmatprep.subr.bf16.mxu0 0
  %146 = vmatpush1.bf16.msra.mxu0 0
  %147 = vmatprep.subr.bf16.mxu0 0
  %148 = vmatpush1.bf16.msra.mxu0 0
  %149 = vmatprep.subr.bf16.mxu0 0
  %150 = vmatpush1.bf16.msra.mxu0 0
  %151 = vmatprep.mubr.bf16.mxu0 0
  %152 = vmatmul.mubr.bf16.gmra.mrb[0].mxu0 %v92
  %v153 = vpop.f32.mrb[0].mxu0
  %v154 = vadd.f32 %v39, %v153
  %v155 = vpop.f32.mrb[0].mxu0
  %v156 = vpop.f32.mrb[0].mxu0
  %v157 = vadd.f32 %v39, %v156
  %v158 = vpop.f32.mrb[0].mxu0
  %159 = vmatprep.mubr.bf16.mxu0 0
  %160 = vmatmul.mubr.bf16.gmra.mrb[0].mxu0 %v95
  %v161 = vpop.f32.mrb[0].mxu0
  %v162 = vadd.f32 %v39, %v161
  %v163 = vpop.f32.mrb[0].mxu0
  %v164 = vpop.f32.mrb[0].mxu0
  %v165 = vadd.f32 %v39, %v164
  %v166 = vpop.f32.mrb[0].mxu0
  %167 = vmatprep.mubr.bf16.mxu0 0
  %168 = vmatmul.mubr.bf16.gmra.mrb[0].mxu0 %v98
  %v169 = vpop.f32.mrb[0].mxu0
  %v170 = vadd.f32 %v39, %v169
  %v171 = vpop.f32.mrb[0].mxu0
  %v172 = vpop.f32.mrb[0].mxu0
  %v173 = vadd.f32 %v39, %v172
  %v174 = vpop.f32.mrb[0].mxu0
  %175 = vmatprep.mubr.bf16.mxu0 0
  %176 = vmatmul.mubr.bf16.gmra.mrb[0].mxu0 %v101
  %v177 = vpop.f32.mrb[0].mxu0
  %v178 = vadd.f32 %v39, %v177
  %v179 = vpop.f32.mrb[0].mxu0
  %v180 = vpop.f32.mrb[0].mxu0
  %v181 = vadd.f32 %v39, %v180
  %v182 = vpop.f32.mrb[0].mxu0
  %183 = vmatprep.mubr.bf16.mxu0 0
  %184 = vmatmul.mubr.bf16.gmra.mrb[0].mxu0 %v104
  %v185 = vpop.f32.mrb[0].mxu0
  %v186 = vadd.f32 %v39, %v185
  %v187 = vpop.f32.mrb[0].mxu0
  %v188 = vpop.f32.mrb[0].mxu0
  %v189 = vadd.f32 %v39, %v188
  %v190 = vpop.f32.mrb[0].mxu0
  %191 = vmatprep.mubr.bf16.mxu0 0
  %192 = vmatmul.mubr.bf16.gmra.mrb[0].mxu0 %v107
  %v193 = vpop.f32.mrb[0].mxu0
  %v194 = vadd.f32 %v39, %v193
  %v195 = vpop.f32.mrb[0].mxu0
  %v196 = vpop.f32.mrb[0].mxu0
  %v197 = vadd.f32 %v39, %v196
  %v198 = vpop.f32.mrb[0].mxu0
  %199 = vmatprep.mubr.bf16.mxu0 0
  %200 = vmatmul.mubr.bf16.gmra.mrb[0].mxu0 %v110
  %v201 = vpop.f32.mrb[0].mxu0
  %v202 = vadd.f32 %v39, %v201
  %v203 = vpop.f32.mrb[0].mxu0
  %v204 = vpop.f32.mrb[0].mxu0
  %v205 = vadd.f32 %v39, %v204
  %v206 = vpop.f32.mrb[0].mxu0
  %207 = vmatprep.mubr.bf16.mxu0 0
  %208 = vmatmul.mubr.bf16.gmra.mrb[0].mxu0 %v113
  %v209 = vpop.f32.mrb[0].mxu0
  %v210 = vadd.f32 %v39, %v209
  %v211 = vpop.f32.mrb[0].mxu0
  %v212 = vpop.f32.mrb[0].mxu0
  %v213 = vadd.f32 %v39, %v212
  %v214 = vpop.f32.mrb[0].mxu0
  %215 = vdwg.mxu0
  %v216 = vxor.u32 %v154, 2147483648
  %v217 = vxor.u32 %v157, 2147483648
  %v218 = vxor.u32 %v162, 2147483648
  %v219 = vxor.u32 %v165, 2147483648
  %v220 = vxor.u32 %v170, 2147483648
  %v221 = vxor.u32 %v173, 2147483648
  %v222 = vxor.u32 %v178, 2147483648
  %v223 = vxor.u32 %v181, 2147483648
  %v224 = vxor.u32 %v186, 2147483648
  %v225 = vxor.u32 %v189, 2147483648
  %v226 = vxor.u32 %v194, 2147483648
  %v227 = vxor.u32 %v197, 2147483648
  %v228 = vxor.u32 %v202, 2147483648
  %v229 = vxor.u32 %v205, 2147483648
  %v230 = vxor.u32 %v210, 2147483648
  %v231 = vxor.u32 %v213, 2147483648
  %v232 = vmul.f32 %v216, 1.442695
  %v233 = vpow.pop %v232
  %v234 = vmul.f32 %v217, 1.442695
  %v235 = vpow.pop %v234
  %v236 = vmul.f32 %v218, 1.442695
  %v237 = vpow.pop %v236
  %v238 = vmul.f32 %v219, 1.442695
  %v239 = vpow.pop %v238
  %v240 = vmul.f32 %v220, 1.442695
  %v241 = vpow.pop %v240
  %v242 = vmul.f32 %v221, 1.442695
  %v243 = vpow.pop %v242
  %v244 = vmul.f32 %v222, 1.442695
  %v245 = vpow.pop %v244
  %v246 = vmul.f32 %v223, 1.442695
  %v247 = vpow.pop %v246
  %v248 = vmul.f32 %v224, 1.442695
  %v249 = vpow.pop %v248
  %v250 = vmul.f32 %v225, 1.442695
  %v251 = vpow.pop %v250
  %v252 = vmul.f32 %v226, 1.442695
  %v253 = vpow.pop %v252
  %v254 = vmul.f32 %v227, 1.442695
  %v255 = vpow.pop %v254
  %v256 = vmul.f32 %v228, 1.442695
  %v257 = vpow.pop %v256
  %v258 = vmul.f32 %v229, 1.442695
  %v259 = vpow.pop %v258
  %v260 = vmul.f32 %v230, 1.442695
  %v261 = vpow.pop %v260
  %v262 = vmul.f32 %v231, 1.442695
  %v263 = vpow.pop %v262
  %v264 = vadd.f32 %v233, 1.0
  %v265 = vadd.f32 %v235, 1.0
  %v266 = vadd.f32 %v237, 1.0
  %v267 = vadd.f32 %v239, 1.0
  %v268 = vadd.f32 %v241, 1.0
  %v269 = vadd.f32 %v243, 1.0
  %v270 = vadd.f32 %v245, 1.0
  %v271 = vadd.f32 %v247, 1.0
  %v272 = vadd.f32 %v249, 1.0
  %v273 = vadd.f32 %v251, 1.0
  %v274 = vadd.f32 %v253, 1.0
  %v275 = vadd.f32 %v255, 1.0
  %v276 = vadd.f32 %v257, 1.0
  %v277 = vadd.f32 %v259, 1.0
  %v278 = vadd.f32 %v261, 1.0
  %v279 = vadd.f32 %v263, 1.0
  %v280 = vrcp.pop %v264
  %v281 = vmul.f32 1.0, %v280
  %v282 = vrcp.pop %v265
  %v283 = vmul.f32 1.0, %v282
  %v284 = vrcp.pop %v266
  %v285 = vmul.f32 1.0, %v284
  %v286 = vrcp.pop %v267
  %v287 = vmul.f32 1.0, %v286
  %v288 = vrcp.pop %v268
  %v289 = vmul.f32 1.0, %v288
  %v290 = vrcp.pop %v269
  %v291 = vmul.f32 1.0, %v290
  %v292 = vrcp.pop %v270
  %v293 = vmul.f32 1.0, %v292
  %v294 = vrcp.pop %v271
  %v295 = vmul.f32 1.0, %v294
  %v296 = vrcp.pop %v272
  %v297 = vmul.f32 1.0, %v296
  %v298 = vrcp.pop %v273
  %v299 = vmul.f32 1.0, %v298
  %v300 = vrcp.pop %v274
  %v301 = vmul.f32 1.0, %v300
  %v302 = vrcp.pop %v275
  %v303 = vmul.f32 1.0, %v302
  %v304 = vrcp.pop %v276
  %v305 = vmul.f32 1.0, %v304
  %v306 = vrcp.pop %v277
  %v307 = vmul.f32 1.0, %v306
  %v308 = vrcp.pop %v278
  %v309 = vmul.f32 1.0, %v308
  %v310 = vrcp.pop %v279
  %v311 = vmul.f32 1.0, %v310
  %v312 = vmul.f32 %v154, %v281
  %v313 = vmul.f32 %v157, %v283
  %v314 = vmul.f32 %v162, %v285
  %v315 = vmul.f32 %v165, %v287
  %v316 = vmul.f32 %v170, %v289
  %v317 = vmul.f32 %v173, %v291
  %v318 = vmul.f32 %v178, %v293
  %v319 = vmul.f32 %v181, %v295
  %v320 = vmul.f32 %v186, %v297
  %v321 = vmul.f32 %v189, %v299
  %v322 = vmul.f32 %v194, %v301
  %v323 = vmul.f32 %v197, %v303
  %v324 = vmul.f32 %v202, %v305
  %v325 = vmul.f32 %v205, %v307
  %v326 = vmul.f32 %v210, %v309
  %v327 = vmul.f32 %v213, %v311
  %v328 = vpack.c.bf16 %v313, %v312
  %v329 = vpack.c.bf16 %v315, %v314
  %v330 = vpack.c.bf16 %v317, %v316
  %v331 = vpack.c.bf16 %v319, %v318
  %v332 = vpack.c.bf16 %v321, %v320
  %v333 = vpack.c.bf16 %v323, %v322
  %v334 = vpack.c.bf16 %v325, %v324
  %v335 = vpack.c.bf16 %v327, %v326
  %v344 = vunpack.c.l.b16 %v328
  %v345 = vunpack.c.h.b16 %v328
  %v346 = vunpack.c.l.b16 %v329
  %v347 = vunpack.c.h.b16 %v329
  %v348 = vunpack.c.l.b16 %v330
  %v349 = vunpack.c.h.b16 %v330
  %v350 = vunpack.c.l.b16 %v331
  %v351 = vunpack.c.h.b16 %v331
  %v352 = vunpack.c.l.b16 %v332
  %v353 = vunpack.c.h.b16 %v332
  %v354 = vunpack.c.l.b16 %v333
  %v355 = vunpack.c.h.b16 %v333
  %v356 = vunpack.c.l.b16 %v334
  %v357 = vunpack.c.h.b16 %v334
  %v358 = vunpack.c.l.b16 %v335
  %v359 = vunpack.c.h.b16 %v335
  %v360 = vpack.c.b16 %v344, %v344
  %v361 = vpack.c.b16 %v345, %v345
  %v362 = vpack.c.b16 %v346, %v346
  %v363 = vpack.c.b16 %v347, %v347
  %v364 = vpack.c.b16 %v348, %v348
  %v365 = vpack.c.b16 %v349, %v349
  %v366 = vpack.c.b16 %v350, %v350
  %v367 = vpack.c.b16 %v351, %v351
  %v368 = vpack.c.b16 %v352, %v352
  %v369 = vpack.c.b16 %v353, %v353
  %v370 = vpack.c.b16 %v354, %v354
  %v371 = vpack.c.b16 %v355, %v355
  %v372 = vpack.c.b16 %v356, %v356
  %v373 = vpack.c.b16 %v357, %v357
  %v374 = vpack.c.b16 %v358, %v358
  %v375 = vpack.c.b16 %v359, %v359
  %vm392 = vcmask 781312
  %393 = vst.msk [vmem:[%s3] sm:$0xf] %vm392, %v360
  %394 = vst.msk [vmem:[%s3 + $0x4] sm:$0xf] %vm392, %v361
  %395 = vst.msk [vmem:[%s3 + $0x8] sm:$0xf] %vm392, %v362
  %396 = vst.msk [vmem:[%s3 + $0xc] sm:$0xf] %vm392, %v363
  %397 = vst.msk [vmem:[%s3 + $0x10] sm:$0xf] %vm392, %v364
  %398 = vst.msk [vmem:[%s3 + $0x14] sm:$0xf] %vm392, %v365
  %399 = vst.msk [vmem:[%s3 + $0x18] sm:$0xf] %vm392, %v366
  %400 = vst.msk [vmem:[%s3 + $0x1c] sm:$0xf] %vm392, %v367
  %401 = vst.msk [vmem:[%s3 + $0x20] sm:$0xf] %vm392, %v368
  %402 = vst.msk [vmem:[%s3 + $0x24] sm:$0xf] %vm392, %v369
  %403 = vst.msk [vmem:[%s3 + $0x28] sm:$0xf] %vm392, %v370
  %404 = vst.msk [vmem:[%s3 + $0x2c] sm:$0xf] %vm392, %v371
  %405 = vst.msk [vmem:[%s3 + $0x30] sm:$0xf] %vm392, %v372
  %406 = vst.msk [vmem:[%s3 + $0x34] sm:$0xf] %vm392, %v373
  %407 = vst.msk [vmem:[%s3 + $0x38] sm:$0xf] %vm392, %v374
  %408 = vst.msk [vmem:[%s3 + $0x3c] sm:$0xf] %vm392, %v375
  // Predicated region
  $region14: #{efficientnet_forward.23} parent=0 // pred_check
    _
  $region15: #{efficientnet_forward.23} parent=0 // pred_check_branch
    %410 = sbr.rel (0) target = $region17
  $region16: #{efficientnet_forward.23} parent=0 // pred_region
    _
  $region17: #{efficientnet_forward.23} parent=0 // pred_fallthru
    _
  // Predicated region
  $region18: #{efficientnet_forward.23} parent=0 // pred_check
    _
  $region19: #{efficientnet_forward.23} parent=0 // pred_check_branch
    %412 = sbr.rel (0) target = $region21
  $region20: #{efficientnet_forward.23} parent=0 // pred_region
    _
  $region21: #{efficientnet_forward.23} parent=0 // pred_fallthru
    _

// kernel: efficientnet_forward.25
$region0: #{efficientnet_forward.25}
  #allocation0 [shape = 'u32[]', space=smem, size = 0x4, offset = 0x4, fixed_abs, tag = 'smem constant byte address 0x4 - core index']
  #allocation1 [shape = 'u32[144,128]{1,0:T(1,128)}', space=vmem, size = 0x12000, scoped, tag = 'internal scratch']
  %s0 = inlined_call_operand.vmem [shape: f32[2,96], index: 0, kind: input, shape index: {}]
  %s1 = inlined_call_operand.vmem [shape: bf16[96,6], index: 1, kind: input, shape index: {}]
  %s2 = inlined_call_operand.vmem [shape: f32[1,6], index: 2, kind: input, shape index: {}]
  %s3 = inlined_call_operand.vmem [shape: bf16[6,96], index: 3, kind: input, shape index: {}]
  %s4 = inlined_call_operand.vmem [shape: f32[1,96], index: 4, kind: input, shape index: {}]
  %s5 = inlined_call_operand.vmem [shape: bf16[2,96], index: 5, kind: output, shape index: {}]
  %s6 = sld [smem:[#allocation0]]
  $region30: #{efficientnet_forward.25} parent=0
    _
  %s8 = ssub.s32 1, %s6
  %s9 = scalar_select 0, %s8, %s6
  // Predicated region
  $region2: #{efficientnet_forward.25} parent=0 // pred_check
    _
  $region3: #{efficientnet_forward.25} parent=0 // pred_check_branch
    %11 = sbr.rel (0) target = $region5
  $region4: #{efficientnet_forward.25} parent=0 // pred_region
    _
  $region5: #{efficientnet_forward.25} parent=0 // pred_fallthru
    _
  // Predicated region
  $region6: #{efficientnet_forward.25} parent=0 // pred_check
    _
  $region7: #{efficientnet_forward.25} parent=0 // pred_check_branch
    %13 = sbr.rel (0) target = $region9
  $region8: #{efficientnet_forward.25} parent=0 // pred_region
    _
  $region9: #{efficientnet_forward.25} parent=0 // pred_fallthru
    _
  // Predicated region
  $region10: #{efficientnet_forward.25} parent=0 // pred_check
    _
  $region11: #{efficientnet_forward.25} parent=0 // pred_check_branch
    %15 = sbr.rel (0) target = $region13
  $region12: #{efficientnet_forward.25} parent=0 // pred_region
    _
  $region13: #{efficientnet_forward.25} parent=0 // pred_fallthru
    _
  // Predicated region
  $region14: #{efficientnet_forward.25} parent=0 // pred_check
    _
  $region15: #{efficientnet_forward.25} parent=0 // pred_check_branch
    %17 = sbr.rel (0) target = $region17
  $region16: #{efficientnet_forward.25} parent=0 // pred_region
    _
  $region17: #{efficientnet_forward.25} parent=0 // pred_fallthru
    _
  // Predicated region
  $region18: #{efficientnet_forward.25} parent=0 // pred_check
    _
  $region19: #{efficientnet_forward.25} parent=0 // pred_check_branch
    %19 = sbr.rel (0) target = $region21
  $region20: #{efficientnet_forward.25} parent=0 // pred_region
    _
  $region21: #{efficientnet_forward.25} parent=0 // pred_fallthru
    _
  %v21 = vld [vmem:[%s0] sm:$0x3]
  %v22 = vmul.f32 %v21, 0.0625
  %v23 = vpack.c.bf16 %v22, %v22
  %v24 = vld [vmem:[%s1] sm:$0xf]
  %v25 = vld [vmem:[%s1 + $0x4] sm:$0xf]
  %v26 = vld [vmem:[%s1 + $0x8] sm:$0xf]
  %v27 = vld [vmem:[%s1 + $0xc] sm:$0xf]
  %v28 = vld [vmem:[%s1 + $0x10] sm:$0xf]
  %v29 = vld [vmem:[%s1 + $0x14] sm:$0xf]
  %v30 = vld [vmem:[%s1 + $0x18] sm:$0xf]
  %v31 = vld [vmem:[%s1 + $0x1c] sm:$0xf]
  %v32 = vld [vmem:[%s1 + $0x20] sm:$0xf]
  %v33 = vld [vmem:[%s1 + $0x24] sm:$0xf]
  %v34 = vld [vmem:[%s1 + $0x28] sm:$0xf]
  %v35 = vld [vmem:[%s1 + $0x2c] sm:$0xf]
  %v36 = vld [vmem:[%s2] sm:$0x1]
  %v38 = vlaneseq
  %v39 = vshrl.u32 %v38, 7
  %v40 = vsub.s32 0, %v39
  %v41 = vrot.slane %v36, %v40
  %v55 = vunpack.c.l.b16 %v24
  %v56 = vunpack.c.l.b16 %v25
  %v57 = vunpack.c.l.b16 %v26
  %v58 = vunpack.c.l.b16 %v27
  %v59 = vunpack.c.l.b16 %v28
  %v60 = vunpack.c.l.b16 %v29
  %v61 = vunpack.c.l.b16 %v30
  %v62 = vunpack.c.l.b16 %v31
  %v63 = vunpack.c.l.b16 %v32
  %v64 = vunpack.c.l.b16 %v33
  %v65 = vunpack.c.l.b16 %v34
  %v66 = vunpack.c.l.b16 %v35
  %v67 = vpack.c.b16 %v56, %v55
  %v68 = vpack.c.b16 %v58, %v57
  %v69 = vpack.c.b16 %v60, %v59
  %v70 = vpack.c.b16 %v62, %v61
  %v71 = vpack.c.b16 %v64, %v63
  %v72 = vpack.c.b16 %v66, %v65
  %vm79 = vcmask 785408
  %v81 = vsel %vm79, %v23, 0
  %83 = vmatprep.subr.bf16.mxu0 0
  %84 = vmatpush1.bf16.msra.mxu0 %v67
  %85 = vmatprep.subr.bf16.mxu0 0
  %86 = vmatpush1.bf16.msra.mxu0 %v68
  %87 = vmatprep.subr.bf16.mxu0 0
  %88 = vmatpush1.bf16.msra.mxu0 %v69
  %89 = vmatprep.subr.bf16.mxu0 0
  %90 = vmatpush1.bf16.msra.mxu0 %v70
  %91 = vmatprep.subr.bf16.mxu0 0
  %92 = vmatpush1.bf16.msra.mxu0 %v71
  %93 = vmatprep.subr.bf16.mxu0 0
  %94 = vmatpush1.bf16.msra.mxu0 %v72
  %95 = vmatprep.subr.bf16.mxu0 0
  %96 = vmatpush1.bf16.msra.mxu0 0
  %97 = vmatprep.subr.bf16.mxu0 0
  %98 = vmatpush1.bf16.msra.mxu0 0
  %99 = vmatprep.subr.bf16.mxu0 0
  %100 = vmatpush1.bf16.msra.mxu0 0
  %101 = vmatprep.subr.bf16.mxu0 0
  %102 = vmatpush1.bf16.msra.mxu0 0
  %103 = vmatprep.subr.bf16.mxu0 0
  %104 = vmatpush1.bf16.msra.mxu0 0
  %105 = vmatprep.subr.bf16.mxu0 0
  %106 = vmatpush1.bf16.msra.mxu0 0
  %107 = vmatprep.subr.bf16.mxu0 0
  %108 = vmatpush1.bf16.msra.mxu0 0
  %109 = vmatprep.subr.bf16.mxu0 0
  %110 = vmatpush1.bf16.msra.mxu0 0
  %111 = vmatprep.subr.bf16.mxu0 0
  %112 = vmatpush1.bf16.msra.mxu0 0
  %113 = vmatprep.subr.bf16.mxu0 0
  %114 = vmatpush1.bf16.msra.mxu0 0
  %115 = vmatprep.mubr.bf16.mxu0 0
  %116 = vmatmul.mubr.bf16.gmra.mrb[0].mxu0 %v81
  %v117 = vpop.f32.mrb[0].mxu0
  %v118 = vadd.f32 %v41, %v117
  %v119 = vpop.f32.mrb[0].mxu0
  %v120 = vpop.f32.mrb[0].mxu0
  %v121 = vpop.f32.mrb[0].mxu0
  %122 = vdwg.mxu0
  %v123 = vxor.u32 %v118, 2147483648
  %v124 = vmul.f32 %v123, 1.442695
  %v125 = vpow.pop %v124
  %v126 = vadd.f32 %v125, 1.0
  %v127 = vrcp.pop %v126
  %v128 = vmul.f32 1.0, %v127
  %v129 = vmul.f32 %v118, %v128
  %v130 = vpack.c.bf16 %v129, %v129
  %v131 = vld [vmem:[%s3] sm:$0x7]
  %v132 = vld [vmem:[%s4] sm:$0x1]
  %v134 = vlaneseq
  %v135 = vshrl.u32 %v134, 7
  %v136 = vsub.s32 0, %v135
  %v137 = vrot.slane %v132, %v136
  %vm139 = vcmask 48128
  %v141 = vsel %vm139, %v130, 0
  %vm143 = vcmask 1042432
  %v145 = vsel %vm143, %v131, 0
  %147 = vmatprep.subr.bf16.mxu0 0
  %148 = vmatpush1.bf16.msra.mxu0 %v145
  %149 = vmatprep.subr.bf16.mxu0 0
  %150 = vmatpush1.bf16.msra.mxu0 0
  %151 = vmatprep.subr.bf16.mxu0 0
  %152 = vmatpush1.bf16.msra.mxu0 0
  %153 = vmatprep.subr.bf16.mxu0 0
  %154 = vmatpush1.bf16.msra.mxu0 0
  %155 = vmatprep.subr.bf16.mxu0 0
  %156 = vmatpush1.bf16.msra.mxu0 0
  %157 = vmatprep.subr.bf16.mxu0 0
  %158 = vmatpush1.bf16.msra.mxu0 0
  %159 = vmatprep.subr.bf16.mxu0 0
  %160 = vmatpush1.bf16.msra.mxu0 0
  %161 = vmatprep.subr.bf16.mxu0 0
  %162 = vmatpush1.bf16.msra.mxu0 0
  %163 = vmatprep.subr.bf16.mxu0 0
  %164 = vmatpush1.bf16.msra.mxu0 0
  %165 = vmatprep.subr.bf16.mxu0 0
  %166 = vmatpush1.bf16.msra.mxu0 0
  %167 = vmatprep.subr.bf16.mxu0 0
  %168 = vmatpush1.bf16.msra.mxu0 0
  %169 = vmatprep.subr.bf16.mxu0 0
  %170 = vmatpush1.bf16.msra.mxu0 0
  %171 = vmatprep.subr.bf16.mxu0 0
  %172 = vmatpush1.bf16.msra.mxu0 0
  %173 = vmatprep.subr.bf16.mxu0 0
  %174 = vmatpush1.bf16.msra.mxu0 0
  %175 = vmatprep.subr.bf16.mxu0 0
  %176 = vmatpush1.bf16.msra.mxu0 0
  %177 = vmatprep.subr.bf16.mxu0 0
  %178 = vmatpush1.bf16.msra.mxu0 0
  %179 = vmatprep.mubr.bf16.mxu0 0
  %180 = vmatmul.mubr.bf16.gmra.mrb[0].mxu0 %v141
  %v181 = vpop.f32.mrb[0].mxu0
  %v182 = vadd.f32 %v137, %v181
  %v183 = vpop.f32.mrb[0].mxu0
  %v184 = vpop.f32.mrb[0].mxu0
  %v185 = vpop.f32.mrb[0].mxu0
  %186 = vdwg.mxu0
  %v187 = vxor.u32 %v182, 2147483648
  %v188 = vmul.f32 %v187, 1.442695
  %v189 = vpow.pop %v188
  %v190 = vadd.f32 %v189, 1.0
  %v191 = vrcp.pop %v190
  %v192 = vmul.f32 1.0, %v191
  %v193 = vpack.c.bf16 %v192, %v192
  %vm194 = vcmask 778240
  %195 = vst.msk [vmem:[%s5] sm:$0x1] %vm194, %v193
  // Predicated region
  $region22: #{efficientnet_forward.25} parent=0 // pred_check
    _
  $region23: #{efficientnet_forward.25} parent=0 // pred_check_branch
    %197 = sbr.rel (0) target = $region25
  $region24: #{efficientnet_forward.25} parent=0 // pred_region
    _
  $region25: #{efficientnet_forward.25} parent=0 // pred_fallthru
    _
  // Predicated region
  $region26: #{efficientnet_forward.25} parent=0 // pred_check
    _
  $region27: #{efficientnet_forward.25} parent=0 // pred_check_branch
    %199 = sbr.rel (0) target = $region29
  $region28: #{efficientnet_forward.25} parent=0 // pred_region
    _
  $region29: #{efficientnet_forward.25} parent=0 // pred_fallthru
    _

// kernel: efficientnet_forward.26
$region0: #{efficientnet_forward.26}
  #allocation0 [shape = 'u32[]', space=smem, size = 0x4, offset = 0x4, fixed_abs, tag = 'smem constant byte address 0x4 - core index']
  #allocation1 [shape = 'u32[144,128]{1,0:T(1,128)}', space=vmem, size = 0x12000, scoped, tag = 'internal scratch']
  %s0 = inlined_call_operand.vmem [shape: bf16[2,16,96], index: 0, kind: input, shape index: {}]
  %s1 = inlined_call_operand.vmem [shape: bf16[2,1,96], index: 1, kind: input, shape index: {}]
  %s2 = inlined_call_operand.vmem [shape: bf16[96,40], index: 2, kind: input, shape index: {}]
  %s3 = inlined_call_operand.vmem [shape: f32[1,40], index: 3, kind: input, shape index: {}]
  %s4 = inlined_call_operand.vmem [shape: bf16[2,16,40], index: 4, kind: output, shape index: {}]
  %s5 = sld [smem:[#allocation0]]
  $region49: #{efficientnet_forward.26} parent=0
    _
  %s7 = ssub.s32 1, %s5
  %s8 = scalar_select 0, %s7, %s5
  loop: start=0, step=1, limit=4
  $region2: #{efficientnet_forward.26} parent=0 // loop_pre_header
    _
  $region3: #{efficientnet_forward.26} parent=0 // loop_header
    %s10 = sphi 0, %s14
    %p11 = scmp.ge.s32.totalorder %s10, 4
    %s17 = sphi 0, %s29
    %s18 = sphi 0, %s25
    %s19 = sphi 0, %s17
    %s20 = sphi 0, %s18
    %s21 = sphi 0, %s19
    %s22 = sphi 0, %s20
    %s34 = sphi 0, %s36
    %s37 = sphi 0, %s34
    %s38 = sphi 0, %s37
    %s54 = sphi 0, %s38
    %s60 = sphi 0, %s62
    %s63 = sphi 0, %s60
    %s64 = sphi 0, %s63
    %s80 = sphi 0, %s64
    %s84 = sphi 0, %s84
    %s86 = sphi 0, %s84
    %s87 = sphi 0, %s86
    %s101 = sphi 0, %s87
    %s105 = sphi 0, %s105
    %s107 = sphi 0, %s105
    %s108 = sphi 0, %s107
    %s122 = sphi 0, %s108
    %s130 = sphi 0, %s132
    %s133 = sphi 0, %s130
    %s134 = sphi 0, %s133
    %s150 = sphi 0, %s134
  $region4: #{efficientnet_forward.26} parent=0 // loop_header_branch
    %13 = sbr.rel (%p11) target = $region8
  $region5: #{efficientnet_forward.26} parent=0 // loop_body
    %s15 = ssub.s32 %s10, 1
    %s16 = ssub.s32 %s10, 2
    %s23 = sadd.s32 1, %s18
    %p24 = scmp.ge.s32.totalorder %s23, 1
    %s25 = scalar_select %p24, 0, %s23
    %s26 = sadd.s32 1, %s17
    %s27 = scalar_select %p24, %s26, %s17
    %p28 = scmp.ge.s32.totalorder %s27, 2
    %s29 = scalar_select %p28, 0, %s27
    %s30 = ssub.s32 %s17, %s29
    %s31 = ssub.s32 %s18, %s25
    %s32 = sor.u32 %s30, %s31
    %p33 = scmp.eq.s32.totalorder %s32, 0
    %s35 = sadd.s32 %s34, 1
    %s36 = scalar_select %p33, %s34, %s35
    %p39 = pneg %p33
    %p40 = scmp.eq.s32.totalorder %s10, 1
    %p41 = por %p39, %p40
    %p42 = scmp.ne.s32.totalorder %s34, %s37
    %p43 = scmp.eq.s32.totalorder %s10, 0
    %p44 = por %p42, %p43
    %p45 = scmp.ne.s32.totalorder %s34, %s37
    %p46 = scmp.eq.s32.totalorder %s15, 1
    %p47 = por %p45, %p46
    %p48 = scmp.ne.s32.totalorder %s37, %s38
    %p49 = scmp.eq.s32.totalorder %s15, 0
    %p50 = por %p48, %p49
    %p51 = scmp.ne.s32.totalorder %s37, %s38
    %p52 = scmp.eq.s32.totalorder %s16, 1
    %p53 = por %p51, %p52
    %p55 = scmp.ne.s32.totalorder %s38, %s54
    %p56 = scmp.eq.s32.totalorder %s16, 0
    %p57 = por %p55, %p56
    %s58 = ssub.s32 %s17, %s29
    %p59 = scmp.eq.s32.totalorder %s58, 0
    %s61 = sadd.s32 %s60, 1
    %s62 = scalar_select %p59, %s60, %s61
    %p65 = pneg %p59
    %p66 = scmp.eq.s32.totalorder %s10, 1
    %p67 = por %p65, %p66
    %p68 = scmp.ne.s32.totalorder %s60, %s63
    %p69 = scmp.eq.s32.totalorder %s10, 0
    %p70 = por %p68, %p69
    %p71 = scmp.ne.s32.totalorder %s60, %s63
    %p72 = scmp.eq.s32.totalorder %s15, 1
    %p73 = por %p71, %p72
    %p74 = scmp.ne.s32.totalorder %s63, %s64
    %p75 = scmp.eq.s32.totalorder %s15, 0
    %p76 = por %p74, %p75
    %p77 = scmp.ne.s32.totalorder %s63, %s64
    %p78 = scmp.eq.s32.totalorder %s16, 1
    %p79 = por %p77, %p78
    %p81 = scmp.ne.s32.totalorder %s64, %s80
    %p82 = scmp.eq.s32.totalorder %s16, 0
    %p83 = por %p81, %p82
    %s85 = sadd.s32 %s84, 1
    %p88 = scmp.eq.s32.totalorder %s10, 1
    %p89 = scmp.ne.s32.totalorder %s84, %s86
    %p90 = scmp.eq.s32.totalorder %s10, 0
    %p91 = por %p89, %p90
    %p92 = scmp.ne.s32.totalorder %s84, %s86
    %p93 = scmp.eq.s32.totalorder %s15, 1
    %p94 = por %p92, %p93
    %p95 = scmp.ne.s32.totalorder %s86, %s87
    %p96 = scmp.eq.s32.totalorder %s15, 0
    %p97 = por %p95, %p96
    %p98 = scmp.ne.s32.totalorder %s86, %s87
    %p99 = scmp.eq.s32.totalorder %s16, 1
    %p100 = por %p98, %p99
    %p102 = scmp.ne.s32.totalorder %s87, %s101
    %p103 = scmp.eq.s32.totalorder %s16, 0
    %p104 = por %p102, %p103
    %s106 = sadd.s32 %s105, 1
    %p109 = scmp.eq.s32.totalorder %s10, 1
    %p110 = scmp.ne.s32.totalorder %s105, %s107
    %p111 = scmp.eq.s32.totalorder %s10, 0
    %p112 = por %p110, %p111
    %p113 = scmp.ne.s32.totalorder %s105, %s107
    %p114 = scmp.eq.s32.totalorder %s15, 1
    %p115 = por %p113, %p114
    %p116 = scmp.ne.s32.totalorder %s107, %s108
    %p117 = scmp.eq.s32.totalorder %s15, 0
    %p118 = por %p116, %p117
    %p119 = scmp.ne.s32.totalorder %s107, %s108
    %p120 = scmp.eq.s32.totalorder %s16, 1
    %p121 = por %p119, %p120
    %p123 = scmp.ne.s32.totalorder %s108, %s122
    %p124 = scmp.eq.s32.totalorder %s16, 0
    %p125 = por %p123, %p124
    %s126 = ssub.s32 %s17, %s29
    %s127 = ssub.s32 %s18, %s25
    %s128 = sor.u32 %s126, %s127
    %p129 = scmp.eq.s32.totalorder %s128, 0
    %s131 = sadd.s32 %s130, 1
    %s132 = scalar_select %p129, %s130, %s131
    %p135 = pneg %p129
    %p136 = scmp.eq.s32.totalorder %s10, 1
    %p137 = por %p135, %p136
    %p138 = scmp.ne.s32.totalorder %s130, %s133
    %p139 = scmp.eq.s32.totalorder %s10, 0
    %p140 = por %p138, %p139
    %p141 = scmp.ne.s32.totalorder %s130, %s133
    %p142 = scmp.eq.s32.totalorder %s15, 1
    %p143 = por %p141, %p142
    %p144 = scmp.ne.s32.totalorder %s133, %s134
    %p145 = scmp.eq.s32.totalorder %s15, 0
    %p146 = por %p144, %p145
    %p147 = scmp.ne.s32.totalorder %s133, %s134
    %p148 = scmp.eq.s32.totalorder %s16, 1
    %p149 = por %p147, %p148
    %p151 = scmp.ne.s32.totalorder %s134, %s150
    %p152 = scmp.eq.s32.totalorder %s16, 0
    %p153 = por %p151, %p152
    %p154 = scmp.le.s32.totalorder 1, %s10
    %p155 = scmp.lt.s32.totalorder %s10, 3
    %p156 = pnand %p154, %p155
    %p157 = pneg %p156
    // Predicated region
    $region9: #{efficientnet_forward.26} parent=5 // pred_check
      _
    $region10: #{efficientnet_forward.26} parent=5 // pred_check_branch
      %159 = sbr.rel (%p156) target = $region12
    $region11: #{efficientnet_forward.26} parent=5 // pred_region
      %s160 = ssub.s32 %s10, 1
      // Predicated region
      $region13: #{efficientnet_forward.26} parent=11 // pred_check
        %p161 = pneg %p97
      $region14: #{efficientnet_forward.26} parent=11 // pred_check_branch
        %163 = sbr.rel (%p161) target = $region16
      $region15: #{efficientnet_forward.26} parent=11 // pred_region
        _
      $region16: #{efficientnet_forward.26} parent=11 // pred_fallthru
        _
      // Predicated region
      $region17: #{efficientnet_forward.26} parent=11 // pred_check
        %p164 = pneg %p118
      $region18: #{efficientnet_forward.26} parent=11 // pred_check_branch
        %166 = sbr.rel (%p164) target = $region20
      $region19: #{efficientnet_forward.26} parent=11 // pred_region
        _
      $region20: #{efficientnet_forward.26} parent=11 // pred_fallthru
        _
    $region12: #{efficientnet_forward.26} parent=5 // pred_fallthru
      _
    %p167 = scmp.lt.s32.totalorder %s10, 2
    // Predicated region
    $region21: #{efficientnet_forward.26} parent=5 // pred_check
      %p168 = pneg %p167
    $region22: #{efficientnet_forward.26} parent=5 // pred_check_branch
      %170 = sbr.rel (%p168) target = $region24
    $region23: #{efficientnet_forward.26} parent=5 // pred_region
      // Predicated region
      $region25: #{efficientnet_forward.26} parent=23 // pred_check
        %p171 = pneg %p44
      $region26: #{efficientnet_forward.26} parent=23 // pred_check_branch
        %173 = sbr.rel (%p171) target = $region28
      $region27: #{efficientnet_forward.26} parent=23 // pred_region
        %s174 = smul.u32 2, %s18
        %p175 = scmp.lt.s32.totalorder %s17, 1
        %s176 = scalar_select %p175, %s17, 1
        %p177 = scmp.lt.s32.totalorder %s174, 1
        %s178 = scalar_select %p177, %s174, 1
        %s179 = smul.addr %s176, 2
        %s180 = sadd.s32 %s178, %s179
        %s181 = smul.addr %s180, 4
        %s182 = scalar_lea.vmem %s0, %s181
        %s183 = smul.u32 2, %s18
      $region28: #{efficientnet_forward.26} parent=23 // pred_fallthru
        _
      // Predicated region
      $region29: #{efficientnet_forward.26} parent=23 // pred_check
        %p184 = pneg %p70
      $region30: #{efficientnet_forward.26} parent=23 // pred_check_branch
        %186 = sbr.rel (%p184) target = $region32
      $region31: #{efficientnet_forward.26} parent=23 // pred_region
        %p187 = scmp.lt.s32.totalorder %s17, 1
        %s188 = scalar_select %p187, %s17, 1
        %s189 = scalar_lea.vmem %s1, %s188
      $region32: #{efficientnet_forward.26} parent=23 // pred_fallthru
        _
    $region24: #{efficientnet_forward.26} parent=5 // pred_fallthru
      _
    %p190 = scmp.le.s32.totalorder 1, %s10
    %p191 = scmp.lt.s32.totalorder %s10, 3
    %p192 = pnand %p190, %p191
    %p193 = pneg %p192
    // Predicated region
    $region33: #{efficientnet_forward.26} parent=5 // pred_check
      _
    $region34: #{efficientnet_forward.26} parent=5 // pred_check_branch
      %195 = sbr.rel (%p192) target = $region36
    $region35: #{efficientnet_forward.26} parent=5 // pred_region
      %s196 = ssub.s32 %s10, 1
      %s197 = smul.u32 2, %s20
      %p198 = scmp.lt.s32.totalorder %s19, 1
      %s199 = scalar_select %p198, %s19, 1
      %p200 = scmp.lt.s32.totalorder %s197, 1
      %s201 = scalar_select %p200, %s197, 1
      %s202 = smul.addr %s199, 2
      %s203 = sadd.s32 %s201, %s202
      %s204 = smul.addr %s203, 4
      %s205 = scalar_lea.vmem %s0, %s204
      %p206 = pneg %p50
      %p207 = pneg %p47
      %p208 = scmp.lt.s32.totalorder %s19, 1
      %s209 = scalar_select %p208, %s19, 1
      %s210 = scalar_lea.vmem %s1, %s209
      %p211 = pneg %p76
      %p212 = pneg %p73
      %p213 = pneg %p97
      %p214 = pneg %p94
      %p215 = pneg %p118
      %p216 = pneg %p115
      %p217 = pneg %p146
      %p218 = pneg %p143
      %s219 = smul.u32 2, %s20
      %p220 = scmp.lt.s32.totalorder %s19, 1
      %s221 = scalar_select %p220, %s19, 1
      %p222 = scmp.lt.s32.totalorder %s219, 1
      %s223 = scalar_select %p222, %s219, 1
      %s224 = smul.addr %s221, 2
      %s225 = sadd.s32 %s223, %s224
      %s226 = smul.addr %s225, 4
      %s227 = scalar_lea.vmem %s4, %s226
      %s228 = smul.u32 2, %s20
      %p229 = scmp.lt.s32.totalorder %s19, 1
      %s230 = scalar_select %p229, %s19, 1
      %p231 = scmp.lt.s32.totalorder %s228, 1
      %s232 = scalar_select %p231, %s228, 1
      %s233 = smul.addr %s230, 2
      %s234 = sadd.s32 %s232, %s233
      %s235 = smul.addr %s234, 4
      %s236 = scalar_lea.vmem %s0, %s235
      %s237 = smul.u32 2, %s20
      %p238 = scmp.lt.s32.totalorder %s19, 1
      %s239 = scalar_select %p238, %s19, 1
      %s240 = scalar_lea.vmem %s1, %s239
      %s241 = smul.u32 2, %s20
      %p242 = scmp.lt.s32.totalorder %s19, 1
      %s243 = scalar_select %p242, %s19, 1
      %p244 = scmp.lt.s32.totalorder %s241, 1
      %s245 = scalar_select %p244, %s241, 1
      %s246 = smul.addr %s243, 2
      %s247 = sadd.s32 %s245, %s246
      %s248 = smul.addr %s247, 4
      %s249 = scalar_lea.vmem %s4, %s248
      %s250 = smul.u32 2, %s20
      %v252 = vld [vmem:[%s236] sm:$0xf]
      %v253 = vld [vmem:[%s236 + $0x4] sm:$0xf]
      %v254 = vld [vmem:[%s240] sm:$0x1]
      %v256 = vpack.i.b16 %v254, %v254
      %v258 = vlaneseq
      %v259 = vshrl.u32 %v258, 7
      %v260 = vsub.s32 0, %v259
      %v261 = vrot.slane %v256, %v260
      %v263 = vunpack.c.l.b16 %v261
      %v264 = vpack.c.b16 %v263, %v263
      %v266 = vmul.bf16 %v252, %v264
      %v267 = vmul.bf16 %v253, %v264
      %v268 = vld [vmem:[%s2] sm:$0xf]
      %v269 = vld [vmem:[%s2 + $0x4] sm:$0xf]
      %v270 = vld [vmem:[%s2 + $0x8] sm:$0xf]
      %v271 = vld [vmem:[%s2 + $0xc] sm:$0xf]
      %v272 = vld [vmem:[%s2 + $0x10] sm:$0xf]
      %v273 = vld [vmem:[%s2 + $0x14] sm:$0xf]
      %v274 = vld [vmem:[%s2 + $0x18] sm:$0xf]
      %v275 = vld [vmem:[%s2 + $0x1c] sm:$0xf]
      %v276 = vld [vmem:[%s2 + $0x20] sm:$0xf]
      %v277 = vld [vmem:[%s2 + $0x24] sm:$0xf]
      %v278 = vld [vmem:[%s2 + $0x28] sm:$0xf]
      %v279 = vld [vmem:[%s2 + $0x2c] sm:$0xf]
      %v280 = vld [vmem:[%s3] sm:$0x1]
      %v282 = vlaneseq
      %v283 = vshrl.u32 %v282, 7
      %v284 = vsub.s32 0, %v283
      %v285 = vrot.slane %v280, %v284
      %v289 = vunpack.c.l.b16 %v266
      %v290 = vunpack.c.l.b16 %v267
      %v291 = vpack.c.b16 %v290, %v289
      %v304 = vunpack.c.l.b16 %v268
      %v305 = vunpack.c.l.b16 %v269
      %v306 = vunpack.c.l.b16 %v270
      %v307 = vunpack.c.l.b16 %v271
      %v308 = vunpack.c.l.b16 %v272
      %v309 = vunpack.c.l.b16 %v273
      %v310 = vunpack.c.l.b16 %v274
      %v311 = vunpack.c.l.b16 %v275
      %v312 = vunpack.c.l.b16 %v276
      %v313 = vunpack.c.l.b16 %v277
      %v314 = vunpack.c.l.b16 %v278
      %v315 = vunpack.c.l.b16 %v279
      %v316 = vpack.c.b16 %v305, %v304
      %v317 = vpack.c.b16 %v307, %v306
      %v318 = vpack.c.b16 %v309, %v308
      %v319 = vpack.c.b16 %v311, %v310
      %v320 = vpack.c.b16 %v313, %v312
      %v321 = vpack.c.b16 %v315, %v314
      %vm328 = vcmask 785408
      %v330 = vsel %vm328, %v291, 0
      %332 = vmatprep.subr.bf16.mxu0 0
      %333 = vmatpush1.bf16.msra.mxu0 %v316
      %334 = vmatprep.subr.bf16.mxu0 0
      %335 = vmatpush1.bf16.msra.mxu0 %v317
      %336 = vmatprep.subr.bf16.mxu0 0
      %337 = vmatpush1.bf16.msra.mxu0 %v318
      %338 = vmatprep.subr.bf16.mxu0 0
      %339 = vmatpush1.bf16.msra.mxu0 %v319
      %340 = vmatprep.subr.bf16.mxu0 0
      %341 = vmatpush1.bf16.msra.mxu0 %v320
      %342 = vmatprep.subr.bf16.mxu0 0
      %343 = vmatpush1.bf16.msra.mxu0 %v321
      %344 = vmatprep.subr.bf16.mxu0 0
      %345 = vmatpush1.bf16.msra.mxu0 0
      %346 = vmatprep.subr.bf16.mxu0 0
      %347 = vmatpush1.bf16.msra.mxu0 0
      %348 = vmatprep.subr.bf16.mxu0 0
      %349 = vmatpush1.bf16.msra.mxu0 0
      %350 = vmatprep.subr.bf16.mxu0 0
      %351 = vmatpush1.bf16.msra.mxu0 0
      %352 = vmatprep.subr.bf16.mxu0 0
      %353 = vmatpush1.bf16.msra.mxu0 0
      %354 = vmatprep.subr.bf16.mxu0 0
      %355 = vmatpush1.bf16.msra.mxu0 0
      %356 = vmatprep.subr.bf16.mxu0 0
      %357 = vmatpush1.bf16.msra.mxu0 0
      %358 = vmatprep.subr.bf16.mxu0 0
      %359 = vmatpush1.bf16.msra.mxu0 0
      %360 = vmatprep.subr.bf16.mxu0 0
      %361 = vmatpush1.bf16.msra.mxu0 0
      %362 = vmatprep.subr.bf16.mxu0 0
      %363 = vmatpush1.bf16.msra.mxu0 0
      %364 = vmatprep.mubr.bf16.mxu0 0
      %365 = vmatmul.mubr.bf16.gmra.mrb[0].mxu0 %v330
      %v366 = vpop.f32.mrb[0].mxu0
      %v367 = vadd.f32 %v285, %v366
      %v368 = vpop.f32.mrb[0].mxu0
      %v369 = vpop.f32.mrb[0].mxu0
      %v370 = vadd.f32 %v285, %v369
      %v371 = vpop.f32.mrb[0].mxu0
      %372 = vdwg.mxu0
      %v373 = vpack.c.bf16 %v370, %v367
      %v375 = vunpack.c.l.b16 %v373
      %v376 = vunpack.c.h.b16 %v373
      %v377 = vpack.c.b16 %v375, %v375
      %v378 = vpack.c.b16 %v376, %v376
      %vm381 = vcmask 322560
      %382 = vst.msk [vmem:[%s249] sm:$0xf] %vm381, %v377
      %383 = vst.msk [vmem:[%s249 + $0x4] sm:$0xf] %vm381, %v378
      %s384 = smul.u32 2, %s20
      %p385 = scmp.lt.s32.totalorder %s19, 1
      %s386 = scalar_select %p385, %s19, 1
      %p387 = scmp.lt.s32.totalorder %s384, 1
      %s388 = scalar_select %p387, %s384, 1
      %s389 = smul.addr %s386, 2
      %s390 = sadd.s32 %s388, %s389
      %s391 = smul.addr %s390, 4
      %s392 = scalar_lea.vmem %s4, %s391
      // Predicated region
      $region37: #{efficientnet_forward.26} parent=35 // pred_check
        %p393 = pneg %p143
      $region38: #{efficientnet_forward.26} parent=35 // pred_check_branch
        %395 = sbr.rel (%p393) target = $region40
      $region39: #{efficientnet_forward.26} parent=35 // pred_region
        %s396 = smul.u32 2, %s20
      $region40: #{efficientnet_forward.26} parent=35 // pred_fallthru
        _
    $region36: #{efficientnet_forward.26} parent=5 // pred_fallthru
      _
    %p397 = scmp.le.s32.totalorder 2, %s10
    // Predicated region
    $region41: #{efficientnet_forward.26} parent=5 // pred_check
      %p398 = pneg %p397
    $region42: #{efficientnet_forward.26} parent=5 // pred_check_branch
      %400 = sbr.rel (%p398) target = $region44
    $region43: #{efficientnet_forward.26} parent=5 // pred_region
      %s401 = ssub.s32 %s10, 2
      // Predicated region
      $region45: #{efficientnet_forward.26} parent=43 // pred_check
        %p402 = pneg %p149
      $region46: #{efficientnet_forward.26} parent=43 // pred_check_branch
        %404 = sbr.rel (%p402) target = $region48
      $region47: #{efficientnet_forward.26} parent=43 // pred_region
        %s405 = smul.u32 2, %s22
        %p406 = scmp.lt.s32.totalorder %s21, 1
        %s407 = scalar_select %p406, %s21, 1
        %p408 = scmp.lt.s32.totalorder %s405, 1
        %s409 = scalar_select %p408, %s405, 1
        %s410 = smul.addr %s407, 2
        %s411 = sadd.s32 %s409, %s410
        %s412 = smul.addr %s411, 4
        %s413 = scalar_lea.vmem %s4, %s412
      $region48: #{efficientnet_forward.26} parent=43 // pred_fallthru
        _
    $region44: #{efficientnet_forward.26} parent=5 // pred_fallthru
      _
  $region6: #{efficientnet_forward.26} parent=0 // loop_footer
    %s14 = sadd.s32 1, %s10
  $region7: #{efficientnet_forward.26} parent=0 // loop_footer_branch
    %9 = sbr.rel target = $region3
  $region8: #{efficientnet_forward.26} parent=0 // loop_exit
    _

// kernel: efficientnet_forward.24
$region0: #{efficientnet_forward.24}
  #allocation0 [shape = 'u32[]', space=smem, size = 0x4, offset = 0x4, fixed_abs, tag = 'smem constant byte address 0x4 - core index']
  #allocation1 [shape = 'u32[144,128]{1,0:T(1,128)}', space=vmem, size = 0x12000, scoped, tag = 'internal scratch']
  %s0 = inlined_call_operand.vmem [shape: bf16[2,24,6,96], index: 0, kind: input, shape index: {}]
  %s1 = inlined_call_operand.vmem [shape: f32[25,96], index: 1, kind: input, shape index: {}]
  %s2 = inlined_call_operand.vmem [shape: f32[1,96], index: 2, kind: input, shape index: {}]
  %s3 = inlined_call_operand.vmem [shape: bf16[2,4,4,96], index: 3, kind: output, shape index: {0}]
  %s4 = inlined_call_operand.vmem [shape: f32[2,1,96], index: 4, kind: output, shape index: {1}]
  %5 = xla_tuple %s3, %s4
  %s6 = sld [smem:[#allocation0]]
  $region53: #{efficientnet_forward.24} parent=0
    _
  %s8 = ssub.s32 1, %s6
  %s9 = scalar_select 0, %s8, %s6
  loop: start=0, step=1, limit=4
  $region2: #{efficientnet_forward.24} parent=0 // loop_pre_header
    _
  $region3: #{efficientnet_forward.24} parent=0 // loop_header
    %s11 = sphi 0, %s15
    %p12 = scmp.ge.s32.totalorder %s11, 4
    %s21 = sphi 0, %s23
    %s24 = sphi 0, %s21
    %s25 = sphi 0, %s24
    %s41 = sphi 0, %s25
    %s45 = sphi 0, %s45
    %s47 = sphi 0, %s45
    %s48 = sphi 0, %s47
    %s62 = sphi 0, %s48
    %s66 = sphi 0, %s66
    %s68 = sphi 0, %s66
    %s69 = sphi 0, %s68
    %s83 = sphi 0, %s69
    %s89 = sphi 0, %s91
    %s92 = sphi 0, %s89
    %s93 = sphi 0, %s92
    %s109 = sphi 0, %s93
    %s115 = sphi 0, %s117
    %s118 = sphi 0, %s115
    %s119 = sphi 0, %s118
    %s135 = sphi 0, %s119
  $region4: #{efficientnet_forward.24} parent=0 // loop_header_branch
    %14 = sbr.rel (%p12) target = $region8
  $region5: #{efficientnet_forward.24} parent=0 // loop_body
    %s16 = ssub.s32 %s11, 1
    %s17 = ssub.s32 %s11, 2
    %s18 = sadd.s32 %s11, 1
    %s19 = ssub.s32 %s11, %s18
    %p20 = scmp.eq.s32.totalorder %s19, 0
    %s22 = sadd.s32 %s21, 1
    %s23 = scalar_select %p20, %s21, %s22
    %p26 = pneg %p20
    %p27 = scmp.eq.s32.totalorder %s11, 1
    %p28 = por %p26, %p27
    %p29 = scmp.ne.s32.totalorder %s21, %s24
    %p30 = scmp.eq.s32.totalorder %s11, 0
    %p31 = por %p29, %p30
    %p32 = scmp.ne.s32.totalorder %s21, %s24
    %p33 = scmp.eq.s32.totalorder %s16, 1
    %p34 = por %p32, %p33
    %p35 = scmp.ne.s32.totalorder %s24, %s25
    %p36 = scmp.eq.s32.totalorder %s16, 0
    %p37 = por %p35, %p36
    %p38 = scmp.ne.s32.totalorder %s24, %s25
    %p39 = scmp.eq.s32.totalorder %s17, 1
    %p40 = por %p38, %p39
    %p42 = scmp.ne.s32.totalorder %s25, %s41
    %p43 = scmp.eq.s32.totalorder %s17, 0
    %p44 = por %p42, %p43
    %s46 = sadd.s32 %s45, 1
    %p49 = scmp.eq.s32.totalorder %s11, 1
    %p50 = scmp.ne.s32.totalorder %s45, %s47
    %p51 = scmp.eq.s32.totalorder %s11, 0
    %p52 = por %p50, %p51
    %p53 = scmp.ne.s32.totalorder %s45, %s47
    %p54 = scmp.eq.s32.totalorder %s16, 1
    %p55 = por %p53, %p54
    %p56 = scmp.ne.s32.totalorder %s47, %s48
    %p57 = scmp.eq.s32.totalorder %s16, 0
    %p58 = por %p56, %p57
    %p59 = scmp.ne.s32.totalorder %s47, %s48
    %p60 = scmp.eq.s32.totalorder %s17, 1
    %p61 = por %p59, %p60
    %p63 = scmp.ne.s32.totalorder %s48, %s62
    %p64 = scmp.eq.s32.totalorder %s17, 0
    %p65 = por %p63, %p64
    %s67 = sadd.s32 %s66, 1
    %p70 = scmp.eq.s32.totalorder %s11, 1
    %p71 = scmp.ne.s32.totalorder %s66, %s68
    %p72 = scmp.eq.s32.totalorder %s11, 0
    %p73 = por %p71, %p72
    %p74 = scmp.ne.s32.totalorder %s66, %s68
    %p75 = scmp.eq.s32.totalorder %s16, 1
    %p76 = por %p74, %p75
    %p77 = scmp.ne.s32.totalorder %s68, %s69
    %p78 = scmp.eq.s32.totalorder %s16, 0
    %p79 = por %p77, %p78
    %p80 = scmp.ne.s32.totalorder %s68, %s69
    %p81 = scmp.eq.s32.totalorder %s17, 1
    %p82 = por %p80, %p81
    %p84 = scmp.ne.s32.totalorder %s69, %s83
    %p85 = scmp.eq.s32.totalorder %s17, 0
    %p86 = por %p84, %p85
    %s87 = ssub.s32 %s11, %s18
    %p88 = scmp.eq.s32.totalorder %s87, 0
    %s90 = sadd.s32 %s89, 1
    %s91 = scalar_select %p88, %s89, %s90
    %p94 = pneg %p88
    %p95 = scmp.eq.s32.totalorder %s11, 1
    %p96 = por %p94, %p95
    %p97 = scmp.ne.s32.totalorder %s89, %s92
    %p98 = scmp.eq.s32.totalorder %s11, 0
    %p99 = por %p97, %p98
    %p100 = scmp.ne.s32.totalorder %s89, %s92
    %p101 = scmp.eq.s32.totalorder %s16, 1
    %p102 = por %p100, %p101
    %p103 = scmp.ne.s32.totalorder %s92, %s93
    %p104 = scmp.eq.s32.totalorder %s16, 0
    %p105 = por %p103, %p104
    %p106 = scmp.ne.s32.totalorder %s92, %s93
    %p107 = scmp.eq.s32.totalorder %s17, 1
    %p108 = por %p106, %p107
    %p110 = scmp.ne.s32.totalorder %s93, %s109
    %p111 = scmp.eq.s32.totalorder %s17, 0
    %p112 = por %p110, %p111
    %s113 = ssub.s32 %s11, %s18
    %p114 = scmp.eq.s32.totalorder %s113, 0
    %s116 = sadd.s32 %s115, 1
    %s117 = scalar_select %p114, %s115, %s116
    %p120 = pneg %p114
    %p121 = scmp.eq.s32.totalorder %s11, 1
    %p122 = por %p120, %p121
    %p123 = scmp.ne.s32.totalorder %s115, %s118
    %p124 = scmp.eq.s32.totalorder %s11, 0
    %p125 = por %p123, %p124
    %p126 = scmp.ne.s32.totalorder %s115, %s118
    %p127 = scmp.eq.s32.totalorder %s16, 1
    %p128 = por %p126, %p127
    %p129 = scmp.ne.s32.totalorder %s118, %s119
    %p130 = scmp.eq.s32.totalorder %s16, 0
    %p131 = por %p129, %p130
    %p132 = scmp.ne.s32.totalorder %s118, %s119
    %p133 = scmp.eq.s32.totalorder %s17, 1
    %p134 = por %p132, %p133
    %p136 = scmp.ne.s32.totalorder %s119, %s135
    %p137 = scmp.eq.s32.totalorder %s17, 0
    %p138 = por %p136, %p137
    %p139 = scmp.le.s32.totalorder 1, %s11
    %p140 = scmp.lt.s32.totalorder %s11, 3
    %p141 = pnand %p139, %p140
    %p142 = pneg %p141
    // Predicated region
    $region9: #{efficientnet_forward.24} parent=5 // pred_check
      _
    $region10: #{efficientnet_forward.24} parent=5 // pred_check_branch
      %144 = sbr.rel (%p141) target = $region12
    $region11: #{efficientnet_forward.24} parent=5 // pred_region
      %s145 = ssub.s32 %s11, 1
      // Predicated region
      $region13: #{efficientnet_forward.24} parent=11 // pred_check
        %p146 = pneg %p58
      $region14: #{efficientnet_forward.24} parent=11 // pred_check_branch
        %148 = sbr.rel (%p146) target = $region16
      $region15: #{efficientnet_forward.24} parent=11 // pred_region
        _
      $region16: #{efficientnet_forward.24} parent=11 // pred_fallthru
        _
      // Predicated region
      $region17: #{efficientnet_forward.24} parent=11 // pred_check
        %p149 = pneg %p79
      $region18: #{efficientnet_forward.24} parent=11 // pred_check_branch
        %151 = sbr.rel (%p149) target = $region20
      $region19: #{efficientnet_forward.24} parent=11 // pred_region
        _
      $region20: #{efficientnet_forward.24} parent=11 // pred_fallthru
        _
    $region12: #{efficientnet_forward.24} parent=5 // pred_fallthru
      _
    %p152 = scmp.lt.s32.totalorder %s11, 2
    // Predicated region
    $region21: #{efficientnet_forward.24} parent=5 // pred_check
      %p153 = pneg %p152
    $region22: #{efficientnet_forward.24} parent=5 // pred_check_branch
      %155 = sbr.rel (%p153) target = $region24
    $region23: #{efficientnet_forward.24} parent=5 // pred_region
      // Predicated region
      $region25: #{efficientnet_forward.24} parent=23 // pred_check
        %p156 = pneg %p31
      $region26: #{efficientnet_forward.24} parent=23 // pred_check_branch
        %158 = sbr.rel (%p156) target = $region28
      $region27: #{efficientnet_forward.24} parent=23 // pred_region
        %p159 = scmp.lt.s32.totalorder %s11, 1
        %s160 = scalar_select %p159, %s11, 1
        %s161 = smul.addr %s160, 24
        %s162 = smul.addr %s161, 4
        %s163 = scalar_lea.vmem %s0, %s162
      $region28: #{efficientnet_forward.24} parent=23 // pred_fallthru
        _
    $region24: #{efficientnet_forward.24} parent=5 // pred_fallthru
      _
    %p164 = scmp.le.s32.totalorder 1, %s11
    %p165 = scmp.lt.s32.totalorder %s11, 3
    %p166 = pnand %p164, %p165
    %p167 = pneg %p166
    // Predicated region
    $region29: #{efficientnet_forward.24} parent=5 // pred_check
      _
    $region30: #{efficientnet_forward.24} parent=5 // pred_check_branch
      %169 = sbr.rel (%p166) target = $region32
    $region31: #{efficientnet_forward.24} parent=5 // pred_region
      %s170 = ssub.s32 %s11, 1
      %p171 = scmp.lt.s32.totalorder %s16, 1
      %s172 = scalar_select %p171, %s16, 1
      %s173 = smul.addr %s172, 24
      %s174 = smul.addr %s173, 4
      %s175 = scalar_lea.vmem %s0, %s174
      %p176 = pneg %p37
      %p177 = pneg %p34
      %p178 = pneg %p58
      %p179 = pneg %p55
      %p180 = pneg %p79
      %p181 = pneg %p76
      %p182 = pneg %p105
      %p183 = pneg %p102
      %p184 = scmp.lt.s32.totalorder %s16, 1
      %s185 = scalar_select %p184, %s16, 1
      %s186 = smul.addr %s185, 4
      %s187 = smul.addr %s186, 2
      %s188 = scalar_lea.vmem %s3, %s187
      %p189 = pneg %p131
      %p190 = pneg %p128
      %p191 = scmp.lt.s32.totalorder %s16, 1
      %s192 = scalar_select %p191, %s16, 1
      %s193 = scalar_lea.vmem %s4, %s192
      %p194 = scmp.lt.s32.totalorder %s16, 1
      %s195 = scalar_select %p194, %s16, 1
      %s196 = smul.addr %s195, 24
      %s197 = smul.addr %s196, 4
      %s198 = scalar_lea.vmem %s0, %s197
      %p199 = scmp.lt.s32.totalorder %s16, 1
      %s200 = scalar_select %p199, %s16, 1
      %s201 = smul.addr %s200, 4
      %s202 = smul.addr %s201, 2
      %s203 = scalar_lea.vmem %s3, %s202
      %p204 = scmp.lt.s32.totalorder %s16, 1
      %s205 = scalar_select %p204, %s16, 1
      %s206 = scalar_lea.vmem %s4, %s205
      %v207 = vld [vmem:[%s1] sm:$0xff]
      %v208 = vld [vmem:[%s1 + $0x8] sm:$0xff]
      %v209 = vld [vmem:[%s1 + $0x10] sm:$0xff]
      %v210 = vld [vmem:[%s1 + $0x18] sm:$0x1]
      %v211 = vld [vmem:[%s198] sm:$0x7]
      %v212 = vld [vmem:[%s198 + $0x4] sm:$0x7]
      %v213 = vld [vmem:[%s198 + $0x8] sm:$0x7]
      %v214 = vld [vmem:[%s198 + $0xc] sm:$0x7]
      %v215 = vld [vmem:[%s198 + $0x10] sm:$0x7]
      %v216 = vld [vmem:[%s198 + $0x14] sm:$0x7]
      %v217 = vld [vmem:[%s198 + $0x18] sm:$0x7]
      %v218 = vld [vmem:[%s198 + $0x1c] sm:$0x7]
      %v219 = vld [vmem:[%s198 + $0x20] sm:$0x7]
      %v220 = vld [vmem:[%s198 + $0x24] sm:$0x7]
      %v221 = vld [vmem:[%s198 + $0x28] sm:$0x7]
      %v222 = vld [vmem:[%s198 + $0x2c] sm:$0x7]
      %v223 = vld [vmem:[%s198 + $0x30] sm:$0x7]
      %v224 = vld [vmem:[%s198 + $0x34] sm:$0x7]
      %v225 = vld [vmem:[%s198 + $0x38] sm:$0x7]
      %v226 = vld [vmem:[%s198 + $0x3c] sm:$0x7]
      %v227 = vld [vmem:[%s198 + $0x40] sm:$0x7]
      %v228 = vld [vmem:[%s198 + $0x48] sm:$0x7]
      %v229 = vld [vmem:[%s198 + $0x4c] sm:$0x7]
      %v230 = vld [vmem:[%s198 + $0x50] sm:$0x7]
      %v231 = vld [vmem:[%s198 + $0x54] sm:$0x7]
      %v232 = vld [vmem:[%s198 + $0x58] sm:$0x7]
      %v233 = vunpack.c.l.bf16 %v211
      %v234 = vunpack.c.l.bf16 %v212
      %v235 = vunpack.c.l.bf16 %v213
      %v236 = vunpack.c.l.bf16 %v214
      %v237 = vlaneseq
      %v238 = vshrl.u32 %v237, 7
      %v239 = vsub.s32 0, %v238
      %v240 = vrot.slane %v207, %v239
      %v241 = vmul.f32 %v233, %v240
      %v242 = vmul.f32 %v234, %v240
      %v243 = vmul.f32 %v235, %v240
      %v244 = vmul.f32 %v236, %v240
      %v245 = vadd.f32 %v241, 0.0
      %v246 = vadd.f32 %v242, 0.0
      %v247 = vadd.f32 %v243, 0.0
      %v248 = vadd.f32 %v244, 0.0
      %v249 = vunpack.c.l.bf16 %v215
      %v250 = vlaneseq
      %v251 = vshrl.u32 %v250, 7
      %v252 = vsub.s32 2, %v251
      %v253 = vrot.slane %v208, %v252
      %v254 = vmul.f32 %v234, %v253
      %v255 = vmul.f32 %v235, %v253
      %v256 = vmul.f32 %v236, %v253
      %v257 = vmul.f32 %v249, %v253
      %v258 = vadd.f32 %v245, %v254
      %v259 = vadd.f32 %v246, %v255
      %v260 = vadd.f32 %v247, %v256
      %v261 = vadd.f32 %v248, %v257
      %v262 = vunpack.c.l.bf16 %v216
      %v263 = vlaneseq
      %v264 = vshrl.u32 %v263, 7
      %v265 = vsub.s32 4, %v264
      %v266 = vrot.slane %v209, %v265
      %v267 = vmul.f32 %v235, %v266
      %v268 = vmul.f32 %v236, %v266
      %v269 = vmul.f32 %v249, %v266
      %v270 = vmul.f32 %v262, %v266
      %v271 = vadd.f32 %v258, %v267
      %v272 = vadd.f32 %v259, %v268
      %v273 = vadd.f32 %v260, %v269
      %v274 = vadd.f32 %v261, %v270
      %v275 = vunpack.c.l.bf16 %v223
      %v276 = vunpack.c.l.bf16 %v224
      %v277 = vunpack.c.l.bf16 %v225
      %v278 = vunpack.c.l.bf16 %v226
      %v279 = vlaneseq
      %v280 = vshrl.u32 %v279, 7
      %v281 = vsub.s32 5, %v280
      %v282 = vrot.slane %v207, %v281
      %v283 = vmul.f32 %v275, %v282
      %v284 = vmul.f32 %v276, %v282
      %v285 = vmul.f32 %v277, %v282
      %v286 = vmul.f32 %v278, %v282
      %v287 = vadd.f32 %v271, %v283
      %v288 = vadd.f32 %v272, %v284
      %v289 = vadd.f32 %v273, %v285
      %v290 = vadd.f32 %v274, %v286
      %v291 = vunpack.c.l.bf16 %v227
      %v292 = vlaneseq
      %v293 = vshrl.u32 %v292, 7
      %v294 = vsub.s32 7, %v293
      %v295 = vrot.slane %v208, %v294
      %v296 = vmul.f32 %v276, %v295
      %v297 = vmul.f32 %v277, %v295
      %v298 = vmul.f32 %v278, %v295
      %v299 = vmul.f32 %v291, %v295
      %v300 = vadd.f32 %v287, %v296
      %v301 = vadd.f32 %v288, %v297
      %v302 = vadd.f32 %v289, %v298
      %v303 = vadd.f32 %v290, %v299
      %v304 = vunpack.c.l.bf16 %v217
      %v305 = vunpack.c.l.bf16 %v218
      %v306 = vunpack.c.l.bf16 %v219
      %v307 = vunpack.c.l.bf16 %v220
      %v308 = vlaneseq
      %v309 = vshrl.u32 %v308, 7
      %v310 = vsub.s32 1, %v309
      %v311 = vrot.slane %v207, %v310
      %v312 = vmul.f32 %v304, %v311
      %v313 = vmul.f32 %v305, %v311
      %v314 = vmul.f32 %v306, %v311
      %v315 = vmul.f32 %v307, %v311
      %v316 = vadd.f32 %v300, %v312
      %v317 = vadd.f32 %v301, %v313
      %v318 = vadd.f32 %v302, %v314
      %v319 = vadd.f32 %v303, %v315
      %v320 = vunpack.c.l.bf16 %v221
      %v321 = vlaneseq
      %v322 = vshrl.u32 %v321, 7
      %v323 = vsub.s32 3, %v322
      %v324 = vrot.slane %v208, %v323
      %v325 = vmul.f32 %v305, %v324
      %v326 = vmul.f32 %v306, %v324
      %v327 = vmul.f32 %v307, %v324
      %v328 = vmul.f32 %v320, %v324
      %v329 = vadd.f32 %v316, %v325
      %v330 = vadd.f32 %v317, %v326
      %v331 = vadd.f32 %v318, %v327
      %v332 = vadd.f32 %v319, %v328
      %v333 = vunpack.c.l.bf16 %v222
      %v334 = vlaneseq
      %v335 = vshrl.u32 %v334, 7
      %v336 = vsub.s32 5, %v335
      %v337 = vrot.slane %v209, %v336
      %v338 = vmul.f32 %v306, %v337
      %v339 = vmul.f32 %v307, %v337
      %v340 = vmul.f32 %v320, %v337
      %v341 = vmul.f32 %v333, %v337
      %v342 = vadd.f32 %v329, %v338
      %v343 = vadd.f32 %v330, %v339
      %v344 = vadd.f32 %v331, %v340
      %v345 = vadd.f32 %v332, %v341
      %v346 = vunpack.c.l.bf16 %v228
      %v347 = vunpack.c.l.bf16 %v229
      %v348 = vunpack.c.l.bf16 %v230
      %v349 = vunpack.c.l.bf16 %v231
      %v350 = vlaneseq
      %v351 = vshrl.u32 %v350, 7
      %v352 = vsub.s32 6, %v351
      %v353 = vrot.slane %v207, %v352
      %v354 = vmul.f32 %v346, %v353
      %v355 = vmul.f32 %v347, %v353
      %v356 = vmul.f32 %v348, %v353
      %v357 = vmul.f32 %v349, %v353
      %v358 = vadd.f32 %v342, %v354
      %v359 = vadd.f32 %v343, %v355
      %v360 = vadd.f32 %v344, %v356
      %v361 = vadd.f32 %v345, %v357
      %v362 = vunpack.c.l.bf16 %v232
      %v363 = vlaneseq
      %v364 = vshrl.u32 %v363, 7
      %v365 = vsub.s32 0, %v364
      %v366 = vrot.slane %v209, %v365
      %v367 = vmul.f32 %v347, %v366
      %v368 = vmul.f32 %v348, %v366
      %v369 = vmul.f32 %v349, %v366
      %v370 = vmul.f32 %v362, %v366
      %v371 = vadd.f32 %v358, %v367
      %v372 = vadd.f32 %v359, %v368
      %v373 = vadd.f32 %v360, %v369
      %v374 = vadd.f32 %v361, %v370
      %v375 = vlaneseq
      %v376 = vshrl.u32 %v375, 7
      %v377 = vsub.s32 2, %v376
      %v378 = vrot.slane %v207, %v377
      %v379 = vmul.f32 %v233, %v378
      %v380 = vmul.f32 %v234, %v378
      %v381 = vmul.f32 %v235, %v378
      %v382 = vmul.f32 %v236, %v378
      %v387 = vrot.slane %v379, 1
      %v388 = vrot.slane %v380, 1
      %v389 = vrot.slane %v381, 1
      %v390 = vrot.slane %v382, 1
      %v395 = vadd.f32 %v371, %v387
      %v396 = vadd.f32 %v372, %v388
      %v397 = vadd.f32 %v373, %v389
      %v398 = vadd.f32 %v374, %v390
      %v399 = vlaneseq
      %v400 = vshrl.u32 %v399, 7
      %v401 = vsub.s32 4, %v400
      %v402 = vrot.slane %v208, %v401
      %v403 = vmul.f32 %v234, %v402
      %v404 = vmul.f32 %v235, %v402
      %v405 = vmul.f32 %v236, %v402
      %v406 = vmul.f32 %v249, %v402
      %v411 = vrot.slane %v403, 1
      %v412 = vrot.slane %v404, 1
      %v413 = vrot.slane %v405, 1
      %v414 = vrot.slane %v406, 1
      %v419 = vadd.f32 %v395, %v411
      %v420 = vadd.f32 %v396, %v412
      %v421 = vadd.f32 %v397, %v413
      %v422 = vadd.f32 %v398, %v414
      %v423 = vlaneseq
      %v424 = vshrl.u32 %v423, 7
      %v425 = vsub.s32 6, %v424
      %v426 = vrot.slane %v209, %v425
      %v427 = vmul.f32 %v235, %v426
      %v428 = vmul.f32 %v236, %v426
      %v429 = vmul.f32 %v249, %v426
      %v430 = vmul.f32 %v262, %v426
      %v435 = vrot.slane %v427, 1
      %v436 = vrot.slane %v428, 1
      %v437 = vrot.slane %v429, 1
      %v438 = vrot.slane %v430, 1
      %v443 = vadd.f32 %v419, %v435
      %v444 = vadd.f32 %v420, %v436
      %v445 = vadd.f32 %v421, %v437
      %v446 = vadd.f32 %v422, %v438
      %v447 = vlaneseq
      %v448 = vshrl.u32 %v447, 7
      %v449 = vsub.s32 7, %v448
      %v450 = vrot.slane %v207, %v449
      %v451 = vmul.f32 %v275, %v450
      %v452 = vmul.f32 %v276, %v450
      %v453 = vmul.f32 %v277, %v450
      %v454 = vmul.f32 %v278, %v450
      %v459 = vrot.slane %v451, 1
      %v460 = vrot.slane %v452, 1
      %v461 = vrot.slane %v453, 1
      %v462 = vrot.slane %v454, 1
      %v467 = vadd.f32 %v443, %v459
      %v468 = vadd.f32 %v444, %v460
      %v469 = vadd.f32 %v445, %v461
      %v470 = vadd.f32 %v446, %v462
      %v471 = vlaneseq
      %v472 = vshrl.u32 %v471, 7
      %v473 = vsub.s32 1, %v472
      %v474 = vrot.slane %v209, %v473
      %v475 = vmul.f32 %v276, %v474
      %v476 = vmul.f32 %v277, %v474
      %v477 = vmul.f32 %v278, %v474
      %v478 = vmul.f32 %v291, %v474
      %v483 = vrot.slane %v475, 1
      %v484 = vrot.slane %v476, 1
      %v485 = vrot.slane %v477, 1
      %v486 = vrot.slane %v478, 1
      %v491 = vadd.f32 %v467, %v483
      %v492 = vadd.f32 %v468, %v484
      %v493 = vadd.f32 %v469, %v485
      %v494 = vadd.f32 %v470, %v486
      %v495 = vlaneseq
      %v496 = vshrl.u32 %v495, 7
      %v497 = vsub.s32 3, %v496
      %v498 = vrot.slane %v207, %v497
      %v499 = vmul.f32 %v304, %v498
      %v500 = vmul.f32 %v305, %v498
      %v501 = vmul.f32 %v306, %v498
      %v502 = vmul.f32 %v307, %v498
      %v507 = vrot.slane %v499, 1
      %v508 = vrot.slane %v500, 1
      %v509 = vrot.slane %v501, 1
      %v510 = vrot.slane %v502, 1
      %v515 = vadd.f32 %v491, %v507
      %v516 = vadd.f32 %v492, %v508
      %v517 = vadd.f32 %v493, %v509
      %v518 = vadd.f32 %v494, %v510
      %v519 = vlaneseq
      %v520 = vshrl.u32 %v519, 7
      %v521 = vsub.s32 5, %v520
      %v522 = vrot.slane %v208, %v521
      %v523 = vmul.f32 %v305, %v522
      %v524 = vmul.f32 %v306, %v522
      %v525 = vmul.f32 %v307, %v522
      %v526 = vmul.f32 %v320, %v522
      %v531 = vrot.slane %v523, 1
      %v532 = vrot.slane %v524, 1
      %v533 = vrot.slane %v525, 1
      %v534 = vrot.slane %v526, 1
      %v539 = vadd.f32 %v515, %v531
      %v540 = vadd.f32 %v516, %v532
      %v541 = vadd.f32 %v517, %v533
      %v542 = vadd.f32 %v518, %v534
      %v543 = vlaneseq
      %v544 = vshrl.u32 %v543, 7
      %v545 = vsub.s32 7, %v544
      %v546 = vrot.slane %v209, %v545
      %v547 = vmul.f32 %v306, %v546
      %v548 = vmul.f32 %v307, %v546
      %v549 = vmul.f32 %v320, %v546
      %v550 = vmul.f32 %v333, %v546
      %v555 = vrot.slane %v547, 1
      %v556 = vrot.slane %v548, 1
      %v557 = vrot.slane %v549, 1
      %v558 = vrot.slane %v550, 1
      %v563 = vadd.f32 %v539, %v555
      %v564 = vadd.f32 %v540, %v556
      %v565 = vadd.f32 %v541, %v557
      %v566 = vadd.f32 %v542, %v558
      %v567 = vlaneseq
      %v568 = vshrl.u32 %v567, 7
      %v569 = vsub.s32 0, %v568
      %v570 = vrot.slane %v208, %v569
      %v571 = vmul.f32 %v346, %v570
      %v572 = vmul.f32 %v347, %v570
      %v573 = vmul.f32 %v348, %v570
      %v574 = vmul.f32 %v349, %v570
      %v579 = vrot.slane %v571, 1
      %v580 = vrot.slane %v572, 1
      %v581 = vrot.slane %v573, 1
      %v582 = vrot.slane %v574, 1
      %v587 = vadd.f32 %v563, %v579
      %v588 = vadd.f32 %v564, %v580
      %v589 = vadd.f32 %v565, %v581
      %v590 = vadd.f32 %v566, %v582
      %v591 = vlaneseq
      %v592 = vshrl.u32 %v591, 7
      %v593 = vsub.s32 2, %v592
      %v594 = vrot.slane %v209, %v593
      %v595 = vmul.f32 %v347, %v594
      %v596 = vmul.f32 %v348, %v594
      %v597 = vmul.f32 %v349, %v594
      %v598 = vmul.f32 %v362, %v594
      %v603 = vrot.slane %v595, 1
      %v604 = vrot.slane %v596, 1
      %v605 = vrot.slane %v597, 1
      %v606 = vrot.slane %v598, 1
      %v611 = vadd.f32 %v587, %v603
      %v612 = vadd.f32 %v588, %v604
      %v613 = vadd.f32 %v589, %v605
      %v614 = vadd.f32 %v590, %v606
      %v615 = vlaneseq
      %v616 = vshrl.u32 %v615, 7
      %v617 = vsub.s32 4, %v616
      %v618 = vrot.slane %v207, %v617
      %v619 = vmul.f32 %v233, %v618
      %v620 = vmul.f32 %v234, %v618
      %v621 = vmul.f32 %v235, %v618
      %v622 = vmul.f32 %v236, %v618
      %v627 = vrot.slane %v619, 2
      %v628 = vrot.slane %v620, 2
      %v629 = vrot.slane %v621, 2
      %v630 = vrot.slane %v622, 2
      %v635 = vadd.f32 %v611, %v627
      %v636 = vadd.f32 %v612, %v628
      %v637 = vadd.f32 %v613, %v629
      %v638 = vadd.f32 %v614, %v630
      %v639 = vlaneseq
      %v640 = vshrl.u32 %v639, 7
      %v641 = vsub.s32 6, %v640
      %v642 = vrot.slane %v208, %v641
      %v643 = vmul.f32 %v234, %v642
      %v644 = vmul.f32 %v235, %v642
      %v645 = vmul.f32 %v236, %v642
      %v646 = vmul.f32 %v249, %v642
      %v651 = vrot.slane %v643, 2
      %v652 = vrot.slane %v644, 2
      %v653 = vrot.slane %v645, 2
      %v654 = vrot.slane %v646, 2
      %v659 = vadd.f32 %v635, %v651
      %v660 = vadd.f32 %v636, %v652
      %v661 = vadd.f32 %v637, %v653
      %v662 = vadd.f32 %v638, %v654
      %v663 = vlaneseq
      %v664 = vshrl.u32 %v663, 7
      %v665 = vsub.s32 0, %v664
      %v666 = vrot.slane %v210, %v665
      %v667 = vmul.f32 %v235, %v666
      %v668 = vmul.f32 %v236, %v666
      %v669 = vmul.f32 %v249, %v666
      %v670 = vmul.f32 %v262, %v666
      %v675 = vrot.slane %v667, 2
      %v676 = vrot.slane %v668, 2
      %v677 = vrot.slane %v669, 2
      %v678 = vrot.slane %v670, 2
      %v683 = vadd.f32 %v659, %v675
      %v684 = vadd.f32 %v660, %v676
      %v685 = vadd.f32 %v661, %v677
      %v686 = vadd.f32 %v662, %v678
      %v687 = vlaneseq
      %v688 = vshrl.u32 %v687, 7
      %v689 = vsub.s32 1, %v688
      %v690 = vrot.slane %v208, %v689
      %v691 = vmul.f32 %v275, %v690
      %v692 = vmul.f32 %v276, %v690
      %v693 = vmul.f32 %v277, %v690
      %v694 = vmul.f32 %v278, %v690
      %v699 = vrot.slane %v691, 2
      %v700 = vrot.slane %v692, 2
      %v701 = vrot.slane %v693, 2
      %v702 = vrot.slane %v694, 2
      %v707 = vadd.f32 %v683, %v699
      %v708 = vadd.f32 %v684, %v700
      %v709 = vadd.f32 %v685, %v701
      %v710 = vadd.f32 %v686, %v702
      %v711 = vlaneseq
      %v712 = vshrl.u32 %v711, 7
      %v713 = vsub.s32 3, %v712
      %v714 = vrot.slane %v209, %v713
      %v715 = vmul.f32 %v276, %v714
      %v716 = vmul.f32 %v277, %v714
      %v717 = vmul.f32 %v278, %v714
      %v718 = vmul.f32 %v291, %v714
      %v723 = vrot.slane %v715, 2
      %v724 = vrot.slane %v716, 2
      %v725 = vrot.slane %v717, 2
      %v726 = vrot.slane %v718, 2
      %v731 = vadd.f32 %v707, %v723
      %v732 = vadd.f32 %v708, %v724
      %v733 = vadd.f32 %v709, %v725
      %v734 = vadd.f32 %v710, %v726
      %v735 = vld [vmem:[%s2] sm:$0x1]
      %v737 = vlaneseq
      %v738 = vshrl.u32 %v737, 7
      %v739 = vsub.s32 0, %v738
      %v740 = vrot.slane %v735, %v739
      %v742 = vadd.f32 %v731, %v740
      %v743 = vadd.f32 %v732, %v740
      %v744 = vadd.f32 %v733, %v740
      %v745 = vadd.f32 %v734, %v740
      %v746 = vxor.u32 %v742, 2147483648
      %v747 = vxor.u32 %v743, 2147483648
      %v748 = vxor.u32 %v744, 2147483648
      %v749 = vxor.u32 %v745, 2147483648
      %v750 = vmul.f32 %v746, 1.442695
      %v751 = vpow.pop %v750
      %v752 = vmul.f32 %v747, 1.442695
      %v753 = vpow.pop %v752
      %v754 = vmul.f32 %v748, 1.442695
      %v755 = vpow.pop %v754
      %v756 = vmul.f32 %v749, 1.442695
      %v757 = vpow.pop %v756
      %v758 = vadd.f32 %v751, 1.0
      %v759 = vadd.f32 %v753, 1.0
      %v760 = vadd.f32 %v755, 1.0
      %v761 = vadd.f32 %v757, 1.0
      %v762 = vrcp.pop %v758
      %v763 = vmul.f32 1.0, %v762
      %v764 = vrcp.pop %v759
      %v765 = vmul.f32 1.0, %v764
      %v766 = vrcp.pop %v760
      %v767 = vmul.f32 1.0, %v766
      %v768 = vrcp.pop %v761
      %v769 = vmul.f32 1.0, %v768
      %v770 = vmul.f32 %v742, %v763
      %v771 = vmul.f32 %v743, %v765
      %v772 = vmul.f32 %v744, %v767
      %v773 = vmul.f32 %v745, %v769
      %v774 = vpack.c.bf16 %v770, %v770
      %v775 = vpack.c.bf16 %v771, %v771
      %v776 = vpack.c.bf16 %v772, %v772
      %v777 = vpack.c.bf16 %v773, %v773
      %vm778 = vcmask 779264
      %779 = vst.msk [vmem:[%s203] sm:$0x3] %vm778, %v774
      %780 = vst.msk [vmem:[%s203 + $0x2] sm:$0x3] %vm778, %v775
      %781 = vst.msk [vmem:[%s203 + $0x4] sm:$0x3] %vm778, %v776
      %782 = vst.msk [vmem:[%s203 + $0x6] sm:$0x3] %vm778, %v777
      %vm783 = vcmask 781312
      %v784 = vsel %vm783, %v770, 0.0
      %v785 = vrot.slane %v784, 4
      %v786 = vadd.f32 %v784, %v785
      %v787 = vrot.slane %v786, 2
      %v788 = vadd.f32 %v786, %v787
      %v789 = vrot.slane %v788, 1
      %v790 = vadd.f32 %v788, %v789
      %v791 = vsel %vm783, %v771, 0.0
      %v792 = vrot.slane %v791, 4
      %v793 = vadd.f32 %v791, %v792
      %v794 = vrot.slane %v793, 2
      %v795 = vadd.f32 %v793, %v794
      %v796 = vrot.slane %v795, 1
      %v797 = vadd.f32 %v795, %v796
      %v798 = vsel %vm783, %v772, 0.0
      %v799 = vrot.slane %v798, 4
      %v800 = vadd.f32 %v798, %v799
      %v801 = vrot.slane %v800, 2
      %v802 = vadd.f32 %v800, %v801
      %v803 = vrot.slane %v802, 1
      %v804 = vadd.f32 %v802, %v803
      %v805 = vsel %vm783, %v773, 0.0
      %v806 = vrot.slane %v805, 4
      %v807 = vadd.f32 %v805, %v806
      %v808 = vrot.slane %v807, 2
      %v809 = vadd.f32 %v807, %v808
      %v810 = vrot.slane %v809, 1
      %v811 = vadd.f32 %v809, %v810
      %vm812 = vcmask 785408
      %v813 = vsel %vm812, %v790, 0.0
      %v814 = vsel %vm812, %v797, 0.0
      %v815 = vadd.f32 %v813, %v814
      %v816 = vsel %vm812, %v804, 0.0
      %v817 = vadd.f32 %v815, %v816
      %v818 = vsel %vm812, %v811, 0.0
      %v819 = vadd.f32 %v817, %v818
      %vm820 = vcmask 778240
      %821 = vst.msk [vmem:[%s206] sm:$0x1] %vm820, %v819
      %p822 = scmp.lt.s32.totalorder %s16, 1
      %s823 = scalar_select %p822, %s16, 1
      %s824 = smul.addr %s823, 4
      %s825 = smul.addr %s824, 2
      %s826 = scalar_lea.vmem %s3, %s825
      %p827 = scmp.lt.s32.totalorder %s16, 1
      %s828 = scalar_select %p827, %s16, 1
      %s829 = scalar_lea.vmem %s4, %s828
      // Predicated region
      $region33: #{efficientnet_forward.24} parent=31 // pred_check
        %p830 = pneg %p102
      $region34: #{efficientnet_forward.24} parent=31 // pred_check_branch
        %832 = sbr.rel (%p830) target = $region36
      $region35: #{efficientnet_forward.24} parent=31 // pred_region
        _
      $region36: #{efficientnet_forward.24} parent=31 // pred_fallthru
        _
      // Predicated region
      $region37: #{efficientnet_forward.24} parent=31 // pred_check
        %p833 = pneg %p128
      $region38: #{efficientnet_forward.24} parent=31 // pred_check_branch
        %835 = sbr.rel (%p833) target = $region40
      $region39: #{efficientnet_forward.24} parent=31 // pred_region
        _
      $region40: #{efficientnet_forward.24} parent=31 // pred_fallthru
        _
    $region32: #{efficientnet_forward.24} parent=5 // pred_fallthru
      _
    %p836 = scmp.le.s32.totalorder 2, %s11
    // Predicated region
    $region41: #{efficientnet_forward.24} parent=5 // pred_check
      %p837 = pneg %p836
    $region42: #{efficientnet_forward.24} parent=5 // pred_check_branch
      %839 = sbr.rel (%p837) target = $region44
    $region43: #{efficientnet_forward.24} parent=5 // pred_region
      %s840 = ssub.s32 %s11, 2
      // Predicated region
      $region45: #{efficientnet_forward.24} parent=43 // pred_check
        %p841 = pneg %p108
      $region46: #{efficientnet_forward.24} parent=43 // pred_check_branch
        %843 = sbr.rel (%p841) target = $region48
      $region47: #{efficientnet_forward.24} parent=43 // pred_region
        %p844 = scmp.lt.s32.totalorder %s17, 1
        %s845 = scalar_select %p844, %s17, 1
        %s846 = smul.addr %s845, 4
        %s847 = smul.addr %s846, 2
        %s848 = scalar_lea.vmem %s3, %s847
      $region48: #{efficientnet_forward.24} parent=43 // pred_fallthru
        _
      // Predicated region
      $region49: #{efficientnet_forward.24} parent=43 // pred_check
        %p849 = pneg %p134
      $region50: #{efficientnet_forward.24} parent=43 // pred_check_branch
        %851 = sbr.rel (%p849) target = $region52
      $region51: #{efficientnet_forward.24} parent=43 // pred_region
        %p852 = scmp.lt.s32.totalorder %s17, 1
        %s853 = scalar_select %p852, %s17, 1
        %s854 = scalar_lea.vmem %s4, %s853
      $region52: #{efficientnet_forward.24} parent=43 // pred_fallthru
        _
    $region44: #{efficientnet_forward.24} parent=5 // pred_fallthru
      _
  $region6: #{efficientnet_forward.24} parent=0 // loop_footer
    %s15 = sadd.s32 1, %s11
  $region7: #{efficientnet_forward.24} parent=0 // loop_footer_branch
    %10 = sbr.rel target = $region3
  $region8: #{efficientnet_forward.24} parent=0 // loop_exit
    _

// kernel: efficientnet_forward.27
$region0: #{efficientnet_forward.27}
  #allocation0 [shape = 'u32[]', space=smem, size = 0x4, offset = 0x4, fixed_abs, tag = 'smem constant byte address 0x4 - core index']
  #allocation1 [shape = 'u32[144,128]{1,0:T(1,128)}', space=vmem, size = 0x12000, scoped, tag = 'internal scratch']
  %s0 = inlined_call_operand.vmem [shape: bf16[32,40], index: 0, kind: input, shape index: {}]
  %s1 = inlined_call_operand.vmem [shape: bf16[40,128], index: 1, kind: input, shape index: {}]
  %s2 = inlined_call_operand.vmem [shape: f32[1,128], index: 2, kind: input, shape index: {}]
  %s3 = inlined_call_operand.vmem [shape: bf16[32,128], index: 3, kind: output, shape index: {}]
  %s4 = sld [smem:[#allocation0]]
  $region22: #{efficientnet_forward.27} parent=0
    _
  %s6 = ssub.s32 1, %s4
  %s7 = scalar_select 0, %s6, %s4
  // Predicated region
  $region2: #{efficientnet_forward.27} parent=0 // pred_check
    _
  $region3: #{efficientnet_forward.27} parent=0 // pred_check_branch
    %9 = sbr.rel (0) target = $region5
  $region4: #{efficientnet_forward.27} parent=0 // pred_region
    _
  $region5: #{efficientnet_forward.27} parent=0 // pred_fallthru
    _
  // Predicated region
  $region6: #{efficientnet_forward.27} parent=0 // pred_check
    _
  $region7: #{efficientnet_forward.27} parent=0 // pred_check_branch
    %11 = sbr.rel (0) target = $region9
  $region8: #{efficientnet_forward.27} parent=0 // pred_region
    _
  $region9: #{efficientnet_forward.27} parent=0 // pred_fallthru
    _
  // Predicated region
  $region10: #{efficientnet_forward.27} parent=0 // pred_check
    _
  $region11: #{efficientnet_forward.27} parent=0 // pred_check_branch
    %13 = sbr.rel (0) target = $region13
  $region12: #{efficientnet_forward.27} parent=0 // pred_region
    _
  $region13: #{efficientnet_forward.27} parent=0 // pred_fallthru
    _
  %v15 = vld [vmem:[%s0] sm:$0xf]
  %v16 = vld [vmem:[%s0 + $0x4] sm:$0xf]
  %v17 = vld [vmem:[%s0 + $0x8] sm:$0xf]
  %v18 = vld [vmem:[%s0 + $0xc] sm:$0xf]
  %v19 = vld [vmem:[%s1] sm:$0xf]
  %v20 = vld [vmem:[%s1 + $0x4] sm:$0xf]
  %v21 = vld [vmem:[%s1 + $0x8] sm:$0xf]
  %v22 = vld [vmem:[%s1 + $0xc] sm:$0xf]
  %v23 = vld [vmem:[%s1 + $0x10] sm:$0xf]
  %v24 = vld [vmem:[%s2] sm:$0x1]
  %v26 = vlaneseq
  %v27 = vshrl.u32 %v26, 7
  %v28 = vsub.s32 0, %v27
  %v29 = vrot.slane %v24, %v28
  %v35 = vunpack.c.l.b16 %v15
  %v36 = vunpack.c.l.b16 %v16
  %v37 = vunpack.c.l.b16 %v17
  %v38 = vunpack.c.l.b16 %v18
  %v39 = vpack.c.b16 %v36, %v35
  %v40 = vpack.c.b16 %v38, %v37
  %v46 = vunpack.c.l.b16 %v19
  %v47 = vunpack.c.l.b16 %v20
  %v48 = vunpack.c.l.b16 %v21
  %v49 = vunpack.c.l.b16 %v22
  %v50 = vunpack.c.l.b16 %v23
  %v51 = vpack.c.b16 %v47, %v46
  %v52 = vpack.c.b16 %v49, %v48
  %v53 = vpack.c.b16 %v50, %v50
  %vm56 = vcmask 326656
  %v58 = vsel %vm56, %v39, 0
  %v61 = vsel %vm56, %v40, 0
  %vm63 = vcmask 1043456
  %v65 = vsel %vm63, %v53, 0
  %67 = vmatprep.subr.bf16.mxu0 0
  %68 = vmatpush1.bf16.msra.mxu0 %v51
  %69 = vmatprep.subr.bf16.mxu0 0
  %70 = vmatpush1.bf16.msra.mxu0 %v52
  %71 = vmatprep.subr.bf16.mxu0 0
  %72 = vmatpush1.bf16.msra.mxu0 %v65
  %73 = vmatprep.subr.bf16.mxu0 0
  %74 = vmatpush1.bf16.msra.mxu0 0
  %75 = vmatprep.subr.bf16.mxu0 0
  %76 = vmatpush1.bf16.msra.mxu0 0
  %77 = vmatprep.subr.bf16.mxu0 0
  %78 = vmatpush1.bf16.msra.mxu0 0
  %79 = vmatprep.subr.bf16.mxu0 0
  %80 = vmatpush1.bf16.msra.mxu0 0
  %81 = vmatprep.subr.bf16.mxu0 0
  %82 = vmatpush1.bf16.msra.mxu0 0
  %83 = vmatprep.subr.bf16.mxu0 0
  %84 = vmatpush1.bf16.msra.mxu0 0
  %85 = vmatprep.subr.bf16.mxu0 0
  %86 = vmatpush1.bf16.msra.mxu0 0
  %87 = vmatprep.subr.bf16.mxu0 0
  %88 = vmatpush1.bf16.msra.mxu0 0
  %89 = vmatprep.subr.bf16.mxu0 0
  %90 = vmatpush1.bf16.msra.mxu0 0
  %91 = vmatprep.subr.bf16.mxu0 0
  %92 = vmatpush1.bf16.msra.mxu0 0
  %93 = vmatprep.subr.bf16.mxu0 0
  %94 = vmatpush1.bf16.msra.mxu0 0
  %95 = vmatprep.subr.bf16.mxu0 0
  %96 = vmatpush1.bf16.msra.mxu0 0
  %97 = vmatprep.subr.bf16.mxu0 0
  %98 = vmatpush1.bf16.msra.mxu0 0
  %99 = vmatprep.mubr.bf16.mxu0 0
  %100 = vmatmul.mubr.bf16.gmra.mrb[0].mxu0 %v58
  %v101 = vpop.f32.mrb[0].mxu0
  %v102 = vadd.f32 %v29, %v101
  %v103 = vpop.f32.mrb[0].mxu0
  %v104 = vpop.f32.mrb[0].mxu0
  %v105 = vadd.f32 %v29, %v104
  %v106 = vpop.f32.mrb[0].mxu0
  %107 = vmatprep.mubr.bf16.mxu0 0
  %108 = vmatmul.mubr.bf16.gmra.mrb[0].mxu0 %v61
  %v109 = vpop.f32.mrb[0].mxu0
  %v110 = vadd.f32 %v29, %v109
  %v111 = vpop.f32.mrb[0].mxu0
  %v112 = vpop.f32.mrb[0].mxu0
  %v113 = vadd.f32 %v29, %v112
  %v114 = vpop.f32.mrb[0].mxu0
  %115 = vdwg.mxu0
  %v116 = vxor.u32 %v102, 2147483648
  %v117 = vxor.u32 %v105, 2147483648
  %v118 = vxor.u32 %v110, 2147483648
  %v119 = vxor.u32 %v113, 2147483648
  %v120 = vmul.f32 %v116, 1.442695
  %v121 = vpow.pop %v120
  %v122 = vmul.f32 %v117, 1.442695
  %v123 = vpow.pop %v122
  %v124 = vmul.f32 %v118, 1.442695
  %v125 = vpow.pop %v124
  %v126 = vmul.f32 %v119, 1.442695
  %v127 = vpow.pop %v126
  %v128 = vadd.f32 %v121, 1.0
  %v129 = vadd.f32 %v123, 1.0
  %v130 = vadd.f32 %v125, 1.0
  %v131 = vadd.f32 %v127, 1.0
  %v132 = vrcp.pop %v128
  %v133 = vmul.f32 1.0, %v132
  %v134 = vrcp.pop %v129
  %v135 = vmul.f32 1.0, %v134
  %v136 = vrcp.pop %v130
  %v137 = vmul.f32 1.0, %v136
  %v138 = vrcp.pop %v131
  %v139 = vmul.f32 1.0, %v138
  %v140 = vmul.f32 %v102, %v133
  %v141 = vmul.f32 %v105, %v135
  %v142 = vmul.f32 %v110, %v137
  %v143 = vmul.f32 %v113, %v139
  %v144 = vpack.c.bf16 %v141, %v140
  %v145 = vpack.c.bf16 %v143, %v142
  %v148 = vunpack.c.l.b16 %v144
  %v149 = vunpack.c.h.b16 %v144
  %v150 = vunpack.c.l.b16 %v145
  %v151 = vunpack.c.h.b16 %v145
  %v152 = vpack.c.b16 %v148, %v148
  %v153 = vpack.c.b16 %v149, %v149
  %v154 = vpack.c.b16 %v150, %v150
  %v155 = vpack.c.b16 %v151, %v151
  %160 = vst [vmem:[%s3] sm:$0xf] %v152
  %161 = vst [vmem:[%s3 + $0x4] sm:$0xf] %v153
  %162 = vst [vmem:[%s3 + $0x8] sm:$0xf] %v154
  %163 = vst [vmem:[%s3 + $0xc] sm:$0xf] %v155
  // Predicated region
  $region14: #{efficientnet_forward.27} parent=0 // pred_check
    _
  $region15: #{efficientnet_forward.27} parent=0 // pred_check_branch
    %165 = sbr.rel (0) target = $region17
  $region16: #{efficientnet_forward.27} parent=0 // pred_region
    _
  $region17: #{efficientnet_forward.27} parent=0 // pred_fallthru
    _
  // Predicated region
  $region18: #{efficientnet_forward.27} parent=0 // pred_check
    _
  $region19: #{efficientnet_forward.27} parent=0 // pred_check_branch
    %167 = sbr.rel (0) target = $region21
  $region20: #{efficientnet_forward.27} parent=0 // pred_region
    _
  $region21: #{efficientnet_forward.27} parent=0 // pred_fallthru
    _

// kernel: efficientnet_forward.28
$region0: #{efficientnet_forward.28}
  #allocation0 [shape = 'u32[]', space=smem, size = 0x4, offset = 0x4, fixed_abs, tag = 'smem constant byte address 0x4 - core index']
  #allocation1 [shape = 'u32[144,128]{1,0:T(1,128)}', space=vmem, size = 0x12000, scoped, tag = 'internal scratch']
  %s0 = inlined_call_operand.vmem [shape: bf16[2,16,128], index: 0, kind: input, shape index: {}]
  %s1 = inlined_call_operand.vmem [shape: f32[2,1,128], index: 1, kind: output, shape index: {}]
  %s2 = sld [smem:[#allocation0]]
  $region45: #{efficientnet_forward.28} parent=0
    _
  %s4 = ssub.s32 1, %s2
  %s5 = scalar_select 0, %s4, %s2
  loop: start=0, step=1, limit=4
  $region2: #{efficientnet_forward.28} parent=0 // loop_pre_header
    _
  $region3: #{efficientnet_forward.28} parent=0 // loop_header
    %s7 = sphi 0, %s11
    %p8 = scmp.ge.s32.totalorder %s7, 4
    %s14 = sphi 0, %s26
    %s15 = sphi 0, %s22
    %s16 = sphi 0, %s14
    %s17 = sphi 0, %s15
    %s18 = sphi 0, %s16
    %s19 = sphi 0, %s17
    %s31 = sphi 0, %s33
    %s34 = sphi 0, %s31
    %s35 = sphi 0, %s34
    %s51 = sphi 0, %s35
    %s57 = sphi 0, %s59
    %s60 = sphi 0, %s57
    %s61 = sphi 0, %s60
    %s77 = sphi 0, %s61
  $region4: #{efficientnet_forward.28} parent=0 // loop_header_branch
    %10 = sbr.rel (%p8) target = $region8
  $region5: #{efficientnet_forward.28} parent=0 // loop_body
    %s12 = ssub.s32 %s7, 1
    %s13 = ssub.s32 %s7, 2
    %s20 = sadd.s32 1, %s15
    %p21 = scmp.ge.s32.totalorder %s20, 1
    %s22 = scalar_select %p21, 0, %s20
    %s23 = sadd.s32 1, %s14
    %s24 = scalar_select %p21, %s23, %s14
    %p25 = scmp.ge.s32.totalorder %s24, 2
    %s26 = scalar_select %p25, 0, %s24
    %s27 = ssub.s32 %s14, %s26
    %s28 = ssub.s32 %s15, %s22
    %s29 = sor.u32 %s27, %s28
    %p30 = scmp.eq.s32.totalorder %s29, 0
    %s32 = sadd.s32 %s31, 1
    %s33 = scalar_select %p30, %s31, %s32
    %p36 = pneg %p30
    %p37 = scmp.eq.s32.totalorder %s7, 1
    %p38 = por %p36, %p37
    %p39 = scmp.ne.s32.totalorder %s31, %s34
    %p40 = scmp.eq.s32.totalorder %s7, 0
    %p41 = por %p39, %p40
    %p42 = scmp.ne.s32.totalorder %s31, %s34
    %p43 = scmp.eq.s32.totalorder %s12, 1
    %p44 = por %p42, %p43
    %p45 = scmp.ne.s32.totalorder %s34, %s35
    %p46 = scmp.eq.s32.totalorder %s12, 0
    %p47 = por %p45, %p46
    %p48 = scmp.ne.s32.totalorder %s34, %s35
    %p49 = scmp.eq.s32.totalorder %s13, 1
    %p50 = por %p48, %p49
    %p52 = scmp.ne.s32.totalorder %s35, %s51
    %p53 = scmp.eq.s32.totalorder %s13, 0
    %p54 = por %p52, %p53
    %s55 = ssub.s32 %s14, %s26
    %p56 = scmp.eq.s32.totalorder %s55, 0
    %s58 = sadd.s32 %s57, 1
    %s59 = scalar_select %p56, %s57, %s58
    %p62 = pneg %p56
    %p63 = scmp.eq.s32.totalorder %s7, 1
    %p64 = por %p62, %p63
    %p65 = scmp.ne.s32.totalorder %s57, %s60
    %p66 = scmp.eq.s32.totalorder %s7, 0
    %p67 = por %p65, %p66
    %p68 = scmp.ne.s32.totalorder %s57, %s60
    %p69 = scmp.eq.s32.totalorder %s12, 1
    %p70 = por %p68, %p69
    %p71 = scmp.ne.s32.totalorder %s60, %s61
    %p72 = scmp.eq.s32.totalorder %s12, 0
    %p73 = por %p71, %p72
    %p74 = scmp.ne.s32.totalorder %s60, %s61
    %p75 = scmp.eq.s32.totalorder %s13, 1
    %p76 = por %p74, %p75
    %p78 = scmp.ne.s32.totalorder %s61, %s77
    %p79 = scmp.eq.s32.totalorder %s13, 0
    %p80 = por %p78, %p79
    %p81 = scmp.le.s32.totalorder 1, %s7
    %p82 = scmp.lt.s32.totalorder %s7, 3
    %p83 = pnand %p81, %p82
    %p84 = pneg %p83
    // Predicated region
    $region9: #{efficientnet_forward.28} parent=5 // pred_check
      _
    $region10: #{efficientnet_forward.28} parent=5 // pred_check_branch
      %86 = sbr.rel (%p83) target = $region12
    $region11: #{efficientnet_forward.28} parent=5 // pred_region
      %s87 = ssub.s32 %s7, 1
    $region12: #{efficientnet_forward.28} parent=5 // pred_fallthru
      _
    %p88 = scmp.lt.s32.totalorder %s7, 2
    // Predicated region
    $region13: #{efficientnet_forward.28} parent=5 // pred_check
      %p89 = pneg %p88
    $region14: #{efficientnet_forward.28} parent=5 // pred_check_branch
      %91 = sbr.rel (%p89) target = $region16
    $region15: #{efficientnet_forward.28} parent=5 // pred_region
      // Predicated region
      $region17: #{efficientnet_forward.28} parent=15 // pred_check
        %p92 = pneg %p41
      $region18: #{efficientnet_forward.28} parent=15 // pred_check_branch
        %94 = sbr.rel (%p92) target = $region20
      $region19: #{efficientnet_forward.28} parent=15 // pred_region
        %s95 = smul.u32 2, %s15
        %p96 = scmp.lt.s32.totalorder %s14, 1
        %s97 = scalar_select %p96, %s14, 1
        %p98 = scmp.lt.s32.totalorder %s95, 1
        %s99 = scalar_select %p98, %s95, 1
        %s100 = smul.addr %s97, 2
        %s101 = sadd.s32 %s99, %s100
        %s102 = smul.addr %s101, 4
        %s103 = scalar_lea.vmem %s0, %s102
        %s104 = smul.u32 2, %s15
      $region20: #{efficientnet_forward.28} parent=15 // pred_fallthru
        _
    $region16: #{efficientnet_forward.28} parent=5 // pred_fallthru
      _
    %p105 = scmp.le.s32.totalorder 1, %s7
    %p106 = scmp.lt.s32.totalorder %s7, 3
    %p107 = pnand %p105, %p106
    %p108 = pneg %p107
    // Predicated region
    $region21: #{efficientnet_forward.28} parent=5 // pred_check
      _
    $region22: #{efficientnet_forward.28} parent=5 // pred_check_branch
      %110 = sbr.rel (%p107) target = $region24
    $region23: #{efficientnet_forward.28} parent=5 // pred_region
      %s111 = ssub.s32 %s7, 1
      %s112 = smul.u32 2, %s17
      %p113 = scmp.lt.s32.totalorder %s16, 1
      %s114 = scalar_select %p113, %s16, 1
      %p115 = scmp.lt.s32.totalorder %s112, 1
      %s116 = scalar_select %p115, %s112, 1
      %s117 = smul.addr %s114, 2
      %s118 = sadd.s32 %s116, %s117
      %s119 = smul.addr %s118, 4
      %s120 = scalar_lea.vmem %s0, %s119
      %p121 = pneg %p47
      %p122 = pneg %p44
      %p123 = pneg %p73
      %p124 = pneg %p70
      %p125 = scmp.lt.s32.totalorder %s16, 1
      %s126 = scalar_select %p125, %s16, 1
      %s127 = scalar_lea.vmem %s1, %s126
      %s128 = smul.u32 2, %s17
      %p129 = scmp.lt.s32.totalorder %s16, 1
      %s130 = scalar_select %p129, %s16, 1
      %p131 = scmp.lt.s32.totalorder %s128, 1
      %s132 = scalar_select %p131, %s128, 1
      %s133 = smul.addr %s130, 2
      %s134 = sadd.s32 %s132, %s133
      %s135 = smul.addr %s134, 4
      %s136 = scalar_lea.vmem %s0, %s135
      %s137 = smul.u32 2, %s17
      %p138 = scmp.lt.s32.totalorder %s16, 1
      %s139 = scalar_select %p138, %s16, 1
      %s140 = scalar_lea.vmem %s1, %s139
      %p141 = scmp.eq.s32.totalorder %s17, 0
      // Predicated region
      $region25: #{efficientnet_forward.28} parent=23 // pred_check
        %p142 = pneg %p141
      $region26: #{efficientnet_forward.28} parent=23 // pred_check_branch
        %144 = sbr.rel (%p142) target = $region28
      $region27: #{efficientnet_forward.28} parent=23 // pred_region
        %145 = vst [vmem:[%s140] sm:$0x1] 0.0
      $region28: #{efficientnet_forward.28} parent=23 // pred_fallthru
        _
      %v146 = vld [vmem:[%s140] sm:$0x1]
      %v147 = vld [vmem:[%s136] sm:$0xf]
      %v148 = vld [vmem:[%s136 + $0x4] sm:$0xf]
      %v149 = vunpack.c.l.bf16 %v147
      %v150 = vunpack.c.l.bf16 %v148
      %v151 = vadd.f32 %v149, %v150
      %v152 = vrot.slane %v151, 4
      %v153 = vadd.f32 %v151, %v152
      %v154 = vrot.slane %v153, 2
      %v155 = vadd.f32 %v153, %v154
      %v156 = vrot.slane %v155, 1
      %v157 = vadd.f32 %v155, %v156
      %v158 = vadd.f32 %v146, %v157
      %159 = vst [vmem:[%s140] sm:$0x1] %v158
      // Predicated region
      $region29: #{efficientnet_forward.28} parent=23 // pred_check
        %p160 = pneg %p141
      $region30: #{efficientnet_forward.28} parent=23 // pred_check_branch
        %162 = sbr.rel (%p160) target = $region32
      $region31: #{efficientnet_forward.28} parent=23 // pred_region
        %v163 = vld [vmem:[%s140] sm:$0x1]
        %v164 = vmul.f32 %v163, 0.0625
        %165 = vst [vmem:[%s140] sm:$0x1] %v164
      $region32: #{efficientnet_forward.28} parent=23 // pred_fallthru
        _
      %p166 = scmp.lt.s32.totalorder %s16, 1
      %s167 = scalar_select %p166, %s16, 1
      %s168 = scalar_lea.vmem %s1, %s167
      // Predicated region
      $region33: #{efficientnet_forward.28} parent=23 // pred_check
        %p169 = pneg %p70
      $region34: #{efficientnet_forward.28} parent=23 // pred_check_branch
        %171 = sbr.rel (%p169) target = $region36
      $region35: #{efficientnet_forward.28} parent=23 // pred_region
        _
      $region36: #{efficientnet_forward.28} parent=23 // pred_fallthru
        _
    $region24: #{efficientnet_forward.28} parent=5 // pred_fallthru
      _
    %p172 = scmp.le.s32.totalorder 2, %s7
    // Predicated region
    $region37: #{efficientnet_forward.28} parent=5 // pred_check
      %p173 = pneg %p172
    $region38: #{efficientnet_forward.28} parent=5 // pred_check_branch
      %175 = sbr.rel (%p173) target = $region40
    $region39: #{efficientnet_forward.28} parent=5 // pred_region
      %s176 = ssub.s32 %s7, 2
      // Predicated region
      $region41: #{efficientnet_forward.28} parent=39 // pred_check
        %p177 = pneg %p76
      $region42: #{efficientnet_forward.28} parent=39 // pred_check_branch
        %179 = sbr.rel (%p177) target = $region44
      $region43: #{efficientnet_forward.28} parent=39 // pred_region
        %p180 = scmp.lt.s32.totalorder %s18, 1
        %s181 = scalar_select %p180, %s18, 1
        %s182 = scalar_lea.vmem %s1, %s181
      $region44: #{efficientnet_forward.28} parent=39 // pred_fallthru
        _
    $region40: #{efficientnet_forward.28} parent=5 // pred_fallthru
      _
  $region6: #{efficientnet_forward.28} parent=0 // loop_footer
    %s11 = sadd.s32 1, %s7
  $region7: #{efficientnet_forward.28} parent=0 // loop_footer_branch
    %6 = sbr.rel target = $region3
  $region8: #{efficientnet_forward.28} parent=0 // loop_exit
    _

// kernel: efficientnet_forward.29
$region0: #{efficientnet_forward.29}
  #allocation0 [shape = 'u32[]', space=smem, size = 0x4, offset = 0x4, fixed_abs, tag = 'smem constant byte address 0x4 - core index']
  #allocation1 [shape = 'u32[144,128]{1,0:T(1,128)}', space=vmem, size = 0x12000, scoped, tag = 'internal scratch']
  %s0 = inlined_call_operand.vmem [shape: bf16[8,128], index: 0, kind: input, shape index: {}]
  %s1 = inlined_call_operand.vmem [shape: bf16[128,128], index: 1, kind: input, shape index: {}]
  %s2 = inlined_call_operand.vmem [shape: f32[1,128], index: 2, kind: input, shape index: {}]
  %s3 = inlined_call_operand.vmem [shape: f32[8,128], index: 3, kind: output, shape index: {}]
  %s4 = sld [smem:[#allocation0]]
  $region22: #{efficientnet_forward.29} parent=0
    _
  %s6 = ssub.s32 1, %s4
  %s7 = scalar_select 0, %s6, %s4
  // Predicated region
  $region2: #{efficientnet_forward.29} parent=0 // pred_check
    _
  $region3: #{efficientnet_forward.29} parent=0 // pred_check_branch
    %9 = sbr.rel (0) target = $region5
  $region4: #{efficientnet_forward.29} parent=0 // pred_region
    _
  $region5: #{efficientnet_forward.29} parent=0 // pred_fallthru
    _
  // Predicated region
  $region6: #{efficientnet_forward.29} parent=0 // pred_check
    _
  $region7: #{efficientnet_forward.29} parent=0 // pred_check_branch
    %11 = sbr.rel (0) target = $region9
  $region8: #{efficientnet_forward.29} parent=0 // pred_region
    _
  $region9: #{efficientnet_forward.29} parent=0 // pred_fallthru
    _
  // Predicated region
  $region10: #{efficientnet_forward.29} parent=0 // pred_check
    _
  $region11: #{efficientnet_forward.29} parent=0 // pred_check_branch
    %13 = sbr.rel (0) target = $region13
  $region12: #{efficientnet_forward.29} parent=0 // pred_region
    _
  $region13: #{efficientnet_forward.29} parent=0 // pred_fallthru
    _
  %v15 = vld [vmem:[%s0] sm:$0xf]
  %v16 = vld [vmem:[%s1] sm:$0xf]
  %v17 = vld [vmem:[%s1 + $0x4] sm:$0xf]
  %v18 = vld [vmem:[%s1 + $0x8] sm:$0xf]
  %v19 = vld [vmem:[%s1 + $0xc] sm:$0xf]
  %v20 = vld [vmem:[%s1 + $0x10] sm:$0xf]
  %v21 = vld [vmem:[%s1 + $0x14] sm:$0xf]
  %v22 = vld [vmem:[%s1 + $0x18] sm:$0xf]
  %v23 = vld [vmem:[%s1 + $0x1c] sm:$0xf]
  %v24 = vld [vmem:[%s1 + $0x20] sm:$0xf]
  %v25 = vld [vmem:[%s1 + $0x24] sm:$0xf]
  %v26 = vld [vmem:[%s1 + $0x28] sm:$0xf]
  %v27 = vld [vmem:[%s1 + $0x2c] sm:$0xf]
  %v28 = vld [vmem:[%s1 + $0x30] sm:$0xf]
  %v29 = vld [vmem:[%s1 + $0x34] sm:$0xf]
  %v30 = vld [vmem:[%s1 + $0x38] sm:$0xf]
  %v31 = vld [vmem:[%s1 + $0x3c] sm:$0xf]
  %v32 = vld [vmem:[%s2] sm:$0x1]
  %v34 = vlaneseq
  %v35 = vshrl.u32 %v34, 7
  %v36 = vsub.s32 0, %v35
  %v37 = vrot.slane %v32, %v36
  %v55 = vunpack.c.l.b16 %v16
  %v56 = vunpack.c.l.b16 %v17
  %v57 = vunpack.c.l.b16 %v18
  %v58 = vunpack.c.l.b16 %v19
  %v59 = vunpack.c.l.b16 %v20
  %v60 = vunpack.c.l.b16 %v21
  %v61 = vunpack.c.l.b16 %v22
  %v62 = vunpack.c.l.b16 %v23
  %v63 = vunpack.c.l.b16 %v24
  %v64 = vunpack.c.l.b16 %v25
  %v65 = vunpack.c.l.b16 %v26
  %v66 = vunpack.c.l.b16 %v27
  %v67 = vunpack.c.l.b16 %v28
  %v68 = vunpack.c.l.b16 %v29
  %v69 = vunpack.c.l.b16 %v30
  %v70 = vunpack.c.l.b16 %v31
  %v71 = vpack.c.b16 %v56, %v55
  %v72 = vpack.c.b16 %v58, %v57
  %v73 = vpack.c.b16 %v60, %v59
  %v74 = vpack.c.b16 %v62, %v61
  %v75 = vpack.c.b16 %v64, %v63
  %v76 = vpack.c.b16 %v66, %v65
  %v77 = vpack.c.b16 %v68, %v67
  %v78 = vpack.c.b16 %v70, %v69
  %87 = vmatprep.subr.bf16.mxu0 0
  %88 = vmatpush1.bf16.msra.mxu0 %v71
  %89 = vmatprep.subr.bf16.mxu0 0
  %90 = vmatpush1.bf16.msra.mxu0 %v72
  %91 = vmatprep.subr.bf16.mxu0 0
  %92 = vmatpush1.bf16.msra.mxu0 %v73
  %93 = vmatprep.subr.bf16.mxu0 0
  %94 = vmatpush1.bf16.msra.mxu0 %v74
  %95 = vmatprep.subr.bf16.mxu0 0
  %96 = vmatpush1.bf16.msra.mxu0 %v75
  %97 = vmatprep.subr.bf16.mxu0 0
  %98 = vmatpush1.bf16.msra.mxu0 %v76
  %99 = vmatprep.subr.bf16.mxu0 0
  %100 = vmatpush1.bf16.msra.mxu0 %v77
  %101 = vmatprep.subr.bf16.mxu0 0
  %102 = vmatpush1.bf16.msra.mxu0 %v78
  %103 = vmatprep.subr.bf16.mxu0 0
  %104 = vmatpush1.bf16.msra.mxu0 0
  %105 = vmatprep.subr.bf16.mxu0 0
  %106 = vmatpush1.bf16.msra.mxu0 0
  %107 = vmatprep.subr.bf16.mxu0 0
  %108 = vmatpush1.bf16.msra.mxu0 0
  %109 = vmatprep.subr.bf16.mxu0 0
  %110 = vmatpush1.bf16.msra.mxu0 0
  %111 = vmatprep.subr.bf16.mxu0 0
  %112 = vmatpush1.bf16.msra.mxu0 0
  %113 = vmatprep.subr.bf16.mxu0 0
  %114 = vmatpush1.bf16.msra.mxu0 0
  %115 = vmatprep.subr.bf16.mxu0 0
  %116 = vmatpush1.bf16.msra.mxu0 0
  %117 = vmatprep.subr.bf16.mxu0 0
  %118 = vmatpush1.bf16.msra.mxu0 0
  %119 = vmatprep.mubr.bf16.mxu0 0
  %120 = vmatmul.mubr.bf16.gmra.mrb[0].mxu0 %v15
  %v121 = vpop.f32.mrb[0].mxu0
  %v122 = vadd.f32 %v37, %v121
  %v123 = vpop.f32.mrb[0].mxu0
  %v124 = vpop.f32.mrb[0].mxu0
  %v125 = vpop.f32.mrb[0].mxu0
  %126 = vdwg.mxu0
  %127 = vst [vmem:[%s3] sm:$0xff] %v122
  // Predicated region
  $region14: #{efficientnet_forward.29} parent=0 // pred_check
    _
  $region15: #{efficientnet_forward.29} parent=0 // pred_check_branch
    %129 = sbr.rel (0) target = $region17
  $region16: #{efficientnet_forward.29} parent=0 // pred_region
    _
  $region17: #{efficientnet_forward.29} parent=0 // pred_fallthru
    _
  // Predicated region
  $region18: #{efficientnet_forward.29} parent=0 // pred_check
    _
  $region19: #{efficientnet_forward.29} parent=0 // pred_check_branch
    %131 = sbr.rel (0) target = $region21
  $region20: #{efficientnet_forward.29} parent=0 // pred_region
    _
  $region21: #{efficientnet_forward.29} parent=0 // pred_fallthru
    _

</llo_original>
